<compile_context>
chip_gen: v7x
topology: tpu7x:2x2x1
jax: 0.10.0
libtpu: 0.0.40
codegen_flags: <defaults>
</compile_context>

<pallas_src>
import jax
import jax.numpy as jnp
from jax import lax
from jax.experimental import pallas as pl
from jax.experimental.pallas import tpu as pltpu

EPS = 1e-5
MAX_ROWS = 2048                       # soft cap on rows per fused-kernel grid step
VMEM_LIMIT = 48 * 1024 * 1024         # safe on v5e/v6e (128 MiB) and v7x (64 MiB)


# ----------------------------------------------------------------------------- kernels
def bn_relu_kernel(x_ref, scale_ref, shift_ref, o_ref):
    # y = relu(x * scale + shift)   (per-channel affine == eval-mode BN), lane-dense.
    o_ref[...] = jnp.maximum(x_ref[...] * scale_ref[...] + shift_ref[...], 0.0)


def _make_fused_kernel(TB, H, W, Cin, KT=4, KS=3):
    rows = TB * H * W

    def fused_ttl_kernel(yp_ref, wm_ref, shift2_ref, w4_ref, o_ref, patch_ref):
        # yp_ref    : (1, T+3, H+2, W+2, Cin) f32  padded activations for this batch item
        # wm_ref    : (KT*KS*KS*Cin, 3G) bf16      merged conv1|conv2|conv3 weights * BN2 scale
        # shift2_ref: (1, 3G) f32                  BN2 shift
        # w4_ref    : (3G, C4) bf16                1x1x1 conv4 weights
        # o_ref     : (rows, C4) f32               conv4 output rows for this (n, t-block)
        # patch_ref : (rows, KT*KS*KS*Cin) bf16    VMEM scratch: in-kernel im2col
        t0 = pl.program_id(1) * TB
        k = 0
        for dt in range(KT):                      # temporal taps -2..+1 (conv3 superset)
            for dh in range(KS):                  # spatial taps -1..+1
                for dw in range(KS):
                    tap = yp_ref[0, pl.ds(t0 + dt, TB), dh:dh + H, dw:dw + W, :]
                    patch_ref[:, k * Cin:(k + 1) * Cin] = (
                        tap.reshape(rows, Cin).astype(patch_ref.dtype))
                    k += 1
        # merged conv1+conv2+conv3 (BN2 scale already folded into wm columns)
        c = jnp.dot(patch_ref[...], wm_ref[...],
                    preferred_element_type=jnp.float32)           # (rows, 3G)
        z = jnp.maximum(c + shift2_ref[...], 0.0)                 # BN2 shift + ReLU
        out = jnp.dot(z.astype(w4_ref.dtype), w4_ref[...],
                      preferred_element_type=jnp.float32)         # conv4, (rows, C4)
        o_ref[...] = out.astype(o_ref.dtype)

    return fused_ttl_kernel


# ----------------------------------------------------------------------------- wrappers
def _row_tile(total, cap=MAX_ROWS):
    """Largest legal row tile: full extent if small, else a multiple-of-8 divisor."""
    if total <= cap:
        return total
    for d in range(cap - cap % 8, 7, -8):
        if total % d == 0:
            return d
    return total


def _bn_relu(x2d, scale_row, shift_row, row_tile):
    R, C = x2d.shape
    return pl.pallas_call(
        bn_relu_kernel,
        out_shape=jax.ShapeDtypeStruct((R, C), x2d.dtype),
        grid=(R // row_tile,),
        in_specs=[
            pl.BlockSpec((row_tile, C), lambda i: (i, 0)),
            pl.BlockSpec((1, C), lambda i: (0, 0)),
            pl.BlockSpec((1, C), lambda i: (0, 0)),
        ],
        out_specs=pl.BlockSpec((row_tile, C), lambda i: (i, 0)),
        compiler_params=pltpu.CompilerParams(
            dimension_semantics=("parallel",),
            vmem_limit_bytes=VMEM_LIMIT),
    )(x2d, scale_row, shift_row)


def _fused_convs(y_pad, w_merged, shift2, w4, N, T, H, W, Cin, TB):
    Tp, Hp, Wp = T + 3, H + 2, W + 2
    rows = TB * H * W
    K, G3 = w_merged.shape
    C4 = w4.shape[1]
    n_tb = T // TB
    kernel = _make_fused_kernel(TB, H, W, Cin)
    return pl.pallas_call(
        kernel,
        out_shape=jax.ShapeDtypeStruct((N * T * H * W, C4), jnp.float32),
        grid=(N, n_tb),
        in_specs=[
            # full padded volume of one batch item; same block across the tb axis
            # -> stays resident in VMEM, pipelined across n.
            pl.BlockSpec((1, Tp, Hp, Wp, Cin), lambda n, tb: (n, 0, 0, 0, 0)),
            pl.BlockSpec((K, G3), lambda n, tb: (0, 0)),
            pl.BlockSpec((1, G3), lambda n, tb: (0, 0)),
            pl.BlockSpec((G3, C4), lambda n, tb: (0, 0)),
        ],
        out_specs=pl.BlockSpec((rows, C4), lambda n, tb: (n * n_tb + tb, 0)),
        scratch_shapes=[pltpu.VMEM((rows, K), jnp.bfloat16)],
        compiler_params=pltpu.CompilerParams(
            dimension_semantics=("parallel", "arbitrary"),
            vmem_limit_bytes=VMEM_LIMIT),
    )(y_pad, w_merged, shift2, w4)


# ----------------------------------------------------------------------------- weight prep
def _build_merged_weight(W1, W2, W3, scale2):
    """Merged (4*3*3*Cin, 3G) weight matching the in-kernel tap ordering (dt,dh,dw,c).

    Tap (dt,dh,dw) reads padded position (t+dt, h+dh, w+dw), i.e. offsets
    (dt-2, dh-1, dw-1).  conv1 uses only tap (2,1,1); conv2 uses dt in {1,2,3};
    conv3 uses all taps.  BN2 scale is folded into the columns.
    """
    G, Cin = W1.shape[0], W1.shape[1]
    Wm = jnp.zeros((4, 3, 3, Cin, 3 * G), jnp.float32)
    Wm = Wm.at[2, 1, 1, :, 0:G].set(W1[:, :, 0, 0, 0].T)                         # conv1
    Wm = Wm.at[1:4, :, :, :, G:2 * G].set(jnp.transpose(W2, (2, 3, 4, 1, 0)))    # conv2
    Wm = Wm.at[:, :, :, :, 2 * G:3 * G].set(jnp.transpose(W3, (2, 3, 4, 1, 0)))  # conv3
    return Wm.reshape(4 * 3 * 3 * Cin, 3 * G) * scale2[None, :]


# ----------------------------------------------------------------------------- forward
def temporal_transition_layer(x_ncdhw, params):
    N, Cin, T, H, W = x_ncdhw.shape
    assert T % 2 == 0 and H % 2 == 0 and W % 2 == 0, "AvgPool3d(2,2) needs even dims"
    M = N * T * H * W

    # --- BN1 + ReLU (fused scale/shift, lane-dense view when possible) ---
    scale1 = params["gamma1"] / jnp.sqrt(params["var1"] + EPS)
    shift1 = params["beta1"] - params["mean1"] * scale1
    x_nthwc = jnp.transpose(x_ncdhw, (0, 2, 3, 4, 1))
    if (M * Cin) % 128 == 0 and 128 % Cin == 0:
        lanes = 128
        R = (M * Cin) // lanes
        rep = lanes // Cin
        xp = x_nthwc.reshape(R, lanes)
        sc = jnp.tile(scale1, rep).reshape(1, lanes)
        sh = jnp.tile(shift1, rep).reshape(1, lanes)
        y = _bn_relu(xp, sc, sh, _row_tile(R)).reshape(N, T, H, W, Cin)
    else:  # fallback: channels-last rows (lane-sparse but always legal)
        xp = x_nthwc.reshape(M, Cin)
        y = _bn_relu(xp, scale1.reshape(1, Cin), shift1.reshape(1, Cin),
                     _row_tile(M)).reshape(N, T, H, W, Cin)

    # --- zero-pad once: temporal (2,1) for the conv3 (4-tap) superset, spatial (1,1) ---
    y_pad = jnp.pad(y, ((0, 0), (2, 1), (1, 1), (1, 1), (0, 0)))

    # --- merged conv weights (BN2 scale folded), BN2 shift, conv4 weights ---
    G = params["W1"].shape[0]
    scale2 = params["gamma2"] / jnp.sqrt(params["var2"] + EPS)
    shift2 = (params["beta2"] - params["mean2"] * scale2).reshape(1, 3 * G)
    w_merged = _build_merged_weight(params["W1"], params["W2"], params["W3"],
                                    scale2).astype(jnp.bfloat16)
    w4 = params["W4"][:, :, 0, 0, 0].T.astype(jnp.bfloat16)        # (3G, C4)
    C4 = w4.shape[1]

    # --- temporal block size: biggest divisor of T keeping rows <= MAX_ROWS ---
    TB = 1
    for d in range(T, 0, -1):
        if T % d == 0 and d * H * W <= MAX_ROWS:
            TB = d
            break
    assert (TB * H * W) % 8 == 0, "row block must be a multiple of 8"

    out4 = _fused_convs(y_pad, w_merged, shift2, w4, N, T, H, W, Cin, TB)

    # --- AvgPool3d(kernel=2, stride=2) + back to NCDHW ---
    pooled = out4.reshape(N, T // 2, 2, H // 2, 2, W // 2, 2, C4).mean(axis=(2, 4, 6))
    return jnp.transpose(pooled, (0, 4, 1, 2, 3))                  # (N, C4, T/2, H/2, W/2)


# ----------------------------------------------------------------------------- reference
def reference(x, params):
    def bn(v, gamma, beta, mean, var):
        s = (1, -1, 1, 1, 1)
        return ((v - mean.reshape(s)) / jnp.sqrt(var.reshape(s) + EPS)
                * gamma.reshape(s) + beta.reshape(s))

    def conv3d(v, w, pad):
        dn = lax.conv_dimension_numbers(v.shape, w.shape, ("NCDHW", "OIDHW", "NCDHW"))
        return lax.conv_general_dilated(v, w, (1, 1, 1), [(p, p) for p in pad],
                                        dimension_numbers=dn,
                                        precision=lax.Precision.HIGHEST)

    y = jnp.maximum(bn(x, params["gamma1"], params["beta1"],
                       params["mean1"], params["var1"]), 0.0)
    o1 = conv3d(y, params["W1"], (0, 0, 0))
    o2 = conv3d(y, params["W2"], (1, 1, 1))
    o3 = conv3d(y, params["W3"], (2, 1, 1))[:, :, : x.shape[2]]    # downsample crop
    cat = jnp.concatenate([o1, o2, o3], axis=1)
    z = jnp.maximum(bn(cat, params["gamma2"], params["beta2"],
                       params["mean2"], params["var2"]), 0.0)
    o4 = conv3d(z, params["W4"], (0, 0, 0))
    N, C4, T, H, W = o4.shape
    return o4.reshape(N, C4, T // 2, 2, H // 2, 2, W // 2, 2).mean(axis=(3, 5, 7))


# ----------------------------------------------------------------------------- main
if __name__ == "__main__":
    import numpy as np

    # Shapes consistent with the module: in_planes=8, growth_rate=12, expansion=1,
    # t_size=[1,3,4], phi=0.5, stride=1, dropout=0.0
    N, Cin, T, H, W = 2, 8, 8, 8, 8
    G = 12 * 1
    C4 = int(Cin * 0.5)

    key = jax.random.PRNGKey(0)
    ks = jax.random.split(key, 14)
    params = {
        "gamma1": jax.random.uniform(ks[0], (Cin,), jnp.float32, 0.5, 1.5),
        "beta1":  jax.random.normal(ks[1], (Cin,), jnp.float32) * 0.1,
        "mean1":  jax.random.normal(ks[2], (Cin,), jnp.float32) * 0.1,
        "var1":   jax.random.uniform(ks[3], (Cin,), jnp.float32, 0.5, 1.5),
        "W1": jax.random.normal(ks[4], (G, Cin, 1, 1, 1), jnp.float32) * 0.2,
        "W2": jax.random.normal(ks[5], (G, Cin, 3, 3, 3), jnp.float32) * 0.1,
        "W3": jax.random.normal(ks[6], (G, Cin, 4, 3, 3), jnp.float32) * 0.1,
        "gamma2": jax.random.uniform(ks[7], (3 * G,), jnp.float32, 0.5, 1.5),
        "beta2":  jax.random.normal(ks[8], (3 * G,), jnp.float32) * 0.1,
        "mean2":  jax.random.normal(ks[9], (3 * G,), jnp.float32) * 0.1,
        "var2":   jax.random.uniform(ks[10], (3 * G,), jnp.float32, 0.5, 1.5),
        "W4": jax.random.normal(ks[11], (C4, 3 * G, 1, 1, 1), jnp.float32) * 0.2,
    }
    x = jax.random.normal(ks[12], (N, Cin, T, H, W), jnp.float32)

    out = jax.block_until_ready(jax.jit(temporal_transition_layer)(x, params))
    ref = jax.block_until_ready(reference(x, params))

    assert out.shape == (N, C4, T // 2, H // 2, W // 2), out.shape
    # bf16 MXU operands vs f32 HIGHEST-precision reference -> slightly loosened tolerance.
    np.testing.assert_allclose(np.asarray(out), np.asarray(ref), rtol=2e-2, atol=2e-2)
    print("KERNEL_OK")
</pallas_src>

<mosaic_0001>
module attributes {stable_mosaic.version = 11 : i64} {
  func.func @bn_relu_kernel(%arg0: i32, %arg1: memref<64x128xf32, #tpu.memory_space<vmem>>, %arg2: memref<1x128xf32, #tpu.memory_space<vmem>>, %arg3: memref<1x128xf32, #tpu.memory_space<vmem>>, %arg4: memref<64x128xf32, #tpu.memory_space<vmem>>) attributes {dimension_semantics = [#tpu.dimension_semantics<parallel>], iteration_bounds = array<i64: 1>, scalar_prefetch = 0 : i64, scratch_operands = 0 : i64, tpu.core_type = #tpu.core_type<tc>, window_params = [{transform_indices = @transform_0, window_bounds = array<i64: 64, 128>}, {pipeline_mode = #tpu.pipeline_mode<synchronous>, transform_indices = @transform_1, window_bounds = array<i64: 1, 128>}, {pipeline_mode = #tpu.pipeline_mode<synchronous>, transform_indices = @transform_2, window_bounds = array<i64: 1, 128>}, {transform_indices = @transform_3, window_bounds = array<i64: 64, 128>}]} {
    %c0 = arith.constant 0 : index
    %c0_0 = arith.constant 0 : index
    %0 = vector.load %arg1[%c0, %c0_0] : memref<64x128xf32, #tpu.memory_space<vmem>>, vector<64x128xf32>
    %c0_1 = arith.constant 0 : index
    %c0_2 = arith.constant 0 : index
    %1 = vector.load %arg2[%c0_1, %c0_2] : memref<1x128xf32, #tpu.memory_space<vmem>>, vector<1x128xf32>
    %2 = vector.broadcast %1 : vector<1x128xf32> to vector<64x128xf32>
    %3 = arith.mulf %0, %2 : vector<64x128xf32>
    %c0_3 = arith.constant 0 : index
    %c0_4 = arith.constant 0 : index
    %4 = vector.load %arg3[%c0_3, %c0_4] : memref<1x128xf32, #tpu.memory_space<vmem>>, vector<1x128xf32>
    %5 = vector.broadcast %4 : vector<1x128xf32> to vector<64x128xf32>
    %6 = arith.addf %3, %5 : vector<64x128xf32>
    %cst = arith.constant 0.000000e+00 : f32
    %7 = vector.broadcast %cst : f32 to vector<64x128xf32>
    %8 = arith.maximumf %6, %7 : vector<64x128xf32>
    %c0_5 = arith.constant 0 : index
    %c0_6 = arith.constant 0 : index
    %9 = vector.load %arg4[%c0_5, %c0_6] : memref<64x128xf32, #tpu.memory_space<vmem>>, vector<64x128xf32>
    tpu.vector_store %arg4[%c0_5, %c0_6], %8 {strides = array<i32>} : memref<64x128xf32, #tpu.memory_space<vmem>>, vector<64x128xf32>,
    return
  }
  func.func @transform_0(%arg0: i32) -> (i32, i32) {
    %c0_i32 = arith.constant 0 : i32
    %c0_i32_0 = arith.constant 0 : i32
    return %arg0, %c0_i32 : i32, i32
  }
  func.func @transform_1(%arg0: i32) -> (i32, i32) {
    %c0_i32 = arith.constant 0 : i32
    %c0_i32_0 = arith.constant 0 : i32
    %c0_i32_1 = arith.constant 0 : i32
    return %c0_i32, %c0_i32_0 : i32, i32
  }
  func.func @transform_2(%arg0: i32) -> (i32, i32) {
    %c0_i32 = arith.constant 0 : i32
    %c0_i32_0 = arith.constant 0 : i32
    %c0_i32_1 = arith.constant 0 : i32
    return %c0_i32, %c0_i32_0 : i32, i32
  }
  func.func @transform_3(%arg0: i32) -> (i32, i32) {
    %c0_i32 = arith.constant 0 : i32
    %c0_i32_0 = arith.constant 0 : i32
    return %arg0, %c0_i32 : i32, i32
  }
}

module attributes {stable_mosaic.version = 11 : i64} {
  func.func @fused_ttl_kernel(%arg0: i32, %arg1: i32, %arg2: memref<1x11x10x10x8xf32, #tpu.memory_space<vmem>>, %arg3: memref<288x36xbf16, #tpu.memory_space<vmem>>, %arg4: memref<1x36xf32, #tpu.memory_space<vmem>>, %arg5: memref<36x4xbf16, #tpu.memory_space<vmem>>, %arg6: memref<512x4xf32, #tpu.memory_space<vmem>>, %arg7: memref<512x288xbf16, #tpu.memory_space<vmem>>) attributes {dimension_semantics = [#tpu.dimension_semantics<parallel>, #tpu.dimension_semantics<arbitrary>], iteration_bounds = array<i64: 2, 1>, scalar_prefetch = 0 : i64, scratch_operands = 1 : i64, tpu.core_type = #tpu.core_type<tc>, window_params = [{transform_indices = @transform_0, window_bounds = array<i64: 1, 11, 10, 10, 8>}, {pipeline_mode = #tpu.pipeline_mode<synchronous>, transform_indices = @transform_1, window_bounds = array<i64: 288, 36>}, {pipeline_mode = #tpu.pipeline_mode<synchronous>, transform_indices = @transform_2, window_bounds = array<i64: 1, 36>}, {pipeline_mode = #tpu.pipeline_mode<synchronous>, transform_indices = @transform_3, window_bounds = array<i64: 36, 4>}, {transform_indices = @transform_4, window_bounds = array<i64: 512, 4>}]} {
    %c8_i32 = arith.constant 8 : i32
    %0 = arith.muli %arg1, %c8_i32 : i32
    %c0_i32 = arith.constant 0 : i32
    %1 = arith.addi %0, %c0_i32 : i32
    %c0 = arith.constant 0 : index
    %2 = arith.index_cast %1 : i32 to index
    %c0_0 = arith.constant 0 : index
    %c0_1 = arith.constant 0 : index
    %c0_2 = arith.constant 0 : index
    %3 = vector.load %arg2[%c0, %2, %c0_0, %c0_1, %c0_2] : memref<1x11x10x10x8xf32, #tpu.memory_space<vmem>>, vector<1x8x8x8x8xf32>
    %4 = vector.shape_cast %3 : vector<1x8x8x8x8xf32> to vector<8x8x8x8xf32>
    %5 = vector.shape_cast %4 : vector<8x8x8x8xf32> to vector<512x8xf32>
    %6 = arith.truncf %5 : vector<512x8xf32> to vector<512x8xbf16>
    %c0_3 = arith.constant 0 : index
    %c0_4 = arith.constant 0 : index
    %7 = vector.load %arg7[%c0_3, %c0_4] : memref<512x288xbf16, #tpu.memory_space<vmem>>, vector<512x8xbf16>
    tpu.vector_store %arg7[%c0_3, %c0_4], %6 {strides = array<i32>} : memref<512x288xbf16, #tpu.memory_space<vmem>>, vector<512x8xbf16>,
    %c0_i32_5 = arith.constant 0 : i32
    %8 = arith.addi %0, %c0_i32_5 : i32
    %c0_6 = arith.constant 0 : index
    %9 = arith.index_cast %8 : i32 to index
    %c0_7 = arith.constant 0 : index
    %c1 = arith.constant 1 : index
    %c0_8 = arith.constant 0 : index
    %10 = vector.load %arg2[%c0_6, %9, %c0_7, %c1, %c0_8] : memref<1x11x10x10x8xf32, #tpu.memory_space<vmem>>, vector<1x8x8x8x8xf32>
    %11 = vector.shape_cast %10 : vector<1x8x8x8x8xf32> to vector<8x8x8x8xf32>
    %12 = vector.shape_cast %11 : vector<8x8x8x8xf32> to vector<512x8xf32>
    %13 = arith.truncf %12 : vector<512x8xf32> to vector<512x8xbf16>
    %c0_9 = arith.constant 0 : index
    %c8 = arith.constant 8 : index
    %14 = vector.load %arg7[%c0_9, %c8] : memref<512x288xbf16, #tpu.memory_space<vmem>>, vector<512x8xbf16>
    tpu.vector_store %arg7[%c0_9, %c8], %13 {strides = array<i32>} : memref<512x288xbf16, #tpu.memory_space<vmem>>, vector<512x8xbf16>,
    %c0_i32_10 = arith.constant 0 : i32
    %15 = arith.addi %0, %c0_i32_10 : i32
    %c0_11 = arith.constant 0 : index
    %16 = arith.index_cast %15 : i32 to index
    %c0_12 = arith.constant 0 : index
    %c2 = arith.constant 2 : index
    %c0_13 = arith.constant 0 : index
    %17 = vector.load %arg2[%c0_11, %16, %c0_12, %c2, %c0_13] : memref<1x11x10x10x8xf32, #tpu.memory_space<vmem>>, vector<1x8x8x8x8xf32>
    %18 = vector.shape_cast %17 : vector<1x8x8x8x8xf32> to vector<8x8x8x8xf32>
    %19 = vector.shape_cast %18 : vector<8x8x8x8xf32> to vector<512x8xf32>
    %20 = arith.truncf %19 : vector<512x8xf32> to vector<512x8xbf16>
    %c0_14 = arith.constant 0 : index
    %c16 = arith.constant 16 : index
    %21 = vector.load %arg7[%c0_14, %c16] : memref<512x288xbf16, #tpu.memory_space<vmem>>, vector<512x8xbf16>
    tpu.vector_store %arg7[%c0_14, %c16], %20 {strides = array<i32>} : memref<512x288xbf16, #tpu.memory_space<vmem>>, vector<512x8xbf16>,
    %c0_i32_15 = arith.constant 0 : i32
    %22 = arith.addi %0, %c0_i32_15 : i32
    %c0_16 = arith.constant 0 : index
    %23 = arith.index_cast %22 : i32 to index
    %c1_17 = arith.constant 1 : index
    %c0_18 = arith.constant 0 : index
    %c0_19 = arith.constant 0 : index
    %24 = vector.load %arg2[%c0_16, %23, %c1_17, %c0_18, %c0_19] : memref<1x11x10x10x8xf32, #tpu.memory_space<vmem>>, vector<1x8x8x8x8xf32>
    %25 = vector.shape_cast %24 : vector<1x8x8x8x8xf32> to vector<8x8x8x8xf32>
    %26 = vector.shape_cast %25 : vector<8x8x8x8xf32> to vector<512x8xf32>
    %27 = arith.truncf %26 : vector<512x8xf32> to vector<512x8xbf16>
    %c0_20 = arith.constant 0 : index
    %c24 = arith.constant 24 : index
    %28 = vector.load %arg7[%c0_20, %c24] : memref<512x288xbf16, #tpu.memory_space<vmem>>, vector<512x8xbf16>
    tpu.vector_store %arg7[%c0_20, %c24], %27 {strides = array<i32>} : memref<512x288xbf16, #tpu.memory_space<vmem>>, vector<512x8xbf16>,
    %c0_i32_21 = arith.constant 0 : i32
    %29 = arith.addi %0, %c0_i32_21 : i32
    %c0_22 = arith.constant 0 : index
    %30 = arith.index_cast %29 : i32 to index
    %c1_23 = arith.constant 1 : index
    %c1_24 = arith.constant 1 : index
    %c0_25 = arith.constant 0 : index
    %31 = vector.load %arg2[%c0_22, %30, %c1_23, %c1_24, %c0_25] : memref<1x11x10x10x8xf32, #tpu.memory_space<vmem>>, vector<1x8x8x8x8xf32>
    %32 = vector.shape_cast %31 : vector<1x8x8x8x8xf32> to vector<8x8x8x8xf32>
    %33 = vector.shape_cast %32 : vector<8x8x8x8xf32> to vector<512x8xf32>
    %34 = arith.truncf %33 : vector<512x8xf32> to vector<512x8xbf16>
    %c0_26 = arith.constant 0 : index
    %c32 = arith.constant 32 : index
    %35 = vector.load %arg7[%c0_26, %c32] : memref<512x288xbf16, #tpu.memory_space<vmem>>, vector<512x8xbf16>
    tpu.vector_store %arg7[%c0_26, %c32], %34 {strides = array<i32>} : memref<512x288xbf16, #tpu.memory_space<vmem>>, vector<512x8xbf16>,
    %c0_i32_27 = arith.constant 0 : i32
    %36 = arith.addi %0, %c0_i32_27 : i32
    %c0_28 = arith.constant 0 : index
    %37 = arith.index_cast %36 : i32 to index
    %c1_29 = arith.constant 1 : index
    %c2_30 = arith.constant 2 : index
    %c0_31 = arith.constant 0 : index
    %38 = vector.load %arg2[%c0_28, %37, %c1_29, %c2_30, %c0_31] : memref<1x11x10x10x8xf32, #tpu.memory_space<vmem>>, vector<1x8x8x8x8xf32>
    %39 = vector.shape_cast %38 : vector<1x8x8x8x8xf32> to vector<8x8x8x8xf32>
    %40 = vector.shape_cast %39 : vector<8x8x8x8xf32> to vector<512x8xf32>
    %41 = arith.truncf %40 : vector<512x8xf32> to vector<512x8xbf16>
    %c0_32 = arith.constant 0 : index
    %c40 = arith.constant 40 : index
    %42 = vector.load %arg7[%c0_32, %c40] : memref<512x288xbf16, #tpu.memory_space<vmem>>, vector<512x8xbf16>
    tpu.vector_store %arg7[%c0_32, %c40], %41 {strides = array<i32>} : memref<512x288xbf16, #tpu.memory_space<vmem>>, vector<512x8xbf16>,
    %c0_i32_33 = arith.constant 0 : i32
    %43 = arith.addi %0, %c0_i32_33 : i32
    %c0_34 = arith.constant 0 : index
    %44 = arith.index_cast %43 : i32 to index
    %c2_35 = arith.constant 2 : index
    %c0_36 = arith.constant 0 : index
    %c0_37 = arith.constant 0 : index
    %45 = vector.load %arg2[%c0_34, %44, %c2_35, %c0_36, %c0_37] : memref<1x11x10x10x8xf32, #tpu.memory_space<vmem>>, vector<1x8x8x8x8xf32>
    %46 = vector.shape_cast %45 : vector<1x8x8x8x8xf32> to vector<8x8x8x8xf32>
    %47 = vector.shape_cast %46 : vector<8x8x8x8xf32> to vector<512x8xf32>
    %48 = arith.truncf %47 : vector<512x8xf32> to vector<512x8xbf16>
    %c0_38 = arith.constant 0 : index
    %c48 = arith.constant 48 : index
    %49 = vector.load %arg7[%c0_38, %c48] : memref<512x288xbf16, #tpu.memory_space<vmem>>, vector<512x8xbf16>
    tpu.vector_store %arg7[%c0_38, %c48], %48 {strides = array<i32>} : memref<512x288xbf16, #tpu.memory_space<vmem>>, vector<512x8xbf16>,
    %c0_i32_39 = arith.constant 0 : i32
    %50 = arith.addi %0, %c0_i32_39 : i32
    %c0_40 = arith.constant 0 : index
    %51 = arith.index_cast %50 : i32 to index
    %c2_41 = arith.constant 2 : index
    %c1_42 = arith.constant 1 : index
    %c0_43 = arith.constant 0 : index
    %52 = vector.load %arg2[%c0_40, %51, %c2_41, %c1_42, %c0_43] : memref<1x11x10x10x8xf32, #tpu.memory_space<vmem>>, vector<1x8x8x8x8xf32>
    %53 = vector.shape_cast %52 : vector<1x8x8x8x8xf32> to vector<8x8x8x8xf32>
    %54 = vector.shape_cast %53 : vector<8x8x8x8xf32> to vector<512x8xf32>
    %55 = arith.truncf %54 : vector<512x8xf32> to vector<512x8xbf16>
    %c0_44 = arith.constant 0 : index
    %c56 = arith.constant 56 : index
    %56 = vector.load %arg7[%c0_44, %c56] : memref<512x288xbf16, #tpu.memory_space<vmem>>, vector<512x8xbf16>
    tpu.vector_store %arg7[%c0_44, %c56], %55 {strides = array<i32>} : memref<512x288xbf16, #tpu.memory_space<vmem>>, vector<512x8xbf16>,
    %c0_i32_45 = arith.constant 0 : i32
    %57 = arith.addi %0, %c0_i32_45 : i32
    %c0_46 = arith.constant 0 : index
    %58 = arith.index_cast %57 : i32 to index
    %c2_47 = arith.constant 2 : index
    %c2_48 = arith.constant 2 : index
    %c0_49 = arith.constant 0 : index
    %59 = vector.load %arg2[%c0_46, %58, %c2_47, %c2_48, %c0_49] : memref<1x11x10x10x8xf32, #tpu.memory_space<vmem>>, vector<1x8x8x8x8xf32>
    %60 = vector.shape_cast %59 : vector<1x8x8x8x8xf32> to vector<8x8x8x8xf32>
    %61 = vector.shape_cast %60 : vector<8x8x8x8xf32> to vector<512x8xf32>
    %62 = arith.truncf %61 : vector<512x8xf32> to vector<512x8xbf16>
    %c0_50 = arith.constant 0 : index
    %c64 = arith.constant 64 : index
    %63 = vector.load %arg7[%c0_50, %c64] : memref<512x288xbf16, #tpu.memory_space<vmem>>, vector<512x8xbf16>
    tpu.vector_store %arg7[%c0_50, %c64], %62 {strides = array<i32>} : memref<512x288xbf16, #tpu.memory_space<vmem>>, vector<512x8xbf16>,
    %c1_i32 = arith.constant 1 : i32
    %64 = arith.addi %0, %c1_i32 : i32
    %c0_51 = arith.constant 0 : index
    %65 = arith.index_cast %64 : i32 to index
    %c0_52 = arith.constant 0 : index
    %c0_53 = arith.constant 0 : index
    %c0_54 = arith.constant 0 : index
    %66 = vector.load %arg2[%c0_51, %65, %c0_52, %c0_53, %c0_54] : memref<1x11x10x10x8xf32, #tpu.memory_space<vmem>>, vector<1x8x8x8x8xf32>
    %67 = vector.shape_cast %66 : vector<1x8x8x8x8xf32> to vector<8x8x8x8xf32>
    %68 = vector.shape_cast %67 : vector<8x8x8x8xf32> to vector<512x8xf32>
    %69 = arith.truncf %68 : vector<512x8xf32> to vector<512x8xbf16>
    %c0_55 = arith.constant 0 : index
    %c72 = arith.constant 72 : index
    %70 = vector.load %arg7[%c0_55, %c72] : memref<512x288xbf16, #tpu.memory_space<vmem>>, vector<512x8xbf16>
    tpu.vector_store %arg7[%c0_55, %c72], %69 {strides = array<i32>} : memref<512x288xbf16, #tpu.memory_space<vmem>>, vector<512x8xbf16>,
    %c1_i32_56 = arith.constant 1 : i32
    %71 = arith.addi %0, %c1_i32_56 : i32
    %c0_57 = arith.constant 0 : index
    %72 = arith.index_cast %71 : i32 to index
    %c0_58 = arith.constant 0 : index
    %c1_59 = arith.constant 1 : index
    %c0_60 = arith.constant 0 : index
    %73 = vector.load %arg2[%c0_57, %72, %c0_58, %c1_59, %c0_60] : memref<1x11x10x10x8xf32, #tpu.memory_space<vmem>>, vector<1x8x8x8x8xf32>
    %74 = vector.shape_cast %73 : vector<1x8x8x8x8xf32> to vector<8x8x8x8xf32>
    %75 = vector.shape_cast %74 : vector<8x8x8x8xf32> to vector<512x8xf32>
    %76 = arith.truncf %75 : vector<512x8xf32> to vector<512x8xbf16>
    %c0_61 = arith.constant 0 : index
    %c80 = arith.constant 80 : index
    %77 = vector.load %arg7[%c0_61, %c80] : memref<512x288xbf16, #tpu.memory_space<vmem>>, vector<512x8xbf16>
    tpu.vector_store %arg7[%c0_61, %c80], %76 {strides = array<i32>} : memref<512x288xbf16, #tpu.memory_space<vmem>>, vector<512x8xbf16>,
    %c1_i32_62 = arith.constant 1 : i32
    %78 = arith.addi %0, %c1_i32_62 : i32
    %c0_63 = arith.constant 0 : index
    %79 = arith.index_cast %78 : i32 to index
    %c0_64 = arith.constant 0 : index
    %c2_65 = arith.constant 2 : index
    %c0_66 = arith.constant 0 : index
    %80 = vector.load %arg2[%c0_63, %79, %c0_64, %c2_65, %c0_66] : memref<1x11x10x10x8xf32, #tpu.memory_space<vmem>>, vector<1x8x8x8x8xf32>
    %81 = vector.shape_cast %80 : vector<1x8x8x8x8xf32> to vector<8x8x8x8xf32>
    %82 = vector.shape_cast %81 : vector<8x8x8x8xf32> to vector<512x8xf32>
    %83 = arith.truncf %82 : vector<512x8xf32> to vector<512x8xbf16>
    %c0_67 = arith.constant 0 : index
    %c88 = arith.constant 88 : index
    %84 = vector.load %arg7[%c0_67, %c88] : memref<512x288xbf16, #tpu.memory_space<vmem>>, vector<512x8xbf16>
    tpu.vector_store %arg7[%c0_67, %c88], %83 {strides = array<i32>} : memref<512x288xbf16, #tpu.memory_space<vmem>>, vector<512x8xbf16>,
    %c1_i32_68 = arith.constant 1 : i32
    %85 = arith.addi %0, %c1_i32_68 : i32
    %c0_69 = arith.constant 0 : index
    %86 = arith.index_cast %85 : i32 to index
    %c1_70 = arith.constant 1 : index
    %c0_71 = arith.constant 0 : index
    %c0_72 = arith.constant 0 : index
    %87 = vector.load %arg2[%c0_69, %86, %c1_70, %c0_71, %c0_72] : memref<1x11x10x10x8xf32, #tpu.memory_space<vmem>>, vector<1x8x8x8x8xf32>
    %88 = vector.shape_cast %87 : vector<1x8x8x8x8xf32> to vector<8x8x8x8xf32>
    %89 = vector.shape_cast %88 : vector<8x8x8x8xf32> to vector<512x8xf32>
    %90 = arith.truncf %89 : vector<512x8xf32> to vector<512x8xbf16>
    %c0_73 = arith.constant 0 : index
    %c96 = arith.constant 96 : index
    %91 = vector.load %arg7[%c0_73, %c96] : memref<512x288xbf16, #tpu.memory_space<vmem>>, vector<512x8xbf16>
    tpu.vector_store %arg7[%c0_73, %c96], %90 {strides = array<i32>} : memref<512x288xbf16, #tpu.memory_space<vmem>>, vector<512x8xbf16>,
    %c1_i32_74 = arith.constant 1 : i32
    %92 = arith.addi %0, %c1_i32_74 : i32
    %c0_75 = arith.constant 0 : index
    %93 = arith.index_cast %92 : i32 to index
    %c1_76 = arith.constant 1 : index
    %c1_77 = arith.constant 1 : index
    %c0_78 = arith.constant 0 : index
    %94 = vector.load %arg2[%c0_75, %93, %c1_76, %c1_77, %c0_78] : memref<1x11x10x10x8xf32, #tpu.memory_space<vmem>>, vector<1x8x8x8x8xf32>
    %95 = vector.shape_cast %94 : vector<1x8x8x8x8xf32> to vector<8x8x8x8xf32>
    %96 = vector.shape_cast %95 : vector<8x8x8x8xf32> to vector<512x8xf32>
    %97 = arith.truncf %96 : vector<512x8xf32> to vector<512x8xbf16>
    %c0_79 = arith.constant 0 : index
    %c104 = arith.constant 104 : index
    %98 = vector.load %arg7[%c0_79, %c104] : memref<512x288xbf16, #tpu.memory_space<vmem>>, vector<512x8xbf16>
    tpu.vector_store %arg7[%c0_79, %c104], %97 {strides = array<i32>} : memref<512x288xbf16, #tpu.memory_space<vmem>>, vector<512x8xbf16>,
    %c1_i32_80 = arith.constant 1 : i32
    %99 = arith.addi %0, %c1_i32_80 : i32
    %c0_81 = arith.constant 0 : index
    %100 = arith.index_cast %99 : i32 to index
    %c1_82 = arith.constant 1 : index
    %c2_83 = arith.constant 2 : index
    %c0_84 = arith.constant 0 : index
    %101 = vector.load %arg2[%c0_81, %100, %c1_82, %c2_83, %c0_84] : memref<1x11x10x10x8xf32, #tpu.memory_space<vmem>>, vector<1x8x8x8x8xf32>
    %102 = vector.shape_cast %101 : vector<1x8x8x8x8xf32> to vector<8x8x8x8xf32>
    %103 = vector.shape_cast %102 : vector<8x8x8x8xf32> to vector<512x8xf32>
    %104 = arith.truncf %103 : vector<512x8xf32> to vector<512x8xbf16>
    %c0_85 = arith.constant 0 : index
    %c112 = arith.constant 112 : index
    %105 = vector.load %arg7[%c0_85, %c112] : memref<512x288xbf16, #tpu.memory_space<vmem>>, vector<512x8xbf16>
    tpu.vector_store %arg7[%c0_85, %c112], %104 {strides = array<i32>} : memref<512x288xbf16, #tpu.memory_space<vmem>>, vector<512x8xbf16>,
    %c1_i32_86 = arith.constant 1 : i32
    %106 = arith.addi %0, %c1_i32_86 : i32
    %c0_87 = arith.constant 0 : index
    %107 = arith.index_cast %106 : i32 to index
    %c2_88 = arith.constant 2 : index
    %c0_89 = arith.constant 0 : index
    %c0_90 = arith.constant 0 : index
    %108 = vector.load %arg2[%c0_87, %107, %c2_88, %c0_89, %c0_90] : memref<1x11x10x10x8xf32, #tpu.memory_space<vmem>>, vector<1x8x8x8x8xf32>
    %109 = vector.shape_cast %108 : vector<1x8x8x8x8xf32> to vector<8x8x8x8xf32>
    %110 = vector.shape_cast %109 : vector<8x8x8x8xf32> to vector<512x8xf32>
    %111 = arith.truncf %110 : vector<512x8xf32> to vector<512x8xbf16>
    %c0_91 = arith.constant 0 : index
    %c120 = arith.constant 120 : index
    %112 = vector.load %arg7[%c0_91, %c120] : memref<512x288xbf16, #tpu.memory_space<vmem>>, vector<512x8xbf16>
    tpu.vector_store %arg7[%c0_91, %c120], %111 {strides = array<i32>} : memref<512x288xbf16, #tpu.memory_space<vmem>>, vector<512x8xbf16>,
    %c1_i32_92 = arith.constant 1 : i32
    %113 = arith.addi %0, %c1_i32_92 : i32
    %c0_93 = arith.constant 0 : index
    %114 = arith.index_cast %113 : i32 to index
    %c2_94 = arith.constant 2 : index
    %c1_95 = arith.constant 1 : index
    %c0_96 = arith.constant 0 : index
    %115 = vector.load %arg2[%c0_93, %114, %c2_94, %c1_95, %c0_96] : memref<1x11x10x10x8xf32, #tpu.memory_space<vmem>>, vector<1x8x8x8x8xf32>
    %116 = vector.shape_cast %115 : vector<1x8x8x8x8xf32> to vector<8x8x8x8xf32>
    %117 = vector.shape_cast %116 : vector<8x8x8x8xf32> to vector<512x8xf32>
    %118 = arith.truncf %117 : vector<512x8xf32> to vector<512x8xbf16>
    %c0_97 = arith.constant 0 : index
    %c128 = arith.constant 128 : index
    %119 = vector.load %arg7[%c0_97, %c128] : memref<512x288xbf16, #tpu.memory_space<vmem>>, vector<512x8xbf16>
    tpu.vector_store %arg7[%c0_97, %c128], %118 {strides = array<i32>} : memref<512x288xbf16, #tpu.memory_space<vmem>>, vector<512x8xbf16>,
    %c1_i32_98 = arith.constant 1 : i32
    %120 = arith.addi %0, %c1_i32_98 : i32
    %c0_99 = arith.constant 0 : index
    %121 = arith.index_cast %120 : i32 to index
    %c2_100 = arith.constant 2 : index
    %c2_101 = arith.constant 2 : index
    %c0_102 = arith.constant 0 : index
    %122 = vector.load %arg2[%c0_99, %121, %c2_100, %c2_101, %c0_102] : memref<1x11x10x10x8xf32, #tpu.memory_space<vmem>>, vector<1x8x8x8x8xf32>
    %123 = vector.shape_cast %122 : vector<1x8x8x8x8xf32> to vector<8x8x8x8xf32>
    %124 = vector.shape_cast %123 : vector<8x8x8x8xf32> to vector<512x8xf32>
    %125 = arith.truncf %124 : vector<512x8xf32> to vector<512x8xbf16>
    %c0_103 = arith.constant 0 : index
    %c136 = arith.constant 136 : index
    %126 = vector.load %arg7[%c0_103, %c136] : memref<512x288xbf16, #tpu.memory_space<vmem>>, vector<512x8xbf16>
    tpu.vector_store %arg7[%c0_103, %c136], %125 {strides = array<i32>} : memref<512x288xbf16, #tpu.memory_space<vmem>>, vector<512x8xbf16>,
    %c2_i32 = arith.constant 2 : i32
    %127 = arith.addi %0, %c2_i32 : i32
    %c0_104 = arith.constant 0 : index
    %128 = arith.index_cast %127 : i32 to index
    %c0_105 = arith.constant 0 : index
    %c0_106 = arith.constant 0 : index
    %c0_107 = arith.constant 0 : index
    %129 = vector.load %arg2[%c0_104, %128, %c0_105, %c0_106, %c0_107] : memref<1x11x10x10x8xf32, #tpu.memory_space<vmem>>, vector<1x8x8x8x8xf32>
    %130 = vector.shape_cast %129 : vector<1x8x8x8x8xf32> to vector<8x8x8x8xf32>
    %131 = vector.shape_cast %130 : vector<8x8x8x8xf32> to vector<512x8xf32>
    %132 = arith.truncf %131 : vector<512x8xf32> to vector<512x8xbf16>
    %c0_108 = arith.constant 0 : index
    %c144 = arith.constant 144 : index
    %133 = vector.load %arg7[%c0_108, %c144] : memref<512x288xbf16, #tpu.memory_space<vmem>>, vector<512x8xbf16>
    tpu.vector_store %arg7[%c0_108, %c144], %132 {strides = array<i32>} : memref<512x288xbf16, #tpu.memory_space<vmem>>, vector<512x8xbf16>,
    %c2_i32_109 = arith.constant 2 : i32
    %134 = arith.addi %0, %c2_i32_109 : i32
    %c0_110 = arith.constant 0 : index
    %135 = arith.index_cast %134 : i32 to index
    %c0_111 = arith.constant 0 : index
    %c1_112 = arith.constant 1 : index
    %c0_113 = arith.constant 0 : index
    %136 = vector.load %arg2[%c0_110, %135, %c0_111, %c1_112, %c0_113] : memref<1x11x10x10x8xf32, #tpu.memory_space<vmem>>, vector<1x8x8x8x8xf32>
    %137 = vector.shape_cast %136 : vector<1x8x8x8x8xf32> to vector<8x8x8x8xf32>
    %138 = vector.shape_cast %137 : vector<8x8x8x8xf32> to vector<512x8xf32>
    %139 = arith.truncf %138 : vector<512x8xf32> to vector<512x8xbf16>
    %c0_114 = arith.constant 0 : index
    %c152 = arith.constant 152 : index
    %140 = vector.load %arg7[%c0_114, %c152] : memref<512x288xbf16, #tpu.memory_space<vmem>>, vector<512x8xbf16>
    tpu.vector_store %arg7[%c0_114, %c152], %139 {strides = array<i32>} : memref<512x288xbf16, #tpu.memory_space<vmem>>, vector<512x8xbf16>,
    %c2_i32_115 = arith.constant 2 : i32
    %141 = arith.addi %0, %c2_i32_115 : i32
    %c0_116 = arith.constant 0 : index
    %142 = arith.index_cast %141 : i32 to index
    %c0_117 = arith.constant 0 : index
    %c2_118 = arith.constant 2 : index
    %c0_119 = arith.constant 0 : index
    %143 = vector.load %arg2[%c0_116, %142, %c0_117, %c2_118, %c0_119] : memref<1x11x10x10x8xf32, #tpu.memory_space<vmem>>, vector<1x8x8x8x8xf32>
    %144 = vector.shape_cast %143 : vector<1x8x8x8x8xf32> to vector<8x8x8x8xf32>
    %145 = vector.shape_cast %144 : vector<8x8x8x8xf32> to vector<512x8xf32>
    %146 = arith.truncf %145 : vector<512x8xf32> to vector<512x8xbf16>
    %c0_120 = arith.constant 0 : index
    %c160 = arith.constant 160 : index
    %147 = vector.load %arg7[%c0_120, %c160] : memref<512x288xbf16, #tpu.memory_space<vmem>>, vector<512x8xbf16>
    tpu.vector_store %arg7[%c0_120, %c160], %146 {strides = array<i32>} : memref<512x288xbf16, #tpu.memory_space<vmem>>, vector<512x8xbf16>,
    %c2_i32_121 = arith.constant 2 : i32
    %148 = arith.addi %0, %c2_i32_121 : i32
    %c0_122 = arith.constant 0 : index
    %149 = arith.index_cast %148 : i32 to index
    %c1_123 = arith.constant 1 : index
    %c0_124 = arith.constant 0 : index
    %c0_125 = arith.constant 0 : index
    %150 = vector.load %arg2[%c0_122, %149, %c1_123, %c0_124, %c0_125] : memref<1x11x10x10x8xf32, #tpu.memory_space<vmem>>, vector<1x8x8x8x8xf32>
    %151 = vector.shape_cast %150 : vector<1x8x8x8x8xf32> to vector<8x8x8x8xf32>
    %152 = vector.shape_cast %151 : vector<8x8x8x8xf32> to vector<512x8xf32>
    %153 = arith.truncf %152 : vector<512x8xf32> to vector<512x8xbf16>
    %c0_126 = arith.constant 0 : index
    %c168 = arith.constant 168 : index
    %154 = vector.load %arg7[%c0_126, %c168] : memref<512x288xbf16, #tpu.memory_space<vmem>>, vector<512x8xbf16>
    tpu.vector_store %arg7[%c0_126, %c168], %153 {strides = array<i32>} : memref<512x288xbf16, #tpu.memory_space<vmem>>, vector<512x8xbf16>,
    %c2_i32_127 = arith.constant 2 : i32
    %155 = arith.addi %0, %c2_i32_127 : i32
    %c0_128 = arith.constant 0 : index
    %156 = arith.index_cast %155 : i32 to index
    %c1_129 = arith.constant 1 : index
    %c1_130 = arith.constant 1 : index
    %c0_131 = arith.constant 0 : index
    %157 = vector.load %arg2[%c0_128, %156, %c1_129, %c1_130, %c0_131] : memref<1x11x10x10x8xf32, #tpu.memory_space<vmem>>, vector<1x8x8x8x8xf32>
    %158 = vector.shape_cast %157 : vector<1x8x8x8x8xf32> to vector<8x8x8x8xf32>
    %159 = vector.shape_cast %158 : vector<8x8x8x8xf32> to vector<512x8xf32>
    %160 = arith.truncf %159 : vector<512x8xf32> to vector<512x8xbf16>
    %c0_132 = arith.constant 0 : index
    %c176 = arith.constant 176 : index
    %161 = vector.load %arg7[%c0_132, %c176] : memref<512x288xbf16, #tpu.memory_space<vmem>>, vector<512x8xbf16>
    tpu.vector_store %arg7[%c0_132, %c176], %160 {strides = array<i32>} : memref<512x288xbf16, #tpu.memory_space<vmem>>, vector<512x8xbf16>,
    %c2_i32_133 = arith.constant 2 : i32
    %162 = arith.addi %0, %c2_i32_133 : i32
    %c0_134 = arith.constant 0 : index
    %163 = arith.index_cast %162 : i32 to index
    %c1_135 = arith.constant 1 : index
    %c2_136 = arith.constant 2 : index
    %c0_137 = arith.constant 0 : index
    %164 = vector.load %arg2[%c0_134, %163, %c1_135, %c2_136, %c0_137] : memref<1x11x10x10x8xf32, #tpu.memory_space<vmem>>, vector<1x8x8x8x8xf32>
    %165 = vector.shape_cast %164 : vector<1x8x8x8x8xf32> to vector<8x8x8x8xf32>
    %166 = vector.shape_cast %165 : vector<8x8x8x8xf32> to vector<512x8xf32>
    %167 = arith.truncf %166 : vector<512x8xf32> to vector<512x8xbf16>
    %c0_138 = arith.constant 0 : index
    %c184 = arith.constant 184 : index
    %168 = vector.load %arg7[%c0_138, %c184] : memref<512x288xbf16, #tpu.memory_space<vmem>>, vector<512x8xbf16>
    tpu.vector_store %arg7[%c0_138, %c184], %167 {strides = array<i32>} : memref<512x288xbf16, #tpu.memory_space<vmem>>, vector<512x8xbf16>,
    %c2_i32_139 = arith.constant 2 : i32
    %169 = arith.addi %0, %c2_i32_139 : i32
    %c0_140 = arith.constant 0 : index
    %170 = arith.index_cast %169 : i32 to index
    %c2_141 = arith.constant 2 : index
    %c0_142 = arith.constant 0 : index
    %c0_143 = arith.constant 0 : index
    %171 = vector.load %arg2[%c0_140, %170, %c2_141, %c0_142, %c0_143] : memref<1x11x10x10x8xf32, #tpu.memory_space<vmem>>, vector<1x8x8x8x8xf32>
    %172 = vector.shape_cast %171 : vector<1x8x8x8x8xf32> to vector<8x8x8x8xf32>
    %173 = vector.shape_cast %172 : vector<8x8x8x8xf32> to vector<512x8xf32>
    %174 = arith.truncf %173 : vector<512x8xf32> to vector<512x8xbf16>
    %c0_144 = arith.constant 0 : index
    %c192 = arith.constant 192 : index
    %175 = vector.load %arg7[%c0_144, %c192] : memref<512x288xbf16, #tpu.memory_space<vmem>>, vector<512x8xbf16>
    tpu.vector_store %arg7[%c0_144, %c192], %174 {strides = array<i32>} : memref<512x288xbf16, #tpu.memory_space<vmem>>, vector<512x8xbf16>,
    %c2_i32_145 = arith.constant 2 : i32
    %176 = arith.addi %0, %c2_i32_145 : i32
    %c0_146 = arith.constant 0 : index
    %177 = arith.index_cast %176 : i32 to index
    %c2_147 = arith.constant 2 : index
    %c1_148 = arith.constant 1 : index
    %c0_149 = arith.constant 0 : index
    %178 = vector.load %arg2[%c0_146, %177, %c2_147, %c1_148, %c0_149] : memref<1x11x10x10x8xf32, #tpu.memory_space<vmem>>, vector<1x8x8x8x8xf32>
    %179 = vector.shape_cast %178 : vector<1x8x8x8x8xf32> to vector<8x8x8x8xf32>
    %180 = vector.shape_cast %179 : vector<8x8x8x8xf32> to vector<512x8xf32>
    %181 = arith.truncf %180 : vector<512x8xf32> to vector<512x8xbf16>
    %c0_150 = arith.constant 0 : index
    %c200 = arith.constant 200 : index
    %182 = vector.load %arg7[%c0_150, %c200] : memref<512x288xbf16, #tpu.memory_space<vmem>>, vector<512x8xbf16>
    tpu.vector_store %arg7[%c0_150, %c200], %181 {strides = array<i32>} : memref<512x288xbf16, #tpu.memory_space<vmem>>, vector<512x8xbf16>,
    %c2_i32_151 = arith.constant 2 : i32
    %183 = arith.addi %0, %c2_i32_151 : i32
    %c0_152 = arith.constant 0 : index
    %184 = arith.index_cast %183 : i32 to index
    %c2_153 = arith.constant 2 : index
    %c2_154 = arith.constant 2 : index
    %c0_155 = arith.constant 0 : index
    %185 = vector.load %arg2[%c0_152, %184, %c2_153, %c2_154, %c0_155] : memref<1x11x10x10x8xf32, #tpu.memory_space<vmem>>, vector<1x8x8x8x8xf32>
    %186 = vector.shape_cast %185 : vector<1x8x8x8x8xf32> to vector<8x8x8x8xf32>
    %187 = vector.shape_cast %186 : vector<8x8x8x8xf32> to vector<512x8xf32>
    %188 = arith.truncf %187 : vector<512x8xf32> to vector<512x8xbf16>
    %c0_156 = arith.constant 0 : index
    %c208 = arith.constant 208 : index
    %189 = vector.load %arg7[%c0_156, %c208] : memref<512x288xbf16, #tpu.memory_space<vmem>>, vector<512x8xbf16>
    tpu.vector_store %arg7[%c0_156, %c208], %188 {strides = array<i32>} : memref<512x288xbf16, #tpu.memory_space<vmem>>, vector<512x8xbf16>,
    %c3_i32 = arith.constant 3 : i32
    %190 = arith.addi %0, %c3_i32 : i32
    %c0_157 = arith.constant 0 : index
    %191 = arith.index_cast %190 : i32 to index
    %c0_158 = arith.constant 0 : index
    %c0_159 = arith.constant 0 : index
    %c0_160 = arith.constant 0 : index
    %192 = vector.load %arg2[%c0_157, %191, %c0_158, %c0_159, %c0_160] : memref<1x11x10x10x8xf32, #tpu.memory_space<vmem>>, vector<1x8x8x8x8xf32>
    %193 = vector.shape_cast %192 : vector<1x8x8x8x8xf32> to vector<8x8x8x8xf32>
    %194 = vector.shape_cast %193 : vector<8x8x8x8xf32> to vector<512x8xf32>
    %195 = arith.truncf %194 : vector<512x8xf32> to vector<512x8xbf16>
    %c0_161 = arith.constant 0 : index
    %c216 = arith.constant 216 : index
    %196 = vector.load %arg7[%c0_161, %c216] : memref<512x288xbf16, #tpu.memory_space<vmem>>, vector<512x8xbf16>
    tpu.vector_store %arg7[%c0_161, %c216], %195 {strides = array<i32>} : memref<512x288xbf16, #tpu.memory_space<vmem>>, vector<512x8xbf16>,
    %c3_i32_162 = arith.constant 3 : i32
    %197 = arith.addi %0, %c3_i32_162 : i32
    %c0_163 = arith.constant 0 : index
    %198 = arith.index_cast %197 : i32 to index
    %c0_164 = arith.constant 0 : index
    %c1_165 = arith.constant 1 : index
    %c0_166 = arith.constant 0 : index
    %199 = vector.load %arg2[%c0_163, %198, %c0_164, %c1_165, %c0_166] : memref<1x11x10x10x8xf32, #tpu.memory_space<vmem>>, vector<1x8x8x8x8xf32>
    %200 = vector.shape_cast %199 : vector<1x8x8x8x8xf32> to vector<8x8x8x8xf32>
    %201 = vector.shape_cast %200 : vector<8x8x8x8xf32> to vector<512x8xf32>
    %202 = arith.truncf %201 : vector<512x8xf32> to vector<512x8xbf16>
    %c0_167 = arith.constant 0 : index
    %c224 = arith.constant 224 : index
    %203 = vector.load %arg7[%c0_167, %c224] : memref<512x288xbf16, #tpu.memory_space<vmem>>, vector<512x8xbf16>
    tpu.vector_store %arg7[%c0_167, %c224], %202 {strides = array<i32>} : memref<512x288xbf16, #tpu.memory_space<vmem>>, vector<512x8xbf16>,
    %c3_i32_168 = arith.constant 3 : i32
    %204 = arith.addi %0, %c3_i32_168 : i32
    %c0_169 = arith.constant 0 : index
    %205 = arith.index_cast %204 : i32 to index
    %c0_170 = arith.constant 0 : index
    %c2_171 = arith.constant 2 : index
    %c0_172 = arith.constant 0 : index
    %206 = vector.load %arg2[%c0_169, %205, %c0_170, %c2_171, %c0_172] : memref<1x11x10x10x8xf32, #tpu.memory_space<vmem>>, vector<1x8x8x8x8xf32>
    %207 = vector.shape_cast %206 : vector<1x8x8x8x8xf32> to vector<8x8x8x8xf32>
    %208 = vector.shape_cast %207 : vector<8x8x8x8xf32> to vector<512x8xf32>
    %209 = arith.truncf %208 : vector<512x8xf32> to vector<512x8xbf16>
    %c0_173 = arith.constant 0 : index
    %c232 = arith.constant 232 : index
    %210 = vector.load %arg7[%c0_173, %c232] : memref<512x288xbf16, #tpu.memory_space<vmem>>, vector<512x8xbf16>
    tpu.vector_store %arg7[%c0_173, %c232], %209 {strides = array<i32>} : memref<512x288xbf16, #tpu.memory_space<vmem>>, vector<512x8xbf16>,
    %c3_i32_174 = arith.constant 3 : i32
    %211 = arith.addi %0, %c3_i32_174 : i32
    %c0_175 = arith.constant 0 : index
    %212 = arith.index_cast %211 : i32 to index
    %c1_176 = arith.constant 1 : index
    %c0_177 = arith.constant 0 : index
    %c0_178 = arith.constant 0 : index
    %213 = vector.load %arg2[%c0_175, %212, %c1_176, %c0_177, %c0_178] : memref<1x11x10x10x8xf32, #tpu.memory_space<vmem>>, vector<1x8x8x8x8xf32>
    %214 = vector.shape_cast %213 : vector<1x8x8x8x8xf32> to vector<8x8x8x8xf32>
    %215 = vector.shape_cast %214 : vector<8x8x8x8xf32> to vector<512x8xf32>
    %216 = arith.truncf %215 : vector<512x8xf32> to vector<512x8xbf16>
    %c0_179 = arith.constant 0 : index
    %c240 = arith.constant 240 : index
    %217 = vector.load %arg7[%c0_179, %c240] : memref<512x288xbf16, #tpu.memory_space<vmem>>, vector<512x8xbf16>
    tpu.vector_store %arg7[%c0_179, %c240], %216 {strides = array<i32>} : memref<512x288xbf16, #tpu.memory_space<vmem>>, vector<512x8xbf16>,
    %c3_i32_180 = arith.constant 3 : i32
    %218 = arith.addi %0, %c3_i32_180 : i32
    %c0_181 = arith.constant 0 : index
    %219 = arith.index_cast %218 : i32 to index
    %c1_182 = arith.constant 1 : index
    %c1_183 = arith.constant 1 : index
    %c0_184 = arith.constant 0 : index
    %220 = vector.load %arg2[%c0_181, %219, %c1_182, %c1_183, %c0_184] : memref<1x11x10x10x8xf32, #tpu.memory_space<vmem>>, vector<1x8x8x8x8xf32>
    %221 = vector.shape_cast %220 : vector<1x8x8x8x8xf32> to vector<8x8x8x8xf32>
    %222 = vector.shape_cast %221 : vector<8x8x8x8xf32> to vector<512x8xf32>
    %223 = arith.truncf %222 : vector<512x8xf32> to vector<512x8xbf16>
    %c0_185 = arith.constant 0 : index
    %c248 = arith.constant 248 : index
    %224 = vector.load %arg7[%c0_185, %c248] : memref<512x288xbf16, #tpu.memory_space<vmem>>, vector<512x8xbf16>
    tpu.vector_store %arg7[%c0_185, %c248], %223 {strides = array<i32>} : memref<512x288xbf16, #tpu.memory_space<vmem>>, vector<512x8xbf16>,
    %c3_i32_186 = arith.constant 3 : i32
    %225 = arith.addi %0, %c3_i32_186 : i32
    %c0_187 = arith.constant 0 : index
    %226 = arith.index_cast %225 : i32 to index
    %c1_188 = arith.constant 1 : index
    %c2_189 = arith.constant 2 : index
    %c0_190 = arith.constant 0 : index
    %227 = vector.load %arg2[%c0_187, %226, %c1_188, %c2_189, %c0_190] : memref<1x11x10x10x8xf32, #tpu.memory_space<vmem>>, vector<1x8x8x8x8xf32>
    %228 = vector.shape_cast %227 : vector<1x8x8x8x8xf32> to vector<8x8x8x8xf32>
    %229 = vector.shape_cast %228 : vector<8x8x8x8xf32> to vector<512x8xf32>
    %230 = arith.truncf %229 : vector<512x8xf32> to vector<512x8xbf16>
    %c0_191 = arith.constant 0 : index
    %c256 = arith.constant 256 : index
    %231 = vector.load %arg7[%c0_191, %c256] : memref<512x288xbf16, #tpu.memory_space<vmem>>, vector<512x8xbf16>
    tpu.vector_store %arg7[%c0_191, %c256], %230 {strides = array<i32>} : memref<512x288xbf16, #tpu.memory_space<vmem>>, vector<512x8xbf16>,
    %c3_i32_192 = arith.constant 3 : i32
    %232 = arith.addi %0, %c3_i32_192 : i32
    %c0_193 = arith.constant 0 : index
    %233 = arith.index_cast %232 : i32 to index
    %c2_194 = arith.constant 2 : index
    %c0_195 = arith.constant 0 : index
    %c0_196 = arith.constant 0 : index
    %234 = vector.load %arg2[%c0_193, %233, %c2_194, %c0_195, %c0_196] : memref<1x11x10x10x8xf32, #tpu.memory_space<vmem>>, vector<1x8x8x8x8xf32>
    %235 = vector.shape_cast %234 : vector<1x8x8x8x8xf32> to vector<8x8x8x8xf32>
    %236 = vector.shape_cast %235 : vector<8x8x8x8xf32> to vector<512x8xf32>
    %237 = arith.truncf %236 : vector<512x8xf32> to vector<512x8xbf16>
    %c0_197 = arith.constant 0 : index
    %c264 = arith.constant 264 : index
    %238 = vector.load %arg7[%c0_197, %c264] : memref<512x288xbf16, #tpu.memory_space<vmem>>, vector<512x8xbf16>
    tpu.vector_store %arg7[%c0_197, %c264], %237 {strides = array<i32>} : memref<512x288xbf16, #tpu.memory_space<vmem>>, vector<512x8xbf16>,
    %c3_i32_198 = arith.constant 3 : i32
    %239 = arith.addi %0, %c3_i32_198 : i32
    %c0_199 = arith.constant 0 : index
    %240 = arith.index_cast %239 : i32 to index
    %c2_200 = arith.constant 2 : index
    %c1_201 = arith.constant 1 : index
    %c0_202 = arith.constant 0 : index
    %241 = vector.load %arg2[%c0_199, %240, %c2_200, %c1_201, %c0_202] : memref<1x11x10x10x8xf32, #tpu.memory_space<vmem>>, vector<1x8x8x8x8xf32>
    %242 = vector.shape_cast %241 : vector<1x8x8x8x8xf32> to vector<8x8x8x8xf32>
    %243 = vector.shape_cast %242 : vector<8x8x8x8xf32> to vector<512x8xf32>
    %244 = arith.truncf %243 : vector<512x8xf32> to vector<512x8xbf16>
    %c0_203 = arith.constant 0 : index
    %c272 = arith.constant 272 : index
    %245 = vector.load %arg7[%c0_203, %c272] : memref<512x288xbf16, #tpu.memory_space<vmem>>, vector<512x8xbf16>
    tpu.vector_store %arg7[%c0_203, %c272], %244 {strides = array<i32>} : memref<512x288xbf16, #tpu.memory_space<vmem>>, vector<512x8xbf16>,
    %c3_i32_204 = arith.constant 3 : i32
    %246 = arith.addi %0, %c3_i32_204 : i32
    %c0_205 = arith.constant 0 : index
    %247 = arith.index_cast %246 : i32 to index
    %c2_206 = arith.constant 2 : index
    %c2_207 = arith.constant 2 : index
    %c0_208 = arith.constant 0 : index
    %248 = vector.load %arg2[%c0_205, %247, %c2_206, %c2_207, %c0_208] : memref<1x11x10x10x8xf32, #tpu.memory_space<vmem>>, vector<1x8x8x8x8xf32>
    %249 = vector.shape_cast %248 : vector<1x8x8x8x8xf32> to vector<8x8x8x8xf32>
    %250 = vector.shape_cast %249 : vector<8x8x8x8xf32> to vector<512x8xf32>
    %251 = arith.truncf %250 : vector<512x8xf32> to vector<512x8xbf16>
    %c0_209 = arith.constant 0 : index
    %c280 = arith.constant 280 : index
    %252 = vector.load %arg7[%c0_209, %c280] : memref<512x288xbf16, #tpu.memory_space<vmem>>, vector<512x8xbf16>
    tpu.vector_store %arg7[%c0_209, %c280], %251 {strides = array<i32>} : memref<512x288xbf16, #tpu.memory_space<vmem>>, vector<512x8xbf16>,
    %c0_210 = arith.constant 0 : index
    %c0_211 = arith.constant 0 : index
    %253 = vector.load %arg7[%c0_210, %c0_211] : memref<512x288xbf16, #tpu.memory_space<vmem>>, vector<512x288xbf16>
    %c0_212 = arith.constant 0 : index
    %c0_213 = arith.constant 0 : index
    %254 = vector.load %arg3[%c0_212, %c0_213] : memref<288x36xbf16, #tpu.memory_space<vmem>>, vector<288x36xbf16>
    %cst = arith.constant dense<0.000000e+00> : vector<512x36xf32>
    %255 = tpu.matmul %253, %254, %cst {dimension_numbers = #tpu.dot_dimension_numbers<[1], [0], [0], [1], [0, 0, 1, 1], [], []>} : vector<512x288xbf16>, vector<288x36xbf16>, vector<512x36xf32> -> vector<512x36xf32>
    %c0_214 = arith.constant 0 : index
    %c0_215 = arith.constant 0 : index
    %256 = vector.load %arg4[%c0_214, %c0_215] : memref<1x36xf32, #tpu.memory_space<vmem>>, vector<1x36xf32>
    %257 = vector.broadcast %256 : vector<1x36xf32> to vector<512x36xf32>
    %258 = arith.addf %255, %257 : vector<512x36xf32>
    %cst_216 = arith.constant 0.000000e+00 : f32
    %259 = vector.broadcast %cst_216 : f32 to vector<512x36xf32>
    %260 = arith.maximumf %258, %259 : vector<512x36xf32>
    %261 = arith.truncf %260 : vector<512x36xf32> to vector<512x36xbf16>
    %c0_217 = arith.constant 0 : index
    %c0_218 = arith.constant 0 : index
    %262 = vector.load %arg5[%c0_217, %c0_218] : memref<36x4xbf16, #tpu.memory_space<vmem>>, vector<36x4xbf16>
    %cst_219 = arith.constant dense<0.000000e+00> : vector<512x4xf32>
    %263 = tpu.matmul %261, %262, %cst_219 {dimension_numbers = #tpu.dot_dimension_numbers<[1], [0], [0], [1], [0, 0, 1, 1], [], []>} : vector<512x36xbf16>, vector<36x4xbf16>, vector<512x4xf32> -> vector<512x4xf32>
    %c0_220 = arith.constant 0 : index
    %c0_221 = arith.constant 0 : index
    %264 = vector.load %arg6[%c0_220, %c0_221] : memref<512x4xf32, #tpu.memory_space<vmem>>, vector<512x4xf32>
    tpu.vector_store %arg6[%c0_220, %c0_221], %263 {strides = array<i32>} : memref<512x4xf32, #tpu.memory_space<vmem>>, vector<512x4xf32>,
    return
  }
  func.func @transform_0(%arg0: i32, %arg1: i32) -> (i32, i32, i32, i32, i32) {
    %c0_i32 = arith.constant 0 : i32
    %c0_i32_0 = arith.constant 0 : i32
    %c0_i32_1 = arith.constant 0 : i32
    %c0_i32_2 = arith.constant 0 : i32
    %c0_i32_3 = arith.constant 0 : i32
    return %arg0, %c0_i32, %c0_i32_0, %c0_i32_1, %c0_i32_2 : i32, i32, i32, i32, i32
  }
  func.func @transform_1(%arg0: i32, %arg1: i32) -> (i32, i32) {
    %c0_i32 = arith.constant 0 : i32
    %c0_i32_0 = arith.constant 0 : i32
    %c0_i32_1 = arith.constant 0 : i32
    return %c0_i32, %c0_i32_0 : i32, i32
  }
  func.func @transform_2(%arg0: i32, %arg1: i32) -> (i32, i32) {
    %c0_i32 = arith.constant 0 : i32
    %c0_i32_0 = arith.constant 0 : i32
    %c0_i32_1 = arith.constant 0 : i32
    return %c0_i32, %c0_i32_0 : i32, i32
  }
  func.func @transform_3(%arg0: i32, %arg1: i32) -> (i32, i32) {
    %c0_i32 = arith.constant 0 : i32
    %c0_i32_0 = arith.constant 0 : i32
    %c0_i32_1 = arith.constant 0 : i32
    return %c0_i32, %c0_i32_0 : i32, i32
  }
  func.func @transform_4(%arg0: i32, %arg1: i32) -> (i32, i32) {
    %c1_i32 = arith.constant 1 : i32
    %0 = arith.muli %arg0, %c1_i32 : i32
    %1 = arith.addi %0, %arg1 : i32
    %c0_i32 = arith.constant 0 : i32
    %c0_i32_0 = arith.constant 0 : i32
    return %1, %c0_i32 : i32, i32
  }
}

</mosaic_0001>

<llo_original>
// kernel: tile.19
$region0: #{tile.19}
  %s0 = inlined_call_operand.vmem [shape: f32[16,8], index: 0, kind: input, shape index: {}]
  %s1 = inlined_call_operand.vmem [shape: f32[1,128], index: 1, kind: output, shape index: {}]
  $region1: #{tile.19} parent=0
    #allocation0 [shape = 'u8[4096]{0}', space=vmem, size = 0x1000, scoped, tag = 'scoped mem for output reshape']
    %v2 = vld [vmem:[%s0] sm:$0x1]
    %vm3 = vcmask 64512
    %4 = vst.msk [vmem:[#allocation0] sm:$0x1] %vm3, %v2
    %s5 = scalar_lea.vmem %s0, 15
    %v6 = vld [vmem:[%s5] sm:$0x1]
    %7 = vrot.lane.b32.xlu0 %v6, 120
    %v8 = vpop.permute.xlu0 %7
    %vm9 = vcmask 1048512
    %10 = vst.msk [vmem:[#allocation0] sm:$0x1] %vm9, %v8
    %s11 = scalar_lea.vmem %s0, 14
    %v12 = vld [vmem:[%s11] sm:$0x1]
    %13 = vrot.lane.b32.xlu0 %v12, 112
    %v14 = vpop.permute.xlu0 %13
    %vm15 = vcmask 982912
    %16 = vst.msk [vmem:[#allocation0] sm:$0x1] %vm15, %v14
    %s17 = scalar_lea.vmem %s0, 13
    %v18 = vld [vmem:[%s17] sm:$0x1]
    %19 = vrot.lane.b32.xlu0 %v18, 104
    %v20 = vpop.permute.xlu0 %19
    %vm21 = vcmask 917312
    %22 = vst.msk [vmem:[#allocation0] sm:$0x1] %vm21, %v20
    %s23 = scalar_lea.vmem %s0, 12
    %v24 = vld [vmem:[%s23] sm:$0x1]
    %25 = vrot.lane.b32.xlu0 %v24, 96
    %v26 = vpop.permute.xlu0 %25
    %vm27 = vcmask 851712
    %28 = vst.msk [vmem:[#allocation0] sm:$0x1] %vm27, %v26
    %s29 = scalar_lea.vmem %s0, 11
    %v30 = vld [vmem:[%s29] sm:$0x1]
    %31 = vrot.lane.b32.xlu0 %v30, 88
    %v32 = vpop.permute.xlu0 %31
    %vm33 = vcmask 786112
    %34 = vst.msk [vmem:[#allocation0] sm:$0x1] %vm33, %v32
    %s35 = scalar_lea.vmem %s0, 10
    %v36 = vld [vmem:[%s35] sm:$0x1]
    %37 = vrot.lane.b32.xlu0 %v36, 80
    %v38 = vpop.permute.xlu0 %37
    %vm39 = vcmask 720512
    %40 = vst.msk [vmem:[#allocation0] sm:$0x1] %vm39, %v38
    %s41 = scalar_lea.vmem %s0, 9
    %v42 = vld [vmem:[%s41] sm:$0x1]
    %43 = vrot.lane.b32.xlu0 %v42, 72
    %v44 = vpop.permute.xlu0 %43
    %vm45 = vcmask 654912
    %46 = vst.msk [vmem:[#allocation0] sm:$0x1] %vm45, %v44
    %s47 = scalar_lea.vmem %s0, 8
    %v48 = vld [vmem:[%s47] sm:$0x1]
    %49 = vrot.lane.b32.xlu0 %v48, 64
    %v50 = vpop.permute.xlu0 %49
    %vm51 = vcmask 589312
    %52 = vst.msk [vmem:[#allocation0] sm:$0x1] %vm51, %v50
    %s53 = scalar_lea.vmem %s0, 7
    %v54 = vld [vmem:[%s53] sm:$0x1]
    %55 = vrot.lane.b32.xlu0 %v54, 56
    %v56 = vpop.permute.xlu0 %55
    %vm57 = vcmask 523712
    %58 = vst.msk [vmem:[#allocation0] sm:$0x1] %vm57, %v56
    %s59 = scalar_lea.vmem %s0, 6
    %v60 = vld [vmem:[%s59] sm:$0x1]
    %61 = vrot.lane.b32.xlu0 %v60, 48
    %v62 = vpop.permute.xlu0 %61
    %vm63 = vcmask 458112
    %64 = vst.msk [vmem:[#allocation0] sm:$0x1] %vm63, %v62
    %s65 = scalar_lea.vmem %s0, 5
    %v66 = vld [vmem:[%s65] sm:$0x1]
    %67 = vrot.lane.b32.xlu0 %v66, 40
    %v68 = vpop.permute.xlu0 %67
    %vm69 = vcmask 392512
    %70 = vst.msk [vmem:[#allocation0] sm:$0x1] %vm69, %v68
    %s71 = scalar_lea.vmem %s0, 4
    %v72 = vld [vmem:[%s71] sm:$0x1]
    %73 = vrot.lane.b32.xlu0 %v72, 32
    %v74 = vpop.permute.xlu0 %73
    %vm75 = vcmask 326912
    %76 = vst.msk [vmem:[#allocation0] sm:$0x1] %vm75, %v74
    %s77 = scalar_lea.vmem %s0, 3
    %v78 = vld [vmem:[%s77] sm:$0x1]
    %79 = vrot.lane.b32.xlu0 %v78, 24
    %v80 = vpop.permute.xlu0 %79
    %vm81 = vcmask 261312
    %82 = vst.msk [vmem:[#allocation0] sm:$0x1] %vm81, %v80
    %s83 = scalar_lea.vmem %s0, 2
    %v84 = vld [vmem:[%s83] sm:$0x1]
    %85 = vrot.lane.b32.xlu0 %v84, 16
    %v86 = vpop.permute.xlu0 %85
    %vm87 = vcmask 195712
    %88 = vst.msk [vmem:[#allocation0] sm:$0x1] %vm87, %v86
    %s89 = scalar_lea.vmem %s0, 1
    %v90 = vld [vmem:[%s89] sm:$0x1]
    %91 = vrot.lane.b32.xlu0 %v90, 8
    %v92 = vpop.permute.xlu0 %91
    %vm93 = vcmask 130112
    %94 = vst.msk [vmem:[#allocation0] sm:$0x1] %vm93, %v92
    %s96 = sshllo.u32 0, 1
    %v98 = vld [vmem:[#allocation0] sm:%s96]
    %s99 = sshllo.u32 0, 1
    %100 = vst [vmem:[%s1] sm:%s99] %v98

// kernel: tile.18
$region0: #{tile.18}
  #allocation0 [shape = 's32[1]{0}', space=sflag, size = 0x4, scoped, tag = 'scoped memory for tile.18']
  %s0 = inlined_call_operand.vmem [shape: f32[8], index: 0, kind: input, shape index: {}]
  %s1 = inlined_call_operand.vmem [shape: f32[16,8], index: 1, kind: output, shape index: {}]
  // Predicated region
  $region2: #{tile.18} parent=0 // pred_check
    _
  $region3: #{tile.18} parent=0 // pred_check_branch
    %3 = sbr.rel (0) target = $region5
  $region4: #{tile.18} parent=0 // pred_region
    _
  $region5: #{tile.18} parent=0 // pred_fallthru
    _
  %v4 = vld [vmem:[%s0] ss:$0 sm:$0xff]
  %5 = vst [vmem:[%s1] sm:$0xff] %v4
  %s6 = scalar_lea.vmem %s1, 8
  %7 = vst [vmem:[%s6] sm:$0xff] %v4

// kernel: temporal_transition_layer.2
$region0: #{temporal_transition_layer.2}
  #allocation0 [shape = 'u32[]', space=smem, size = 0x4, offset = 0x4, fixed_abs, tag = 'smem constant byte address 0x4 - core index']
  #allocation1 [shape = 'u32[144,128]{1,0:T(1,128)}', space=vmem, size = 0x12000, scoped, tag = 'internal scratch']
  %s0 = inlined_call_operand.vmem [shape: f32[64,128], index: 0, kind: input, shape index: {}]
  %s1 = inlined_call_operand.vmem [shape: f32[1,128], index: 1, kind: input, shape index: {}]
  %s2 = inlined_call_operand.vmem [shape: f32[1,128], index: 2, kind: input, shape index: {}]
  %s3 = inlined_call_operand.vmem [shape: f32[64,128], index: 3, kind: output, shape index: {}]
  %s4 = sld [smem:[#allocation0]]
  $region22: #{temporal_transition_layer.2} parent=0
    _
  %s6 = ssub.s32 1, %s4
  %s7 = scalar_select 0, %s6, %s4
  // Predicated region
  $region2: #{temporal_transition_layer.2} parent=0 // pred_check
    _
  $region3: #{temporal_transition_layer.2} parent=0 // pred_check_branch
    %9 = sbr.rel (0) target = $region5
  $region4: #{temporal_transition_layer.2} parent=0 // pred_region
    _
  $region5: #{temporal_transition_layer.2} parent=0 // pred_fallthru
    _
  // Predicated region
  $region6: #{temporal_transition_layer.2} parent=0 // pred_check
    _
  $region7: #{temporal_transition_layer.2} parent=0 // pred_check_branch
    %11 = sbr.rel (0) target = $region9
  $region8: #{temporal_transition_layer.2} parent=0 // pred_region
    _
  $region9: #{temporal_transition_layer.2} parent=0 // pred_fallthru
    _
  // Predicated region
  $region10: #{temporal_transition_layer.2} parent=0 // pred_check
    _
  $region11: #{temporal_transition_layer.2} parent=0 // pred_check_branch
    %13 = sbr.rel (0) target = $region13
  $region12: #{temporal_transition_layer.2} parent=0 // pred_region
    _
  $region13: #{temporal_transition_layer.2} parent=0 // pred_fallthru
    _
  %v14 = vld [vmem:[%s0] sm:$0xff]
  %v15 = vld [vmem:[%s0 + $0x8] sm:$0xff]
  %v16 = vld [vmem:[%s0 + $0x10] sm:$0xff]
  %v17 = vld [vmem:[%s0 + $0x18] sm:$0xff]
  %v18 = vld [vmem:[%s0 + $0x20] sm:$0xff]
  %v19 = vld [vmem:[%s0 + $0x28] sm:$0xff]
  %v20 = vld [vmem:[%s0 + $0x30] sm:$0xff]
  %v21 = vld [vmem:[%s0 + $0x38] sm:$0xff]
  %v22 = vld [vmem:[%s1] sm:$0x1]
  %v24 = vlaneseq
  %v25 = vshrl.u32 %v24, 7
  %v26 = vsub.s32 0, %v25
  %v27 = vrot.slane %v22, %v26
  %v29 = vmul.f32 %v14, %v27
  %v30 = vmul.f32 %v15, %v27
  %v31 = vmul.f32 %v16, %v27
  %v32 = vmul.f32 %v17, %v27
  %v33 = vmul.f32 %v18, %v27
  %v34 = vmul.f32 %v19, %v27
  %v35 = vmul.f32 %v20, %v27
  %v36 = vmul.f32 %v21, %v27
  %v37 = vld [vmem:[%s2] sm:$0x1]
  %v39 = vlaneseq
  %v40 = vshrl.u32 %v39, 7
  %v41 = vsub.s32 0, %v40
  %v42 = vrot.slane %v37, %v41
  %v44 = vadd.f32 %v29, %v42
  %v45 = vadd.f32 %v30, %v42
  %v46 = vadd.f32 %v31, %v42
  %v47 = vadd.f32 %v32, %v42
  %v48 = vadd.f32 %v33, %v42
  %v49 = vadd.f32 %v34, %v42
  %v50 = vadd.f32 %v35, %v42
  %v51 = vadd.f32 %v36, %v42
  %v52 = vmax.f32 %v44, 0.0
  %v53 = vmax.f32 %v45, 0.0
  %v54 = vmax.f32 %v46, 0.0
  %v55 = vmax.f32 %v47, 0.0
  %v56 = vmax.f32 %v48, 0.0
  %v57 = vmax.f32 %v49, 0.0
  %v58 = vmax.f32 %v50, 0.0
  %v59 = vmax.f32 %v51, 0.0
  %60 = vst [vmem:[%s3] sm:$0xff] %v52
  %61 = vst [vmem:[%s3 + $0x8] sm:$0xff] %v53
  %62 = vst [vmem:[%s3 + $0x10] sm:$0xff] %v54
  %63 = vst [vmem:[%s3 + $0x18] sm:$0xff] %v55
  %64 = vst [vmem:[%s3 + $0x20] sm:$0xff] %v56
  %65 = vst [vmem:[%s3 + $0x28] sm:$0xff] %v57
  %66 = vst [vmem:[%s3 + $0x30] sm:$0xff] %v58
  %67 = vst [vmem:[%s3 + $0x38] sm:$0xff] %v59
  // Predicated region
  $region14: #{temporal_transition_layer.2} parent=0 // pred_check
    _
  $region15: #{temporal_transition_layer.2} parent=0 // pred_check_branch
    %69 = sbr.rel (0) target = $region17
  $region16: #{temporal_transition_layer.2} parent=0 // pred_region
    _
  $region17: #{temporal_transition_layer.2} parent=0 // pred_fallthru
    _
  // Predicated region
  $region18: #{temporal_transition_layer.2} parent=0 // pred_check
    _
  $region19: #{temporal_transition_layer.2} parent=0 // pred_check_branch
    %71 = sbr.rel (0) target = $region21
  $region20: #{temporal_transition_layer.2} parent=0 // pred_region
    _
  $region21: #{temporal_transition_layer.2} parent=0 // pred_fallthru
    _

// kernel: temporal_transition_layer.3
$region0: #{temporal_transition_layer.3}
  #allocation0 [shape = 'u32[]', space=smem, size = 0x4, offset = 0x4, fixed_abs, tag = 'smem constant byte address 0x4 - core index']
  #allocation1 [shape = 'u32[144,128]{1,0:T(1,128)}', space=vmem, size = 0x12000, scoped, tag = 'internal scratch']
  #allocation2 [shape = 'bf16[512,288]{1,0:T(16,128)(2,1)}', space=vmem, size = 0x60000, scoped, tag = 'scratch operand']
  %s0 = inlined_call_operand.vmem [shape: f32[2,11,10,10,8], index: 0, kind: input, shape index: {}]
  %s1 = inlined_call_operand.vmem [shape: bf16[288,36], index: 1, kind: input, shape index: {}]
  %s2 = inlined_call_operand.vmem [shape: f32[1,36], index: 2, kind: input, shape index: {}]
  %s3 = inlined_call_operand.vmem [shape: bf16[36,4], index: 3, kind: input, shape index: {}]
  %s4 = inlined_call_operand.vmem [shape: f32[1024,4], index: 4, kind: output, shape index: {}]
  %s5 = sld [smem:[#allocation0]]
  $region49: #{temporal_transition_layer.3} parent=0
    _
  %s7 = ssub.s32 1, %s5
  %s8 = scalar_select 0, %s7, %s5
  loop: start=0, step=1, limit=4
  $region2: #{temporal_transition_layer.3} parent=0 // loop_pre_header
    _
  $region3: #{temporal_transition_layer.3} parent=0 // loop_header
    %s10 = sphi 0, %s14
    %p11 = scmp.ge.s32.totalorder %s10, 4
    %s17 = sphi 0, %s29
    %s18 = sphi 0, %s25
    %s19 = sphi 0, %s17
    %s20 = sphi 0, %s18
    %s21 = sphi 0, %s19
    %s22 = sphi 0, %s20
    %s32 = sphi 0, %s34
    %s35 = sphi 0, %s32
    %s36 = sphi 0, %s35
    %s52 = sphi 0, %s36
    %s56 = sphi 0, %s56
    %s58 = sphi 0, %s56
    %s59 = sphi 0, %s58
    %s73 = sphi 0, %s59
    %s77 = sphi 0, %s77
    %s79 = sphi 0, %s77
    %s80 = sphi 0, %s79
    %s94 = sphi 0, %s80
    %s98 = sphi 0, %s98
    %s100 = sphi 0, %s98
    %s101 = sphi 0, %s100
    %s115 = sphi 0, %s101
    %s123 = sphi 0, %s125
    %s126 = sphi 0, %s123
    %s127 = sphi 0, %s126
    %s143 = sphi 0, %s127
  $region4: #{temporal_transition_layer.3} parent=0 // loop_header_branch
    %13 = sbr.rel (%p11) target = $region8
  $region5: #{temporal_transition_layer.3} parent=0 // loop_body
    %s15 = ssub.s32 %s10, 1
    %s16 = ssub.s32 %s10, 2
    %s23 = sadd.s32 1, %s18
    %p24 = scmp.ge.s32.totalorder %s23, 1
    %s25 = scalar_select %p24, 0, %s23
    %s26 = sadd.s32 1, %s17
    %s27 = scalar_select %p24, %s26, %s17
    %p28 = scmp.ge.s32.totalorder %s27, 2
    %s29 = scalar_select %p28, 0, %s27
    %s30 = ssub.s32 %s17, %s29
    %p31 = scmp.eq.s32.totalorder %s30, 0
    %s33 = sadd.s32 %s32, 1
    %s34 = scalar_select %p31, %s32, %s33
    %p37 = pneg %p31
    %p38 = scmp.eq.s32.totalorder %s10, 1
    %p39 = por %p37, %p38
    %p40 = scmp.ne.s32.totalorder %s32, %s35
    %p41 = scmp.eq.s32.totalorder %s10, 0
    %p42 = por %p40, %p41
    %p43 = scmp.ne.s32.totalorder %s32, %s35
    %p44 = scmp.eq.s32.totalorder %s15, 1
    %p45 = por %p43, %p44
    %p46 = scmp.ne.s32.totalorder %s35, %s36
    %p47 = scmp.eq.s32.totalorder %s15, 0
    %p48 = por %p46, %p47
    %p49 = scmp.ne.s32.totalorder %s35, %s36
    %p50 = scmp.eq.s32.totalorder %s16, 1
    %p51 = por %p49, %p50
    %p53 = scmp.ne.s32.totalorder %s36, %s52
    %p54 = scmp.eq.s32.totalorder %s16, 0
    %p55 = por %p53, %p54
    %s57 = sadd.s32 %s56, 1
    %p60 = scmp.eq.s32.totalorder %s10, 1
    %p61 = scmp.ne.s32.totalorder %s56, %s58
    %p62 = scmp.eq.s32.totalorder %s10, 0
    %p63 = por %p61, %p62
    %p64 = scmp.ne.s32.totalorder %s56, %s58
    %p65 = scmp.eq.s32.totalorder %s15, 1
    %p66 = por %p64, %p65
    %p67 = scmp.ne.s32.totalorder %s58, %s59
    %p68 = scmp.eq.s32.totalorder %s15, 0
    %p69 = por %p67, %p68
    %p70 = scmp.ne.s32.totalorder %s58, %s59
    %p71 = scmp.eq.s32.totalorder %s16, 1
    %p72 = por %p70, %p71
    %p74 = scmp.ne.s32.totalorder %s59, %s73
    %p75 = scmp.eq.s32.totalorder %s16, 0
    %p76 = por %p74, %p75
    %s78 = sadd.s32 %s77, 1
    %p81 = scmp.eq.s32.totalorder %s10, 1
    %p82 = scmp.ne.s32.totalorder %s77, %s79
    %p83 = scmp.eq.s32.totalorder %s10, 0
    %p84 = por %p82, %p83
    %p85 = scmp.ne.s32.totalorder %s77, %s79
    %p86 = scmp.eq.s32.totalorder %s15, 1
    %p87 = por %p85, %p86
    %p88 = scmp.ne.s32.totalorder %s79, %s80
    %p89 = scmp.eq.s32.totalorder %s15, 0
    %p90 = por %p88, %p89
    %p91 = scmp.ne.s32.totalorder %s79, %s80
    %p92 = scmp.eq.s32.totalorder %s16, 1
    %p93 = por %p91, %p92
    %p95 = scmp.ne.s32.totalorder %s80, %s94
    %p96 = scmp.eq.s32.totalorder %s16, 0
    %p97 = por %p95, %p96
    %s99 = sadd.s32 %s98, 1
    %p102 = scmp.eq.s32.totalorder %s10, 1
    %p103 = scmp.ne.s32.totalorder %s98, %s100
    %p104 = scmp.eq.s32.totalorder %s10, 0
    %p105 = por %p103, %p104
    %p106 = scmp.ne.s32.totalorder %s98, %s100
    %p107 = scmp.eq.s32.totalorder %s15, 1
    %p108 = por %p106, %p107
    %p109 = scmp.ne.s32.totalorder %s100, %s101
    %p110 = scmp.eq.s32.totalorder %s15, 0
    %p111 = por %p109, %p110
    %p112 = scmp.ne.s32.totalorder %s100, %s101
    %p113 = scmp.eq.s32.totalorder %s16, 1
    %p114 = por %p112, %p113
    %p116 = scmp.ne.s32.totalorder %s101, %s115
    %p117 = scmp.eq.s32.totalorder %s16, 0
    %p118 = por %p116, %p117
    %s119 = sadd.s32 %s17, %s18
    %s120 = sadd.s32 %s29, %s25
    %s121 = ssub.s32 %s119, %s120
    %p122 = scmp.eq.s32.totalorder %s121, 0
    %s124 = sadd.s32 %s123, 1
    %s125 = scalar_select %p122, %s123, %s124
    %p128 = pneg %p122
    %p129 = scmp.eq.s32.totalorder %s10, 1
    %p130 = por %p128, %p129
    %p131 = scmp.ne.s32.totalorder %s123, %s126
    %p132 = scmp.eq.s32.totalorder %s10, 0
    %p133 = por %p131, %p132
    %p134 = scmp.ne.s32.totalorder %s123, %s126
    %p135 = scmp.eq.s32.totalorder %s15, 1
    %p136 = por %p134, %p135
    %p137 = scmp.ne.s32.totalorder %s126, %s127
    %p138 = scmp.eq.s32.totalorder %s15, 0
    %p139 = por %p137, %p138
    %p140 = scmp.ne.s32.totalorder %s126, %s127
    %p141 = scmp.eq.s32.totalorder %s16, 1
    %p142 = por %p140, %p141
    %p144 = scmp.ne.s32.totalorder %s127, %s143
    %p145 = scmp.eq.s32.totalorder %s16, 0
    %p146 = por %p144, %p145
    %p147 = scmp.le.s32.totalorder 1, %s10
    %p148 = scmp.lt.s32.totalorder %s10, 3
    %p149 = pnand %p147, %p148
    %p150 = pneg %p149
    // Predicated region
    $region9: #{temporal_transition_layer.3} parent=5 // pred_check
      _
    $region10: #{temporal_transition_layer.3} parent=5 // pred_check_branch
      %152 = sbr.rel (%p149) target = $region12
    $region11: #{temporal_transition_layer.3} parent=5 // pred_region
      %s153 = ssub.s32 %s10, 1
      // Predicated region
      $region13: #{temporal_transition_layer.3} parent=11 // pred_check
        %p154 = pneg %p69
      $region14: #{temporal_transition_layer.3} parent=11 // pred_check_branch
        %156 = sbr.rel (%p154) target = $region16
      $region15: #{temporal_transition_layer.3} parent=11 // pred_region
        _
      $region16: #{temporal_transition_layer.3} parent=11 // pred_fallthru
        _
      // Predicated region
      $region17: #{temporal_transition_layer.3} parent=11 // pred_check
        %p157 = pneg %p90
      $region18: #{temporal_transition_layer.3} parent=11 // pred_check_branch
        %159 = sbr.rel (%p157) target = $region20
      $region19: #{temporal_transition_layer.3} parent=11 // pred_region
        _
      $region20: #{temporal_transition_layer.3} parent=11 // pred_fallthru
        _
      // Predicated region
      $region21: #{temporal_transition_layer.3} parent=11 // pred_check
        %p160 = pneg %p111
      $region22: #{temporal_transition_layer.3} parent=11 // pred_check_branch
        %162 = sbr.rel (%p160) target = $region24
      $region23: #{temporal_transition_layer.3} parent=11 // pred_region
        _
      $region24: #{temporal_transition_layer.3} parent=11 // pred_fallthru
        _
    $region12: #{temporal_transition_layer.3} parent=5 // pred_fallthru
      _
    %p163 = scmp.lt.s32.totalorder %s10, 2
    // Predicated region
    $region25: #{temporal_transition_layer.3} parent=5 // pred_check
      %p164 = pneg %p163
    $region26: #{temporal_transition_layer.3} parent=5 // pred_check_branch
      %166 = sbr.rel (%p164) target = $region28
    $region27: #{temporal_transition_layer.3} parent=5 // pred_region
      // Predicated region
      $region29: #{temporal_transition_layer.3} parent=27 // pred_check
        %p167 = pneg %p42
      $region30: #{temporal_transition_layer.3} parent=27 // pred_check_branch
        %169 = sbr.rel (%p167) target = $region32
      $region31: #{temporal_transition_layer.3} parent=27 // pred_region
        %p170 = scmp.lt.s32.totalorder %s17, 1
        %s171 = scalar_select %p170, %s17, 1
        %s172 = smul.addr %s171, 220
        %s173 = smul.addr %s172, 8
        %s174 = scalar_lea.vmem %s0, %s173
      $region32: #{temporal_transition_layer.3} parent=27 // pred_fallthru
        _
    $region28: #{temporal_transition_layer.3} parent=5 // pred_fallthru
      _
    %p175 = scmp.le.s32.totalorder 1, %s10
    %p176 = scmp.lt.s32.totalorder %s10, 3
    %p177 = pnand %p175, %p176
    %p178 = pneg %p177
    // Predicated region
    $region33: #{temporal_transition_layer.3} parent=5 // pred_check
      _
    $region34: #{temporal_transition_layer.3} parent=5 // pred_check_branch
      %180 = sbr.rel (%p177) target = $region36
    $region35: #{temporal_transition_layer.3} parent=5 // pred_region
      %s181 = ssub.s32 %s10, 1
      %p182 = scmp.lt.s32.totalorder %s19, 1
      %s183 = scalar_select %p182, %s19, 1
      %s184 = smul.addr %s183, 220
      %s185 = smul.addr %s184, 8
      %s186 = scalar_lea.vmem %s0, %s185
      %p187 = pneg %p48
      %p188 = pneg %p45
      %p189 = pneg %p69
      %p190 = pneg %p66
      %p191 = pneg %p90
      %p192 = pneg %p87
      %p193 = pneg %p111
      %p194 = pneg %p108
      %p195 = pneg %p139
      %p196 = pneg %p136
      %s197 = sadd.s32 %s19, %s20
      %s198 = smul.u32 64, %s197
      %p199 = scmp.lt.s32.totalorder %s198, 127
      %s200 = scalar_select %p199, %s198, 127
      %s201 = smul.addr %s200, 8
      %s202 = scalar_lea.vmem %s4, %s201
      %p203 = scmp.lt.s32.totalorder %s19, 1
      %s204 = scalar_select %p203, %s19, 1
      %s205 = smul.addr %s204, 220
      %s206 = smul.addr %s205, 8
      %s207 = scalar_lea.vmem %s0, %s206
      %s208 = sadd.s32 %s19, %s20
      %s209 = smul.u32 64, %s208
      %p210 = scmp.lt.s32.totalorder %s209, 127
      %s211 = scalar_select %p210, %s209, 127
      %s212 = smul.addr %s211, 8
      %s213 = scalar_lea.vmem %s4, %s212
      %s214 = sadd.s32 %s19, %s20
      %s215 = smul.u32 64, %s214
      %s217 = smul.u32 %s20, 8
      %s218 = smul.u32 %s217, 160
      %s219 = scalar_lea.vmem %s207, %s218
      %v220 = vld [vmem:[%s219] sm:$0xff]
      %v221 = vld [vmem:[%s219 + $0x10] sm:$0xff]
      %v222 = vld [vmem:[%s219 + $0x20] sm:$0xff]
      %v223 = vld [vmem:[%s219 + $0x30] sm:$0xff]
      %v224 = vld [vmem:[%s219 + $0x40] sm:$0xff]
      %v225 = vld [vmem:[%s219 + $0x50] sm:$0xff]
      %v226 = vld [vmem:[%s219 + $0x60] sm:$0xff]
      %v227 = vld [vmem:[%s219 + $0x70] sm:$0xff]
      %v228 = vld [vmem:[%s219 + $0xa0] sm:$0xff]
      %v229 = vld [vmem:[%s219 + $0xb0] sm:$0xff]
      %v230 = vld [vmem:[%s219 + $0xc0] sm:$0xff]
      %v231 = vld [vmem:[%s219 + $0xd0] sm:$0xff]
      %v232 = vld [vmem:[%s219 + $0xe0] sm:$0xff]
      %v233 = vld [vmem:[%s219 + $0xf0] sm:$0xff]
      %v234 = vld [vmem:[%s219 + $0x100] sm:$0xff]
      %v235 = vld [vmem:[%s219 + $0x110] sm:$0xff]
      %v236 = vld [vmem:[%s219 + $0x140] sm:$0xff]
      %v237 = vld [vmem:[%s219 + $0x150] sm:$0xff]
      %v238 = vld [vmem:[%s219 + $0x160] sm:$0xff]
      %v239 = vld [vmem:[%s219 + $0x170] sm:$0xff]
      %v240 = vld [vmem:[%s219 + $0x180] sm:$0xff]
      %v241 = vld [vmem:[%s219 + $0x190] sm:$0xff]
      %v242 = vld [vmem:[%s219 + $0x1a0] sm:$0xff]
      %v243 = vld [vmem:[%s219 + $0x1b0] sm:$0xff]
      %v244 = vld [vmem:[%s219 + $0x1e0] sm:$0xff]
      %v245 = vld [vmem:[%s219 + $0x1f0] sm:$0xff]
      %v246 = vld [vmem:[%s219 + $0x200] sm:$0xff]
      %v247 = vld [vmem:[%s219 + $0x210] sm:$0xff]
      %v248 = vld [vmem:[%s219 + $0x220] sm:$0xff]
      %v249 = vld [vmem:[%s219 + $0x230] sm:$0xff]
      %v250 = vld [vmem:[%s219 + $0x240] sm:$0xff]
      %v251 = vld [vmem:[%s219 + $0x250] sm:$0xff]
      %v252 = vld [vmem:[%s219 + $0x280] sm:$0xff]
      %v253 = vld [vmem:[%s219 + $0x290] sm:$0xff]
      %v254 = vld [vmem:[%s219 + $0x2a0] sm:$0xff]
      %v255 = vld [vmem:[%s219 + $0x2b0] sm:$0xff]
      %v256 = vld [vmem:[%s219 + $0x2c0] sm:$0xff]
      %v257 = vld [vmem:[%s219 + $0x2d0] sm:$0xff]
      %v258 = vld [vmem:[%s219 + $0x2e0] sm:$0xff]
      %v259 = vld [vmem:[%s219 + $0x2f0] sm:$0xff]
      %v260 = vld [vmem:[%s219 + $0x320] sm:$0xff]
      %v261 = vld [vmem:[%s219 + $0x330] sm:$0xff]
      %v262 = vld [vmem:[%s219 + $0x340] sm:$0xff]
      %v263 = vld [vmem:[%s219 + $0x350] sm:$0xff]
      %v264 = vld [vmem:[%s219 + $0x360] sm:$0xff]
      %v265 = vld [vmem:[%s219 + $0x370] sm:$0xff]
      %v266 = vld [vmem:[%s219 + $0x380] sm:$0xff]
      %v267 = vld [vmem:[%s219 + $0x390] sm:$0xff]
      %v268 = vld [vmem:[%s219 + $0x3c0] sm:$0xff]
      %v269 = vld [vmem:[%s219 + $0x3d0] sm:$0xff]
      %v270 = vld [vmem:[%s219 + $0x3e0] sm:$0xff]
      %v271 = vld [vmem:[%s219 + $0x3f0] sm:$0xff]
      %v272 = vld [vmem:[%s219 + $0x400] sm:$0xff]
      %v273 = vld [vmem:[%s219 + $0x410] sm:$0xff]
      %v274 = vld [vmem:[%s219 + $0x420] sm:$0xff]
      %v275 = vld [vmem:[%s219 + $0x430] sm:$0xff]
      %v276 = vld [vmem:[%s219 + $0x460] sm:$0xff]
      %v277 = vld [vmem:[%s219 + $0x470] sm:$0xff]
      %v278 = vld [vmem:[%s219 + $0x480] sm:$0xff]
      %v279 = vld [vmem:[%s219 + $0x490] sm:$0xff]
      %v280 = vld [vmem:[%s219 + $0x4a0] sm:$0xff]
      %v281 = vld [vmem:[%s219 + $0x4b0] sm:$0xff]
      %v282 = vld [vmem:[%s219 + $0x4c0] sm:$0xff]
      %v283 = vld [vmem:[%s219 + $0x4d0] sm:$0xff]
      %v284 = vpack.c.bf16 %v221, %v220
      %v285 = vpack.c.bf16 %v223, %v222
      %v286 = vpack.c.bf16 %v225, %v224
      %v287 = vpack.c.bf16 %v227, %v226
      %v288 = vpack.c.bf16 %v229, %v228
      %v289 = vpack.c.bf16 %v231, %v230
      %v290 = vpack.c.bf16 %v233, %v232
      %v291 = vpack.c.bf16 %v235, %v234
      %v292 = vpack.c.bf16 %v237, %v236
      %v293 = vpack.c.bf16 %v239, %v238
      %v294 = vpack.c.bf16 %v241, %v240
      %v295 = vpack.c.bf16 %v243, %v242
      %v296 = vpack.c.bf16 %v245, %v244
      %v297 = vpack.c.bf16 %v247, %v246
      %v298 = vpack.c.bf16 %v249, %v248
      %v299 = vpack.c.bf16 %v251, %v250
      %v300 = vpack.c.bf16 %v253, %v252
      %v301 = vpack.c.bf16 %v255, %v254
      %v302 = vpack.c.bf16 %v257, %v256
      %v303 = vpack.c.bf16 %v259, %v258
      %v304 = vpack.c.bf16 %v261, %v260
      %v305 = vpack.c.bf16 %v263, %v262
      %v306 = vpack.c.bf16 %v265, %v264
      %v307 = vpack.c.bf16 %v267, %v266
      %v308 = vpack.c.bf16 %v269, %v268
      %v309 = vpack.c.bf16 %v271, %v270
      %v310 = vpack.c.bf16 %v273, %v272
      %v311 = vpack.c.bf16 %v275, %v274
      %v312 = vpack.c.bf16 %v277, %v276
      %v313 = vpack.c.bf16 %v279, %v278
      %v314 = vpack.c.bf16 %v281, %v280
      %v315 = vpack.c.bf16 %v283, %v282
      %vm316 = vcmask 64512
      %317 = vst.msk [vmem:[#allocation2] sm:$0xff] %vm316, %v284
      %318 = vst.msk [vmem:[#allocation2 + $0x18] sm:$0xff] %vm316, %v285
      %319 = vst.msk [vmem:[#allocation2 + $0x30] sm:$0xff] %vm316, %v286
      %320 = vst.msk [vmem:[#allocation2 + $0x48] sm:$0xff] %vm316, %v287
      %321 = vst.msk [vmem:[#allocation2 + $0x60] sm:$0xff] %vm316, %v288
      %322 = vst.msk [vmem:[#allocation2 + $0x78] sm:$0xff] %vm316, %v289
      %323 = vst.msk [vmem:[#allocation2 + $0x90] sm:$0xff] %vm316, %v290
      %324 = vst.msk [vmem:[#allocation2 + $0xa8] sm:$0xff] %vm316, %v291
      %325 = vst.msk [vmem:[#allocation2 + $0xc0] sm:$0xff] %vm316, %v292
      %326 = vst.msk [vmem:[#allocation2 + $0xd8] sm:$0xff] %vm316, %v293
      %327 = vst.msk [vmem:[#allocation2 + $0xf0] sm:$0xff] %vm316, %v294
      %328 = vst.msk [vmem:[#allocation2 + $0x108] sm:$0xff] %vm316, %v295
      %329 = vst.msk [vmem:[#allocation2 + $0x120] sm:$0xff] %vm316, %v296
      %330 = vst.msk [vmem:[#allocation2 + $0x138] sm:$0xff] %vm316, %v297
      %331 = vst.msk [vmem:[#allocation2 + $0x150] sm:$0xff] %vm316, %v298
      %332 = vst.msk [vmem:[#allocation2 + $0x168] sm:$0xff] %vm316, %v299
      %333 = vst.msk [vmem:[#allocation2 + $0x180] sm:$0xff] %vm316, %v300
      %334 = vst.msk [vmem:[#allocation2 + $0x198] sm:$0xff] %vm316, %v301
      %335 = vst.msk [vmem:[#allocation2 + $0x1b0] sm:$0xff] %vm316, %v302
      %336 = vst.msk [vmem:[#allocation2 + $0x1c8] sm:$0xff] %vm316, %v303
      %337 = vst.msk [vmem:[#allocation2 + $0x1e0] sm:$0xff] %vm316, %v304
      %338 = vst.msk [vmem:[#allocation2 + $0x1f8] sm:$0xff] %vm316, %v305
      %339 = vst.msk [vmem:[#allocation2 + $0x210] sm:$0xff] %vm316, %v306
      %340 = vst.msk [vmem:[#allocation2 + $0x228] sm:$0xff] %vm316, %v307
      %341 = vst.msk [vmem:[#allocation2 + $0x240] sm:$0xff] %vm316, %v308
      %342 = vst.msk [vmem:[#allocation2 + $0x258] sm:$0xff] %vm316, %v309
      %343 = vst.msk [vmem:[#allocation2 + $0x270] sm:$0xff] %vm316, %v310
      %344 = vst.msk [vmem:[#allocation2 + $0x288] sm:$0xff] %vm316, %v311
      %345 = vst.msk [vmem:[#allocation2 + $0x2a0] sm:$0xff] %vm316, %v312
      %346 = vst.msk [vmem:[#allocation2 + $0x2b8] sm:$0xff] %vm316, %v313
      %347 = vst.msk [vmem:[#allocation2 + $0x2d0] sm:$0xff] %vm316, %v314
      %348 = vst.msk [vmem:[#allocation2 + $0x2e8] sm:$0xff] %vm316, %v315
      %v349 = vld [vmem:[%s219 + $0x1] sm:$0xff]
      %v350 = vld [vmem:[%s219 + $0x11] sm:$0xff]
      %v351 = vld [vmem:[%s219 + $0x21] sm:$0xff]
      %v352 = vld [vmem:[%s219 + $0x31] sm:$0xff]
      %v353 = vld [vmem:[%s219 + $0x41] sm:$0xff]
      %v354 = vld [vmem:[%s219 + $0x51] sm:$0xff]
      %v355 = vld [vmem:[%s219 + $0x61] sm:$0xff]
      %v356 = vld [vmem:[%s219 + $0x71] sm:$0xff]
      %v357 = vld [vmem:[%s219 + $0xa1] sm:$0xff]
      %v358 = vld [vmem:[%s219 + $0xb1] sm:$0xff]
      %v359 = vld [vmem:[%s219 + $0xc1] sm:$0xff]
      %v360 = vld [vmem:[%s219 + $0xd1] sm:$0xff]
      %v361 = vld [vmem:[%s219 + $0xe1] sm:$0xff]
      %v362 = vld [vmem:[%s219 + $0xf1] sm:$0xff]
      %v363 = vld [vmem:[%s219 + $0x101] sm:$0xff]
      %v364 = vld [vmem:[%s219 + $0x111] sm:$0xff]
      %v365 = vld [vmem:[%s219 + $0x141] sm:$0xff]
      %v366 = vld [vmem:[%s219 + $0x151] sm:$0xff]
      %v367 = vld [vmem:[%s219 + $0x161] sm:$0xff]
      %v368 = vld [vmem:[%s219 + $0x171] sm:$0xff]
      %v369 = vld [vmem:[%s219 + $0x181] sm:$0xff]
      %v370 = vld [vmem:[%s219 + $0x191] sm:$0xff]
      %v371 = vld [vmem:[%s219 + $0x1a1] sm:$0xff]
      %v372 = vld [vmem:[%s219 + $0x1b1] sm:$0xff]
      %v373 = vld [vmem:[%s219 + $0x1e1] sm:$0xff]
      %v374 = vld [vmem:[%s219 + $0x1f1] sm:$0xff]
      %v375 = vld [vmem:[%s219 + $0x201] sm:$0xff]
      %v376 = vld [vmem:[%s219 + $0x211] sm:$0xff]
      %v377 = vld [vmem:[%s219 + $0x221] sm:$0xff]
      %v378 = vld [vmem:[%s219 + $0x231] sm:$0xff]
      %v379 = vld [vmem:[%s219 + $0x241] sm:$0xff]
      %v380 = vld [vmem:[%s219 + $0x251] sm:$0xff]
      %v381 = vld [vmem:[%s219 + $0x281] sm:$0xff]
      %v382 = vld [vmem:[%s219 + $0x291] sm:$0xff]
      %v383 = vld [vmem:[%s219 + $0x2a1] sm:$0xff]
      %v384 = vld [vmem:[%s219 + $0x2b1] sm:$0xff]
      %v385 = vld [vmem:[%s219 + $0x2c1] sm:$0xff]
      %v386 = vld [vmem:[%s219 + $0x2d1] sm:$0xff]
      %v387 = vld [vmem:[%s219 + $0x2e1] sm:$0xff]
      %v388 = vld [vmem:[%s219 + $0x2f1] sm:$0xff]
      %v389 = vld [vmem:[%s219 + $0x321] sm:$0xff]
      %v390 = vld [vmem:[%s219 + $0x331] sm:$0xff]
      %v391 = vld [vmem:[%s219 + $0x341] sm:$0xff]
      %v392 = vld [vmem:[%s219 + $0x351] sm:$0xff]
      %v393 = vld [vmem:[%s219 + $0x361] sm:$0xff]
      %v394 = vld [vmem:[%s219 + $0x371] sm:$0xff]
      %v395 = vld [vmem:[%s219 + $0x381] sm:$0xff]
      %v396 = vld [vmem:[%s219 + $0x391] sm:$0xff]
      %v397 = vld [vmem:[%s219 + $0x3c1] sm:$0xff]
      %v398 = vld [vmem:[%s219 + $0x3d1] sm:$0xff]
      %v399 = vld [vmem:[%s219 + $0x3e1] sm:$0xff]
      %v400 = vld [vmem:[%s219 + $0x3f1] sm:$0xff]
      %v401 = vld [vmem:[%s219 + $0x401] sm:$0xff]
      %v402 = vld [vmem:[%s219 + $0x411] sm:$0xff]
      %v403 = vld [vmem:[%s219 + $0x421] sm:$0xff]
      %v404 = vld [vmem:[%s219 + $0x431] sm:$0xff]
      %v405 = vld [vmem:[%s219 + $0x461] sm:$0xff]
      %v406 = vld [vmem:[%s219 + $0x471] sm:$0xff]
      %v407 = vld [vmem:[%s219 + $0x481] sm:$0xff]
      %v408 = vld [vmem:[%s219 + $0x491] sm:$0xff]
      %v409 = vld [vmem:[%s219 + $0x4a1] sm:$0xff]
      %v410 = vld [vmem:[%s219 + $0x4b1] sm:$0xff]
      %v411 = vld [vmem:[%s219 + $0x4c1] sm:$0xff]
      %v412 = vld [vmem:[%s219 + $0x4d1] sm:$0xff]
      %v413 = vpack.c.bf16 %v350, %v349
      %v414 = vpack.c.bf16 %v352, %v351
      %v415 = vpack.c.bf16 %v354, %v353
      %v416 = vpack.c.bf16 %v356, %v355
      %v417 = vpack.c.bf16 %v358, %v357
      %v418 = vpack.c.bf16 %v360, %v359
      %v419 = vpack.c.bf16 %v362, %v361
      %v420 = vpack.c.bf16 %v364, %v363
      %v421 = vpack.c.bf16 %v366, %v365
      %v422 = vpack.c.bf16 %v368, %v367
      %v423 = vpack.c.bf16 %v370, %v369
      %v424 = vpack.c.bf16 %v372, %v371
      %v425 = vpack.c.bf16 %v374, %v373
      %v426 = vpack.c.bf16 %v376, %v375
      %v427 = vpack.c.bf16 %v378, %v377
      %v428 = vpack.c.bf16 %v380, %v379
      %v429 = vpack.c.bf16 %v382, %v381
      %v430 = vpack.c.bf16 %v384, %v383
      %v431 = vpack.c.bf16 %v386, %v385
      %v432 = vpack.c.bf16 %v388, %v387
      %v433 = vpack.c.bf16 %v390, %v389
      %v434 = vpack.c.bf16 %v392, %v391
      %v435 = vpack.c.bf16 %v394, %v393
      %v436 = vpack.c.bf16 %v396, %v395
      %v437 = vpack.c.bf16 %v398, %v397
      %v438 = vpack.c.bf16 %v400, %v399
      %v439 = vpack.c.bf16 %v402, %v401
      %v440 = vpack.c.bf16 %v404, %v403
      %v441 = vpack.c.bf16 %v406, %v405
      %v442 = vpack.c.bf16 %v408, %v407
      %v443 = vpack.c.bf16 %v410, %v409
      %v444 = vpack.c.bf16 %v412, %v411
      %477 = vrot.lane.b32.xlu0 %v413, 8
      %v478 = vpop.permute.xlu0 %477
      %479 = vrot.lane.b32.xlu0 %v414, 8
      %v480 = vpop.permute.xlu0 %479
      %481 = vrot.lane.b32.xlu0 %v415, 8
      %v482 = vpop.permute.xlu0 %481
      %483 = vrot.lane.b32.xlu0 %v416, 8
      %v484 = vpop.permute.xlu0 %483
      %485 = vrot.lane.b32.xlu0 %v417, 8
      %v486 = vpop.permute.xlu0 %485
      %487 = vrot.lane.b32.xlu0 %v418, 8
      %v488 = vpop.permute.xlu0 %487
      %489 = vrot.lane.b32.xlu0 %v419, 8
      %v490 = vpop.permute.xlu0 %489
      %491 = vrot.lane.b32.xlu0 %v420, 8
      %v492 = vpop.permute.xlu0 %491
      %493 = vrot.lane.b32.xlu0 %v421, 8
      %v494 = vpop.permute.xlu0 %493
      %495 = vrot.lane.b32.xlu0 %v422, 8
      %v496 = vpop.permute.xlu0 %495
      %497 = vrot.lane.b32.xlu0 %v423, 8
      %v498 = vpop.permute.xlu0 %497
      %499 = vrot.lane.b32.xlu0 %v424, 8
      %v500 = vpop.permute.xlu0 %499
      %501 = vrot.lane.b32.xlu0 %v425, 8
      %v502 = vpop.permute.xlu0 %501
      %503 = vrot.lane.b32.xlu0 %v426, 8
      %v504 = vpop.permute.xlu0 %503
      %505 = vrot.lane.b32.xlu0 %v427, 8
      %v506 = vpop.permute.xlu0 %505
      %507 = vrot.lane.b32.xlu0 %v428, 8
      %v508 = vpop.permute.xlu0 %507
      %509 = vrot.lane.b32.xlu0 %v429, 8
      %v510 = vpop.permute.xlu0 %509
      %511 = vrot.lane.b32.xlu0 %v430, 8
      %v512 = vpop.permute.xlu0 %511
      %513 = vrot.lane.b32.xlu0 %v431, 8
      %v514 = vpop.permute.xlu0 %513
      %515 = vrot.lane.b32.xlu0 %v432, 8
      %v516 = vpop.permute.xlu0 %515
      %517 = vrot.lane.b32.xlu0 %v433, 8
      %v518 = vpop.permute.xlu0 %517
      %519 = vrot.lane.b32.xlu0 %v434, 8
      %v520 = vpop.permute.xlu0 %519
      %521 = vrot.lane.b32.xlu0 %v435, 8
      %v522 = vpop.permute.xlu0 %521
      %523 = vrot.lane.b32.xlu0 %v436, 8
      %v524 = vpop.permute.xlu0 %523
      %525 = vrot.lane.b32.xlu0 %v437, 8
      %v526 = vpop.permute.xlu0 %525
      %527 = vrot.lane.b32.xlu0 %v438, 8
      %v528 = vpop.permute.xlu0 %527
      %529 = vrot.lane.b32.xlu0 %v439, 8
      %v530 = vpop.permute.xlu0 %529
      %531 = vrot.lane.b32.xlu0 %v440, 8
      %v532 = vpop.permute.xlu0 %531
      %533 = vrot.lane.b32.xlu0 %v441, 8
      %v534 = vpop.permute.xlu0 %533
      %535 = vrot.lane.b32.xlu0 %v442, 8
      %v536 = vpop.permute.xlu0 %535
      %537 = vrot.lane.b32.xlu0 %v443, 8
      %v538 = vpop.permute.xlu0 %537
      %539 = vrot.lane.b32.xlu0 %v444, 8
      %v540 = vpop.permute.xlu0 %539
      %vm573 = vcmask 130112
      %574 = vst.msk [vmem:[#allocation2] sm:$0xff] %vm573, %v478
      %575 = vst.msk [vmem:[#allocation2 + $0x18] sm:$0xff] %vm573, %v480
      %576 = vst.msk [vmem:[#allocation2 + $0x30] sm:$0xff] %vm573, %v482
      %577 = vst.msk [vmem:[#allocation2 + $0x48] sm:$0xff] %vm573, %v484
      %578 = vst.msk [vmem:[#allocation2 + $0x60] sm:$0xff] %vm573, %v486
      %579 = vst.msk [vmem:[#allocation2 + $0x78] sm:$0xff] %vm573, %v488
      %580 = vst.msk [vmem:[#allocation2 + $0x90] sm:$0xff] %vm573, %v490
      %581 = vst.msk [vmem:[#allocation2 + $0xa8] sm:$0xff] %vm573, %v492
      %582 = vst.msk [vmem:[#allocation2 + $0xc0] sm:$0xff] %vm573, %v494
      %583 = vst.msk [vmem:[#allocation2 + $0xd8] sm:$0xff] %vm573, %v496
      %584 = vst.msk [vmem:[#allocation2 + $0xf0] sm:$0xff] %vm573, %v498
      %585 = vst.msk [vmem:[#allocation2 + $0x108] sm:$0xff] %vm573, %v500
      %586 = vst.msk [vmem:[#allocation2 + $0x120] sm:$0xff] %vm573, %v502
      %587 = vst.msk [vmem:[#allocation2 + $0x138] sm:$0xff] %vm573, %v504
      %588 = vst.msk [vmem:[#allocation2 + $0x150] sm:$0xff] %vm573, %v506
      %589 = vst.msk [vmem:[#allocation2 + $0x168] sm:$0xff] %vm573, %v508
      %590 = vst.msk [vmem:[#allocation2 + $0x180] sm:$0xff] %vm573, %v510
      %591 = vst.msk [vmem:[#allocation2 + $0x198] sm:$0xff] %vm573, %v512
      %592 = vst.msk [vmem:[#allocation2 + $0x1b0] sm:$0xff] %vm573, %v514
      %593 = vst.msk [vmem:[#allocation2 + $0x1c8] sm:$0xff] %vm573, %v516
      %594 = vst.msk [vmem:[#allocation2 + $0x1e0] sm:$0xff] %vm573, %v518
      %595 = vst.msk [vmem:[#allocation2 + $0x1f8] sm:$0xff] %vm573, %v520
      %596 = vst.msk [vmem:[#allocation2 + $0x210] sm:$0xff] %vm573, %v522
      %597 = vst.msk [vmem:[#allocation2 + $0x228] sm:$0xff] %vm573, %v524
      %598 = vst.msk [vmem:[#allocation2 + $0x240] sm:$0xff] %vm573, %v526
      %599 = vst.msk [vmem:[#allocation2 + $0x258] sm:$0xff] %vm573, %v528
      %600 = vst.msk [vmem:[#allocation2 + $0x270] sm:$0xff] %vm573, %v530
      %601 = vst.msk [vmem:[#allocation2 + $0x288] sm:$0xff] %vm573, %v532
      %602 = vst.msk [vmem:[#allocation2 + $0x2a0] sm:$0xff] %vm573, %v534
      %603 = vst.msk [vmem:[#allocation2 + $0x2b8] sm:$0xff] %vm573, %v536
      %604 = vst.msk [vmem:[#allocation2 + $0x2d0] sm:$0xff] %vm573, %v538
      %605 = vst.msk [vmem:[#allocation2 + $0x2e8] sm:$0xff] %vm573, %v540
      %v606 = vld [vmem:[%s219 + $0x2] sm:$0xff]
      %v607 = vld [vmem:[%s219 + $0x12] sm:$0xff]
      %v608 = vld [vmem:[%s219 + $0x22] sm:$0xff]
      %v609 = vld [vmem:[%s219 + $0x32] sm:$0xff]
      %v610 = vld [vmem:[%s219 + $0x42] sm:$0xff]
      %v611 = vld [vmem:[%s219 + $0x52] sm:$0xff]
      %v612 = vld [vmem:[%s219 + $0x62] sm:$0xff]
      %v613 = vld [vmem:[%s219 + $0x72] sm:$0xff]
      %v614 = vld [vmem:[%s219 + $0xa2] sm:$0xff]
      %v615 = vld [vmem:[%s219 + $0xb2] sm:$0xff]
      %v616 = vld [vmem:[%s219 + $0xc2] sm:$0xff]
      %v617 = vld [vmem:[%s219 + $0xd2] sm:$0xff]
      %v618 = vld [vmem:[%s219 + $0xe2] sm:$0xff]
      %v619 = vld [vmem:[%s219 + $0xf2] sm:$0xff]
      %v620 = vld [vmem:[%s219 + $0x102] sm:$0xff]
      %v621 = vld [vmem:[%s219 + $0x112] sm:$0xff]
      %v622 = vld [vmem:[%s219 + $0x142] sm:$0xff]
      %v623 = vld [vmem:[%s219 + $0x152] sm:$0xff]
      %v624 = vld [vmem:[%s219 + $0x162] sm:$0xff]
      %v625 = vld [vmem:[%s219 + $0x172] sm:$0xff]
      %v626 = vld [vmem:[%s219 + $0x182] sm:$0xff]
      %v627 = vld [vmem:[%s219 + $0x192] sm:$0xff]
      %v628 = vld [vmem:[%s219 + $0x1a2] sm:$0xff]
      %v629 = vld [vmem:[%s219 + $0x1b2] sm:$0xff]
      %v630 = vld [vmem:[%s219 + $0x1e2] sm:$0xff]
      %v631 = vld [vmem:[%s219 + $0x1f2] sm:$0xff]
      %v632 = vld [vmem:[%s219 + $0x202] sm:$0xff]
      %v633 = vld [vmem:[%s219 + $0x212] sm:$0xff]
      %v634 = vld [vmem:[%s219 + $0x222] sm:$0xff]
      %v635 = vld [vmem:[%s219 + $0x232] sm:$0xff]
      %v636 = vld [vmem:[%s219 + $0x242] sm:$0xff]
      %v637 = vld [vmem:[%s219 + $0x252] sm:$0xff]
      %v638 = vld [vmem:[%s219 + $0x282] sm:$0xff]
      %v639 = vld [vmem:[%s219 + $0x292] sm:$0xff]
      %v640 = vld [vmem:[%s219 + $0x2a2] sm:$0xff]
      %v641 = vld [vmem:[%s219 + $0x2b2] sm:$0xff]
      %v642 = vld [vmem:[%s219 + $0x2c2] sm:$0xff]
      %v643 = vld [vmem:[%s219 + $0x2d2] sm:$0xff]
      %v644 = vld [vmem:[%s219 + $0x2e2] sm:$0xff]
      %v645 = vld [vmem:[%s219 + $0x2f2] sm:$0xff]
      %v646 = vld [vmem:[%s219 + $0x322] sm:$0xff]
      %v647 = vld [vmem:[%s219 + $0x332] sm:$0xff]
      %v648 = vld [vmem:[%s219 + $0x342] sm:$0xff]
      %v649 = vld [vmem:[%s219 + $0x352] sm:$0xff]
      %v650 = vld [vmem:[%s219 + $0x362] sm:$0xff]
      %v651 = vld [vmem:[%s219 + $0x372] sm:$0xff]
      %v652 = vld [vmem:[%s219 + $0x382] sm:$0xff]
      %v653 = vld [vmem:[%s219 + $0x392] sm:$0xff]
      %v654 = vld [vmem:[%s219 + $0x3c2] sm:$0xff]
      %v655 = vld [vmem:[%s219 + $0x3d2] sm:$0xff]
      %v656 = vld [vmem:[%s219 + $0x3e2] sm:$0xff]
      %v657 = vld [vmem:[%s219 + $0x3f2] sm:$0xff]
      %v658 = vld [vmem:[%s219 + $0x402] sm:$0xff]
      %v659 = vld [vmem:[%s219 + $0x412] sm:$0xff]
      %v660 = vld [vmem:[%s219 + $0x422] sm:$0xff]
      %v661 = vld [vmem:[%s219 + $0x432] sm:$0xff]
      %v662 = vld [vmem:[%s219 + $0x462] sm:$0xff]
      %v663 = vld [vmem:[%s219 + $0x472] sm:$0xff]
      %v664 = vld [vmem:[%s219 + $0x482] sm:$0xff]
      %v665 = vld [vmem:[%s219 + $0x492] sm:$0xff]
      %v666 = vld [vmem:[%s219 + $0x4a2] sm:$0xff]
      %v667 = vld [vmem:[%s219 + $0x4b2] sm:$0xff]
      %v668 = vld [vmem:[%s219 + $0x4c2] sm:$0xff]
      %v669 = vld [vmem:[%s219 + $0x4d2] sm:$0xff]
      %v670 = vpack.c.bf16 %v607, %v606
      %v671 = vpack.c.bf16 %v609, %v608
      %v672 = vpack.c.bf16 %v611, %v610
      %v673 = vpack.c.bf16 %v613, %v612
      %v674 = vpack.c.bf16 %v615, %v614
      %v675 = vpack.c.bf16 %v617, %v616
      %v676 = vpack.c.bf16 %v619, %v618
      %v677 = vpack.c.bf16 %v621, %v620
      %v678 = vpack.c.bf16 %v623, %v622
      %v679 = vpack.c.bf16 %v625, %v624
      %v680 = vpack.c.bf16 %v627, %v626
      %v681 = vpack.c.bf16 %v629, %v628
      %v682 = vpack.c.bf16 %v631, %v630
      %v683 = vpack.c.bf16 %v633, %v632
      %v684 = vpack.c.bf16 %v635, %v634
      %v685 = vpack.c.bf16 %v637, %v636
      %v686 = vpack.c.bf16 %v639, %v638
      %v687 = vpack.c.bf16 %v641, %v640
      %v688 = vpack.c.bf16 %v643, %v642
      %v689 = vpack.c.bf16 %v645, %v644
      %v690 = vpack.c.bf16 %v647, %v646
      %v691 = vpack.c.bf16 %v649, %v648
      %v692 = vpack.c.bf16 %v651, %v650
      %v693 = vpack.c.bf16 %v653, %v652
      %v694 = vpack.c.bf16 %v655, %v654
      %v695 = vpack.c.bf16 %v657, %v656
      %v696 = vpack.c.bf16 %v659, %v658
      %v697 = vpack.c.bf16 %v661, %v660
      %v698 = vpack.c.bf16 %v663, %v662
      %v699 = vpack.c.bf16 %v665, %v664
      %v700 = vpack.c.bf16 %v667, %v666
      %v701 = vpack.c.bf16 %v669, %v668
      %734 = vrot.lane.b32.xlu0 %v670, 16
      %v735 = vpop.permute.xlu0 %734
      %736 = vrot.lane.b32.xlu0 %v671, 16
      %v737 = vpop.permute.xlu0 %736
      %738 = vrot.lane.b32.xlu0 %v672, 16
      %v739 = vpop.permute.xlu0 %738
      %740 = vrot.lane.b32.xlu0 %v673, 16
      %v741 = vpop.permute.xlu0 %740
      %742 = vrot.lane.b32.xlu0 %v674, 16
      %v743 = vpop.permute.xlu0 %742
      %744 = vrot.lane.b32.xlu0 %v675, 16
      %v745 = vpop.permute.xlu0 %744
      %746 = vrot.lane.b32.xlu0 %v676, 16
      %v747 = vpop.permute.xlu0 %746
      %748 = vrot.lane.b32.xlu0 %v677, 16
      %v749 = vpop.permute.xlu0 %748
      %750 = vrot.lane.b32.xlu0 %v678, 16
      %v751 = vpop.permute.xlu0 %750
      %752 = vrot.lane.b32.xlu0 %v679, 16
      %v753 = vpop.permute.xlu0 %752
      %754 = vrot.lane.b32.xlu0 %v680, 16
      %v755 = vpop.permute.xlu0 %754
      %756 = vrot.lane.b32.xlu0 %v681, 16
      %v757 = vpop.permute.xlu0 %756
      %758 = vrot.lane.b32.xlu0 %v682, 16
      %v759 = vpop.permute.xlu0 %758
      %760 = vrot.lane.b32.xlu0 %v683, 16
      %v761 = vpop.permute.xlu0 %760
      %762 = vrot.lane.b32.xlu0 %v684, 16
      %v763 = vpop.permute.xlu0 %762
      %764 = vrot.lane.b32.xlu0 %v685, 16
      %v765 = vpop.permute.xlu0 %764
      %766 = vrot.lane.b32.xlu0 %v686, 16
      %v767 = vpop.permute.xlu0 %766
      %768 = vrot.lane.b32.xlu0 %v687, 16
      %v769 = vpop.permute.xlu0 %768
      %770 = vrot.lane.b32.xlu0 %v688, 16
      %v771 = vpop.permute.xlu0 %770
      %772 = vrot.lane.b32.xlu0 %v689, 16
      %v773 = vpop.permute.xlu0 %772
      %774 = vrot.lane.b32.xlu0 %v690, 16
      %v775 = vpop.permute.xlu0 %774
      %776 = vrot.lane.b32.xlu0 %v691, 16
      %v777 = vpop.permute.xlu0 %776
      %778 = vrot.lane.b32.xlu0 %v692, 16
      %v779 = vpop.permute.xlu0 %778
      %780 = vrot.lane.b32.xlu0 %v693, 16
      %v781 = vpop.permute.xlu0 %780
      %782 = vrot.lane.b32.xlu0 %v694, 16
      %v783 = vpop.permute.xlu0 %782
      %784 = vrot.lane.b32.xlu0 %v695, 16
      %v785 = vpop.permute.xlu0 %784
      %786 = vrot.lane.b32.xlu0 %v696, 16
      %v787 = vpop.permute.xlu0 %786
      %788 = vrot.lane.b32.xlu0 %v697, 16
      %v789 = vpop.permute.xlu0 %788
      %790 = vrot.lane.b32.xlu0 %v698, 16
      %v791 = vpop.permute.xlu0 %790
      %792 = vrot.lane.b32.xlu0 %v699, 16
      %v793 = vpop.permute.xlu0 %792
      %794 = vrot.lane.b32.xlu0 %v700, 16
      %v795 = vpop.permute.xlu0 %794
      %796 = vrot.lane.b32.xlu0 %v701, 16
      %v797 = vpop.permute.xlu0 %796
      %vm830 = vcmask 195712
      %831 = vst.msk [vmem:[#allocation2] sm:$0xff] %vm830, %v735
      %832 = vst.msk [vmem:[#allocation2 + $0x18] sm:$0xff] %vm830, %v737
      %833 = vst.msk [vmem:[#allocation2 + $0x30] sm:$0xff] %vm830, %v739
      %834 = vst.msk [vmem:[#allocation2 + $0x48] sm:$0xff] %vm830, %v741
      %835 = vst.msk [vmem:[#allocation2 + $0x60] sm:$0xff] %vm830, %v743
      %836 = vst.msk [vmem:[#allocation2 + $0x78] sm:$0xff] %vm830, %v745
      %837 = vst.msk [vmem:[#allocation2 + $0x90] sm:$0xff] %vm830, %v747
      %838 = vst.msk [vmem:[#allocation2 + $0xa8] sm:$0xff] %vm830, %v749
      %839 = vst.msk [vmem:[#allocation2 + $0xc0] sm:$0xff] %vm830, %v751
      %840 = vst.msk [vmem:[#allocation2 + $0xd8] sm:$0xff] %vm830, %v753
      %841 = vst.msk [vmem:[#allocation2 + $0xf0] sm:$0xff] %vm830, %v755
      %842 = vst.msk [vmem:[#allocation2 + $0x108] sm:$0xff] %vm830, %v757
      %843 = vst.msk [vmem:[#allocation2 + $0x120] sm:$0xff] %vm830, %v759
      %844 = vst.msk [vmem:[#allocation2 + $0x138] sm:$0xff] %vm830, %v761
      %845 = vst.msk [vmem:[#allocation2 + $0x150] sm:$0xff] %vm830, %v763
      %846 = vst.msk [vmem:[#allocation2 + $0x168] sm:$0xff] %vm830, %v765
      %847 = vst.msk [vmem:[#allocation2 + $0x180] sm:$0xff] %vm830, %v767
      %848 = vst.msk [vmem:[#allocation2 + $0x198] sm:$0xff] %vm830, %v769
      %849 = vst.msk [vmem:[#allocation2 + $0x1b0] sm:$0xff] %vm830, %v771
      %850 = vst.msk [vmem:[#allocation2 + $0x1c8] sm:$0xff] %vm830, %v773
      %851 = vst.msk [vmem:[#allocation2 + $0x1e0] sm:$0xff] %vm830, %v775
      %852 = vst.msk [vmem:[#allocation2 + $0x1f8] sm:$0xff] %vm830, %v777
      %853 = vst.msk [vmem:[#allocation2 + $0x210] sm:$0xff] %vm830, %v779
      %854 = vst.msk [vmem:[#allocation2 + $0x228] sm:$0xff] %vm830, %v781
      %855 = vst.msk [vmem:[#allocation2 + $0x240] sm:$0xff] %vm830, %v783
      %856 = vst.msk [vmem:[#allocation2 + $0x258] sm:$0xff] %vm830, %v785
      %857 = vst.msk [vmem:[#allocation2 + $0x270] sm:$0xff] %vm830, %v787
      %858 = vst.msk [vmem:[#allocation2 + $0x288] sm:$0xff] %vm830, %v789
      %859 = vst.msk [vmem:[#allocation2 + $0x2a0] sm:$0xff] %vm830, %v791
      %860 = vst.msk [vmem:[#allocation2 + $0x2b8] sm:$0xff] %vm830, %v793
      %861 = vst.msk [vmem:[#allocation2 + $0x2d0] sm:$0xff] %vm830, %v795
      %862 = vst.msk [vmem:[#allocation2 + $0x2e8] sm:$0xff] %vm830, %v797
      %s863 = sadd.s32 16, %s218
      %s864 = scalar_lea.vmem %s207, %s863
      %v865 = vld [vmem:[%s864] sm:$0xff]
      %v866 = vld [vmem:[%s864 + $0x10] sm:$0xff]
      %v867 = vld [vmem:[%s864 + $0x20] sm:$0xff]
      %v868 = vld [vmem:[%s864 + $0x30] sm:$0xff]
      %v869 = vld [vmem:[%s864 + $0x40] sm:$0xff]
      %v870 = vld [vmem:[%s864 + $0x50] sm:$0xff]
      %v871 = vld [vmem:[%s864 + $0x60] sm:$0xff]
      %v872 = vld [vmem:[%s864 + $0x70] sm:$0xff]
      %v873 = vld [vmem:[%s864 + $0xa0] sm:$0xff]
      %v874 = vld [vmem:[%s864 + $0xb0] sm:$0xff]
      %v875 = vld [vmem:[%s864 + $0xc0] sm:$0xff]
      %v876 = vld [vmem:[%s864 + $0xd0] sm:$0xff]
      %v877 = vld [vmem:[%s864 + $0xe0] sm:$0xff]
      %v878 = vld [vmem:[%s864 + $0xf0] sm:$0xff]
      %v879 = vld [vmem:[%s864 + $0x100] sm:$0xff]
      %v880 = vld [vmem:[%s864 + $0x110] sm:$0xff]
      %v881 = vld [vmem:[%s864 + $0x140] sm:$0xff]
      %v882 = vld [vmem:[%s864 + $0x150] sm:$0xff]
      %v883 = vld [vmem:[%s864 + $0x160] sm:$0xff]
      %v884 = vld [vmem:[%s864 + $0x170] sm:$0xff]
      %v885 = vld [vmem:[%s864 + $0x180] sm:$0xff]
      %v886 = vld [vmem:[%s864 + $0x190] sm:$0xff]
      %v887 = vld [vmem:[%s864 + $0x1a0] sm:$0xff]
      %v888 = vld [vmem:[%s864 + $0x1b0] sm:$0xff]
      %v889 = vld [vmem:[%s864 + $0x1e0] sm:$0xff]
      %v890 = vld [vmem:[%s864 + $0x1f0] sm:$0xff]
      %v891 = vld [vmem:[%s864 + $0x200] sm:$0xff]
      %v892 = vld [vmem:[%s864 + $0x210] sm:$0xff]
      %v893 = vld [vmem:[%s864 + $0x220] sm:$0xff]
      %v894 = vld [vmem:[%s864 + $0x230] sm:$0xff]
      %v895 = vld [vmem:[%s864 + $0x240] sm:$0xff]
      %v896 = vld [vmem:[%s864 + $0x250] sm:$0xff]
      %v897 = vld [vmem:[%s864 + $0x280] sm:$0xff]
      %v898 = vld [vmem:[%s864 + $0x290] sm:$0xff]
      %v899 = vld [vmem:[%s864 + $0x2a0] sm:$0xff]
      %v900 = vld [vmem:[%s864 + $0x2b0] sm:$0xff]
      %v901 = vld [vmem:[%s864 + $0x2c0] sm:$0xff]
      %v902 = vld [vmem:[%s864 + $0x2d0] sm:$0xff]
      %v903 = vld [vmem:[%s864 + $0x2e0] sm:$0xff]
      %v904 = vld [vmem:[%s864 + $0x2f0] sm:$0xff]
      %v905 = vld [vmem:[%s864 + $0x320] sm:$0xff]
      %v906 = vld [vmem:[%s864 + $0x330] sm:$0xff]
      %v907 = vld [vmem:[%s864 + $0x340] sm:$0xff]
      %v908 = vld [vmem:[%s864 + $0x350] sm:$0xff]
      %v909 = vld [vmem:[%s864 + $0x360] sm:$0xff]
      %v910 = vld [vmem:[%s864 + $0x370] sm:$0xff]
      %v911 = vld [vmem:[%s864 + $0x380] sm:$0xff]
      %v912 = vld [vmem:[%s864 + $0x390] sm:$0xff]
      %v913 = vld [vmem:[%s864 + $0x3c0] sm:$0xff]
      %v914 = vld [vmem:[%s864 + $0x3d0] sm:$0xff]
      %v915 = vld [vmem:[%s864 + $0x3e0] sm:$0xff]
      %v916 = vld [vmem:[%s864 + $0x3f0] sm:$0xff]
      %v917 = vld [vmem:[%s864 + $0x400] sm:$0xff]
      %v918 = vld [vmem:[%s864 + $0x410] sm:$0xff]
      %v919 = vld [vmem:[%s864 + $0x420] sm:$0xff]
      %v920 = vld [vmem:[%s864 + $0x430] sm:$0xff]
      %v921 = vld [vmem:[%s864 + $0x460] sm:$0xff]
      %v922 = vld [vmem:[%s864 + $0x470] sm:$0xff]
      %v923 = vld [vmem:[%s864 + $0x480] sm:$0xff]
      %v924 = vld [vmem:[%s864 + $0x490] sm:$0xff]
      %v925 = vld [vmem:[%s864 + $0x4a0] sm:$0xff]
      %v926 = vld [vmem:[%s864 + $0x4b0] sm:$0xff]
      %v927 = vld [vmem:[%s864 + $0x4c0] sm:$0xff]
      %v928 = vld [vmem:[%s864 + $0x4d0] sm:$0xff]
      %v929 = vpack.c.bf16 %v866, %v865
      %v930 = vpack.c.bf16 %v868, %v867
      %v931 = vpack.c.bf16 %v870, %v869
      %v932 = vpack.c.bf16 %v872, %v871
      %v933 = vpack.c.bf16 %v874, %v873
      %v934 = vpack.c.bf16 %v876, %v875
      %v935 = vpack.c.bf16 %v878, %v877
      %v936 = vpack.c.bf16 %v880, %v879
      %v937 = vpack.c.bf16 %v882, %v881
      %v938 = vpack.c.bf16 %v884, %v883
      %v939 = vpack.c.bf16 %v886, %v885
      %v940 = vpack.c.bf16 %v888, %v887
      %v941 = vpack.c.bf16 %v890, %v889
      %v942 = vpack.c.bf16 %v892, %v891
      %v943 = vpack.c.bf16 %v894, %v893
      %v944 = vpack.c.bf16 %v896, %v895
      %v945 = vpack.c.bf16 %v898, %v897
      %v946 = vpack.c.bf16 %v900, %v899
      %v947 = vpack.c.bf16 %v902, %v901
      %v948 = vpack.c.bf16 %v904, %v903
      %v949 = vpack.c.bf16 %v906, %v905
      %v950 = vpack.c.bf16 %v908, %v907
      %v951 = vpack.c.bf16 %v910, %v909
      %v952 = vpack.c.bf16 %v912, %v911
      %v953 = vpack.c.bf16 %v914, %v913
      %v954 = vpack.c.bf16 %v916, %v915
      %v955 = vpack.c.bf16 %v918, %v917
      %v956 = vpack.c.bf16 %v920, %v919
      %v957 = vpack.c.bf16 %v922, %v921
      %v958 = vpack.c.bf16 %v924, %v923
      %v959 = vpack.c.bf16 %v926, %v925
      %v960 = vpack.c.bf16 %v928, %v927
      %993 = vrot.lane.b32.xlu0 %v929, 24
      %v994 = vpop.permute.xlu0 %993
      %995 = vrot.lane.b32.xlu0 %v930, 24
      %v996 = vpop.permute.xlu0 %995
      %997 = vrot.lane.b32.xlu0 %v931, 24
      %v998 = vpop.permute.xlu0 %997
      %999 = vrot.lane.b32.xlu0 %v932, 24
      %v1000 = vpop.permute.xlu0 %999
      %1001 = vrot.lane.b32.xlu0 %v933, 24
      %v1002 = vpop.permute.xlu0 %1001
      %1003 = vrot.lane.b32.xlu0 %v934, 24
      %v1004 = vpop.permute.xlu0 %1003
      %1005 = vrot.lane.b32.xlu0 %v935, 24
      %v1006 = vpop.permute.xlu0 %1005
      %1007 = vrot.lane.b32.xlu0 %v936, 24
      %v1008 = vpop.permute.xlu0 %1007
      %1009 = vrot.lane.b32.xlu0 %v937, 24
      %v1010 = vpop.permute.xlu0 %1009
      %1011 = vrot.lane.b32.xlu0 %v938, 24
      %v1012 = vpop.permute.xlu0 %1011
      %1013 = vrot.lane.b32.xlu0 %v939, 24
      %v1014 = vpop.permute.xlu0 %1013
      %1015 = vrot.lane.b32.xlu0 %v940, 24
      %v1016 = vpop.permute.xlu0 %1015
      %1017 = vrot.lane.b32.xlu0 %v941, 24
      %v1018 = vpop.permute.xlu0 %1017
      %1019 = vrot.lane.b32.xlu0 %v942, 24
      %v1020 = vpop.permute.xlu0 %1019
      %1021 = vrot.lane.b32.xlu0 %v943, 24
      %v1022 = vpop.permute.xlu0 %1021
      %1023 = vrot.lane.b32.xlu0 %v944, 24
      %v1024 = vpop.permute.xlu0 %1023
      %1025 = vrot.lane.b32.xlu0 %v945, 24
      %v1026 = vpop.permute.xlu0 %1025
      %1027 = vrot.lane.b32.xlu0 %v946, 24
      %v1028 = vpop.permute.xlu0 %1027
      %1029 = vrot.lane.b32.xlu0 %v947, 24
      %v1030 = vpop.permute.xlu0 %1029
      %1031 = vrot.lane.b32.xlu0 %v948, 24
      %v1032 = vpop.permute.xlu0 %1031
      %1033 = vrot.lane.b32.xlu0 %v949, 24
      %v1034 = vpop.permute.xlu0 %1033
      %1035 = vrot.lane.b32.xlu0 %v950, 24
      %v1036 = vpop.permute.xlu0 %1035
      %1037 = vrot.lane.b32.xlu0 %v951, 24
      %v1038 = vpop.permute.xlu0 %1037
      %1039 = vrot.lane.b32.xlu0 %v952, 24
      %v1040 = vpop.permute.xlu0 %1039
      %1041 = vrot.lane.b32.xlu0 %v953, 24
      %v1042 = vpop.permute.xlu0 %1041
      %1043 = vrot.lane.b32.xlu0 %v954, 24
      %v1044 = vpop.permute.xlu0 %1043
      %1045 = vrot.lane.b32.xlu0 %v955, 24
      %v1046 = vpop.permute.xlu0 %1045
      %1047 = vrot.lane.b32.xlu0 %v956, 24
      %v1048 = vpop.permute.xlu0 %1047
      %1049 = vrot.lane.b32.xlu0 %v957, 24
      %v1050 = vpop.permute.xlu0 %1049
      %1051 = vrot.lane.b32.xlu0 %v958, 24
      %v1052 = vpop.permute.xlu0 %1051
      %1053 = vrot.lane.b32.xlu0 %v959, 24
      %v1054 = vpop.permute.xlu0 %1053
      %1055 = vrot.lane.b32.xlu0 %v960, 24
      %v1056 = vpop.permute.xlu0 %1055
      %vm1089 = vcmask 261312
      %1090 = vst.msk [vmem:[#allocation2] sm:$0xff] %vm1089, %v994
      %1091 = vst.msk [vmem:[#allocation2 + $0x18] sm:$0xff] %vm1089, %v996
      %1092 = vst.msk [vmem:[#allocation2 + $0x30] sm:$0xff] %vm1089, %v998
      %1093 = vst.msk [vmem:[#allocation2 + $0x48] sm:$0xff] %vm1089, %v1000
      %1094 = vst.msk [vmem:[#allocation2 + $0x60] sm:$0xff] %vm1089, %v1002
      %1095 = vst.msk [vmem:[#allocation2 + $0x78] sm:$0xff] %vm1089, %v1004
      %1096 = vst.msk [vmem:[#allocation2 + $0x90] sm:$0xff] %vm1089, %v1006
      %1097 = vst.msk [vmem:[#allocation2 + $0xa8] sm:$0xff] %vm1089, %v1008
      %1098 = vst.msk [vmem:[#allocation2 + $0xc0] sm:$0xff] %vm1089, %v1010
      %1099 = vst.msk [vmem:[#allocation2 + $0xd8] sm:$0xff] %vm1089, %v1012
      %1100 = vst.msk [vmem:[#allocation2 + $0xf0] sm:$0xff] %vm1089, %v1014
      %1101 = vst.msk [vmem:[#allocation2 + $0x108] sm:$0xff] %vm1089, %v1016
      %1102 = vst.msk [vmem:[#allocation2 + $0x120] sm:$0xff] %vm1089, %v1018
      %1103 = vst.msk [vmem:[#allocation2 + $0x138] sm:$0xff] %vm1089, %v1020
      %1104 = vst.msk [vmem:[#allocation2 + $0x150] sm:$0xff] %vm1089, %v1022
      %1105 = vst.msk [vmem:[#allocation2 + $0x168] sm:$0xff] %vm1089, %v1024
      %1106 = vst.msk [vmem:[#allocation2 + $0x180] sm:$0xff] %vm1089, %v1026
      %1107 = vst.msk [vmem:[#allocation2 + $0x198] sm:$0xff] %vm1089, %v1028
      %1108 = vst.msk [vmem:[#allocation2 + $0x1b0] sm:$0xff] %vm1089, %v1030
      %1109 = vst.msk [vmem:[#allocation2 + $0x1c8] sm:$0xff] %vm1089, %v1032
      %1110 = vst.msk [vmem:[#allocation2 + $0x1e0] sm:$0xff] %vm1089, %v1034
      %1111 = vst.msk [vmem:[#allocation2 + $0x1f8] sm:$0xff] %vm1089, %v1036
      %1112 = vst.msk [vmem:[#allocation2 + $0x210] sm:$0xff] %vm1089, %v1038
      %1113 = vst.msk [vmem:[#allocation2 + $0x228] sm:$0xff] %vm1089, %v1040
      %1114 = vst.msk [vmem:[#allocation2 + $0x240] sm:$0xff] %vm1089, %v1042
      %1115 = vst.msk [vmem:[#allocation2 + $0x258] sm:$0xff] %vm1089, %v1044
      %1116 = vst.msk [vmem:[#allocation2 + $0x270] sm:$0xff] %vm1089, %v1046
      %1117 = vst.msk [vmem:[#allocation2 + $0x288] sm:$0xff] %vm1089, %v1048
      %1118 = vst.msk [vmem:[#allocation2 + $0x2a0] sm:$0xff] %vm1089, %v1050
      %1119 = vst.msk [vmem:[#allocation2 + $0x2b8] sm:$0xff] %vm1089, %v1052
      %1120 = vst.msk [vmem:[#allocation2 + $0x2d0] sm:$0xff] %vm1089, %v1054
      %1121 = vst.msk [vmem:[#allocation2 + $0x2e8] sm:$0xff] %vm1089, %v1056
      %v1122 = vld [vmem:[%s864 + $0x1] sm:$0xff]
      %v1123 = vld [vmem:[%s864 + $0x11] sm:$0xff]
      %v1124 = vld [vmem:[%s864 + $0x21] sm:$0xff]
      %v1125 = vld [vmem:[%s864 + $0x31] sm:$0xff]
      %v1126 = vld [vmem:[%s864 + $0x41] sm:$0xff]
      %v1127 = vld [vmem:[%s864 + $0x51] sm:$0xff]
      %v1128 = vld [vmem:[%s864 + $0x61] sm:$0xff]
      %v1129 = vld [vmem:[%s864 + $0x71] sm:$0xff]
      %v1130 = vld [vmem:[%s864 + $0xa1] sm:$0xff]
      %v1131 = vld [vmem:[%s864 + $0xb1] sm:$0xff]
      %v1132 = vld [vmem:[%s864 + $0xc1] sm:$0xff]
      %v1133 = vld [vmem:[%s864 + $0xd1] sm:$0xff]
      %v1134 = vld [vmem:[%s864 + $0xe1] sm:$0xff]
      %v1135 = vld [vmem:[%s864 + $0xf1] sm:$0xff]
      %v1136 = vld [vmem:[%s864 + $0x101] sm:$0xff]
      %v1137 = vld [vmem:[%s864 + $0x111] sm:$0xff]
      %v1138 = vld [vmem:[%s864 + $0x141] sm:$0xff]
      %v1139 = vld [vmem:[%s864 + $0x151] sm:$0xff]
      %v1140 = vld [vmem:[%s864 + $0x161] sm:$0xff]
      %v1141 = vld [vmem:[%s864 + $0x171] sm:$0xff]
      %v1142 = vld [vmem:[%s864 + $0x181] sm:$0xff]
      %v1143 = vld [vmem:[%s864 + $0x191] sm:$0xff]
      %v1144 = vld [vmem:[%s864 + $0x1a1] sm:$0xff]
      %v1145 = vld [vmem:[%s864 + $0x1b1] sm:$0xff]
      %v1146 = vld [vmem:[%s864 + $0x1e1] sm:$0xff]
      %v1147 = vld [vmem:[%s864 + $0x1f1] sm:$0xff]
      %v1148 = vld [vmem:[%s864 + $0x201] sm:$0xff]
      %v1149 = vld [vmem:[%s864 + $0x211] sm:$0xff]
      %v1150 = vld [vmem:[%s864 + $0x221] sm:$0xff]
      %v1151 = vld [vmem:[%s864 + $0x231] sm:$0xff]
      %v1152 = vld [vmem:[%s864 + $0x241] sm:$0xff]
      %v1153 = vld [vmem:[%s864 + $0x251] sm:$0xff]
      %v1154 = vld [vmem:[%s864 + $0x281] sm:$0xff]
      %v1155 = vld [vmem:[%s864 + $0x291] sm:$0xff]
      %v1156 = vld [vmem:[%s864 + $0x2a1] sm:$0xff]
      %v1157 = vld [vmem:[%s864 + $0x2b1] sm:$0xff]
      %v1158 = vld [vmem:[%s864 + $0x2c1] sm:$0xff]
      %v1159 = vld [vmem:[%s864 + $0x2d1] sm:$0xff]
      %v1160 = vld [vmem:[%s864 + $0x2e1] sm:$0xff]
      %v1161 = vld [vmem:[%s864 + $0x2f1] sm:$0xff]
      %v1162 = vld [vmem:[%s864 + $0x321] sm:$0xff]
      %v1163 = vld [vmem:[%s864 + $0x331] sm:$0xff]
      %v1164 = vld [vmem:[%s864 + $0x341] sm:$0xff]
      %v1165 = vld [vmem:[%s864 + $0x351] sm:$0xff]
      %v1166 = vld [vmem:[%s864 + $0x361] sm:$0xff]
      %v1167 = vld [vmem:[%s864 + $0x371] sm:$0xff]
      %v1168 = vld [vmem:[%s864 + $0x381] sm:$0xff]
      %v1169 = vld [vmem:[%s864 + $0x391] sm:$0xff]
      %v1170 = vld [vmem:[%s864 + $0x3c1] sm:$0xff]
      %v1171 = vld [vmem:[%s864 + $0x3d1] sm:$0xff]
      %v1172 = vld [vmem:[%s864 + $0x3e1] sm:$0xff]
      %v1173 = vld [vmem:[%s864 + $0x3f1] sm:$0xff]
      %v1174 = vld [vmem:[%s864 + $0x401] sm:$0xff]
      %v1175 = vld [vmem:[%s864 + $0x411] sm:$0xff]
      %v1176 = vld [vmem:[%s864 + $0x421] sm:$0xff]
      %v1177 = vld [vmem:[%s864 + $0x431] sm:$0xff]
      %v1178 = vld [vmem:[%s864 + $0x461] sm:$0xff]
      %v1179 = vld [vmem:[%s864 + $0x471] sm:$0xff]
      %v1180 = vld [vmem:[%s864 + $0x481] sm:$0xff]
      %v1181 = vld [vmem:[%s864 + $0x491] sm:$0xff]
      %v1182 = vld [vmem:[%s864 + $0x4a1] sm:$0xff]
      %v1183 = vld [vmem:[%s864 + $0x4b1] sm:$0xff]
      %v1184 = vld [vmem:[%s864 + $0x4c1] sm:$0xff]
      %v1185 = vld [vmem:[%s864 + $0x4d1] sm:$0xff]
      %v1186 = vpack.c.bf16 %v1123, %v1122
      %v1187 = vpack.c.bf16 %v1125, %v1124
      %v1188 = vpack.c.bf16 %v1127, %v1126
      %v1189 = vpack.c.bf16 %v1129, %v1128
      %v1190 = vpack.c.bf16 %v1131, %v1130
      %v1191 = vpack.c.bf16 %v1133, %v1132
      %v1192 = vpack.c.bf16 %v1135, %v1134
      %v1193 = vpack.c.bf16 %v1137, %v1136
      %v1194 = vpack.c.bf16 %v1139, %v1138
      %v1195 = vpack.c.bf16 %v1141, %v1140
      %v1196 = vpack.c.bf16 %v1143, %v1142
      %v1197 = vpack.c.bf16 %v1145, %v1144
      %v1198 = vpack.c.bf16 %v1147, %v1146
      %v1199 = vpack.c.bf16 %v1149, %v1148
      %v1200 = vpack.c.bf16 %v1151, %v1150
      %v1201 = vpack.c.bf16 %v1153, %v1152
      %v1202 = vpack.c.bf16 %v1155, %v1154
      %v1203 = vpack.c.bf16 %v1157, %v1156
      %v1204 = vpack.c.bf16 %v1159, %v1158
      %v1205 = vpack.c.bf16 %v1161, %v1160
      %v1206 = vpack.c.bf16 %v1163, %v1162
      %v1207 = vpack.c.bf16 %v1165, %v1164
      %v1208 = vpack.c.bf16 %v1167, %v1166
      %v1209 = vpack.c.bf16 %v1169, %v1168
      %v1210 = vpack.c.bf16 %v1171, %v1170
      %v1211 = vpack.c.bf16 %v1173, %v1172
      %v1212 = vpack.c.bf16 %v1175, %v1174
      %v1213 = vpack.c.bf16 %v1177, %v1176
      %v1214 = vpack.c.bf16 %v1179, %v1178
      %v1215 = vpack.c.bf16 %v1181, %v1180
      %v1216 = vpack.c.bf16 %v1183, %v1182
      %v1217 = vpack.c.bf16 %v1185, %v1184
      %1250 = vrot.lane.b32.xlu0 %v1186, 32
      %v1251 = vpop.permute.xlu0 %1250
      %1252 = vrot.lane.b32.xlu0 %v1187, 32
      %v1253 = vpop.permute.xlu0 %1252
      %1254 = vrot.lane.b32.xlu0 %v1188, 32
      %v1255 = vpop.permute.xlu0 %1254
      %1256 = vrot.lane.b32.xlu0 %v1189, 32
      %v1257 = vpop.permute.xlu0 %1256
      %1258 = vrot.lane.b32.xlu0 %v1190, 32
      %v1259 = vpop.permute.xlu0 %1258
      %1260 = vrot.lane.b32.xlu0 %v1191, 32
      %v1261 = vpop.permute.xlu0 %1260
      %1262 = vrot.lane.b32.xlu0 %v1192, 32
      %v1263 = vpop.permute.xlu0 %1262
      %1264 = vrot.lane.b32.xlu0 %v1193, 32
      %v1265 = vpop.permute.xlu0 %1264
      %1266 = vrot.lane.b32.xlu0 %v1194, 32
      %v1267 = vpop.permute.xlu0 %1266
      %1268 = vrot.lane.b32.xlu0 %v1195, 32
      %v1269 = vpop.permute.xlu0 %1268
      %1270 = vrot.lane.b32.xlu0 %v1196, 32
      %v1271 = vpop.permute.xlu0 %1270
      %1272 = vrot.lane.b32.xlu0 %v1197, 32
      %v1273 = vpop.permute.xlu0 %1272
      %1274 = vrot.lane.b32.xlu0 %v1198, 32
      %v1275 = vpop.permute.xlu0 %1274
      %1276 = vrot.lane.b32.xlu0 %v1199, 32
      %v1277 = vpop.permute.xlu0 %1276
      %1278 = vrot.lane.b32.xlu0 %v1200, 32
      %v1279 = vpop.permute.xlu0 %1278
      %1280 = vrot.lane.b32.xlu0 %v1201, 32
      %v1281 = vpop.permute.xlu0 %1280
      %1282 = vrot.lane.b32.xlu0 %v1202, 32
      %v1283 = vpop.permute.xlu0 %1282
      %1284 = vrot.lane.b32.xlu0 %v1203, 32
      %v1285 = vpop.permute.xlu0 %1284
      %1286 = vrot.lane.b32.xlu0 %v1204, 32
      %v1287 = vpop.permute.xlu0 %1286
      %1288 = vrot.lane.b32.xlu0 %v1205, 32
      %v1289 = vpop.permute.xlu0 %1288
      %1290 = vrot.lane.b32.xlu0 %v1206, 32
      %v1291 = vpop.permute.xlu0 %1290
      %1292 = vrot.lane.b32.xlu0 %v1207, 32
      %v1293 = vpop.permute.xlu0 %1292
      %1294 = vrot.lane.b32.xlu0 %v1208, 32
      %v1295 = vpop.permute.xlu0 %1294
      %1296 = vrot.lane.b32.xlu0 %v1209, 32
      %v1297 = vpop.permute.xlu0 %1296
      %1298 = vrot.lane.b32.xlu0 %v1210, 32
      %v1299 = vpop.permute.xlu0 %1298
      %1300 = vrot.lane.b32.xlu0 %v1211, 32
      %v1301 = vpop.permute.xlu0 %1300
      %1302 = vrot.lane.b32.xlu0 %v1212, 32
      %v1303 = vpop.permute.xlu0 %1302
      %1304 = vrot.lane.b32.xlu0 %v1213, 32
      %v1305 = vpop.permute.xlu0 %1304
      %1306 = vrot.lane.b32.xlu0 %v1214, 32
      %v1307 = vpop.permute.xlu0 %1306
      %1308 = vrot.lane.b32.xlu0 %v1215, 32
      %v1309 = vpop.permute.xlu0 %1308
      %1310 = vrot.lane.b32.xlu0 %v1216, 32
      %v1311 = vpop.permute.xlu0 %1310
      %1312 = vrot.lane.b32.xlu0 %v1217, 32
      %v1313 = vpop.permute.xlu0 %1312
      %vm1346 = vcmask 326912
      %1347 = vst.msk [vmem:[#allocation2] sm:$0xff] %vm1346, %v1251
      %1348 = vst.msk [vmem:[#allocation2 + $0x18] sm:$0xff] %vm1346, %v1253
      %1349 = vst.msk [vmem:[#allocation2 + $0x30] sm:$0xff] %vm1346, %v1255
      %1350 = vst.msk [vmem:[#allocation2 + $0x48] sm:$0xff] %vm1346, %v1257
      %1351 = vst.msk [vmem:[#allocation2 + $0x60] sm:$0xff] %vm1346, %v1259
      %1352 = vst.msk [vmem:[#allocation2 + $0x78] sm:$0xff] %vm1346, %v1261
      %1353 = vst.msk [vmem:[#allocation2 + $0x90] sm:$0xff] %vm1346, %v1263
      %1354 = vst.msk [vmem:[#allocation2 + $0xa8] sm:$0xff] %vm1346, %v1265
      %1355 = vst.msk [vmem:[#allocation2 + $0xc0] sm:$0xff] %vm1346, %v1267
      %1356 = vst.msk [vmem:[#allocation2 + $0xd8] sm:$0xff] %vm1346, %v1269
      %1357 = vst.msk [vmem:[#allocation2 + $0xf0] sm:$0xff] %vm1346, %v1271
      %1358 = vst.msk [vmem:[#allocation2 + $0x108] sm:$0xff] %vm1346, %v1273
      %1359 = vst.msk [vmem:[#allocation2 + $0x120] sm:$0xff] %vm1346, %v1275
      %1360 = vst.msk [vmem:[#allocation2 + $0x138] sm:$0xff] %vm1346, %v1277
      %1361 = vst.msk [vmem:[#allocation2 + $0x150] sm:$0xff] %vm1346, %v1279
      %1362 = vst.msk [vmem:[#allocation2 + $0x168] sm:$0xff] %vm1346, %v1281
      %1363 = vst.msk [vmem:[#allocation2 + $0x180] sm:$0xff] %vm1346, %v1283
      %1364 = vst.msk [vmem:[#allocation2 + $0x198] sm:$0xff] %vm1346, %v1285
      %1365 = vst.msk [vmem:[#allocation2 + $0x1b0] sm:$0xff] %vm1346, %v1287
      %1366 = vst.msk [vmem:[#allocation2 + $0x1c8] sm:$0xff] %vm1346, %v1289
      %1367 = vst.msk [vmem:[#allocation2 + $0x1e0] sm:$0xff] %vm1346, %v1291
      %1368 = vst.msk [vmem:[#allocation2 + $0x1f8] sm:$0xff] %vm1346, %v1293
      %1369 = vst.msk [vmem:[#allocation2 + $0x210] sm:$0xff] %vm1346, %v1295
      %1370 = vst.msk [vmem:[#allocation2 + $0x228] sm:$0xff] %vm1346, %v1297
      %1371 = vst.msk [vmem:[#allocation2 + $0x240] sm:$0xff] %vm1346, %v1299
      %1372 = vst.msk [vmem:[#allocation2 + $0x258] sm:$0xff] %vm1346, %v1301
      %1373 = vst.msk [vmem:[#allocation2 + $0x270] sm:$0xff] %vm1346, %v1303
      %1374 = vst.msk [vmem:[#allocation2 + $0x288] sm:$0xff] %vm1346, %v1305
      %1375 = vst.msk [vmem:[#allocation2 + $0x2a0] sm:$0xff] %vm1346, %v1307
      %1376 = vst.msk [vmem:[#allocation2 + $0x2b8] sm:$0xff] %vm1346, %v1309
      %1377 = vst.msk [vmem:[#allocation2 + $0x2d0] sm:$0xff] %vm1346, %v1311
      %1378 = vst.msk [vmem:[#allocation2 + $0x2e8] sm:$0xff] %vm1346, %v1313
      %v1379 = vld [vmem:[%s864 + $0x2] sm:$0xff]
      %v1380 = vld [vmem:[%s864 + $0x12] sm:$0xff]
      %v1381 = vld [vmem:[%s864 + $0x22] sm:$0xff]
      %v1382 = vld [vmem:[%s864 + $0x32] sm:$0xff]
      %v1383 = vld [vmem:[%s864 + $0x42] sm:$0xff]
      %v1384 = vld [vmem:[%s864 + $0x52] sm:$0xff]
      %v1385 = vld [vmem:[%s864 + $0x62] sm:$0xff]
      %v1386 = vld [vmem:[%s864 + $0x72] sm:$0xff]
      %v1387 = vld [vmem:[%s864 + $0xa2] sm:$0xff]
      %v1388 = vld [vmem:[%s864 + $0xb2] sm:$0xff]
      %v1389 = vld [vmem:[%s864 + $0xc2] sm:$0xff]
      %v1390 = vld [vmem:[%s864 + $0xd2] sm:$0xff]
      %v1391 = vld [vmem:[%s864 + $0xe2] sm:$0xff]
      %v1392 = vld [vmem:[%s864 + $0xf2] sm:$0xff]
      %v1393 = vld [vmem:[%s864 + $0x102] sm:$0xff]
      %v1394 = vld [vmem:[%s864 + $0x112] sm:$0xff]
      %v1395 = vld [vmem:[%s864 + $0x142] sm:$0xff]
      %v1396 = vld [vmem:[%s864 + $0x152] sm:$0xff]
      %v1397 = vld [vmem:[%s864 + $0x162] sm:$0xff]
      %v1398 = vld [vmem:[%s864 + $0x172] sm:$0xff]
      %v1399 = vld [vmem:[%s864 + $0x182] sm:$0xff]
      %v1400 = vld [vmem:[%s864 + $0x192] sm:$0xff]
      %v1401 = vld [vmem:[%s864 + $0x1a2] sm:$0xff]
      %v1402 = vld [vmem:[%s864 + $0x1b2] sm:$0xff]
      %v1403 = vld [vmem:[%s864 + $0x1e2] sm:$0xff]
      %v1404 = vld [vmem:[%s864 + $0x1f2] sm:$0xff]
      %v1405 = vld [vmem:[%s864 + $0x202] sm:$0xff]
      %v1406 = vld [vmem:[%s864 + $0x212] sm:$0xff]
      %v1407 = vld [vmem:[%s864 + $0x222] sm:$0xff]
      %v1408 = vld [vmem:[%s864 + $0x232] sm:$0xff]
      %v1409 = vld [vmem:[%s864 + $0x242] sm:$0xff]
      %v1410 = vld [vmem:[%s864 + $0x252] sm:$0xff]
      %v1411 = vld [vmem:[%s864 + $0x282] sm:$0xff]
      %v1412 = vld [vmem:[%s864 + $0x292] sm:$0xff]
      %v1413 = vld [vmem:[%s864 + $0x2a2] sm:$0xff]
      %v1414 = vld [vmem:[%s864 + $0x2b2] sm:$0xff]
      %v1415 = vld [vmem:[%s864 + $0x2c2] sm:$0xff]
      %v1416 = vld [vmem:[%s864 + $0x2d2] sm:$0xff]
      %v1417 = vld [vmem:[%s864 + $0x2e2] sm:$0xff]
      %v1418 = vld [vmem:[%s864 + $0x2f2] sm:$0xff]
      %v1419 = vld [vmem:[%s864 + $0x322] sm:$0xff]
      %v1420 = vld [vmem:[%s864 + $0x332] sm:$0xff]
      %v1421 = vld [vmem:[%s864 + $0x342] sm:$0xff]
      %v1422 = vld [vmem:[%s864 + $0x352] sm:$0xff]
      %v1423 = vld [vmem:[%s864 + $0x362] sm:$0xff]
      %v1424 = vld [vmem:[%s864 + $0x372] sm:$0xff]
      %v1425 = vld [vmem:[%s864 + $0x382] sm:$0xff]
      %v1426 = vld [vmem:[%s864 + $0x392] sm:$0xff]
      %v1427 = vld [vmem:[%s864 + $0x3c2] sm:$0xff]
      %v1428 = vld [vmem:[%s864 + $0x3d2] sm:$0xff]
      %v1429 = vld [vmem:[%s864 + $0x3e2] sm:$0xff]
      %v1430 = vld [vmem:[%s864 + $0x3f2] sm:$0xff]
      %v1431 = vld [vmem:[%s864 + $0x402] sm:$0xff]
      %v1432 = vld [vmem:[%s864 + $0x412] sm:$0xff]
      %v1433 = vld [vmem:[%s864 + $0x422] sm:$0xff]
      %v1434 = vld [vmem:[%s864 + $0x432] sm:$0xff]
      %v1435 = vld [vmem:[%s864 + $0x462] sm:$0xff]
      %v1436 = vld [vmem:[%s864 + $0x472] sm:$0xff]
      %v1437 = vld [vmem:[%s864 + $0x482] sm:$0xff]
      %v1438 = vld [vmem:[%s864 + $0x492] sm:$0xff]
      %v1439 = vld [vmem:[%s864 + $0x4a2] sm:$0xff]
      %v1440 = vld [vmem:[%s864 + $0x4b2] sm:$0xff]
      %v1441 = vld [vmem:[%s864 + $0x4c2] sm:$0xff]
      %v1442 = vld [vmem:[%s864 + $0x4d2] sm:$0xff]
      %v1443 = vpack.c.bf16 %v1380, %v1379
      %v1444 = vpack.c.bf16 %v1382, %v1381
      %v1445 = vpack.c.bf16 %v1384, %v1383
      %v1446 = vpack.c.bf16 %v1386, %v1385
      %v1447 = vpack.c.bf16 %v1388, %v1387
      %v1448 = vpack.c.bf16 %v1390, %v1389
      %v1449 = vpack.c.bf16 %v1392, %v1391
      %v1450 = vpack.c.bf16 %v1394, %v1393
      %v1451 = vpack.c.bf16 %v1396, %v1395
      %v1452 = vpack.c.bf16 %v1398, %v1397
      %v1453 = vpack.c.bf16 %v1400, %v1399
      %v1454 = vpack.c.bf16 %v1402, %v1401
      %v1455 = vpack.c.bf16 %v1404, %v1403
      %v1456 = vpack.c.bf16 %v1406, %v1405
      %v1457 = vpack.c.bf16 %v1408, %v1407
      %v1458 = vpack.c.bf16 %v1410, %v1409
      %v1459 = vpack.c.bf16 %v1412, %v1411
      %v1460 = vpack.c.bf16 %v1414, %v1413
      %v1461 = vpack.c.bf16 %v1416, %v1415
      %v1462 = vpack.c.bf16 %v1418, %v1417
      %v1463 = vpack.c.bf16 %v1420, %v1419
      %v1464 = vpack.c.bf16 %v1422, %v1421
      %v1465 = vpack.c.bf16 %v1424, %v1423
      %v1466 = vpack.c.bf16 %v1426, %v1425
      %v1467 = vpack.c.bf16 %v1428, %v1427
      %v1468 = vpack.c.bf16 %v1430, %v1429
      %v1469 = vpack.c.bf16 %v1432, %v1431
      %v1470 = vpack.c.bf16 %v1434, %v1433
      %v1471 = vpack.c.bf16 %v1436, %v1435
      %v1472 = vpack.c.bf16 %v1438, %v1437
      %v1473 = vpack.c.bf16 %v1440, %v1439
      %v1474 = vpack.c.bf16 %v1442, %v1441
      %1507 = vrot.lane.b32.xlu0 %v1443, 40
      %v1508 = vpop.permute.xlu0 %1507
      %1509 = vrot.lane.b32.xlu0 %v1444, 40
      %v1510 = vpop.permute.xlu0 %1509
      %1511 = vrot.lane.b32.xlu0 %v1445, 40
      %v1512 = vpop.permute.xlu0 %1511
      %1513 = vrot.lane.b32.xlu0 %v1446, 40
      %v1514 = vpop.permute.xlu0 %1513
      %1515 = vrot.lane.b32.xlu0 %v1447, 40
      %v1516 = vpop.permute.xlu0 %1515
      %1517 = vrot.lane.b32.xlu0 %v1448, 40
      %v1518 = vpop.permute.xlu0 %1517
      %1519 = vrot.lane.b32.xlu0 %v1449, 40
      %v1520 = vpop.permute.xlu0 %1519
      %1521 = vrot.lane.b32.xlu0 %v1450, 40
      %v1522 = vpop.permute.xlu0 %1521
      %1523 = vrot.lane.b32.xlu0 %v1451, 40
      %v1524 = vpop.permute.xlu0 %1523
      %1525 = vrot.lane.b32.xlu0 %v1452, 40
      %v1526 = vpop.permute.xlu0 %1525
      %1527 = vrot.lane.b32.xlu0 %v1453, 40
      %v1528 = vpop.permute.xlu0 %1527
      %1529 = vrot.lane.b32.xlu0 %v1454, 40
      %v1530 = vpop.permute.xlu0 %1529
      %1531 = vrot.lane.b32.xlu0 %v1455, 40
      %v1532 = vpop.permute.xlu0 %1531
      %1533 = vrot.lane.b32.xlu0 %v1456, 40
      %v1534 = vpop.permute.xlu0 %1533
      %1535 = vrot.lane.b32.xlu0 %v1457, 40
      %v1536 = vpop.permute.xlu0 %1535
      %1537 = vrot.lane.b32.xlu0 %v1458, 40
      %v1538 = vpop.permute.xlu0 %1537
      %1539 = vrot.lane.b32.xlu0 %v1459, 40
      %v1540 = vpop.permute.xlu0 %1539
      %1541 = vrot.lane.b32.xlu0 %v1460, 40
      %v1542 = vpop.permute.xlu0 %1541
      %1543 = vrot.lane.b32.xlu0 %v1461, 40
      %v1544 = vpop.permute.xlu0 %1543
      %1545 = vrot.lane.b32.xlu0 %v1462, 40
      %v1546 = vpop.permute.xlu0 %1545
      %1547 = vrot.lane.b32.xlu0 %v1463, 40
      %v1548 = vpop.permute.xlu0 %1547
      %1549 = vrot.lane.b32.xlu0 %v1464, 40
      %v1550 = vpop.permute.xlu0 %1549
      %1551 = vrot.lane.b32.xlu0 %v1465, 40
      %v1552 = vpop.permute.xlu0 %1551
      %1553 = vrot.lane.b32.xlu0 %v1466, 40
      %v1554 = vpop.permute.xlu0 %1553
      %1555 = vrot.lane.b32.xlu0 %v1467, 40
      %v1556 = vpop.permute.xlu0 %1555
      %1557 = vrot.lane.b32.xlu0 %v1468, 40
      %v1558 = vpop.permute.xlu0 %1557
      %1559 = vrot.lane.b32.xlu0 %v1469, 40
      %v1560 = vpop.permute.xlu0 %1559
      %1561 = vrot.lane.b32.xlu0 %v1470, 40
      %v1562 = vpop.permute.xlu0 %1561
      %1563 = vrot.lane.b32.xlu0 %v1471, 40
      %v1564 = vpop.permute.xlu0 %1563
      %1565 = vrot.lane.b32.xlu0 %v1472, 40
      %v1566 = vpop.permute.xlu0 %1565
      %1567 = vrot.lane.b32.xlu0 %v1473, 40
      %v1568 = vpop.permute.xlu0 %1567
      %1569 = vrot.lane.b32.xlu0 %v1474, 40
      %v1570 = vpop.permute.xlu0 %1569
      %vm1603 = vcmask 392512
      %1604 = vst.msk [vmem:[#allocation2] sm:$0xff] %vm1603, %v1508
      %1605 = vst.msk [vmem:[#allocation2 + $0x18] sm:$0xff] %vm1603, %v1510
      %1606 = vst.msk [vmem:[#allocation2 + $0x30] sm:$0xff] %vm1603, %v1512
      %1607 = vst.msk [vmem:[#allocation2 + $0x48] sm:$0xff] %vm1603, %v1514
      %1608 = vst.msk [vmem:[#allocation2 + $0x60] sm:$0xff] %vm1603, %v1516
      %1609 = vst.msk [vmem:[#allocation2 + $0x78] sm:$0xff] %vm1603, %v1518
      %1610 = vst.msk [vmem:[#allocation2 + $0x90] sm:$0xff] %vm1603, %v1520
      %1611 = vst.msk [vmem:[#allocation2 + $0xa8] sm:$0xff] %vm1603, %v1522
      %1612 = vst.msk [vmem:[#allocation2 + $0xc0] sm:$0xff] %vm1603, %v1524
      %1613 = vst.msk [vmem:[#allocation2 + $0xd8] sm:$0xff] %vm1603, %v1526
      %1614 = vst.msk [vmem:[#allocation2 + $0xf0] sm:$0xff] %vm1603, %v1528
      %1615 = vst.msk [vmem:[#allocation2 + $0x108] sm:$0xff] %vm1603, %v1530
      %1616 = vst.msk [vmem:[#allocation2 + $0x120] sm:$0xff] %vm1603, %v1532
      %1617 = vst.msk [vmem:[#allocation2 + $0x138] sm:$0xff] %vm1603, %v1534
      %1618 = vst.msk [vmem:[#allocation2 + $0x150] sm:$0xff] %vm1603, %v1536
      %1619 = vst.msk [vmem:[#allocation2 + $0x168] sm:$0xff] %vm1603, %v1538
      %1620 = vst.msk [vmem:[#allocation2 + $0x180] sm:$0xff] %vm1603, %v1540
      %1621 = vst.msk [vmem:[#allocation2 + $0x198] sm:$0xff] %vm1603, %v1542
      %1622 = vst.msk [vmem:[#allocation2 + $0x1b0] sm:$0xff] %vm1603, %v1544
      %1623 = vst.msk [vmem:[#allocation2 + $0x1c8] sm:$0xff] %vm1603, %v1546
      %1624 = vst.msk [vmem:[#allocation2 + $0x1e0] sm:$0xff] %vm1603, %v1548
      %1625 = vst.msk [vmem:[#allocation2 + $0x1f8] sm:$0xff] %vm1603, %v1550
      %1626 = vst.msk [vmem:[#allocation2 + $0x210] sm:$0xff] %vm1603, %v1552
      %1627 = vst.msk [vmem:[#allocation2 + $0x228] sm:$0xff] %vm1603, %v1554
      %1628 = vst.msk [vmem:[#allocation2 + $0x240] sm:$0xff] %vm1603, %v1556
      %1629 = vst.msk [vmem:[#allocation2 + $0x258] sm:$0xff] %vm1603, %v1558
      %1630 = vst.msk [vmem:[#allocation2 + $0x270] sm:$0xff] %vm1603, %v1560
      %1631 = vst.msk [vmem:[#allocation2 + $0x288] sm:$0xff] %vm1603, %v1562
      %1632 = vst.msk [vmem:[#allocation2 + $0x2a0] sm:$0xff] %vm1603, %v1564
      %1633 = vst.msk [vmem:[#allocation2 + $0x2b8] sm:$0xff] %vm1603, %v1566
      %1634 = vst.msk [vmem:[#allocation2 + $0x2d0] sm:$0xff] %vm1603, %v1568
      %1635 = vst.msk [vmem:[#allocation2 + $0x2e8] sm:$0xff] %vm1603, %v1570
      %s1636 = sadd.s32 32, %s218
      %s1637 = scalar_lea.vmem %s207, %s1636
      %v1638 = vld [vmem:[%s1637] sm:$0xff]
      %v1639 = vld [vmem:[%s1637 + $0x10] sm:$0xff]
      %v1640 = vld [vmem:[%s1637 + $0x20] sm:$0xff]
      %v1641 = vld [vmem:[%s1637 + $0x30] sm:$0xff]
      %v1642 = vld [vmem:[%s1637 + $0x40] sm:$0xff]
      %v1643 = vld [vmem:[%s1637 + $0x50] sm:$0xff]
      %v1644 = vld [vmem:[%s1637 + $0x60] sm:$0xff]
      %v1645 = vld [vmem:[%s1637 + $0x70] sm:$0xff]
      %v1646 = vld [vmem:[%s1637 + $0xa0] sm:$0xff]
      %v1647 = vld [vmem:[%s1637 + $0xb0] sm:$0xff]
      %v1648 = vld [vmem:[%s1637 + $0xc0] sm:$0xff]
      %v1649 = vld [vmem:[%s1637 + $0xd0] sm:$0xff]
      %v1650 = vld [vmem:[%s1637 + $0xe0] sm:$0xff]
      %v1651 = vld [vmem:[%s1637 + $0xf0] sm:$0xff]
      %v1652 = vld [vmem:[%s1637 + $0x100] sm:$0xff]
      %v1653 = vld [vmem:[%s1637 + $0x110] sm:$0xff]
      %v1654 = vld [vmem:[%s1637 + $0x140] sm:$0xff]
      %v1655 = vld [vmem:[%s1637 + $0x150] sm:$0xff]
      %v1656 = vld [vmem:[%s1637 + $0x160] sm:$0xff]
      %v1657 = vld [vmem:[%s1637 + $0x170] sm:$0xff]
      %v1658 = vld [vmem:[%s1637 + $0x180] sm:$0xff]
      %v1659 = vld [vmem:[%s1637 + $0x190] sm:$0xff]
      %v1660 = vld [vmem:[%s1637 + $0x1a0] sm:$0xff]
      %v1661 = vld [vmem:[%s1637 + $0x1b0] sm:$0xff]
      %v1662 = vld [vmem:[%s1637 + $0x1e0] sm:$0xff]
      %v1663 = vld [vmem:[%s1637 + $0x1f0] sm:$0xff]
      %v1664 = vld [vmem:[%s1637 + $0x200] sm:$0xff]
      %v1665 = vld [vmem:[%s1637 + $0x210] sm:$0xff]
      %v1666 = vld [vmem:[%s1637 + $0x220] sm:$0xff]
      %v1667 = vld [vmem:[%s1637 + $0x230] sm:$0xff]
      %v1668 = vld [vmem:[%s1637 + $0x240] sm:$0xff]
      %v1669 = vld [vmem:[%s1637 + $0x250] sm:$0xff]
      %v1670 = vld [vmem:[%s1637 + $0x280] sm:$0xff]
      %v1671 = vld [vmem:[%s1637 + $0x290] sm:$0xff]
      %v1672 = vld [vmem:[%s1637 + $0x2a0] sm:$0xff]
      %v1673 = vld [vmem:[%s1637 + $0x2b0] sm:$0xff]
      %v1674 = vld [vmem:[%s1637 + $0x2c0] sm:$0xff]
      %v1675 = vld [vmem:[%s1637 + $0x2d0] sm:$0xff]
      %v1676 = vld [vmem:[%s1637 + $0x2e0] sm:$0xff]
      %v1677 = vld [vmem:[%s1637 + $0x2f0] sm:$0xff]
      %v1678 = vld [vmem:[%s1637 + $0x320] sm:$0xff]
      %v1679 = vld [vmem:[%s1637 + $0x330] sm:$0xff]
      %v1680 = vld [vmem:[%s1637 + $0x340] sm:$0xff]
      %v1681 = vld [vmem:[%s1637 + $0x350] sm:$0xff]
      %v1682 = vld [vmem:[%s1637 + $0x360] sm:$0xff]
      %v1683 = vld [vmem:[%s1637 + $0x370] sm:$0xff]
      %v1684 = vld [vmem:[%s1637 + $0x380] sm:$0xff]
      %v1685 = vld [vmem:[%s1637 + $0x390] sm:$0xff]
      %v1686 = vld [vmem:[%s1637 + $0x3c0] sm:$0xff]
      %v1687 = vld [vmem:[%s1637 + $0x3d0] sm:$0xff]
      %v1688 = vld [vmem:[%s1637 + $0x3e0] sm:$0xff]
      %v1689 = vld [vmem:[%s1637 + $0x3f0] sm:$0xff]
      %v1690 = vld [vmem:[%s1637 + $0x400] sm:$0xff]
      %v1691 = vld [vmem:[%s1637 + $0x410] sm:$0xff]
      %v1692 = vld [vmem:[%s1637 + $0x420] sm:$0xff]
      %v1693 = vld [vmem:[%s1637 + $0x430] sm:$0xff]
      %v1694 = vld [vmem:[%s1637 + $0x460] sm:$0xff]
      %v1695 = vld [vmem:[%s1637 + $0x470] sm:$0xff]
      %v1696 = vld [vmem:[%s1637 + $0x480] sm:$0xff]
      %v1697 = vld [vmem:[%s1637 + $0x490] sm:$0xff]
      %v1698 = vld [vmem:[%s1637 + $0x4a0] sm:$0xff]
      %v1699 = vld [vmem:[%s1637 + $0x4b0] sm:$0xff]
      %v1700 = vld [vmem:[%s1637 + $0x4c0] sm:$0xff]
      %v1701 = vld [vmem:[%s1637 + $0x4d0] sm:$0xff]
      %v1702 = vpack.c.bf16 %v1639, %v1638
      %v1703 = vpack.c.bf16 %v1641, %v1640
      %v1704 = vpack.c.bf16 %v1643, %v1642
      %v1705 = vpack.c.bf16 %v1645, %v1644
      %v1706 = vpack.c.bf16 %v1647, %v1646
      %v1707 = vpack.c.bf16 %v1649, %v1648
      %v1708 = vpack.c.bf16 %v1651, %v1650
      %v1709 = vpack.c.bf16 %v1653, %v1652
      %v1710 = vpack.c.bf16 %v1655, %v1654
      %v1711 = vpack.c.bf16 %v1657, %v1656
      %v1712 = vpack.c.bf16 %v1659, %v1658
      %v1713 = vpack.c.bf16 %v1661, %v1660
      %v1714 = vpack.c.bf16 %v1663, %v1662
      %v1715 = vpack.c.bf16 %v1665, %v1664
      %v1716 = vpack.c.bf16 %v1667, %v1666
      %v1717 = vpack.c.bf16 %v1669, %v1668
      %v1718 = vpack.c.bf16 %v1671, %v1670
      %v1719 = vpack.c.bf16 %v1673, %v1672
      %v1720 = vpack.c.bf16 %v1675, %v1674
      %v1721 = vpack.c.bf16 %v1677, %v1676
      %v1722 = vpack.c.bf16 %v1679, %v1678
      %v1723 = vpack.c.bf16 %v1681, %v1680
      %v1724 = vpack.c.bf16 %v1683, %v1682
      %v1725 = vpack.c.bf16 %v1685, %v1684
      %v1726 = vpack.c.bf16 %v1687, %v1686
      %v1727 = vpack.c.bf16 %v1689, %v1688
      %v1728 = vpack.c.bf16 %v1691, %v1690
      %v1729 = vpack.c.bf16 %v1693, %v1692
      %v1730 = vpack.c.bf16 %v1695, %v1694
      %v1731 = vpack.c.bf16 %v1697, %v1696
      %v1732 = vpack.c.bf16 %v1699, %v1698
      %v1733 = vpack.c.bf16 %v1701, %v1700
      %1766 = vrot.lane.b32.xlu0 %v1702, 48
      %v1767 = vpop.permute.xlu0 %1766
      %1768 = vrot.lane.b32.xlu0 %v1703, 48
      %v1769 = vpop.permute.xlu0 %1768
      %1770 = vrot.lane.b32.xlu0 %v1704, 48
      %v1771 = vpop.permute.xlu0 %1770
      %1772 = vrot.lane.b32.xlu0 %v1705, 48
      %v1773 = vpop.permute.xlu0 %1772
      %1774 = vrot.lane.b32.xlu0 %v1706, 48
      %v1775 = vpop.permute.xlu0 %1774
      %1776 = vrot.lane.b32.xlu0 %v1707, 48
      %v1777 = vpop.permute.xlu0 %1776
      %1778 = vrot.lane.b32.xlu0 %v1708, 48
      %v1779 = vpop.permute.xlu0 %1778
      %1780 = vrot.lane.b32.xlu0 %v1709, 48
      %v1781 = vpop.permute.xlu0 %1780
      %1782 = vrot.lane.b32.xlu0 %v1710, 48
      %v1783 = vpop.permute.xlu0 %1782
      %1784 = vrot.lane.b32.xlu0 %v1711, 48
      %v1785 = vpop.permute.xlu0 %1784
      %1786 = vrot.lane.b32.xlu0 %v1712, 48
      %v1787 = vpop.permute.xlu0 %1786
      %1788 = vrot.lane.b32.xlu0 %v1713, 48
      %v1789 = vpop.permute.xlu0 %1788
      %1790 = vrot.lane.b32.xlu0 %v1714, 48
      %v1791 = vpop.permute.xlu0 %1790
      %1792 = vrot.lane.b32.xlu0 %v1715, 48
      %v1793 = vpop.permute.xlu0 %1792
      %1794 = vrot.lane.b32.xlu0 %v1716, 48
      %v1795 = vpop.permute.xlu0 %1794
      %1796 = vrot.lane.b32.xlu0 %v1717, 48
      %v1797 = vpop.permute.xlu0 %1796
      %1798 = vrot.lane.b32.xlu0 %v1718, 48
      %v1799 = vpop.permute.xlu0 %1798
      %1800 = vrot.lane.b32.xlu0 %v1719, 48
      %v1801 = vpop.permute.xlu0 %1800
      %1802 = vrot.lane.b32.xlu0 %v1720, 48
      %v1803 = vpop.permute.xlu0 %1802
      %1804 = vrot.lane.b32.xlu0 %v1721, 48
      %v1805 = vpop.permute.xlu0 %1804
      %1806 = vrot.lane.b32.xlu0 %v1722, 48
      %v1807 = vpop.permute.xlu0 %1806
      %1808 = vrot.lane.b32.xlu0 %v1723, 48
      %v1809 = vpop.permute.xlu0 %1808
      %1810 = vrot.lane.b32.xlu0 %v1724, 48
      %v1811 = vpop.permute.xlu0 %1810
      %1812 = vrot.lane.b32.xlu0 %v1725, 48
      %v1813 = vpop.permute.xlu0 %1812
      %1814 = vrot.lane.b32.xlu0 %v1726, 48
      %v1815 = vpop.permute.xlu0 %1814
      %1816 = vrot.lane.b32.xlu0 %v1727, 48
      %v1817 = vpop.permute.xlu0 %1816
      %1818 = vrot.lane.b32.xlu0 %v1728, 48
      %v1819 = vpop.permute.xlu0 %1818
      %1820 = vrot.lane.b32.xlu0 %v1729, 48
      %v1821 = vpop.permute.xlu0 %1820
      %1822 = vrot.lane.b32.xlu0 %v1730, 48
      %v1823 = vpop.permute.xlu0 %1822
      %1824 = vrot.lane.b32.xlu0 %v1731, 48
      %v1825 = vpop.permute.xlu0 %1824
      %1826 = vrot.lane.b32.xlu0 %v1732, 48
      %v1827 = vpop.permute.xlu0 %1826
      %1828 = vrot.lane.b32.xlu0 %v1733, 48
      %v1829 = vpop.permute.xlu0 %1828
      %vm1862 = vcmask 458112
      %1863 = vst.msk [vmem:[#allocation2] sm:$0xff] %vm1862, %v1767
      %1864 = vst.msk [vmem:[#allocation2 + $0x18] sm:$0xff] %vm1862, %v1769
      %1865 = vst.msk [vmem:[#allocation2 + $0x30] sm:$0xff] %vm1862, %v1771
      %1866 = vst.msk [vmem:[#allocation2 + $0x48] sm:$0xff] %vm1862, %v1773
      %1867 = vst.msk [vmem:[#allocation2 + $0x60] sm:$0xff] %vm1862, %v1775
      %1868 = vst.msk [vmem:[#allocation2 + $0x78] sm:$0xff] %vm1862, %v1777
      %1869 = vst.msk [vmem:[#allocation2 + $0x90] sm:$0xff] %vm1862, %v1779
      %1870 = vst.msk [vmem:[#allocation2 + $0xa8] sm:$0xff] %vm1862, %v1781
      %1871 = vst.msk [vmem:[#allocation2 + $0xc0] sm:$0xff] %vm1862, %v1783
      %1872 = vst.msk [vmem:[#allocation2 + $0xd8] sm:$0xff] %vm1862, %v1785
      %1873 = vst.msk [vmem:[#allocation2 + $0xf0] sm:$0xff] %vm1862, %v1787
      %1874 = vst.msk [vmem:[#allocation2 + $0x108] sm:$0xff] %vm1862, %v1789
      %1875 = vst.msk [vmem:[#allocation2 + $0x120] sm:$0xff] %vm1862, %v1791
      %1876 = vst.msk [vmem:[#allocation2 + $0x138] sm:$0xff] %vm1862, %v1793
      %1877 = vst.msk [vmem:[#allocation2 + $0x150] sm:$0xff] %vm1862, %v1795
      %1878 = vst.msk [vmem:[#allocation2 + $0x168] sm:$0xff] %vm1862, %v1797
      %1879 = vst.msk [vmem:[#allocation2 + $0x180] sm:$0xff] %vm1862, %v1799
      %1880 = vst.msk [vmem:[#allocation2 + $0x198] sm:$0xff] %vm1862, %v1801
      %1881 = vst.msk [vmem:[#allocation2 + $0x1b0] sm:$0xff] %vm1862, %v1803
      %1882 = vst.msk [vmem:[#allocation2 + $0x1c8] sm:$0xff] %vm1862, %v1805
      %1883 = vst.msk [vmem:[#allocation2 + $0x1e0] sm:$0xff] %vm1862, %v1807
      %1884 = vst.msk [vmem:[#allocation2 + $0x1f8] sm:$0xff] %vm1862, %v1809
      %1885 = vst.msk [vmem:[#allocation2 + $0x210] sm:$0xff] %vm1862, %v1811
      %1886 = vst.msk [vmem:[#allocation2 + $0x228] sm:$0xff] %vm1862, %v1813
      %1887 = vst.msk [vmem:[#allocation2 + $0x240] sm:$0xff] %vm1862, %v1815
      %1888 = vst.msk [vmem:[#allocation2 + $0x258] sm:$0xff] %vm1862, %v1817
      %1889 = vst.msk [vmem:[#allocation2 + $0x270] sm:$0xff] %vm1862, %v1819
      %1890 = vst.msk [vmem:[#allocation2 + $0x288] sm:$0xff] %vm1862, %v1821
      %1891 = vst.msk [vmem:[#allocation2 + $0x2a0] sm:$0xff] %vm1862, %v1823
      %1892 = vst.msk [vmem:[#allocation2 + $0x2b8] sm:$0xff] %vm1862, %v1825
      %1893 = vst.msk [vmem:[#allocation2 + $0x2d0] sm:$0xff] %vm1862, %v1827
      %1894 = vst.msk [vmem:[#allocation2 + $0x2e8] sm:$0xff] %vm1862, %v1829
      %v1895 = vld [vmem:[%s1637 + $0x1] sm:$0xff]
      %v1896 = vld [vmem:[%s1637 + $0x11] sm:$0xff]
      %v1897 = vld [vmem:[%s1637 + $0x21] sm:$0xff]
      %v1898 = vld [vmem:[%s1637 + $0x31] sm:$0xff]
      %v1899 = vld [vmem:[%s1637 + $0x41] sm:$0xff]
      %v1900 = vld [vmem:[%s1637 + $0x51] sm:$0xff]
      %v1901 = vld [vmem:[%s1637 + $0x61] sm:$0xff]
      %v1902 = vld [vmem:[%s1637 + $0x71] sm:$0xff]
      %v1903 = vld [vmem:[%s1637 + $0xa1] sm:$0xff]
      %v1904 = vld [vmem:[%s1637 + $0xb1] sm:$0xff]
      %v1905 = vld [vmem:[%s1637 + $0xc1] sm:$0xff]
      %v1906 = vld [vmem:[%s1637 + $0xd1] sm:$0xff]
      %v1907 = vld [vmem:[%s1637 + $0xe1] sm:$0xff]
      %v1908 = vld [vmem:[%s1637 + $0xf1] sm:$0xff]
      %v1909 = vld [vmem:[%s1637 + $0x101] sm:$0xff]
      %v1910 = vld [vmem:[%s1637 + $0x111] sm:$0xff]
      %v1911 = vld [vmem:[%s1637 + $0x141] sm:$0xff]
      %v1912 = vld [vmem:[%s1637 + $0x151] sm:$0xff]
      %v1913 = vld [vmem:[%s1637 + $0x161] sm:$0xff]
      %v1914 = vld [vmem:[%s1637 + $0x171] sm:$0xff]
      %v1915 = vld [vmem:[%s1637 + $0x181] sm:$0xff]
      %v1916 = vld [vmem:[%s1637 + $0x191] sm:$0xff]
      %v1917 = vld [vmem:[%s1637 + $0x1a1] sm:$0xff]
      %v1918 = vld [vmem:[%s1637 + $0x1b1] sm:$0xff]
      %v1919 = vld [vmem:[%s1637 + $0x1e1] sm:$0xff]
      %v1920 = vld [vmem:[%s1637 + $0x1f1] sm:$0xff]
      %v1921 = vld [vmem:[%s1637 + $0x201] sm:$0xff]
      %v1922 = vld [vmem:[%s1637 + $0x211] sm:$0xff]
      %v1923 = vld [vmem:[%s1637 + $0x221] sm:$0xff]
      %v1924 = vld [vmem:[%s1637 + $0x231] sm:$0xff]
      %v1925 = vld [vmem:[%s1637 + $0x241] sm:$0xff]
      %v1926 = vld [vmem:[%s1637 + $0x251] sm:$0xff]
      %v1927 = vld [vmem:[%s1637 + $0x281] sm:$0xff]
      %v1928 = vld [vmem:[%s1637 + $0x291] sm:$0xff]
      %v1929 = vld [vmem:[%s1637 + $0x2a1] sm:$0xff]
      %v1930 = vld [vmem:[%s1637 + $0x2b1] sm:$0xff]
      %v1931 = vld [vmem:[%s1637 + $0x2c1] sm:$0xff]
      %v1932 = vld [vmem:[%s1637 + $0x2d1] sm:$0xff]
      %v1933 = vld [vmem:[%s1637 + $0x2e1] sm:$0xff]
      %v1934 = vld [vmem:[%s1637 + $0x2f1] sm:$0xff]
      %v1935 = vld [vmem:[%s1637 + $0x321] sm:$0xff]
      %v1936 = vld [vmem:[%s1637 + $0x331] sm:$0xff]
      %v1937 = vld [vmem:[%s1637 + $0x341] sm:$0xff]
      %v1938 = vld [vmem:[%s1637 + $0x351] sm:$0xff]
      %v1939 = vld [vmem:[%s1637 + $0x361] sm:$0xff]
      %v1940 = vld [vmem:[%s1637 + $0x371] sm:$0xff]
      %v1941 = vld [vmem:[%s1637 + $0x381] sm:$0xff]
      %v1942 = vld [vmem:[%s1637 + $0x391] sm:$0xff]
      %v1943 = vld [vmem:[%s1637 + $0x3c1] sm:$0xff]
      %v1944 = vld [vmem:[%s1637 + $0x3d1] sm:$0xff]
      %v1945 = vld [vmem:[%s1637 + $0x3e1] sm:$0xff]
      %v1946 = vld [vmem:[%s1637 + $0x3f1] sm:$0xff]
      %v1947 = vld [vmem:[%s1637 + $0x401] sm:$0xff]
      %v1948 = vld [vmem:[%s1637 + $0x411] sm:$0xff]
      %v1949 = vld [vmem:[%s1637 + $0x421] sm:$0xff]
      %v1950 = vld [vmem:[%s1637 + $0x431] sm:$0xff]
      %v1951 = vld [vmem:[%s1637 + $0x461] sm:$0xff]
      %v1952 = vld [vmem:[%s1637 + $0x471] sm:$0xff]
      %v1953 = vld [vmem:[%s1637 + $0x481] sm:$0xff]
      %v1954 = vld [vmem:[%s1637 + $0x491] sm:$0xff]
      %v1955 = vld [vmem:[%s1637 + $0x4a1] sm:$0xff]
      %v1956 = vld [vmem:[%s1637 + $0x4b1] sm:$0xff]
      %v1957 = vld [vmem:[%s1637 + $0x4c1] sm:$0xff]
      %v1958 = vld [vmem:[%s1637 + $0x4d1] sm:$0xff]
      %v1959 = vpack.c.bf16 %v1896, %v1895
      %v1960 = vpack.c.bf16 %v1898, %v1897
      %v1961 = vpack.c.bf16 %v1900, %v1899
      %v1962 = vpack.c.bf16 %v1902, %v1901
      %v1963 = vpack.c.bf16 %v1904, %v1903
      %v1964 = vpack.c.bf16 %v1906, %v1905
      %v1965 = vpack.c.bf16 %v1908, %v1907
      %v1966 = vpack.c.bf16 %v1910, %v1909
      %v1967 = vpack.c.bf16 %v1912, %v1911
      %v1968 = vpack.c.bf16 %v1914, %v1913
      %v1969 = vpack.c.bf16 %v1916, %v1915
      %v1970 = vpack.c.bf16 %v1918, %v1917
      %v1971 = vpack.c.bf16 %v1920, %v1919
      %v1972 = vpack.c.bf16 %v1922, %v1921
      %v1973 = vpack.c.bf16 %v1924, %v1923
      %v1974 = vpack.c.bf16 %v1926, %v1925
      %v1975 = vpack.c.bf16 %v1928, %v1927
      %v1976 = vpack.c.bf16 %v1930, %v1929
      %v1977 = vpack.c.bf16 %v1932, %v1931
      %v1978 = vpack.c.bf16 %v1934, %v1933
      %v1979 = vpack.c.bf16 %v1936, %v1935
      %v1980 = vpack.c.bf16 %v1938, %v1937
      %v1981 = vpack.c.bf16 %v1940, %v1939
      %v1982 = vpack.c.bf16 %v1942, %v1941
      %v1983 = vpack.c.bf16 %v1944, %v1943
      %v1984 = vpack.c.bf16 %v1946, %v1945
      %v1985 = vpack.c.bf16 %v1948, %v1947
      %v1986 = vpack.c.bf16 %v1950, %v1949
      %v1987 = vpack.c.bf16 %v1952, %v1951
      %v1988 = vpack.c.bf16 %v1954, %v1953
      %v1989 = vpack.c.bf16 %v1956, %v1955
      %v1990 = vpack.c.bf16 %v1958, %v1957
      %2023 = vrot.lane.b32.xlu0 %v1959, 56
      %v2024 = vpop.permute.xlu0 %2023
      %2025 = vrot.lane.b32.xlu0 %v1960, 56
      %v2026 = vpop.permute.xlu0 %2025
      %2027 = vrot.lane.b32.xlu0 %v1961, 56
      %v2028 = vpop.permute.xlu0 %2027
      %2029 = vrot.lane.b32.xlu0 %v1962, 56
      %v2030 = vpop.permute.xlu0 %2029
      %2031 = vrot.lane.b32.xlu0 %v1963, 56
      %v2032 = vpop.permute.xlu0 %2031
      %2033 = vrot.lane.b32.xlu0 %v1964, 56
      %v2034 = vpop.permute.xlu0 %2033
      %2035 = vrot.lane.b32.xlu0 %v1965, 56
      %v2036 = vpop.permute.xlu0 %2035
      %2037 = vrot.lane.b32.xlu0 %v1966, 56
      %v2038 = vpop.permute.xlu0 %2037
      %2039 = vrot.lane.b32.xlu0 %v1967, 56
      %v2040 = vpop.permute.xlu0 %2039
      %2041 = vrot.lane.b32.xlu0 %v1968, 56
      %v2042 = vpop.permute.xlu0 %2041
      %2043 = vrot.lane.b32.xlu0 %v1969, 56
      %v2044 = vpop.permute.xlu0 %2043
      %2045 = vrot.lane.b32.xlu0 %v1970, 56
      %v2046 = vpop.permute.xlu0 %2045
      %2047 = vrot.lane.b32.xlu0 %v1971, 56
      %v2048 = vpop.permute.xlu0 %2047
      %2049 = vrot.lane.b32.xlu0 %v1972, 56
      %v2050 = vpop.permute.xlu0 %2049
      %2051 = vrot.lane.b32.xlu0 %v1973, 56
      %v2052 = vpop.permute.xlu0 %2051
      %2053 = vrot.lane.b32.xlu0 %v1974, 56
      %v2054 = vpop.permute.xlu0 %2053
      %2055 = vrot.lane.b32.xlu0 %v1975, 56
      %v2056 = vpop.permute.xlu0 %2055
      %2057 = vrot.lane.b32.xlu0 %v1976, 56
      %v2058 = vpop.permute.xlu0 %2057
      %2059 = vrot.lane.b32.xlu0 %v1977, 56
      %v2060 = vpop.permute.xlu0 %2059
      %2061 = vrot.lane.b32.xlu0 %v1978, 56
      %v2062 = vpop.permute.xlu0 %2061
      %2063 = vrot.lane.b32.xlu0 %v1979, 56
      %v2064 = vpop.permute.xlu0 %2063
      %2065 = vrot.lane.b32.xlu0 %v1980, 56
      %v2066 = vpop.permute.xlu0 %2065
      %2067 = vrot.lane.b32.xlu0 %v1981, 56
      %v2068 = vpop.permute.xlu0 %2067
      %2069 = vrot.lane.b32.xlu0 %v1982, 56
      %v2070 = vpop.permute.xlu0 %2069
      %2071 = vrot.lane.b32.xlu0 %v1983, 56
      %v2072 = vpop.permute.xlu0 %2071
      %2073 = vrot.lane.b32.xlu0 %v1984, 56
      %v2074 = vpop.permute.xlu0 %2073
      %2075 = vrot.lane.b32.xlu0 %v1985, 56
      %v2076 = vpop.permute.xlu0 %2075
      %2077 = vrot.lane.b32.xlu0 %v1986, 56
      %v2078 = vpop.permute.xlu0 %2077
      %2079 = vrot.lane.b32.xlu0 %v1987, 56
      %v2080 = vpop.permute.xlu0 %2079
      %2081 = vrot.lane.b32.xlu0 %v1988, 56
      %v2082 = vpop.permute.xlu0 %2081
      %2083 = vrot.lane.b32.xlu0 %v1989, 56
      %v2084 = vpop.permute.xlu0 %2083
      %2085 = vrot.lane.b32.xlu0 %v1990, 56
      %v2086 = vpop.permute.xlu0 %2085
      %vm2119 = vcmask 523712
      %2120 = vst.msk [vmem:[#allocation2] sm:$0xff] %vm2119, %v2024
      %2121 = vst.msk [vmem:[#allocation2 + $0x18] sm:$0xff] %vm2119, %v2026
      %2122 = vst.msk [vmem:[#allocation2 + $0x30] sm:$0xff] %vm2119, %v2028
      %2123 = vst.msk [vmem:[#allocation2 + $0x48] sm:$0xff] %vm2119, %v2030
      %2124 = vst.msk [vmem:[#allocation2 + $0x60] sm:$0xff] %vm2119, %v2032
      %2125 = vst.msk [vmem:[#allocation2 + $0x78] sm:$0xff] %vm2119, %v2034
      %2126 = vst.msk [vmem:[#allocation2 + $0x90] sm:$0xff] %vm2119, %v2036
      %2127 = vst.msk [vmem:[#allocation2 + $0xa8] sm:$0xff] %vm2119, %v2038
      %2128 = vst.msk [vmem:[#allocation2 + $0xc0] sm:$0xff] %vm2119, %v2040
      %2129 = vst.msk [vmem:[#allocation2 + $0xd8] sm:$0xff] %vm2119, %v2042
      %2130 = vst.msk [vmem:[#allocation2 + $0xf0] sm:$0xff] %vm2119, %v2044
      %2131 = vst.msk [vmem:[#allocation2 + $0x108] sm:$0xff] %vm2119, %v2046
      %2132 = vst.msk [vmem:[#allocation2 + $0x120] sm:$0xff] %vm2119, %v2048
      %2133 = vst.msk [vmem:[#allocation2 + $0x138] sm:$0xff] %vm2119, %v2050
      %2134 = vst.msk [vmem:[#allocation2 + $0x150] sm:$0xff] %vm2119, %v2052
      %2135 = vst.msk [vmem:[#allocation2 + $0x168] sm:$0xff] %vm2119, %v2054
      %2136 = vst.msk [vmem:[#allocation2 + $0x180] sm:$0xff] %vm2119, %v2056
      %2137 = vst.msk [vmem:[#allocation2 + $0x198] sm:$0xff] %vm2119, %v2058
      %2138 = vst.msk [vmem:[#allocation2 + $0x1b0] sm:$0xff] %vm2119, %v2060
      %2139 = vst.msk [vmem:[#allocation2 + $0x1c8] sm:$0xff] %vm2119, %v2062
      %2140 = vst.msk [vmem:[#allocation2 + $0x1e0] sm:$0xff] %vm2119, %v2064
      %2141 = vst.msk [vmem:[#allocation2 + $0x1f8] sm:$0xff] %vm2119, %v2066
      %2142 = vst.msk [vmem:[#allocation2 + $0x210] sm:$0xff] %vm2119, %v2068
      %2143 = vst.msk [vmem:[#allocation2 + $0x228] sm:$0xff] %vm2119, %v2070
      %2144 = vst.msk [vmem:[#allocation2 + $0x240] sm:$0xff] %vm2119, %v2072
      %2145 = vst.msk [vmem:[#allocation2 + $0x258] sm:$0xff] %vm2119, %v2074
      %2146 = vst.msk [vmem:[#allocation2 + $0x270] sm:$0xff] %vm2119, %v2076
      %2147 = vst.msk [vmem:[#allocation2 + $0x288] sm:$0xff] %vm2119, %v2078
      %2148 = vst.msk [vmem:[#allocation2 + $0x2a0] sm:$0xff] %vm2119, %v2080
      %2149 = vst.msk [vmem:[#allocation2 + $0x2b8] sm:$0xff] %vm2119, %v2082
      %2150 = vst.msk [vmem:[#allocation2 + $0x2d0] sm:$0xff] %vm2119, %v2084
      %2151 = vst.msk [vmem:[#allocation2 + $0x2e8] sm:$0xff] %vm2119, %v2086
      %v2152 = vld [vmem:[%s1637 + $0x2] sm:$0xff]
      %v2153 = vld [vmem:[%s1637 + $0x12] sm:$0xff]
      %v2154 = vld [vmem:[%s1637 + $0x22] sm:$0xff]
      %v2155 = vld [vmem:[%s1637 + $0x32] sm:$0xff]
      %v2156 = vld [vmem:[%s1637 + $0x42] sm:$0xff]
      %v2157 = vld [vmem:[%s1637 + $0x52] sm:$0xff]
      %v2158 = vld [vmem:[%s1637 + $0x62] sm:$0xff]
      %v2159 = vld [vmem:[%s1637 + $0x72] sm:$0xff]
      %v2160 = vld [vmem:[%s1637 + $0xa2] sm:$0xff]
      %v2161 = vld [vmem:[%s1637 + $0xb2] sm:$0xff]
      %v2162 = vld [vmem:[%s1637 + $0xc2] sm:$0xff]
      %v2163 = vld [vmem:[%s1637 + $0xd2] sm:$0xff]
      %v2164 = vld [vmem:[%s1637 + $0xe2] sm:$0xff]
      %v2165 = vld [vmem:[%s1637 + $0xf2] sm:$0xff]
      %v2166 = vld [vmem:[%s1637 + $0x102] sm:$0xff]
      %v2167 = vld [vmem:[%s1637 + $0x112] sm:$0xff]
      %v2168 = vld [vmem:[%s1637 + $0x142] sm:$0xff]
      %v2169 = vld [vmem:[%s1637 + $0x152] sm:$0xff]
      %v2170 = vld [vmem:[%s1637 + $0x162] sm:$0xff]
      %v2171 = vld [vmem:[%s1637 + $0x172] sm:$0xff]
      %v2172 = vld [vmem:[%s1637 + $0x182] sm:$0xff]
      %v2173 = vld [vmem:[%s1637 + $0x192] sm:$0xff]
      %v2174 = vld [vmem:[%s1637 + $0x1a2] sm:$0xff]
      %v2175 = vld [vmem:[%s1637 + $0x1b2] sm:$0xff]
      %v2176 = vld [vmem:[%s1637 + $0x1e2] sm:$0xff]
      %v2177 = vld [vmem:[%s1637 + $0x1f2] sm:$0xff]
      %v2178 = vld [vmem:[%s1637 + $0x202] sm:$0xff]
      %v2179 = vld [vmem:[%s1637 + $0x212] sm:$0xff]
      %v2180 = vld [vmem:[%s1637 + $0x222] sm:$0xff]
      %v2181 = vld [vmem:[%s1637 + $0x232] sm:$0xff]
      %v2182 = vld [vmem:[%s1637 + $0x242] sm:$0xff]
      %v2183 = vld [vmem:[%s1637 + $0x252] sm:$0xff]
      %v2184 = vld [vmem:[%s1637 + $0x282] sm:$0xff]
      %v2185 = vld [vmem:[%s1637 + $0x292] sm:$0xff]
      %v2186 = vld [vmem:[%s1637 + $0x2a2] sm:$0xff]
      %v2187 = vld [vmem:[%s1637 + $0x2b2] sm:$0xff]
      %v2188 = vld [vmem:[%s1637 + $0x2c2] sm:$0xff]
      %v2189 = vld [vmem:[%s1637 + $0x2d2] sm:$0xff]
      %v2190 = vld [vmem:[%s1637 + $0x2e2] sm:$0xff]
      %v2191 = vld [vmem:[%s1637 + $0x2f2] sm:$0xff]
      %v2192 = vld [vmem:[%s1637 + $0x322] sm:$0xff]
      %v2193 = vld [vmem:[%s1637 + $0x332] sm:$0xff]
      %v2194 = vld [vmem:[%s1637 + $0x342] sm:$0xff]
      %v2195 = vld [vmem:[%s1637 + $0x352] sm:$0xff]
      %v2196 = vld [vmem:[%s1637 + $0x362] sm:$0xff]
      %v2197 = vld [vmem:[%s1637 + $0x372] sm:$0xff]
      %v2198 = vld [vmem:[%s1637 + $0x382] sm:$0xff]
      %v2199 = vld [vmem:[%s1637 + $0x392] sm:$0xff]
      %v2200 = vld [vmem:[%s1637 + $0x3c2] sm:$0xff]
      %v2201 = vld [vmem:[%s1637 + $0x3d2] sm:$0xff]
      %v2202 = vld [vmem:[%s1637 + $0x3e2] sm:$0xff]
      %v2203 = vld [vmem:[%s1637 + $0x3f2] sm:$0xff]
      %v2204 = vld [vmem:[%s1637 + $0x402] sm:$0xff]
      %v2205 = vld [vmem:[%s1637 + $0x412] sm:$0xff]
      %v2206 = vld [vmem:[%s1637 + $0x422] sm:$0xff]
      %v2207 = vld [vmem:[%s1637 + $0x432] sm:$0xff]
      %v2208 = vld [vmem:[%s1637 + $0x462] sm:$0xff]
      %v2209 = vld [vmem:[%s1637 + $0x472] sm:$0xff]
      %v2210 = vld [vmem:[%s1637 + $0x482] sm:$0xff]
      %v2211 = vld [vmem:[%s1637 + $0x492] sm:$0xff]
      %v2212 = vld [vmem:[%s1637 + $0x4a2] sm:$0xff]
      %v2213 = vld [vmem:[%s1637 + $0x4b2] sm:$0xff]
      %v2214 = vld [vmem:[%s1637 + $0x4c2] sm:$0xff]
      %v2215 = vld [vmem:[%s1637 + $0x4d2] sm:$0xff]
      %v2216 = vpack.c.bf16 %v2153, %v2152
      %v2217 = vpack.c.bf16 %v2155, %v2154
      %v2218 = vpack.c.bf16 %v2157, %v2156
      %v2219 = vpack.c.bf16 %v2159, %v2158
      %v2220 = vpack.c.bf16 %v2161, %v2160
      %v2221 = vpack.c.bf16 %v2163, %v2162
      %v2222 = vpack.c.bf16 %v2165, %v2164
      %v2223 = vpack.c.bf16 %v2167, %v2166
      %v2224 = vpack.c.bf16 %v2169, %v2168
      %v2225 = vpack.c.bf16 %v2171, %v2170
      %v2226 = vpack.c.bf16 %v2173, %v2172
      %v2227 = vpack.c.bf16 %v2175, %v2174
      %v2228 = vpack.c.bf16 %v2177, %v2176
      %v2229 = vpack.c.bf16 %v2179, %v2178
      %v2230 = vpack.c.bf16 %v2181, %v2180
      %v2231 = vpack.c.bf16 %v2183, %v2182
      %v2232 = vpack.c.bf16 %v2185, %v2184
      %v2233 = vpack.c.bf16 %v2187, %v2186
      %v2234 = vpack.c.bf16 %v2189, %v2188
      %v2235 = vpack.c.bf16 %v2191, %v2190
      %v2236 = vpack.c.bf16 %v2193, %v2192
      %v2237 = vpack.c.bf16 %v2195, %v2194
      %v2238 = vpack.c.bf16 %v2197, %v2196
      %v2239 = vpack.c.bf16 %v2199, %v2198
      %v2240 = vpack.c.bf16 %v2201, %v2200
      %v2241 = vpack.c.bf16 %v2203, %v2202
      %v2242 = vpack.c.bf16 %v2205, %v2204
      %v2243 = vpack.c.bf16 %v2207, %v2206
      %v2244 = vpack.c.bf16 %v2209, %v2208
      %v2245 = vpack.c.bf16 %v2211, %v2210
      %v2246 = vpack.c.bf16 %v2213, %v2212
      %v2247 = vpack.c.bf16 %v2215, %v2214
      %2280 = vrot.lane.b32.xlu0 %v2216, 64
      %v2281 = vpop.permute.xlu0 %2280
      %2282 = vrot.lane.b32.xlu0 %v2217, 64
      %v2283 = vpop.permute.xlu0 %2282
      %2284 = vrot.lane.b32.xlu0 %v2218, 64
      %v2285 = vpop.permute.xlu0 %2284
      %2286 = vrot.lane.b32.xlu0 %v2219, 64
      %v2287 = vpop.permute.xlu0 %2286
      %2288 = vrot.lane.b32.xlu0 %v2220, 64
      %v2289 = vpop.permute.xlu0 %2288
      %2290 = vrot.lane.b32.xlu0 %v2221, 64
      %v2291 = vpop.permute.xlu0 %2290
      %2292 = vrot.lane.b32.xlu0 %v2222, 64
      %v2293 = vpop.permute.xlu0 %2292
      %2294 = vrot.lane.b32.xlu0 %v2223, 64
      %v2295 = vpop.permute.xlu0 %2294
      %2296 = vrot.lane.b32.xlu0 %v2224, 64
      %v2297 = vpop.permute.xlu0 %2296
      %2298 = vrot.lane.b32.xlu0 %v2225, 64
      %v2299 = vpop.permute.xlu0 %2298
      %2300 = vrot.lane.b32.xlu0 %v2226, 64
      %v2301 = vpop.permute.xlu0 %2300
      %2302 = vrot.lane.b32.xlu0 %v2227, 64
      %v2303 = vpop.permute.xlu0 %2302
      %2304 = vrot.lane.b32.xlu0 %v2228, 64
      %v2305 = vpop.permute.xlu0 %2304
      %2306 = vrot.lane.b32.xlu0 %v2229, 64
      %v2307 = vpop.permute.xlu0 %2306
      %2308 = vrot.lane.b32.xlu0 %v2230, 64
      %v2309 = vpop.permute.xlu0 %2308
      %2310 = vrot.lane.b32.xlu0 %v2231, 64
      %v2311 = vpop.permute.xlu0 %2310
      %2312 = vrot.lane.b32.xlu0 %v2232, 64
      %v2313 = vpop.permute.xlu0 %2312
      %2314 = vrot.lane.b32.xlu0 %v2233, 64
      %v2315 = vpop.permute.xlu0 %2314
      %2316 = vrot.lane.b32.xlu0 %v2234, 64
      %v2317 = vpop.permute.xlu0 %2316
      %2318 = vrot.lane.b32.xlu0 %v2235, 64
      %v2319 = vpop.permute.xlu0 %2318
      %2320 = vrot.lane.b32.xlu0 %v2236, 64
      %v2321 = vpop.permute.xlu0 %2320
      %2322 = vrot.lane.b32.xlu0 %v2237, 64
      %v2323 = vpop.permute.xlu0 %2322
      %2324 = vrot.lane.b32.xlu0 %v2238, 64
      %v2325 = vpop.permute.xlu0 %2324
      %2326 = vrot.lane.b32.xlu0 %v2239, 64
      %v2327 = vpop.permute.xlu0 %2326
      %2328 = vrot.lane.b32.xlu0 %v2240, 64
      %v2329 = vpop.permute.xlu0 %2328
      %2330 = vrot.lane.b32.xlu0 %v2241, 64
      %v2331 = vpop.permute.xlu0 %2330
      %2332 = vrot.lane.b32.xlu0 %v2242, 64
      %v2333 = vpop.permute.xlu0 %2332
      %2334 = vrot.lane.b32.xlu0 %v2243, 64
      %v2335 = vpop.permute.xlu0 %2334
      %2336 = vrot.lane.b32.xlu0 %v2244, 64
      %v2337 = vpop.permute.xlu0 %2336
      %2338 = vrot.lane.b32.xlu0 %v2245, 64
      %v2339 = vpop.permute.xlu0 %2338
      %2340 = vrot.lane.b32.xlu0 %v2246, 64
      %v2341 = vpop.permute.xlu0 %2340
      %2342 = vrot.lane.b32.xlu0 %v2247, 64
      %v2343 = vpop.permute.xlu0 %2342
      %vm2376 = vcmask 589312
      %2377 = vst.msk [vmem:[#allocation2] sm:$0xff] %vm2376, %v2281
      %2378 = vst.msk [vmem:[#allocation2 + $0x18] sm:$0xff] %vm2376, %v2283
      %2379 = vst.msk [vmem:[#allocation2 + $0x30] sm:$0xff] %vm2376, %v2285
      %2380 = vst.msk [vmem:[#allocation2 + $0x48] sm:$0xff] %vm2376, %v2287
      %2381 = vst.msk [vmem:[#allocation2 + $0x60] sm:$0xff] %vm2376, %v2289
      %2382 = vst.msk [vmem:[#allocation2 + $0x78] sm:$0xff] %vm2376, %v2291
      %2383 = vst.msk [vmem:[#allocation2 + $0x90] sm:$0xff] %vm2376, %v2293
      %2384 = vst.msk [vmem:[#allocation2 + $0xa8] sm:$0xff] %vm2376, %v2295
      %2385 = vst.msk [vmem:[#allocation2 + $0xc0] sm:$0xff] %vm2376, %v2297
      %2386 = vst.msk [vmem:[#allocation2 + $0xd8] sm:$0xff] %vm2376, %v2299
      %2387 = vst.msk [vmem:[#allocation2 + $0xf0] sm:$0xff] %vm2376, %v2301
      %2388 = vst.msk [vmem:[#allocation2 + $0x108] sm:$0xff] %vm2376, %v2303
      %2389 = vst.msk [vmem:[#allocation2 + $0x120] sm:$0xff] %vm2376, %v2305
      %2390 = vst.msk [vmem:[#allocation2 + $0x138] sm:$0xff] %vm2376, %v2307
      %2391 = vst.msk [vmem:[#allocation2 + $0x150] sm:$0xff] %vm2376, %v2309
      %2392 = vst.msk [vmem:[#allocation2 + $0x168] sm:$0xff] %vm2376, %v2311
      %2393 = vst.msk [vmem:[#allocation2 + $0x180] sm:$0xff] %vm2376, %v2313
      %2394 = vst.msk [vmem:[#allocation2 + $0x198] sm:$0xff] %vm2376, %v2315
      %2395 = vst.msk [vmem:[#allocation2 + $0x1b0] sm:$0xff] %vm2376, %v2317
      %2396 = vst.msk [vmem:[#allocation2 + $0x1c8] sm:$0xff] %vm2376, %v2319
      %2397 = vst.msk [vmem:[#allocation2 + $0x1e0] sm:$0xff] %vm2376, %v2321
      %2398 = vst.msk [vmem:[#allocation2 + $0x1f8] sm:$0xff] %vm2376, %v2323
      %2399 = vst.msk [vmem:[#allocation2 + $0x210] sm:$0xff] %vm2376, %v2325
      %2400 = vst.msk [vmem:[#allocation2 + $0x228] sm:$0xff] %vm2376, %v2327
      %2401 = vst.msk [vmem:[#allocation2 + $0x240] sm:$0xff] %vm2376, %v2329
      %2402 = vst.msk [vmem:[#allocation2 + $0x258] sm:$0xff] %vm2376, %v2331
      %2403 = vst.msk [vmem:[#allocation2 + $0x270] sm:$0xff] %vm2376, %v2333
      %2404 = vst.msk [vmem:[#allocation2 + $0x288] sm:$0xff] %vm2376, %v2335
      %2405 = vst.msk [vmem:[#allocation2 + $0x2a0] sm:$0xff] %vm2376, %v2337
      %2406 = vst.msk [vmem:[#allocation2 + $0x2b8] sm:$0xff] %vm2376, %v2339
      %2407 = vst.msk [vmem:[#allocation2 + $0x2d0] sm:$0xff] %vm2376, %v2341
      %2408 = vst.msk [vmem:[#allocation2 + $0x2e8] sm:$0xff] %vm2376, %v2343
      %s2409 = sadd.s32 %s217, 1
      %s2410 = smul.u32 %s2409, 160
      %s2411 = scalar_lea.vmem %s207, %s2410
      %v2412 = vld [vmem:[%s2411] sm:$0xff]
      %v2413 = vld [vmem:[%s2411 + $0x10] sm:$0xff]
      %v2414 = vld [vmem:[%s2411 + $0x20] sm:$0xff]
      %v2415 = vld [vmem:[%s2411 + $0x30] sm:$0xff]
      %v2416 = vld [vmem:[%s2411 + $0x40] sm:$0xff]
      %v2417 = vld [vmem:[%s2411 + $0x50] sm:$0xff]
      %v2418 = vld [vmem:[%s2411 + $0x60] sm:$0xff]
      %v2419 = vld [vmem:[%s2411 + $0x70] sm:$0xff]
      %v2420 = vld [vmem:[%s2411 + $0xa0] sm:$0xff]
      %v2421 = vld [vmem:[%s2411 + $0xb0] sm:$0xff]
      %v2422 = vld [vmem:[%s2411 + $0xc0] sm:$0xff]
      %v2423 = vld [vmem:[%s2411 + $0xd0] sm:$0xff]
      %v2424 = vld [vmem:[%s2411 + $0xe0] sm:$0xff]
      %v2425 = vld [vmem:[%s2411 + $0xf0] sm:$0xff]
      %v2426 = vld [vmem:[%s2411 + $0x100] sm:$0xff]
      %v2427 = vld [vmem:[%s2411 + $0x110] sm:$0xff]
      %v2428 = vld [vmem:[%s2411 + $0x140] sm:$0xff]
      %v2429 = vld [vmem:[%s2411 + $0x150] sm:$0xff]
      %v2430 = vld [vmem:[%s2411 + $0x160] sm:$0xff]
      %v2431 = vld [vmem:[%s2411 + $0x170] sm:$0xff]
      %v2432 = vld [vmem:[%s2411 + $0x180] sm:$0xff]
      %v2433 = vld [vmem:[%s2411 + $0x190] sm:$0xff]
      %v2434 = vld [vmem:[%s2411 + $0x1a0] sm:$0xff]
      %v2435 = vld [vmem:[%s2411 + $0x1b0] sm:$0xff]
      %v2436 = vld [vmem:[%s2411 + $0x1e0] sm:$0xff]
      %v2437 = vld [vmem:[%s2411 + $0x1f0] sm:$0xff]
      %v2438 = vld [vmem:[%s2411 + $0x200] sm:$0xff]
      %v2439 = vld [vmem:[%s2411 + $0x210] sm:$0xff]
      %v2440 = vld [vmem:[%s2411 + $0x220] sm:$0xff]
      %v2441 = vld [vmem:[%s2411 + $0x230] sm:$0xff]
      %v2442 = vld [vmem:[%s2411 + $0x240] sm:$0xff]
      %v2443 = vld [vmem:[%s2411 + $0x250] sm:$0xff]
      %v2444 = vld [vmem:[%s2411 + $0x280] sm:$0xff]
      %v2445 = vld [vmem:[%s2411 + $0x290] sm:$0xff]
      %v2446 = vld [vmem:[%s2411 + $0x2a0] sm:$0xff]
      %v2447 = vld [vmem:[%s2411 + $0x2b0] sm:$0xff]
      %v2448 = vld [vmem:[%s2411 + $0x2c0] sm:$0xff]
      %v2449 = vld [vmem:[%s2411 + $0x2d0] sm:$0xff]
      %v2450 = vld [vmem:[%s2411 + $0x2e0] sm:$0xff]
      %v2451 = vld [vmem:[%s2411 + $0x2f0] sm:$0xff]
      %v2452 = vld [vmem:[%s2411 + $0x320] sm:$0xff]
      %v2453 = vld [vmem:[%s2411 + $0x330] sm:$0xff]
      %v2454 = vld [vmem:[%s2411 + $0x340] sm:$0xff]
      %v2455 = vld [vmem:[%s2411 + $0x350] sm:$0xff]
      %v2456 = vld [vmem:[%s2411 + $0x360] sm:$0xff]
      %v2457 = vld [vmem:[%s2411 + $0x370] sm:$0xff]
      %v2458 = vld [vmem:[%s2411 + $0x380] sm:$0xff]
      %v2459 = vld [vmem:[%s2411 + $0x390] sm:$0xff]
      %v2460 = vld [vmem:[%s2411 + $0x3c0] sm:$0xff]
      %v2461 = vld [vmem:[%s2411 + $0x3d0] sm:$0xff]
      %v2462 = vld [vmem:[%s2411 + $0x3e0] sm:$0xff]
      %v2463 = vld [vmem:[%s2411 + $0x3f0] sm:$0xff]
      %v2464 = vld [vmem:[%s2411 + $0x400] sm:$0xff]
      %v2465 = vld [vmem:[%s2411 + $0x410] sm:$0xff]
      %v2466 = vld [vmem:[%s2411 + $0x420] sm:$0xff]
      %v2467 = vld [vmem:[%s2411 + $0x430] sm:$0xff]
      %v2468 = vld [vmem:[%s2411 + $0x460] sm:$0xff]
      %v2469 = vld [vmem:[%s2411 + $0x470] sm:$0xff]
      %v2470 = vld [vmem:[%s2411 + $0x480] sm:$0xff]
      %v2471 = vld [vmem:[%s2411 + $0x490] sm:$0xff]
      %v2472 = vld [vmem:[%s2411 + $0x4a0] sm:$0xff]
      %v2473 = vld [vmem:[%s2411 + $0x4b0] sm:$0xff]
      %v2474 = vld [vmem:[%s2411 + $0x4c0] sm:$0xff]
      %v2475 = vld [vmem:[%s2411 + $0x4d0] sm:$0xff]
      %v2476 = vpack.c.bf16 %v2413, %v2412
      %v2477 = vpack.c.bf16 %v2415, %v2414
      %v2478 = vpack.c.bf16 %v2417, %v2416
      %v2479 = vpack.c.bf16 %v2419, %v2418
      %v2480 = vpack.c.bf16 %v2421, %v2420
      %v2481 = vpack.c.bf16 %v2423, %v2422
      %v2482 = vpack.c.bf16 %v2425, %v2424
      %v2483 = vpack.c.bf16 %v2427, %v2426
      %v2484 = vpack.c.bf16 %v2429, %v2428
      %v2485 = vpack.c.bf16 %v2431, %v2430
      %v2486 = vpack.c.bf16 %v2433, %v2432
      %v2487 = vpack.c.bf16 %v2435, %v2434
      %v2488 = vpack.c.bf16 %v2437, %v2436
      %v2489 = vpack.c.bf16 %v2439, %v2438
      %v2490 = vpack.c.bf16 %v2441, %v2440
      %v2491 = vpack.c.bf16 %v2443, %v2442
      %v2492 = vpack.c.bf16 %v2445, %v2444
      %v2493 = vpack.c.bf16 %v2447, %v2446
      %v2494 = vpack.c.bf16 %v2449, %v2448
      %v2495 = vpack.c.bf16 %v2451, %v2450
      %v2496 = vpack.c.bf16 %v2453, %v2452
      %v2497 = vpack.c.bf16 %v2455, %v2454
      %v2498 = vpack.c.bf16 %v2457, %v2456
      %v2499 = vpack.c.bf16 %v2459, %v2458
      %v2500 = vpack.c.bf16 %v2461, %v2460
      %v2501 = vpack.c.bf16 %v2463, %v2462
      %v2502 = vpack.c.bf16 %v2465, %v2464
      %v2503 = vpack.c.bf16 %v2467, %v2466
      %v2504 = vpack.c.bf16 %v2469, %v2468
      %v2505 = vpack.c.bf16 %v2471, %v2470
      %v2506 = vpack.c.bf16 %v2473, %v2472
      %v2507 = vpack.c.bf16 %v2475, %v2474
      %2540 = vrot.lane.b32.xlu0 %v2476, 72
      %v2541 = vpop.permute.xlu0 %2540
      %2542 = vrot.lane.b32.xlu0 %v2477, 72
      %v2543 = vpop.permute.xlu0 %2542
      %2544 = vrot.lane.b32.xlu0 %v2478, 72
      %v2545 = vpop.permute.xlu0 %2544
      %2546 = vrot.lane.b32.xlu0 %v2479, 72
      %v2547 = vpop.permute.xlu0 %2546
      %2548 = vrot.lane.b32.xlu0 %v2480, 72
      %v2549 = vpop.permute.xlu0 %2548
      %2550 = vrot.lane.b32.xlu0 %v2481, 72
      %v2551 = vpop.permute.xlu0 %2550
      %2552 = vrot.lane.b32.xlu0 %v2482, 72
      %v2553 = vpop.permute.xlu0 %2552
      %2554 = vrot.lane.b32.xlu0 %v2483, 72
      %v2555 = vpop.permute.xlu0 %2554
      %2556 = vrot.lane.b32.xlu0 %v2484, 72
      %v2557 = vpop.permute.xlu0 %2556
      %2558 = vrot.lane.b32.xlu0 %v2485, 72
      %v2559 = vpop.permute.xlu0 %2558
      %2560 = vrot.lane.b32.xlu0 %v2486, 72
      %v2561 = vpop.permute.xlu0 %2560
      %2562 = vrot.lane.b32.xlu0 %v2487, 72
      %v2563 = vpop.permute.xlu0 %2562
      %2564 = vrot.lane.b32.xlu0 %v2488, 72
      %v2565 = vpop.permute.xlu0 %2564
      %2566 = vrot.lane.b32.xlu0 %v2489, 72
      %v2567 = vpop.permute.xlu0 %2566
      %2568 = vrot.lane.b32.xlu0 %v2490, 72
      %v2569 = vpop.permute.xlu0 %2568
      %2570 = vrot.lane.b32.xlu0 %v2491, 72
      %v2571 = vpop.permute.xlu0 %2570
      %2572 = vrot.lane.b32.xlu0 %v2492, 72
      %v2573 = vpop.permute.xlu0 %2572
      %2574 = vrot.lane.b32.xlu0 %v2493, 72
      %v2575 = vpop.permute.xlu0 %2574
      %2576 = vrot.lane.b32.xlu0 %v2494, 72
      %v2577 = vpop.permute.xlu0 %2576
      %2578 = vrot.lane.b32.xlu0 %v2495, 72
      %v2579 = vpop.permute.xlu0 %2578
      %2580 = vrot.lane.b32.xlu0 %v2496, 72
      %v2581 = vpop.permute.xlu0 %2580
      %2582 = vrot.lane.b32.xlu0 %v2497, 72
      %v2583 = vpop.permute.xlu0 %2582
      %2584 = vrot.lane.b32.xlu0 %v2498, 72
      %v2585 = vpop.permute.xlu0 %2584
      %2586 = vrot.lane.b32.xlu0 %v2499, 72
      %v2587 = vpop.permute.xlu0 %2586
      %2588 = vrot.lane.b32.xlu0 %v2500, 72
      %v2589 = vpop.permute.xlu0 %2588
      %2590 = vrot.lane.b32.xlu0 %v2501, 72
      %v2591 = vpop.permute.xlu0 %2590
      %2592 = vrot.lane.b32.xlu0 %v2502, 72
      %v2593 = vpop.permute.xlu0 %2592
      %2594 = vrot.lane.b32.xlu0 %v2503, 72
      %v2595 = vpop.permute.xlu0 %2594
      %2596 = vrot.lane.b32.xlu0 %v2504, 72
      %v2597 = vpop.permute.xlu0 %2596
      %2598 = vrot.lane.b32.xlu0 %v2505, 72
      %v2599 = vpop.permute.xlu0 %2598
      %2600 = vrot.lane.b32.xlu0 %v2506, 72
      %v2601 = vpop.permute.xlu0 %2600
      %2602 = vrot.lane.b32.xlu0 %v2507, 72
      %v2603 = vpop.permute.xlu0 %2602
      %vm2636 = vcmask 654912
      %2637 = vst.msk [vmem:[#allocation2] sm:$0xff] %vm2636, %v2541
      %2638 = vst.msk [vmem:[#allocation2 + $0x18] sm:$0xff] %vm2636, %v2543
      %2639 = vst.msk [vmem:[#allocation2 + $0x30] sm:$0xff] %vm2636, %v2545
      %2640 = vst.msk [vmem:[#allocation2 + $0x48] sm:$0xff] %vm2636, %v2547
      %2641 = vst.msk [vmem:[#allocation2 + $0x60] sm:$0xff] %vm2636, %v2549
      %2642 = vst.msk [vmem:[#allocation2 + $0x78] sm:$0xff] %vm2636, %v2551
      %2643 = vst.msk [vmem:[#allocation2 + $0x90] sm:$0xff] %vm2636, %v2553
      %2644 = vst.msk [vmem:[#allocation2 + $0xa8] sm:$0xff] %vm2636, %v2555
      %2645 = vst.msk [vmem:[#allocation2 + $0xc0] sm:$0xff] %vm2636, %v2557
      %2646 = vst.msk [vmem:[#allocation2 + $0xd8] sm:$0xff] %vm2636, %v2559
      %2647 = vst.msk [vmem:[#allocation2 + $0xf0] sm:$0xff] %vm2636, %v2561
      %2648 = vst.msk [vmem:[#allocation2 + $0x108] sm:$0xff] %vm2636, %v2563
      %2649 = vst.msk [vmem:[#allocation2 + $0x120] sm:$0xff] %vm2636, %v2565
      %2650 = vst.msk [vmem:[#allocation2 + $0x138] sm:$0xff] %vm2636, %v2567
      %2651 = vst.msk [vmem:[#allocation2 + $0x150] sm:$0xff] %vm2636, %v2569
      %2652 = vst.msk [vmem:[#allocation2 + $0x168] sm:$0xff] %vm2636, %v2571
      %2653 = vst.msk [vmem:[#allocation2 + $0x180] sm:$0xff] %vm2636, %v2573
      %2654 = vst.msk [vmem:[#allocation2 + $0x198] sm:$0xff] %vm2636, %v2575
      %2655 = vst.msk [vmem:[#allocation2 + $0x1b0] sm:$0xff] %vm2636, %v2577
      %2656 = vst.msk [vmem:[#allocation2 + $0x1c8] sm:$0xff] %vm2636, %v2579
      %2657 = vst.msk [vmem:[#allocation2 + $0x1e0] sm:$0xff] %vm2636, %v2581
      %2658 = vst.msk [vmem:[#allocation2 + $0x1f8] sm:$0xff] %vm2636, %v2583
      %2659 = vst.msk [vmem:[#allocation2 + $0x210] sm:$0xff] %vm2636, %v2585
      %2660 = vst.msk [vmem:[#allocation2 + $0x228] sm:$0xff] %vm2636, %v2587
      %2661 = vst.msk [vmem:[#allocation2 + $0x240] sm:$0xff] %vm2636, %v2589
      %2662 = vst.msk [vmem:[#allocation2 + $0x258] sm:$0xff] %vm2636, %v2591
      %2663 = vst.msk [vmem:[#allocation2 + $0x270] sm:$0xff] %vm2636, %v2593
      %2664 = vst.msk [vmem:[#allocation2 + $0x288] sm:$0xff] %vm2636, %v2595
      %2665 = vst.msk [vmem:[#allocation2 + $0x2a0] sm:$0xff] %vm2636, %v2597
      %2666 = vst.msk [vmem:[#allocation2 + $0x2b8] sm:$0xff] %vm2636, %v2599
      %2667 = vst.msk [vmem:[#allocation2 + $0x2d0] sm:$0xff] %vm2636, %v2601
      %2668 = vst.msk [vmem:[#allocation2 + $0x2e8] sm:$0xff] %vm2636, %v2603
      %v2669 = vld [vmem:[%s2411 + $0x1] sm:$0xff]
      %v2670 = vld [vmem:[%s2411 + $0x11] sm:$0xff]
      %v2671 = vld [vmem:[%s2411 + $0x21] sm:$0xff]
      %v2672 = vld [vmem:[%s2411 + $0x31] sm:$0xff]
      %v2673 = vld [vmem:[%s2411 + $0x41] sm:$0xff]
      %v2674 = vld [vmem:[%s2411 + $0x51] sm:$0xff]
      %v2675 = vld [vmem:[%s2411 + $0x61] sm:$0xff]
      %v2676 = vld [vmem:[%s2411 + $0x71] sm:$0xff]
      %v2677 = vld [vmem:[%s2411 + $0xa1] sm:$0xff]
      %v2678 = vld [vmem:[%s2411 + $0xb1] sm:$0xff]
      %v2679 = vld [vmem:[%s2411 + $0xc1] sm:$0xff]
      %v2680 = vld [vmem:[%s2411 + $0xd1] sm:$0xff]
      %v2681 = vld [vmem:[%s2411 + $0xe1] sm:$0xff]
      %v2682 = vld [vmem:[%s2411 + $0xf1] sm:$0xff]
      %v2683 = vld [vmem:[%s2411 + $0x101] sm:$0xff]
      %v2684 = vld [vmem:[%s2411 + $0x111] sm:$0xff]
      %v2685 = vld [vmem:[%s2411 + $0x141] sm:$0xff]
      %v2686 = vld [vmem:[%s2411 + $0x151] sm:$0xff]
      %v2687 = vld [vmem:[%s2411 + $0x161] sm:$0xff]
      %v2688 = vld [vmem:[%s2411 + $0x171] sm:$0xff]
      %v2689 = vld [vmem:[%s2411 + $0x181] sm:$0xff]
      %v2690 = vld [vmem:[%s2411 + $0x191] sm:$0xff]
      %v2691 = vld [vmem:[%s2411 + $0x1a1] sm:$0xff]
      %v2692 = vld [vmem:[%s2411 + $0x1b1] sm:$0xff]
      %v2693 = vld [vmem:[%s2411 + $0x1e1] sm:$0xff]
      %v2694 = vld [vmem:[%s2411 + $0x1f1] sm:$0xff]
      %v2695 = vld [vmem:[%s2411 + $0x201] sm:$0xff]
      %v2696 = vld [vmem:[%s2411 + $0x211] sm:$0xff]
      %v2697 = vld [vmem:[%s2411 + $0x221] sm:$0xff]
      %v2698 = vld [vmem:[%s2411 + $0x231] sm:$0xff]
      %v2699 = vld [vmem:[%s2411 + $0x241] sm:$0xff]
      %v2700 = vld [vmem:[%s2411 + $0x251] sm:$0xff]
      %v2701 = vld [vmem:[%s2411 + $0x281] sm:$0xff]
      %v2702 = vld [vmem:[%s2411 + $0x291] sm:$0xff]
      %v2703 = vld [vmem:[%s2411 + $0x2a1] sm:$0xff]
      %v2704 = vld [vmem:[%s2411 + $0x2b1] sm:$0xff]
      %v2705 = vld [vmem:[%s2411 + $0x2c1] sm:$0xff]
      %v2706 = vld [vmem:[%s2411 + $0x2d1] sm:$0xff]
      %v2707 = vld [vmem:[%s2411 + $0x2e1] sm:$0xff]
      %v2708 = vld [vmem:[%s2411 + $0x2f1] sm:$0xff]
      %v2709 = vld [vmem:[%s2411 + $0x321] sm:$0xff]
      %v2710 = vld [vmem:[%s2411 + $0x331] sm:$0xff]
      %v2711 = vld [vmem:[%s2411 + $0x341] sm:$0xff]
      %v2712 = vld [vmem:[%s2411 + $0x351] sm:$0xff]
      %v2713 = vld [vmem:[%s2411 + $0x361] sm:$0xff]
      %v2714 = vld [vmem:[%s2411 + $0x371] sm:$0xff]
      %v2715 = vld [vmem:[%s2411 + $0x381] sm:$0xff]
      %v2716 = vld [vmem:[%s2411 + $0x391] sm:$0xff]
      %v2717 = vld [vmem:[%s2411 + $0x3c1] sm:$0xff]
      %v2718 = vld [vmem:[%s2411 + $0x3d1] sm:$0xff]
      %v2719 = vld [vmem:[%s2411 + $0x3e1] sm:$0xff]
      %v2720 = vld [vmem:[%s2411 + $0x3f1] sm:$0xff]
      %v2721 = vld [vmem:[%s2411 + $0x401] sm:$0xff]
      %v2722 = vld [vmem:[%s2411 + $0x411] sm:$0xff]
      %v2723 = vld [vmem:[%s2411 + $0x421] sm:$0xff]
      %v2724 = vld [vmem:[%s2411 + $0x431] sm:$0xff]
      %v2725 = vld [vmem:[%s2411 + $0x461] sm:$0xff]
      %v2726 = vld [vmem:[%s2411 + $0x471] sm:$0xff]
      %v2727 = vld [vmem:[%s2411 + $0x481] sm:$0xff]
      %v2728 = vld [vmem:[%s2411 + $0x491] sm:$0xff]
      %v2729 = vld [vmem:[%s2411 + $0x4a1] sm:$0xff]
      %v2730 = vld [vmem:[%s2411 + $0x4b1] sm:$0xff]
      %v2731 = vld [vmem:[%s2411 + $0x4c1] sm:$0xff]
      %v2732 = vld [vmem:[%s2411 + $0x4d1] sm:$0xff]
      %v2733 = vpack.c.bf16 %v2670, %v2669
      %v2734 = vpack.c.bf16 %v2672, %v2671
      %v2735 = vpack.c.bf16 %v2674, %v2673
      %v2736 = vpack.c.bf16 %v2676, %v2675
      %v2737 = vpack.c.bf16 %v2678, %v2677
      %v2738 = vpack.c.bf16 %v2680, %v2679
      %v2739 = vpack.c.bf16 %v2682, %v2681
      %v2740 = vpack.c.bf16 %v2684, %v2683
      %v2741 = vpack.c.bf16 %v2686, %v2685
      %v2742 = vpack.c.bf16 %v2688, %v2687
      %v2743 = vpack.c.bf16 %v2690, %v2689
      %v2744 = vpack.c.bf16 %v2692, %v2691
      %v2745 = vpack.c.bf16 %v2694, %v2693
      %v2746 = vpack.c.bf16 %v2696, %v2695
      %v2747 = vpack.c.bf16 %v2698, %v2697
      %v2748 = vpack.c.bf16 %v2700, %v2699
      %v2749 = vpack.c.bf16 %v2702, %v2701
      %v2750 = vpack.c.bf16 %v2704, %v2703
      %v2751 = vpack.c.bf16 %v2706, %v2705
      %v2752 = vpack.c.bf16 %v2708, %v2707
      %v2753 = vpack.c.bf16 %v2710, %v2709
      %v2754 = vpack.c.bf16 %v2712, %v2711
      %v2755 = vpack.c.bf16 %v2714, %v2713
      %v2756 = vpack.c.bf16 %v2716, %v2715
      %v2757 = vpack.c.bf16 %v2718, %v2717
      %v2758 = vpack.c.bf16 %v2720, %v2719
      %v2759 = vpack.c.bf16 %v2722, %v2721
      %v2760 = vpack.c.bf16 %v2724, %v2723
      %v2761 = vpack.c.bf16 %v2726, %v2725
      %v2762 = vpack.c.bf16 %v2728, %v2727
      %v2763 = vpack.c.bf16 %v2730, %v2729
      %v2764 = vpack.c.bf16 %v2732, %v2731
      %2797 = vrot.lane.b32.xlu0 %v2733, 80
      %v2798 = vpop.permute.xlu0 %2797
      %2799 = vrot.lane.b32.xlu0 %v2734, 80
      %v2800 = vpop.permute.xlu0 %2799
      %2801 = vrot.lane.b32.xlu0 %v2735, 80
      %v2802 = vpop.permute.xlu0 %2801
      %2803 = vrot.lane.b32.xlu0 %v2736, 80
      %v2804 = vpop.permute.xlu0 %2803
      %2805 = vrot.lane.b32.xlu0 %v2737, 80
      %v2806 = vpop.permute.xlu0 %2805
      %2807 = vrot.lane.b32.xlu0 %v2738, 80
      %v2808 = vpop.permute.xlu0 %2807
      %2809 = vrot.lane.b32.xlu0 %v2739, 80
      %v2810 = vpop.permute.xlu0 %2809
      %2811 = vrot.lane.b32.xlu0 %v2740, 80
      %v2812 = vpop.permute.xlu0 %2811
      %2813 = vrot.lane.b32.xlu0 %v2741, 80
      %v2814 = vpop.permute.xlu0 %2813
      %2815 = vrot.lane.b32.xlu0 %v2742, 80
      %v2816 = vpop.permute.xlu0 %2815
      %2817 = vrot.lane.b32.xlu0 %v2743, 80
      %v2818 = vpop.permute.xlu0 %2817
      %2819 = vrot.lane.b32.xlu0 %v2744, 80
      %v2820 = vpop.permute.xlu0 %2819
      %2821 = vrot.lane.b32.xlu0 %v2745, 80
      %v2822 = vpop.permute.xlu0 %2821
      %2823 = vrot.lane.b32.xlu0 %v2746, 80
      %v2824 = vpop.permute.xlu0 %2823
      %2825 = vrot.lane.b32.xlu0 %v2747, 80
      %v2826 = vpop.permute.xlu0 %2825
      %2827 = vrot.lane.b32.xlu0 %v2748, 80
      %v2828 = vpop.permute.xlu0 %2827
      %2829 = vrot.lane.b32.xlu0 %v2749, 80
      %v2830 = vpop.permute.xlu0 %2829
      %2831 = vrot.lane.b32.xlu0 %v2750, 80
      %v2832 = vpop.permute.xlu0 %2831
      %2833 = vrot.lane.b32.xlu0 %v2751, 80
      %v2834 = vpop.permute.xlu0 %2833
      %2835 = vrot.lane.b32.xlu0 %v2752, 80
      %v2836 = vpop.permute.xlu0 %2835
      %2837 = vrot.lane.b32.xlu0 %v2753, 80
      %v2838 = vpop.permute.xlu0 %2837
      %2839 = vrot.lane.b32.xlu0 %v2754, 80
      %v2840 = vpop.permute.xlu0 %2839
      %2841 = vrot.lane.b32.xlu0 %v2755, 80
      %v2842 = vpop.permute.xlu0 %2841
      %2843 = vrot.lane.b32.xlu0 %v2756, 80
      %v2844 = vpop.permute.xlu0 %2843
      %2845 = vrot.lane.b32.xlu0 %v2757, 80
      %v2846 = vpop.permute.xlu0 %2845
      %2847 = vrot.lane.b32.xlu0 %v2758, 80
      %v2848 = vpop.permute.xlu0 %2847
      %2849 = vrot.lane.b32.xlu0 %v2759, 80
      %v2850 = vpop.permute.xlu0 %2849
      %2851 = vrot.lane.b32.xlu0 %v2760, 80
      %v2852 = vpop.permute.xlu0 %2851
      %2853 = vrot.lane.b32.xlu0 %v2761, 80
      %v2854 = vpop.permute.xlu0 %2853
      %2855 = vrot.lane.b32.xlu0 %v2762, 80
      %v2856 = vpop.permute.xlu0 %2855
      %2857 = vrot.lane.b32.xlu0 %v2763, 80
      %v2858 = vpop.permute.xlu0 %2857
      %2859 = vrot.lane.b32.xlu0 %v2764, 80
      %v2860 = vpop.permute.xlu0 %2859
      %vm2893 = vcmask 720512
      %2894 = vst.msk [vmem:[#allocation2] sm:$0xff] %vm2893, %v2798
      %2895 = vst.msk [vmem:[#allocation2 + $0x18] sm:$0xff] %vm2893, %v2800
      %2896 = vst.msk [vmem:[#allocation2 + $0x30] sm:$0xff] %vm2893, %v2802
      %2897 = vst.msk [vmem:[#allocation2 + $0x48] sm:$0xff] %vm2893, %v2804
      %2898 = vst.msk [vmem:[#allocation2 + $0x60] sm:$0xff] %vm2893, %v2806
      %2899 = vst.msk [vmem:[#allocation2 + $0x78] sm:$0xff] %vm2893, %v2808
      %2900 = vst.msk [vmem:[#allocation2 + $0x90] sm:$0xff] %vm2893, %v2810
      %2901 = vst.msk [vmem:[#allocation2 + $0xa8] sm:$0xff] %vm2893, %v2812
      %2902 = vst.msk [vmem:[#allocation2 + $0xc0] sm:$0xff] %vm2893, %v2814
      %2903 = vst.msk [vmem:[#allocation2 + $0xd8] sm:$0xff] %vm2893, %v2816
      %2904 = vst.msk [vmem:[#allocation2 + $0xf0] sm:$0xff] %vm2893, %v2818
      %2905 = vst.msk [vmem:[#allocation2 + $0x108] sm:$0xff] %vm2893, %v2820
      %2906 = vst.msk [vmem:[#allocation2 + $0x120] sm:$0xff] %vm2893, %v2822
      %2907 = vst.msk [vmem:[#allocation2 + $0x138] sm:$0xff] %vm2893, %v2824
      %2908 = vst.msk [vmem:[#allocation2 + $0x150] sm:$0xff] %vm2893, %v2826
      %2909 = vst.msk [vmem:[#allocation2 + $0x168] sm:$0xff] %vm2893, %v2828
      %2910 = vst.msk [vmem:[#allocation2 + $0x180] sm:$0xff] %vm2893, %v2830
      %2911 = vst.msk [vmem:[#allocation2 + $0x198] sm:$0xff] %vm2893, %v2832
      %2912 = vst.msk [vmem:[#allocation2 + $0x1b0] sm:$0xff] %vm2893, %v2834
      %2913 = vst.msk [vmem:[#allocation2 + $0x1c8] sm:$0xff] %vm2893, %v2836
      %2914 = vst.msk [vmem:[#allocation2 + $0x1e0] sm:$0xff] %vm2893, %v2838
      %2915 = vst.msk [vmem:[#allocation2 + $0x1f8] sm:$0xff] %vm2893, %v2840
      %2916 = vst.msk [vmem:[#allocation2 + $0x210] sm:$0xff] %vm2893, %v2842
      %2917 = vst.msk [vmem:[#allocation2 + $0x228] sm:$0xff] %vm2893, %v2844
      %2918 = vst.msk [vmem:[#allocation2 + $0x240] sm:$0xff] %vm2893, %v2846
      %2919 = vst.msk [vmem:[#allocation2 + $0x258] sm:$0xff] %vm2893, %v2848
      %2920 = vst.msk [vmem:[#allocation2 + $0x270] sm:$0xff] %vm2893, %v2850
      %2921 = vst.msk [vmem:[#allocation2 + $0x288] sm:$0xff] %vm2893, %v2852
      %2922 = vst.msk [vmem:[#allocation2 + $0x2a0] sm:$0xff] %vm2893, %v2854
      %2923 = vst.msk [vmem:[#allocation2 + $0x2b8] sm:$0xff] %vm2893, %v2856
      %2924 = vst.msk [vmem:[#allocation2 + $0x2d0] sm:$0xff] %vm2893, %v2858
      %2925 = vst.msk [vmem:[#allocation2 + $0x2e8] sm:$0xff] %vm2893, %v2860
      %v2926 = vld [vmem:[%s2411 + $0x2] sm:$0xff]
      %v2927 = vld [vmem:[%s2411 + $0x12] sm:$0xff]
      %v2928 = vld [vmem:[%s2411 + $0x22] sm:$0xff]
      %v2929 = vld [vmem:[%s2411 + $0x32] sm:$0xff]
      %v2930 = vld [vmem:[%s2411 + $0x42] sm:$0xff]
      %v2931 = vld [vmem:[%s2411 + $0x52] sm:$0xff]
      %v2932 = vld [vmem:[%s2411 + $0x62] sm:$0xff]
      %v2933 = vld [vmem:[%s2411 + $0x72] sm:$0xff]
      %v2934 = vld [vmem:[%s2411 + $0xa2] sm:$0xff]
      %v2935 = vld [vmem:[%s2411 + $0xb2] sm:$0xff]
      %v2936 = vld [vmem:[%s2411 + $0xc2] sm:$0xff]
      %v2937 = vld [vmem:[%s2411 + $0xd2] sm:$0xff]
      %v2938 = vld [vmem:[%s2411 + $0xe2] sm:$0xff]
      %v2939 = vld [vmem:[%s2411 + $0xf2] sm:$0xff]
      %v2940 = vld [vmem:[%s2411 + $0x102] sm:$0xff]
      %v2941 = vld [vmem:[%s2411 + $0x112] sm:$0xff]
      %v2942 = vld [vmem:[%s2411 + $0x142] sm:$0xff]
      %v2943 = vld [vmem:[%s2411 + $0x152] sm:$0xff]
      %v2944 = vld [vmem:[%s2411 + $0x162] sm:$0xff]
      %v2945 = vld [vmem:[%s2411 + $0x172] sm:$0xff]
      %v2946 = vld [vmem:[%s2411 + $0x182] sm:$0xff]
      %v2947 = vld [vmem:[%s2411 + $0x192] sm:$0xff]
      %v2948 = vld [vmem:[%s2411 + $0x1a2] sm:$0xff]
      %v2949 = vld [vmem:[%s2411 + $0x1b2] sm:$0xff]
      %v2950 = vld [vmem:[%s2411 + $0x1e2] sm:$0xff]
      %v2951 = vld [vmem:[%s2411 + $0x1f2] sm:$0xff]
      %v2952 = vld [vmem:[%s2411 + $0x202] sm:$0xff]
      %v2953 = vld [vmem:[%s2411 + $0x212] sm:$0xff]
      %v2954 = vld [vmem:[%s2411 + $0x222] sm:$0xff]
      %v2955 = vld [vmem:[%s2411 + $0x232] sm:$0xff]
      %v2956 = vld [vmem:[%s2411 + $0x242] sm:$0xff]
      %v2957 = vld [vmem:[%s2411 + $0x252] sm:$0xff]
      %v2958 = vld [vmem:[%s2411 + $0x282] sm:$0xff]
      %v2959 = vld [vmem:[%s2411 + $0x292] sm:$0xff]
      %v2960 = vld [vmem:[%s2411 + $0x2a2] sm:$0xff]
      %v2961 = vld [vmem:[%s2411 + $0x2b2] sm:$0xff]
      %v2962 = vld [vmem:[%s2411 + $0x2c2] sm:$0xff]
      %v2963 = vld [vmem:[%s2411 + $0x2d2] sm:$0xff]
      %v2964 = vld [vmem:[%s2411 + $0x2e2] sm:$0xff]
      %v2965 = vld [vmem:[%s2411 + $0x2f2] sm:$0xff]
      %v2966 = vld [vmem:[%s2411 + $0x322] sm:$0xff]
      %v2967 = vld [vmem:[%s2411 + $0x332] sm:$0xff]
      %v2968 = vld [vmem:[%s2411 + $0x342] sm:$0xff]
      %v2969 = vld [vmem:[%s2411 + $0x352] sm:$0xff]
      %v2970 = vld [vmem:[%s2411 + $0x362] sm:$0xff]
      %v2971 = vld [vmem:[%s2411 + $0x372] sm:$0xff]
      %v2972 = vld [vmem:[%s2411 + $0x382] sm:$0xff]
      %v2973 = vld [vmem:[%s2411 + $0x392] sm:$0xff]
      %v2974 = vld [vmem:[%s2411 + $0x3c2] sm:$0xff]
      %v2975 = vld [vmem:[%s2411 + $0x3d2] sm:$0xff]
      %v2976 = vld [vmem:[%s2411 + $0x3e2] sm:$0xff]
      %v2977 = vld [vmem:[%s2411 + $0x3f2] sm:$0xff]
      %v2978 = vld [vmem:[%s2411 + $0x402] sm:$0xff]
      %v2979 = vld [vmem:[%s2411 + $0x412] sm:$0xff]
      %v2980 = vld [vmem:[%s2411 + $0x422] sm:$0xff]
      %v2981 = vld [vmem:[%s2411 + $0x432] sm:$0xff]
      %v2982 = vld [vmem:[%s2411 + $0x462] sm:$0xff]
      %v2983 = vld [vmem:[%s2411 + $0x472] sm:$0xff]
      %v2984 = vld [vmem:[%s2411 + $0x482] sm:$0xff]
      %v2985 = vld [vmem:[%s2411 + $0x492] sm:$0xff]
      %v2986 = vld [vmem:[%s2411 + $0x4a2] sm:$0xff]
      %v2987 = vld [vmem:[%s2411 + $0x4b2] sm:$0xff]
      %v2988 = vld [vmem:[%s2411 + $0x4c2] sm:$0xff]
      %v2989 = vld [vmem:[%s2411 + $0x4d2] sm:$0xff]
      %v2990 = vpack.c.bf16 %v2927, %v2926
      %v2991 = vpack.c.bf16 %v2929, %v2928
      %v2992 = vpack.c.bf16 %v2931, %v2930
      %v2993 = vpack.c.bf16 %v2933, %v2932
      %v2994 = vpack.c.bf16 %v2935, %v2934
      %v2995 = vpack.c.bf16 %v2937, %v2936
      %v2996 = vpack.c.bf16 %v2939, %v2938
      %v2997 = vpack.c.bf16 %v2941, %v2940
      %v2998 = vpack.c.bf16 %v2943, %v2942
      %v2999 = vpack.c.bf16 %v2945, %v2944
      %v3000 = vpack.c.bf16 %v2947, %v2946
      %v3001 = vpack.c.bf16 %v2949, %v2948
      %v3002 = vpack.c.bf16 %v2951, %v2950
      %v3003 = vpack.c.bf16 %v2953, %v2952
      %v3004 = vpack.c.bf16 %v2955, %v2954
      %v3005 = vpack.c.bf16 %v2957, %v2956
      %v3006 = vpack.c.bf16 %v2959, %v2958
      %v3007 = vpack.c.bf16 %v2961, %v2960
      %v3008 = vpack.c.bf16 %v2963, %v2962
      %v3009 = vpack.c.bf16 %v2965, %v2964
      %v3010 = vpack.c.bf16 %v2967, %v2966
      %v3011 = vpack.c.bf16 %v2969, %v2968
      %v3012 = vpack.c.bf16 %v2971, %v2970
      %v3013 = vpack.c.bf16 %v2973, %v2972
      %v3014 = vpack.c.bf16 %v2975, %v2974
      %v3015 = vpack.c.bf16 %v2977, %v2976
      %v3016 = vpack.c.bf16 %v2979, %v2978
      %v3017 = vpack.c.bf16 %v2981, %v2980
      %v3018 = vpack.c.bf16 %v2983, %v2982
      %v3019 = vpack.c.bf16 %v2985, %v2984
      %v3020 = vpack.c.bf16 %v2987, %v2986
      %v3021 = vpack.c.bf16 %v2989, %v2988
      %3054 = vrot.lane.b32.xlu0 %v2990, 88
      %v3055 = vpop.permute.xlu0 %3054
      %3056 = vrot.lane.b32.xlu0 %v2991, 88
      %v3057 = vpop.permute.xlu0 %3056
      %3058 = vrot.lane.b32.xlu0 %v2992, 88
      %v3059 = vpop.permute.xlu0 %3058
      %3060 = vrot.lane.b32.xlu0 %v2993, 88
      %v3061 = vpop.permute.xlu0 %3060
      %3062 = vrot.lane.b32.xlu0 %v2994, 88
      %v3063 = vpop.permute.xlu0 %3062
      %3064 = vrot.lane.b32.xlu0 %v2995, 88
      %v3065 = vpop.permute.xlu0 %3064
      %3066 = vrot.lane.b32.xlu0 %v2996, 88
      %v3067 = vpop.permute.xlu0 %3066
      %3068 = vrot.lane.b32.xlu0 %v2997, 88
      %v3069 = vpop.permute.xlu0 %3068
      %3070 = vrot.lane.b32.xlu0 %v2998, 88
      %v3071 = vpop.permute.xlu0 %3070
      %3072 = vrot.lane.b32.xlu0 %v2999, 88
      %v3073 = vpop.permute.xlu0 %3072
      %3074 = vrot.lane.b32.xlu0 %v3000, 88
      %v3075 = vpop.permute.xlu0 %3074
      %3076 = vrot.lane.b32.xlu0 %v3001, 88
      %v3077 = vpop.permute.xlu0 %3076
      %3078 = vrot.lane.b32.xlu0 %v3002, 88
      %v3079 = vpop.permute.xlu0 %3078
      %3080 = vrot.lane.b32.xlu0 %v3003, 88
      %v3081 = vpop.permute.xlu0 %3080
      %3082 = vrot.lane.b32.xlu0 %v3004, 88
      %v3083 = vpop.permute.xlu0 %3082
      %3084 = vrot.lane.b32.xlu0 %v3005, 88
      %v3085 = vpop.permute.xlu0 %3084
      %3086 = vrot.lane.b32.xlu0 %v3006, 88
      %v3087 = vpop.permute.xlu0 %3086
      %3088 = vrot.lane.b32.xlu0 %v3007, 88
      %v3089 = vpop.permute.xlu0 %3088
      %3090 = vrot.lane.b32.xlu0 %v3008, 88
      %v3091 = vpop.permute.xlu0 %3090
      %3092 = vrot.lane.b32.xlu0 %v3009, 88
      %v3093 = vpop.permute.xlu0 %3092
      %3094 = vrot.lane.b32.xlu0 %v3010, 88
      %v3095 = vpop.permute.xlu0 %3094
      %3096 = vrot.lane.b32.xlu0 %v3011, 88
      %v3097 = vpop.permute.xlu0 %3096
      %3098 = vrot.lane.b32.xlu0 %v3012, 88
      %v3099 = vpop.permute.xlu0 %3098
      %3100 = vrot.lane.b32.xlu0 %v3013, 88
      %v3101 = vpop.permute.xlu0 %3100
      %3102 = vrot.lane.b32.xlu0 %v3014, 88
      %v3103 = vpop.permute.xlu0 %3102
      %3104 = vrot.lane.b32.xlu0 %v3015, 88
      %v3105 = vpop.permute.xlu0 %3104
      %3106 = vrot.lane.b32.xlu0 %v3016, 88
      %v3107 = vpop.permute.xlu0 %3106
      %3108 = vrot.lane.b32.xlu0 %v3017, 88
      %v3109 = vpop.permute.xlu0 %3108
      %3110 = vrot.lane.b32.xlu0 %v3018, 88
      %v3111 = vpop.permute.xlu0 %3110
      %3112 = vrot.lane.b32.xlu0 %v3019, 88
      %v3113 = vpop.permute.xlu0 %3112
      %3114 = vrot.lane.b32.xlu0 %v3020, 88
      %v3115 = vpop.permute.xlu0 %3114
      %3116 = vrot.lane.b32.xlu0 %v3021, 88
      %v3117 = vpop.permute.xlu0 %3116
      %vm3150 = vcmask 786112
      %3151 = vst.msk [vmem:[#allocation2] sm:$0xff] %vm3150, %v3055
      %3152 = vst.msk [vmem:[#allocation2 + $0x18] sm:$0xff] %vm3150, %v3057
      %3153 = vst.msk [vmem:[#allocation2 + $0x30] sm:$0xff] %vm3150, %v3059
      %3154 = vst.msk [vmem:[#allocation2 + $0x48] sm:$0xff] %vm3150, %v3061
      %3155 = vst.msk [vmem:[#allocation2 + $0x60] sm:$0xff] %vm3150, %v3063
      %3156 = vst.msk [vmem:[#allocation2 + $0x78] sm:$0xff] %vm3150, %v3065
      %3157 = vst.msk [vmem:[#allocation2 + $0x90] sm:$0xff] %vm3150, %v3067
      %3158 = vst.msk [vmem:[#allocation2 + $0xa8] sm:$0xff] %vm3150, %v3069
      %3159 = vst.msk [vmem:[#allocation2 + $0xc0] sm:$0xff] %vm3150, %v3071
      %3160 = vst.msk [vmem:[#allocation2 + $0xd8] sm:$0xff] %vm3150, %v3073
      %3161 = vst.msk [vmem:[#allocation2 + $0xf0] sm:$0xff] %vm3150, %v3075
      %3162 = vst.msk [vmem:[#allocation2 + $0x108] sm:$0xff] %vm3150, %v3077
      %3163 = vst.msk [vmem:[#allocation2 + $0x120] sm:$0xff] %vm3150, %v3079
      %3164 = vst.msk [vmem:[#allocation2 + $0x138] sm:$0xff] %vm3150, %v3081
      %3165 = vst.msk [vmem:[#allocation2 + $0x150] sm:$0xff] %vm3150, %v3083
      %3166 = vst.msk [vmem:[#allocation2 + $0x168] sm:$0xff] %vm3150, %v3085
      %3167 = vst.msk [vmem:[#allocation2 + $0x180] sm:$0xff] %vm3150, %v3087
      %3168 = vst.msk [vmem:[#allocation2 + $0x198] sm:$0xff] %vm3150, %v3089
      %3169 = vst.msk [vmem:[#allocation2 + $0x1b0] sm:$0xff] %vm3150, %v3091
      %3170 = vst.msk [vmem:[#allocation2 + $0x1c8] sm:$0xff] %vm3150, %v3093
      %3171 = vst.msk [vmem:[#allocation2 + $0x1e0] sm:$0xff] %vm3150, %v3095
      %3172 = vst.msk [vmem:[#allocation2 + $0x1f8] sm:$0xff] %vm3150, %v3097
      %3173 = vst.msk [vmem:[#allocation2 + $0x210] sm:$0xff] %vm3150, %v3099
      %3174 = vst.msk [vmem:[#allocation2 + $0x228] sm:$0xff] %vm3150, %v3101
      %3175 = vst.msk [vmem:[#allocation2 + $0x240] sm:$0xff] %vm3150, %v3103
      %3176 = vst.msk [vmem:[#allocation2 + $0x258] sm:$0xff] %vm3150, %v3105
      %3177 = vst.msk [vmem:[#allocation2 + $0x270] sm:$0xff] %vm3150, %v3107
      %3178 = vst.msk [vmem:[#allocation2 + $0x288] sm:$0xff] %vm3150, %v3109
      %3179 = vst.msk [vmem:[#allocation2 + $0x2a0] sm:$0xff] %vm3150, %v3111
      %3180 = vst.msk [vmem:[#allocation2 + $0x2b8] sm:$0xff] %vm3150, %v3113
      %3181 = vst.msk [vmem:[#allocation2 + $0x2d0] sm:$0xff] %vm3150, %v3115
      %3182 = vst.msk [vmem:[#allocation2 + $0x2e8] sm:$0xff] %vm3150, %v3117
      %s3183 = sadd.s32 16, %s2410
      %s3184 = scalar_lea.vmem %s207, %s3183
      %v3185 = vld [vmem:[%s3184] sm:$0xff]
      %v3186 = vld [vmem:[%s3184 + $0x10] sm:$0xff]
      %v3187 = vld [vmem:[%s3184 + $0x20] sm:$0xff]
      %v3188 = vld [vmem:[%s3184 + $0x30] sm:$0xff]
      %v3189 = vld [vmem:[%s3184 + $0x40] sm:$0xff]
      %v3190 = vld [vmem:[%s3184 + $0x50] sm:$0xff]
      %v3191 = vld [vmem:[%s3184 + $0x60] sm:$0xff]
      %v3192 = vld [vmem:[%s3184 + $0x70] sm:$0xff]
      %v3193 = vld [vmem:[%s3184 + $0xa0] sm:$0xff]
      %v3194 = vld [vmem:[%s3184 + $0xb0] sm:$0xff]
      %v3195 = vld [vmem:[%s3184 + $0xc0] sm:$0xff]
      %v3196 = vld [vmem:[%s3184 + $0xd0] sm:$0xff]
      %v3197 = vld [vmem:[%s3184 + $0xe0] sm:$0xff]
      %v3198 = vld [vmem:[%s3184 + $0xf0] sm:$0xff]
      %v3199 = vld [vmem:[%s3184 + $0x100] sm:$0xff]
      %v3200 = vld [vmem:[%s3184 + $0x110] sm:$0xff]
      %v3201 = vld [vmem:[%s3184 + $0x140] sm:$0xff]
      %v3202 = vld [vmem:[%s3184 + $0x150] sm:$0xff]
      %v3203 = vld [vmem:[%s3184 + $0x160] sm:$0xff]
      %v3204 = vld [vmem:[%s3184 + $0x170] sm:$0xff]
      %v3205 = vld [vmem:[%s3184 + $0x180] sm:$0xff]
      %v3206 = vld [vmem:[%s3184 + $0x190] sm:$0xff]
      %v3207 = vld [vmem:[%s3184 + $0x1a0] sm:$0xff]
      %v3208 = vld [vmem:[%s3184 + $0x1b0] sm:$0xff]
      %v3209 = vld [vmem:[%s3184 + $0x1e0] sm:$0xff]
      %v3210 = vld [vmem:[%s3184 + $0x1f0] sm:$0xff]
      %v3211 = vld [vmem:[%s3184 + $0x200] sm:$0xff]
      %v3212 = vld [vmem:[%s3184 + $0x210] sm:$0xff]
      %v3213 = vld [vmem:[%s3184 + $0x220] sm:$0xff]
      %v3214 = vld [vmem:[%s3184 + $0x230] sm:$0xff]
      %v3215 = vld [vmem:[%s3184 + $0x240] sm:$0xff]
      %v3216 = vld [vmem:[%s3184 + $0x250] sm:$0xff]
      %v3217 = vld [vmem:[%s3184 + $0x280] sm:$0xff]
      %v3218 = vld [vmem:[%s3184 + $0x290] sm:$0xff]
      %v3219 = vld [vmem:[%s3184 + $0x2a0] sm:$0xff]
      %v3220 = vld [vmem:[%s3184 + $0x2b0] sm:$0xff]
      %v3221 = vld [vmem:[%s3184 + $0x2c0] sm:$0xff]
      %v3222 = vld [vmem:[%s3184 + $0x2d0] sm:$0xff]
      %v3223 = vld [vmem:[%s3184 + $0x2e0] sm:$0xff]
      %v3224 = vld [vmem:[%s3184 + $0x2f0] sm:$0xff]
      %v3225 = vld [vmem:[%s3184 + $0x320] sm:$0xff]
      %v3226 = vld [vmem:[%s3184 + $0x330] sm:$0xff]
      %v3227 = vld [vmem:[%s3184 + $0x340] sm:$0xff]
      %v3228 = vld [vmem:[%s3184 + $0x350] sm:$0xff]
      %v3229 = vld [vmem:[%s3184 + $0x360] sm:$0xff]
      %v3230 = vld [vmem:[%s3184 + $0x370] sm:$0xff]
      %v3231 = vld [vmem:[%s3184 + $0x380] sm:$0xff]
      %v3232 = vld [vmem:[%s3184 + $0x390] sm:$0xff]
      %v3233 = vld [vmem:[%s3184 + $0x3c0] sm:$0xff]
      %v3234 = vld [vmem:[%s3184 + $0x3d0] sm:$0xff]
      %v3235 = vld [vmem:[%s3184 + $0x3e0] sm:$0xff]
      %v3236 = vld [vmem:[%s3184 + $0x3f0] sm:$0xff]
      %v3237 = vld [vmem:[%s3184 + $0x400] sm:$0xff]
      %v3238 = vld [vmem:[%s3184 + $0x410] sm:$0xff]
      %v3239 = vld [vmem:[%s3184 + $0x420] sm:$0xff]
      %v3240 = vld [vmem:[%s3184 + $0x430] sm:$0xff]
      %v3241 = vld [vmem:[%s3184 + $0x460] sm:$0xff]
      %v3242 = vld [vmem:[%s3184 + $0x470] sm:$0xff]
      %v3243 = vld [vmem:[%s3184 + $0x480] sm:$0xff]
      %v3244 = vld [vmem:[%s3184 + $0x490] sm:$0xff]
      %v3245 = vld [vmem:[%s3184 + $0x4a0] sm:$0xff]
      %v3246 = vld [vmem:[%s3184 + $0x4b0] sm:$0xff]
      %v3247 = vld [vmem:[%s3184 + $0x4c0] sm:$0xff]
      %v3248 = vld [vmem:[%s3184 + $0x4d0] sm:$0xff]
      %v3249 = vpack.c.bf16 %v3186, %v3185
      %v3250 = vpack.c.bf16 %v3188, %v3187
      %v3251 = vpack.c.bf16 %v3190, %v3189
      %v3252 = vpack.c.bf16 %v3192, %v3191
      %v3253 = vpack.c.bf16 %v3194, %v3193
      %v3254 = vpack.c.bf16 %v3196, %v3195
      %v3255 = vpack.c.bf16 %v3198, %v3197
      %v3256 = vpack.c.bf16 %v3200, %v3199
      %v3257 = vpack.c.bf16 %v3202, %v3201
      %v3258 = vpack.c.bf16 %v3204, %v3203
      %v3259 = vpack.c.bf16 %v3206, %v3205
      %v3260 = vpack.c.bf16 %v3208, %v3207
      %v3261 = vpack.c.bf16 %v3210, %v3209
      %v3262 = vpack.c.bf16 %v3212, %v3211
      %v3263 = vpack.c.bf16 %v3214, %v3213
      %v3264 = vpack.c.bf16 %v3216, %v3215
      %v3265 = vpack.c.bf16 %v3218, %v3217
      %v3266 = vpack.c.bf16 %v3220, %v3219
      %v3267 = vpack.c.bf16 %v3222, %v3221
      %v3268 = vpack.c.bf16 %v3224, %v3223
      %v3269 = vpack.c.bf16 %v3226, %v3225
      %v3270 = vpack.c.bf16 %v3228, %v3227
      %v3271 = vpack.c.bf16 %v3230, %v3229
      %v3272 = vpack.c.bf16 %v3232, %v3231
      %v3273 = vpack.c.bf16 %v3234, %v3233
      %v3274 = vpack.c.bf16 %v3236, %v3235
      %v3275 = vpack.c.bf16 %v3238, %v3237
      %v3276 = vpack.c.bf16 %v3240, %v3239
      %v3277 = vpack.c.bf16 %v3242, %v3241
      %v3278 = vpack.c.bf16 %v3244, %v3243
      %v3279 = vpack.c.bf16 %v3246, %v3245
      %v3280 = vpack.c.bf16 %v3248, %v3247
      %3313 = vrot.lane.b32.xlu0 %v3249, 96
      %v3314 = vpop.permute.xlu0 %3313
      %3315 = vrot.lane.b32.xlu0 %v3250, 96
      %v3316 = vpop.permute.xlu0 %3315
      %3317 = vrot.lane.b32.xlu0 %v3251, 96
      %v3318 = vpop.permute.xlu0 %3317
      %3319 = vrot.lane.b32.xlu0 %v3252, 96
      %v3320 = vpop.permute.xlu0 %3319
      %3321 = vrot.lane.b32.xlu0 %v3253, 96
      %v3322 = vpop.permute.xlu0 %3321
      %3323 = vrot.lane.b32.xlu0 %v3254, 96
      %v3324 = vpop.permute.xlu0 %3323
      %3325 = vrot.lane.b32.xlu0 %v3255, 96
      %v3326 = vpop.permute.xlu0 %3325
      %3327 = vrot.lane.b32.xlu0 %v3256, 96
      %v3328 = vpop.permute.xlu0 %3327
      %3329 = vrot.lane.b32.xlu0 %v3257, 96
      %v3330 = vpop.permute.xlu0 %3329
      %3331 = vrot.lane.b32.xlu0 %v3258, 96
      %v3332 = vpop.permute.xlu0 %3331
      %3333 = vrot.lane.b32.xlu0 %v3259, 96
      %v3334 = vpop.permute.xlu0 %3333
      %3335 = vrot.lane.b32.xlu0 %v3260, 96
      %v3336 = vpop.permute.xlu0 %3335
      %3337 = vrot.lane.b32.xlu0 %v3261, 96
      %v3338 = vpop.permute.xlu0 %3337
      %3339 = vrot.lane.b32.xlu0 %v3262, 96
      %v3340 = vpop.permute.xlu0 %3339
      %3341 = vrot.lane.b32.xlu0 %v3263, 96
      %v3342 = vpop.permute.xlu0 %3341
      %3343 = vrot.lane.b32.xlu0 %v3264, 96
      %v3344 = vpop.permute.xlu0 %3343
      %3345 = vrot.lane.b32.xlu0 %v3265, 96
      %v3346 = vpop.permute.xlu0 %3345
      %3347 = vrot.lane.b32.xlu0 %v3266, 96
      %v3348 = vpop.permute.xlu0 %3347
      %3349 = vrot.lane.b32.xlu0 %v3267, 96
      %v3350 = vpop.permute.xlu0 %3349
      %3351 = vrot.lane.b32.xlu0 %v3268, 96
      %v3352 = vpop.permute.xlu0 %3351
      %3353 = vrot.lane.b32.xlu0 %v3269, 96
      %v3354 = vpop.permute.xlu0 %3353
      %3355 = vrot.lane.b32.xlu0 %v3270, 96
      %v3356 = vpop.permute.xlu0 %3355
      %3357 = vrot.lane.b32.xlu0 %v3271, 96
      %v3358 = vpop.permute.xlu0 %3357
      %3359 = vrot.lane.b32.xlu0 %v3272, 96
      %v3360 = vpop.permute.xlu0 %3359
      %3361 = vrot.lane.b32.xlu0 %v3273, 96
      %v3362 = vpop.permute.xlu0 %3361
      %3363 = vrot.lane.b32.xlu0 %v3274, 96
      %v3364 = vpop.permute.xlu0 %3363
      %3365 = vrot.lane.b32.xlu0 %v3275, 96
      %v3366 = vpop.permute.xlu0 %3365
      %3367 = vrot.lane.b32.xlu0 %v3276, 96
      %v3368 = vpop.permute.xlu0 %3367
      %3369 = vrot.lane.b32.xlu0 %v3277, 96
      %v3370 = vpop.permute.xlu0 %3369
      %3371 = vrot.lane.b32.xlu0 %v3278, 96
      %v3372 = vpop.permute.xlu0 %3371
      %3373 = vrot.lane.b32.xlu0 %v3279, 96
      %v3374 = vpop.permute.xlu0 %3373
      %3375 = vrot.lane.b32.xlu0 %v3280, 96
      %v3376 = vpop.permute.xlu0 %3375
      %vm3409 = vcmask 851712
      %3410 = vst.msk [vmem:[#allocation2] sm:$0xff] %vm3409, %v3314
      %3411 = vst.msk [vmem:[#allocation2 + $0x18] sm:$0xff] %vm3409, %v3316
      %3412 = vst.msk [vmem:[#allocation2 + $0x30] sm:$0xff] %vm3409, %v3318
      %3413 = vst.msk [vmem:[#allocation2 + $0x48] sm:$0xff] %vm3409, %v3320
      %3414 = vst.msk [vmem:[#allocation2 + $0x60] sm:$0xff] %vm3409, %v3322
      %3415 = vst.msk [vmem:[#allocation2 + $0x78] sm:$0xff] %vm3409, %v3324
      %3416 = vst.msk [vmem:[#allocation2 + $0x90] sm:$0xff] %vm3409, %v3326
      %3417 = vst.msk [vmem:[#allocation2 + $0xa8] sm:$0xff] %vm3409, %v3328
      %3418 = vst.msk [vmem:[#allocation2 + $0xc0] sm:$0xff] %vm3409, %v3330
      %3419 = vst.msk [vmem:[#allocation2 + $0xd8] sm:$0xff] %vm3409, %v3332
      %3420 = vst.msk [vmem:[#allocation2 + $0xf0] sm:$0xff] %vm3409, %v3334
      %3421 = vst.msk [vmem:[#allocation2 + $0x108] sm:$0xff] %vm3409, %v3336
      %3422 = vst.msk [vmem:[#allocation2 + $0x120] sm:$0xff] %vm3409, %v3338
      %3423 = vst.msk [vmem:[#allocation2 + $0x138] sm:$0xff] %vm3409, %v3340
      %3424 = vst.msk [vmem:[#allocation2 + $0x150] sm:$0xff] %vm3409, %v3342
      %3425 = vst.msk [vmem:[#allocation2 + $0x168] sm:$0xff] %vm3409, %v3344
      %3426 = vst.msk [vmem:[#allocation2 + $0x180] sm:$0xff] %vm3409, %v3346
      %3427 = vst.msk [vmem:[#allocation2 + $0x198] sm:$0xff] %vm3409, %v3348
      %3428 = vst.msk [vmem:[#allocation2 + $0x1b0] sm:$0xff] %vm3409, %v3350
      %3429 = vst.msk [vmem:[#allocation2 + $0x1c8] sm:$0xff] %vm3409, %v3352
      %3430 = vst.msk [vmem:[#allocation2 + $0x1e0] sm:$0xff] %vm3409, %v3354
      %3431 = vst.msk [vmem:[#allocation2 + $0x1f8] sm:$0xff] %vm3409, %v3356
      %3432 = vst.msk [vmem:[#allocation2 + $0x210] sm:$0xff] %vm3409, %v3358
      %3433 = vst.msk [vmem:[#allocation2 + $0x228] sm:$0xff] %vm3409, %v3360
      %3434 = vst.msk [vmem:[#allocation2 + $0x240] sm:$0xff] %vm3409, %v3362
      %3435 = vst.msk [vmem:[#allocation2 + $0x258] sm:$0xff] %vm3409, %v3364
      %3436 = vst.msk [vmem:[#allocation2 + $0x270] sm:$0xff] %vm3409, %v3366
      %3437 = vst.msk [vmem:[#allocation2 + $0x288] sm:$0xff] %vm3409, %v3368
      %3438 = vst.msk [vmem:[#allocation2 + $0x2a0] sm:$0xff] %vm3409, %v3370
      %3439 = vst.msk [vmem:[#allocation2 + $0x2b8] sm:$0xff] %vm3409, %v3372
      %3440 = vst.msk [vmem:[#allocation2 + $0x2d0] sm:$0xff] %vm3409, %v3374
      %3441 = vst.msk [vmem:[#allocation2 + $0x2e8] sm:$0xff] %vm3409, %v3376
      %v3442 = vld [vmem:[%s3184 + $0x1] sm:$0xff]
      %v3443 = vld [vmem:[%s3184 + $0x11] sm:$0xff]
      %v3444 = vld [vmem:[%s3184 + $0x21] sm:$0xff]
      %v3445 = vld [vmem:[%s3184 + $0x31] sm:$0xff]
      %v3446 = vld [vmem:[%s3184 + $0x41] sm:$0xff]
      %v3447 = vld [vmem:[%s3184 + $0x51] sm:$0xff]
      %v3448 = vld [vmem:[%s3184 + $0x61] sm:$0xff]
      %v3449 = vld [vmem:[%s3184 + $0x71] sm:$0xff]
      %v3450 = vld [vmem:[%s3184 + $0xa1] sm:$0xff]
      %v3451 = vld [vmem:[%s3184 + $0xb1] sm:$0xff]
      %v3452 = vld [vmem:[%s3184 + $0xc1] sm:$0xff]
      %v3453 = vld [vmem:[%s3184 + $0xd1] sm:$0xff]
      %v3454 = vld [vmem:[%s3184 + $0xe1] sm:$0xff]
      %v3455 = vld [vmem:[%s3184 + $0xf1] sm:$0xff]
      %v3456 = vld [vmem:[%s3184 + $0x101] sm:$0xff]
      %v3457 = vld [vmem:[%s3184 + $0x111] sm:$0xff]
      %v3458 = vld [vmem:[%s3184 + $0x141] sm:$0xff]
      %v3459 = vld [vmem:[%s3184 + $0x151] sm:$0xff]
      %v3460 = vld [vmem:[%s3184 + $0x161] sm:$0xff]
      %v3461 = vld [vmem:[%s3184 + $0x171] sm:$0xff]
      %v3462 = vld [vmem:[%s3184 + $0x181] sm:$0xff]
      %v3463 = vld [vmem:[%s3184 + $0x191] sm:$0xff]
      %v3464 = vld [vmem:[%s3184 + $0x1a1] sm:$0xff]
      %v3465 = vld [vmem:[%s3184 + $0x1b1] sm:$0xff]
      %v3466 = vld [vmem:[%s3184 + $0x1e1] sm:$0xff]
      %v3467 = vld [vmem:[%s3184 + $0x1f1] sm:$0xff]
      %v3468 = vld [vmem:[%s3184 + $0x201] sm:$0xff]
      %v3469 = vld [vmem:[%s3184 + $0x211] sm:$0xff]
      %v3470 = vld [vmem:[%s3184 + $0x221] sm:$0xff]
      %v3471 = vld [vmem:[%s3184 + $0x231] sm:$0xff]
      %v3472 = vld [vmem:[%s3184 + $0x241] sm:$0xff]
      %v3473 = vld [vmem:[%s3184 + $0x251] sm:$0xff]
      %v3474 = vld [vmem:[%s3184 + $0x281] sm:$0xff]
      %v3475 = vld [vmem:[%s3184 + $0x291] sm:$0xff]
      %v3476 = vld [vmem:[%s3184 + $0x2a1] sm:$0xff]
      %v3477 = vld [vmem:[%s3184 + $0x2b1] sm:$0xff]
      %v3478 = vld [vmem:[%s3184 + $0x2c1] sm:$0xff]
      %v3479 = vld [vmem:[%s3184 + $0x2d1] sm:$0xff]
      %v3480 = vld [vmem:[%s3184 + $0x2e1] sm:$0xff]
      %v3481 = vld [vmem:[%s3184 + $0x2f1] sm:$0xff]
      %v3482 = vld [vmem:[%s3184 + $0x321] sm:$0xff]
      %v3483 = vld [vmem:[%s3184 + $0x331] sm:$0xff]
      %v3484 = vld [vmem:[%s3184 + $0x341] sm:$0xff]
      %v3485 = vld [vmem:[%s3184 + $0x351] sm:$0xff]
      %v3486 = vld [vmem:[%s3184 + $0x361] sm:$0xff]
      %v3487 = vld [vmem:[%s3184 + $0x371] sm:$0xff]
      %v3488 = vld [vmem:[%s3184 + $0x381] sm:$0xff]
      %v3489 = vld [vmem:[%s3184 + $0x391] sm:$0xff]
      %v3490 = vld [vmem:[%s3184 + $0x3c1] sm:$0xff]
      %v3491 = vld [vmem:[%s3184 + $0x3d1] sm:$0xff]
      %v3492 = vld [vmem:[%s3184 + $0x3e1] sm:$0xff]
      %v3493 = vld [vmem:[%s3184 + $0x3f1] sm:$0xff]
      %v3494 = vld [vmem:[%s3184 + $0x401] sm:$0xff]
      %v3495 = vld [vmem:[%s3184 + $0x411] sm:$0xff]
      %v3496 = vld [vmem:[%s3184 + $0x421] sm:$0xff]
      %v3497 = vld [vmem:[%s3184 + $0x431] sm:$0xff]
      %v3498 = vld [vmem:[%s3184 + $0x461] sm:$0xff]
      %v3499 = vld [vmem:[%s3184 + $0x471] sm:$0xff]
      %v3500 = vld [vmem:[%s3184 + $0x481] sm:$0xff]
      %v3501 = vld [vmem:[%s3184 + $0x491] sm:$0xff]
      %v3502 = vld [vmem:[%s3184 + $0x4a1] sm:$0xff]
      %v3503 = vld [vmem:[%s3184 + $0x4b1] sm:$0xff]
      %v3504 = vld [vmem:[%s3184 + $0x4c1] sm:$0xff]
      %v3505 = vld [vmem:[%s3184 + $0x4d1] sm:$0xff]
      %v3506 = vpack.c.bf16 %v3443, %v3442
      %v3507 = vpack.c.bf16 %v3445, %v3444
      %v3508 = vpack.c.bf16 %v3447, %v3446
      %v3509 = vpack.c.bf16 %v3449, %v3448
      %v3510 = vpack.c.bf16 %v3451, %v3450
      %v3511 = vpack.c.bf16 %v3453, %v3452
      %v3512 = vpack.c.bf16 %v3455, %v3454
      %v3513 = vpack.c.bf16 %v3457, %v3456
      %v3514 = vpack.c.bf16 %v3459, %v3458
      %v3515 = vpack.c.bf16 %v3461, %v3460
      %v3516 = vpack.c.bf16 %v3463, %v3462
      %v3517 = vpack.c.bf16 %v3465, %v3464
      %v3518 = vpack.c.bf16 %v3467, %v3466
      %v3519 = vpack.c.bf16 %v3469, %v3468
      %v3520 = vpack.c.bf16 %v3471, %v3470
      %v3521 = vpack.c.bf16 %v3473, %v3472
      %v3522 = vpack.c.bf16 %v3475, %v3474
      %v3523 = vpack.c.bf16 %v3477, %v3476
      %v3524 = vpack.c.bf16 %v3479, %v3478
      %v3525 = vpack.c.bf16 %v3481, %v3480
      %v3526 = vpack.c.bf16 %v3483, %v3482
      %v3527 = vpack.c.bf16 %v3485, %v3484
      %v3528 = vpack.c.bf16 %v3487, %v3486
      %v3529 = vpack.c.bf16 %v3489, %v3488
      %v3530 = vpack.c.bf16 %v3491, %v3490
      %v3531 = vpack.c.bf16 %v3493, %v3492
      %v3532 = vpack.c.bf16 %v3495, %v3494
      %v3533 = vpack.c.bf16 %v3497, %v3496
      %v3534 = vpack.c.bf16 %v3499, %v3498
      %v3535 = vpack.c.bf16 %v3501, %v3500
      %v3536 = vpack.c.bf16 %v3503, %v3502
      %v3537 = vpack.c.bf16 %v3505, %v3504
      %3570 = vrot.lane.b32.xlu0 %v3506, 104
      %v3571 = vpop.permute.xlu0 %3570
      %3572 = vrot.lane.b32.xlu0 %v3507, 104
      %v3573 = vpop.permute.xlu0 %3572
      %3574 = vrot.lane.b32.xlu0 %v3508, 104
      %v3575 = vpop.permute.xlu0 %3574
      %3576 = vrot.lane.b32.xlu0 %v3509, 104
      %v3577 = vpop.permute.xlu0 %3576
      %3578 = vrot.lane.b32.xlu0 %v3510, 104
      %v3579 = vpop.permute.xlu0 %3578
      %3580 = vrot.lane.b32.xlu0 %v3511, 104
      %v3581 = vpop.permute.xlu0 %3580
      %3582 = vrot.lane.b32.xlu0 %v3512, 104
      %v3583 = vpop.permute.xlu0 %3582
      %3584 = vrot.lane.b32.xlu0 %v3513, 104
      %v3585 = vpop.permute.xlu0 %3584
      %3586 = vrot.lane.b32.xlu0 %v3514, 104
      %v3587 = vpop.permute.xlu0 %3586
      %3588 = vrot.lane.b32.xlu0 %v3515, 104
      %v3589 = vpop.permute.xlu0 %3588
      %3590 = vrot.lane.b32.xlu0 %v3516, 104
      %v3591 = vpop.permute.xlu0 %3590
      %3592 = vrot.lane.b32.xlu0 %v3517, 104
      %v3593 = vpop.permute.xlu0 %3592
      %3594 = vrot.lane.b32.xlu0 %v3518, 104
      %v3595 = vpop.permute.xlu0 %3594
      %3596 = vrot.lane.b32.xlu0 %v3519, 104
      %v3597 = vpop.permute.xlu0 %3596
      %3598 = vrot.lane.b32.xlu0 %v3520, 104
      %v3599 = vpop.permute.xlu0 %3598
      %3600 = vrot.lane.b32.xlu0 %v3521, 104
      %v3601 = vpop.permute.xlu0 %3600
      %3602 = vrot.lane.b32.xlu0 %v3522, 104
      %v3603 = vpop.permute.xlu0 %3602
      %3604 = vrot.lane.b32.xlu0 %v3523, 104
      %v3605 = vpop.permute.xlu0 %3604
      %3606 = vrot.lane.b32.xlu0 %v3524, 104
      %v3607 = vpop.permute.xlu0 %3606
      %3608 = vrot.lane.b32.xlu0 %v3525, 104
      %v3609 = vpop.permute.xlu0 %3608
      %3610 = vrot.lane.b32.xlu0 %v3526, 104
      %v3611 = vpop.permute.xlu0 %3610
      %3612 = vrot.lane.b32.xlu0 %v3527, 104
      %v3613 = vpop.permute.xlu0 %3612
      %3614 = vrot.lane.b32.xlu0 %v3528, 104
      %v3615 = vpop.permute.xlu0 %3614
      %3616 = vrot.lane.b32.xlu0 %v3529, 104
      %v3617 = vpop.permute.xlu0 %3616
      %3618 = vrot.lane.b32.xlu0 %v3530, 104
      %v3619 = vpop.permute.xlu0 %3618
      %3620 = vrot.lane.b32.xlu0 %v3531, 104
      %v3621 = vpop.permute.xlu0 %3620
      %3622 = vrot.lane.b32.xlu0 %v3532, 104
      %v3623 = vpop.permute.xlu0 %3622
      %3624 = vrot.lane.b32.xlu0 %v3533, 104
      %v3625 = vpop.permute.xlu0 %3624
      %3626 = vrot.lane.b32.xlu0 %v3534, 104
      %v3627 = vpop.permute.xlu0 %3626
      %3628 = vrot.lane.b32.xlu0 %v3535, 104
      %v3629 = vpop.permute.xlu0 %3628
      %3630 = vrot.lane.b32.xlu0 %v3536, 104
      %v3631 = vpop.permute.xlu0 %3630
      %3632 = vrot.lane.b32.xlu0 %v3537, 104
      %v3633 = vpop.permute.xlu0 %3632
      %vm3666 = vcmask 917312
      %3667 = vst.msk [vmem:[#allocation2] sm:$0xff] %vm3666, %v3571
      %3668 = vst.msk [vmem:[#allocation2 + $0x18] sm:$0xff] %vm3666, %v3573
      %3669 = vst.msk [vmem:[#allocation2 + $0x30] sm:$0xff] %vm3666, %v3575
      %3670 = vst.msk [vmem:[#allocation2 + $0x48] sm:$0xff] %vm3666, %v3577
      %3671 = vst.msk [vmem:[#allocation2 + $0x60] sm:$0xff] %vm3666, %v3579
      %3672 = vst.msk [vmem:[#allocation2 + $0x78] sm:$0xff] %vm3666, %v3581
      %3673 = vst.msk [vmem:[#allocation2 + $0x90] sm:$0xff] %vm3666, %v3583
      %3674 = vst.msk [vmem:[#allocation2 + $0xa8] sm:$0xff] %vm3666, %v3585
      %3675 = vst.msk [vmem:[#allocation2 + $0xc0] sm:$0xff] %vm3666, %v3587
      %3676 = vst.msk [vmem:[#allocation2 + $0xd8] sm:$0xff] %vm3666, %v3589
      %3677 = vst.msk [vmem:[#allocation2 + $0xf0] sm:$0xff] %vm3666, %v3591
      %3678 = vst.msk [vmem:[#allocation2 + $0x108] sm:$0xff] %vm3666, %v3593
      %3679 = vst.msk [vmem:[#allocation2 + $0x120] sm:$0xff] %vm3666, %v3595
      %3680 = vst.msk [vmem:[#allocation2 + $0x138] sm:$0xff] %vm3666, %v3597
      %3681 = vst.msk [vmem:[#allocation2 + $0x150] sm:$0xff] %vm3666, %v3599
      %3682 = vst.msk [vmem:[#allocation2 + $0x168] sm:$0xff] %vm3666, %v3601
      %3683 = vst.msk [vmem:[#allocation2 + $0x180] sm:$0xff] %vm3666, %v3603
      %3684 = vst.msk [vmem:[#allocation2 + $0x198] sm:$0xff] %vm3666, %v3605
      %3685 = vst.msk [vmem:[#allocation2 + $0x1b0] sm:$0xff] %vm3666, %v3607
      %3686 = vst.msk [vmem:[#allocation2 + $0x1c8] sm:$0xff] %vm3666, %v3609
      %3687 = vst.msk [vmem:[#allocation2 + $0x1e0] sm:$0xff] %vm3666, %v3611
      %3688 = vst.msk [vmem:[#allocation2 + $0x1f8] sm:$0xff] %vm3666, %v3613
      %3689 = vst.msk [vmem:[#allocation2 + $0x210] sm:$0xff] %vm3666, %v3615
      %3690 = vst.msk [vmem:[#allocation2 + $0x228] sm:$0xff] %vm3666, %v3617
      %3691 = vst.msk [vmem:[#allocation2 + $0x240] sm:$0xff] %vm3666, %v3619
      %3692 = vst.msk [vmem:[#allocation2 + $0x258] sm:$0xff] %vm3666, %v3621
      %3693 = vst.msk [vmem:[#allocation2 + $0x270] sm:$0xff] %vm3666, %v3623
      %3694 = vst.msk [vmem:[#allocation2 + $0x288] sm:$0xff] %vm3666, %v3625
      %3695 = vst.msk [vmem:[#allocation2 + $0x2a0] sm:$0xff] %vm3666, %v3627
      %3696 = vst.msk [vmem:[#allocation2 + $0x2b8] sm:$0xff] %vm3666, %v3629
      %3697 = vst.msk [vmem:[#allocation2 + $0x2d0] sm:$0xff] %vm3666, %v3631
      %3698 = vst.msk [vmem:[#allocation2 + $0x2e8] sm:$0xff] %vm3666, %v3633
      %v3699 = vld [vmem:[%s3184 + $0x2] sm:$0xff]
      %v3700 = vld [vmem:[%s3184 + $0x12] sm:$0xff]
      %v3701 = vld [vmem:[%s3184 + $0x22] sm:$0xff]
      %v3702 = vld [vmem:[%s3184 + $0x32] sm:$0xff]
      %v3703 = vld [vmem:[%s3184 + $0x42] sm:$0xff]
      %v3704 = vld [vmem:[%s3184 + $0x52] sm:$0xff]
      %v3705 = vld [vmem:[%s3184 + $0x62] sm:$0xff]
      %v3706 = vld [vmem:[%s3184 + $0x72] sm:$0xff]
      %v3707 = vld [vmem:[%s3184 + $0xa2] sm:$0xff]
      %v3708 = vld [vmem:[%s3184 + $0xb2] sm:$0xff]
      %v3709 = vld [vmem:[%s3184 + $0xc2] sm:$0xff]
      %v3710 = vld [vmem:[%s3184 + $0xd2] sm:$0xff]
      %v3711 = vld [vmem:[%s3184 + $0xe2] sm:$0xff]
      %v3712 = vld [vmem:[%s3184 + $0xf2] sm:$0xff]
      %v3713 = vld [vmem:[%s3184 + $0x102] sm:$0xff]
      %v3714 = vld [vmem:[%s3184 + $0x112] sm:$0xff]
      %v3715 = vld [vmem:[%s3184 + $0x142] sm:$0xff]
      %v3716 = vld [vmem:[%s3184 + $0x152] sm:$0xff]
      %v3717 = vld [vmem:[%s3184 + $0x162] sm:$0xff]
      %v3718 = vld [vmem:[%s3184 + $0x172] sm:$0xff]
      %v3719 = vld [vmem:[%s3184 + $0x182] sm:$0xff]
      %v3720 = vld [vmem:[%s3184 + $0x192] sm:$0xff]
      %v3721 = vld [vmem:[%s3184 + $0x1a2] sm:$0xff]
      %v3722 = vld [vmem:[%s3184 + $0x1b2] sm:$0xff]
      %v3723 = vld [vmem:[%s3184 + $0x1e2] sm:$0xff]
      %v3724 = vld [vmem:[%s3184 + $0x1f2] sm:$0xff]
      %v3725 = vld [vmem:[%s3184 + $0x202] sm:$0xff]
      %v3726 = vld [vmem:[%s3184 + $0x212] sm:$0xff]
      %v3727 = vld [vmem:[%s3184 + $0x222] sm:$0xff]
      %v3728 = vld [vmem:[%s3184 + $0x232] sm:$0xff]
      %v3729 = vld [vmem:[%s3184 + $0x242] sm:$0xff]
      %v3730 = vld [vmem:[%s3184 + $0x252] sm:$0xff]
      %v3731 = vld [vmem:[%s3184 + $0x282] sm:$0xff]
      %v3732 = vld [vmem:[%s3184 + $0x292] sm:$0xff]
      %v3733 = vld [vmem:[%s3184 + $0x2a2] sm:$0xff]
      %v3734 = vld [vmem:[%s3184 + $0x2b2] sm:$0xff]
      %v3735 = vld [vmem:[%s3184 + $0x2c2] sm:$0xff]
      %v3736 = vld [vmem:[%s3184 + $0x2d2] sm:$0xff]
      %v3737 = vld [vmem:[%s3184 + $0x2e2] sm:$0xff]
      %v3738 = vld [vmem:[%s3184 + $0x2f2] sm:$0xff]
      %v3739 = vld [vmem:[%s3184 + $0x322] sm:$0xff]
      %v3740 = vld [vmem:[%s3184 + $0x332] sm:$0xff]
      %v3741 = vld [vmem:[%s3184 + $0x342] sm:$0xff]
      %v3742 = vld [vmem:[%s3184 + $0x352] sm:$0xff]
      %v3743 = vld [vmem:[%s3184 + $0x362] sm:$0xff]
      %v3744 = vld [vmem:[%s3184 + $0x372] sm:$0xff]
      %v3745 = vld [vmem:[%s3184 + $0x382] sm:$0xff]
      %v3746 = vld [vmem:[%s3184 + $0x392] sm:$0xff]
      %v3747 = vld [vmem:[%s3184 + $0x3c2] sm:$0xff]
      %v3748 = vld [vmem:[%s3184 + $0x3d2] sm:$0xff]
      %v3749 = vld [vmem:[%s3184 + $0x3e2] sm:$0xff]
      %v3750 = vld [vmem:[%s3184 + $0x3f2] sm:$0xff]
      %v3751 = vld [vmem:[%s3184 + $0x402] sm:$0xff]
      %v3752 = vld [vmem:[%s3184 + $0x412] sm:$0xff]
      %v3753 = vld [vmem:[%s3184 + $0x422] sm:$0xff]
      %v3754 = vld [vmem:[%s3184 + $0x432] sm:$0xff]
      %v3755 = vld [vmem:[%s3184 + $0x462] sm:$0xff]
      %v3756 = vld [vmem:[%s3184 + $0x472] sm:$0xff]
      %v3757 = vld [vmem:[%s3184 + $0x482] sm:$0xff]
      %v3758 = vld [vmem:[%s3184 + $0x492] sm:$0xff]
      %v3759 = vld [vmem:[%s3184 + $0x4a2] sm:$0xff]
      %v3760 = vld [vmem:[%s3184 + $0x4b2] sm:$0xff]
      %v3761 = vld [vmem:[%s3184 + $0x4c2] sm:$0xff]
      %v3762 = vld [vmem:[%s3184 + $0x4d2] sm:$0xff]
      %v3763 = vpack.c.bf16 %v3700, %v3699
      %v3764 = vpack.c.bf16 %v3702, %v3701
      %v3765 = vpack.c.bf16 %v3704, %v3703
      %v3766 = vpack.c.bf16 %v3706, %v3705
      %v3767 = vpack.c.bf16 %v3708, %v3707
      %v3768 = vpack.c.bf16 %v3710, %v3709
      %v3769 = vpack.c.bf16 %v3712, %v3711
      %v3770 = vpack.c.bf16 %v3714, %v3713
      %v3771 = vpack.c.bf16 %v3716, %v3715
      %v3772 = vpack.c.bf16 %v3718, %v3717
      %v3773 = vpack.c.bf16 %v3720, %v3719
      %v3774 = vpack.c.bf16 %v3722, %v3721
      %v3775 = vpack.c.bf16 %v3724, %v3723
      %v3776 = vpack.c.bf16 %v3726, %v3725
      %v3777 = vpack.c.bf16 %v3728, %v3727
      %v3778 = vpack.c.bf16 %v3730, %v3729
      %v3779 = vpack.c.bf16 %v3732, %v3731
      %v3780 = vpack.c.bf16 %v3734, %v3733
      %v3781 = vpack.c.bf16 %v3736, %v3735
      %v3782 = vpack.c.bf16 %v3738, %v3737
      %v3783 = vpack.c.bf16 %v3740, %v3739
      %v3784 = vpack.c.bf16 %v3742, %v3741
      %v3785 = vpack.c.bf16 %v3744, %v3743
      %v3786 = vpack.c.bf16 %v3746, %v3745
      %v3787 = vpack.c.bf16 %v3748, %v3747
      %v3788 = vpack.c.bf16 %v3750, %v3749
      %v3789 = vpack.c.bf16 %v3752, %v3751
      %v3790 = vpack.c.bf16 %v3754, %v3753
      %v3791 = vpack.c.bf16 %v3756, %v3755
      %v3792 = vpack.c.bf16 %v3758, %v3757
      %v3793 = vpack.c.bf16 %v3760, %v3759
      %v3794 = vpack.c.bf16 %v3762, %v3761
      %3827 = vrot.lane.b32.xlu0 %v3763, 112
      %v3828 = vpop.permute.xlu0 %3827
      %3829 = vrot.lane.b32.xlu0 %v3764, 112
      %v3830 = vpop.permute.xlu0 %3829
      %3831 = vrot.lane.b32.xlu0 %v3765, 112
      %v3832 = vpop.permute.xlu0 %3831
      %3833 = vrot.lane.b32.xlu0 %v3766, 112
      %v3834 = vpop.permute.xlu0 %3833
      %3835 = vrot.lane.b32.xlu0 %v3767, 112
      %v3836 = vpop.permute.xlu0 %3835
      %3837 = vrot.lane.b32.xlu0 %v3768, 112
      %v3838 = vpop.permute.xlu0 %3837
      %3839 = vrot.lane.b32.xlu0 %v3769, 112
      %v3840 = vpop.permute.xlu0 %3839
      %3841 = vrot.lane.b32.xlu0 %v3770, 112
      %v3842 = vpop.permute.xlu0 %3841
      %3843 = vrot.lane.b32.xlu0 %v3771, 112
      %v3844 = vpop.permute.xlu0 %3843
      %3845 = vrot.lane.b32.xlu0 %v3772, 112
      %v3846 = vpop.permute.xlu0 %3845
      %3847 = vrot.lane.b32.xlu0 %v3773, 112
      %v3848 = vpop.permute.xlu0 %3847
      %3849 = vrot.lane.b32.xlu0 %v3774, 112
      %v3850 = vpop.permute.xlu0 %3849
      %3851 = vrot.lane.b32.xlu0 %v3775, 112
      %v3852 = vpop.permute.xlu0 %3851
      %3853 = vrot.lane.b32.xlu0 %v3776, 112
      %v3854 = vpop.permute.xlu0 %3853
      %3855 = vrot.lane.b32.xlu0 %v3777, 112
      %v3856 = vpop.permute.xlu0 %3855
      %3857 = vrot.lane.b32.xlu0 %v3778, 112
      %v3858 = vpop.permute.xlu0 %3857
      %3859 = vrot.lane.b32.xlu0 %v3779, 112
      %v3860 = vpop.permute.xlu0 %3859
      %3861 = vrot.lane.b32.xlu0 %v3780, 112
      %v3862 = vpop.permute.xlu0 %3861
      %3863 = vrot.lane.b32.xlu0 %v3781, 112
      %v3864 = vpop.permute.xlu0 %3863
      %3865 = vrot.lane.b32.xlu0 %v3782, 112
      %v3866 = vpop.permute.xlu0 %3865
      %3867 = vrot.lane.b32.xlu0 %v3783, 112
      %v3868 = vpop.permute.xlu0 %3867
      %3869 = vrot.lane.b32.xlu0 %v3784, 112
      %v3870 = vpop.permute.xlu0 %3869
      %3871 = vrot.lane.b32.xlu0 %v3785, 112
      %v3872 = vpop.permute.xlu0 %3871
      %3873 = vrot.lane.b32.xlu0 %v3786, 112
      %v3874 = vpop.permute.xlu0 %3873
      %3875 = vrot.lane.b32.xlu0 %v3787, 112
      %v3876 = vpop.permute.xlu0 %3875
      %3877 = vrot.lane.b32.xlu0 %v3788, 112
      %v3878 = vpop.permute.xlu0 %3877
      %3879 = vrot.lane.b32.xlu0 %v3789, 112
      %v3880 = vpop.permute.xlu0 %3879
      %3881 = vrot.lane.b32.xlu0 %v3790, 112
      %v3882 = vpop.permute.xlu0 %3881
      %3883 = vrot.lane.b32.xlu0 %v3791, 112
      %v3884 = vpop.permute.xlu0 %3883
      %3885 = vrot.lane.b32.xlu0 %v3792, 112
      %v3886 = vpop.permute.xlu0 %3885
      %3887 = vrot.lane.b32.xlu0 %v3793, 112
      %v3888 = vpop.permute.xlu0 %3887
      %3889 = vrot.lane.b32.xlu0 %v3794, 112
      %v3890 = vpop.permute.xlu0 %3889
      %vm3923 = vcmask 982912
      %3924 = vst.msk [vmem:[#allocation2] sm:$0xff] %vm3923, %v3828
      %3925 = vst.msk [vmem:[#allocation2 + $0x18] sm:$0xff] %vm3923, %v3830
      %3926 = vst.msk [vmem:[#allocation2 + $0x30] sm:$0xff] %vm3923, %v3832
      %3927 = vst.msk [vmem:[#allocation2 + $0x48] sm:$0xff] %vm3923, %v3834
      %3928 = vst.msk [vmem:[#allocation2 + $0x60] sm:$0xff] %vm3923, %v3836
      %3929 = vst.msk [vmem:[#allocation2 + $0x78] sm:$0xff] %vm3923, %v3838
      %3930 = vst.msk [vmem:[#allocation2 + $0x90] sm:$0xff] %vm3923, %v3840
      %3931 = vst.msk [vmem:[#allocation2 + $0xa8] sm:$0xff] %vm3923, %v3842
      %3932 = vst.msk [vmem:[#allocation2 + $0xc0] sm:$0xff] %vm3923, %v3844
      %3933 = vst.msk [vmem:[#allocation2 + $0xd8] sm:$0xff] %vm3923, %v3846
      %3934 = vst.msk [vmem:[#allocation2 + $0xf0] sm:$0xff] %vm3923, %v3848
      %3935 = vst.msk [vmem:[#allocation2 + $0x108] sm:$0xff] %vm3923, %v3850
      %3936 = vst.msk [vmem:[#allocation2 + $0x120] sm:$0xff] %vm3923, %v3852
      %3937 = vst.msk [vmem:[#allocation2 + $0x138] sm:$0xff] %vm3923, %v3854
      %3938 = vst.msk [vmem:[#allocation2 + $0x150] sm:$0xff] %vm3923, %v3856
      %3939 = vst.msk [vmem:[#allocation2 + $0x168] sm:$0xff] %vm3923, %v3858
      %3940 = vst.msk [vmem:[#allocation2 + $0x180] sm:$0xff] %vm3923, %v3860
      %3941 = vst.msk [vmem:[#allocation2 + $0x198] sm:$0xff] %vm3923, %v3862
      %3942 = vst.msk [vmem:[#allocation2 + $0x1b0] sm:$0xff] %vm3923, %v3864
      %3943 = vst.msk [vmem:[#allocation2 + $0x1c8] sm:$0xff] %vm3923, %v3866
      %3944 = vst.msk [vmem:[#allocation2 + $0x1e0] sm:$0xff] %vm3923, %v3868
      %3945 = vst.msk [vmem:[#allocation2 + $0x1f8] sm:$0xff] %vm3923, %v3870
      %3946 = vst.msk [vmem:[#allocation2 + $0x210] sm:$0xff] %vm3923, %v3872
      %3947 = vst.msk [vmem:[#allocation2 + $0x228] sm:$0xff] %vm3923, %v3874
      %3948 = vst.msk [vmem:[#allocation2 + $0x240] sm:$0xff] %vm3923, %v3876
      %3949 = vst.msk [vmem:[#allocation2 + $0x258] sm:$0xff] %vm3923, %v3878
      %3950 = vst.msk [vmem:[#allocation2 + $0x270] sm:$0xff] %vm3923, %v3880
      %3951 = vst.msk [vmem:[#allocation2 + $0x288] sm:$0xff] %vm3923, %v3882
      %3952 = vst.msk [vmem:[#allocation2 + $0x2a0] sm:$0xff] %vm3923, %v3884
      %3953 = vst.msk [vmem:[#allocation2 + $0x2b8] sm:$0xff] %vm3923, %v3886
      %3954 = vst.msk [vmem:[#allocation2 + $0x2d0] sm:$0xff] %vm3923, %v3888
      %3955 = vst.msk [vmem:[#allocation2 + $0x2e8] sm:$0xff] %vm3923, %v3890
      %s3956 = sadd.s32 32, %s2410
      %s3957 = scalar_lea.vmem %s207, %s3956
      %v3958 = vld [vmem:[%s3957] sm:$0xff]
      %v3959 = vld [vmem:[%s3957 + $0x10] sm:$0xff]
      %v3960 = vld [vmem:[%s3957 + $0x20] sm:$0xff]
      %v3961 = vld [vmem:[%s3957 + $0x30] sm:$0xff]
      %v3962 = vld [vmem:[%s3957 + $0x40] sm:$0xff]
      %v3963 = vld [vmem:[%s3957 + $0x50] sm:$0xff]
      %v3964 = vld [vmem:[%s3957 + $0x60] sm:$0xff]
      %v3965 = vld [vmem:[%s3957 + $0x70] sm:$0xff]
      %v3966 = vld [vmem:[%s3957 + $0xa0] sm:$0xff]
      %v3967 = vld [vmem:[%s3957 + $0xb0] sm:$0xff]
      %v3968 = vld [vmem:[%s3957 + $0xc0] sm:$0xff]
      %v3969 = vld [vmem:[%s3957 + $0xd0] sm:$0xff]
      %v3970 = vld [vmem:[%s3957 + $0xe0] sm:$0xff]
      %v3971 = vld [vmem:[%s3957 + $0xf0] sm:$0xff]
      %v3972 = vld [vmem:[%s3957 + $0x100] sm:$0xff]
      %v3973 = vld [vmem:[%s3957 + $0x110] sm:$0xff]
      %v3974 = vld [vmem:[%s3957 + $0x140] sm:$0xff]
      %v3975 = vld [vmem:[%s3957 + $0x150] sm:$0xff]
      %v3976 = vld [vmem:[%s3957 + $0x160] sm:$0xff]
      %v3977 = vld [vmem:[%s3957 + $0x170] sm:$0xff]
      %v3978 = vld [vmem:[%s3957 + $0x180] sm:$0xff]
      %v3979 = vld [vmem:[%s3957 + $0x190] sm:$0xff]
      %v3980 = vld [vmem:[%s3957 + $0x1a0] sm:$0xff]
      %v3981 = vld [vmem:[%s3957 + $0x1b0] sm:$0xff]
      %v3982 = vld [vmem:[%s3957 + $0x1e0] sm:$0xff]
      %v3983 = vld [vmem:[%s3957 + $0x1f0] sm:$0xff]
      %v3984 = vld [vmem:[%s3957 + $0x200] sm:$0xff]
      %v3985 = vld [vmem:[%s3957 + $0x210] sm:$0xff]
      %v3986 = vld [vmem:[%s3957 + $0x220] sm:$0xff]
      %v3987 = vld [vmem:[%s3957 + $0x230] sm:$0xff]
      %v3988 = vld [vmem:[%s3957 + $0x240] sm:$0xff]
      %v3989 = vld [vmem:[%s3957 + $0x250] sm:$0xff]
      %v3990 = vld [vmem:[%s3957 + $0x280] sm:$0xff]
      %v3991 = vld [vmem:[%s3957 + $0x290] sm:$0xff]
      %v3992 = vld [vmem:[%s3957 + $0x2a0] sm:$0xff]
      %v3993 = vld [vmem:[%s3957 + $0x2b0] sm:$0xff]
      %v3994 = vld [vmem:[%s3957 + $0x2c0] sm:$0xff]
      %v3995 = vld [vmem:[%s3957 + $0x2d0] sm:$0xff]
      %v3996 = vld [vmem:[%s3957 + $0x2e0] sm:$0xff]
      %v3997 = vld [vmem:[%s3957 + $0x2f0] sm:$0xff]
      %v3998 = vld [vmem:[%s3957 + $0x320] sm:$0xff]
      %v3999 = vld [vmem:[%s3957 + $0x330] sm:$0xff]
      %v4000 = vld [vmem:[%s3957 + $0x340] sm:$0xff]
      %v4001 = vld [vmem:[%s3957 + $0x350] sm:$0xff]
      %v4002 = vld [vmem:[%s3957 + $0x360] sm:$0xff]
      %v4003 = vld [vmem:[%s3957 + $0x370] sm:$0xff]
      %v4004 = vld [vmem:[%s3957 + $0x380] sm:$0xff]
      %v4005 = vld [vmem:[%s3957 + $0x390] sm:$0xff]
      %v4006 = vld [vmem:[%s3957 + $0x3c0] sm:$0xff]
      %v4007 = vld [vmem:[%s3957 + $0x3d0] sm:$0xff]
      %v4008 = vld [vmem:[%s3957 + $0x3e0] sm:$0xff]
      %v4009 = vld [vmem:[%s3957 + $0x3f0] sm:$0xff]
      %v4010 = vld [vmem:[%s3957 + $0x400] sm:$0xff]
      %v4011 = vld [vmem:[%s3957 + $0x410] sm:$0xff]
      %v4012 = vld [vmem:[%s3957 + $0x420] sm:$0xff]
      %v4013 = vld [vmem:[%s3957 + $0x430] sm:$0xff]
      %v4014 = vld [vmem:[%s3957 + $0x460] sm:$0xff]
      %v4015 = vld [vmem:[%s3957 + $0x470] sm:$0xff]
      %v4016 = vld [vmem:[%s3957 + $0x480] sm:$0xff]
      %v4017 = vld [vmem:[%s3957 + $0x490] sm:$0xff]
      %v4018 = vld [vmem:[%s3957 + $0x4a0] sm:$0xff]
      %v4019 = vld [vmem:[%s3957 + $0x4b0] sm:$0xff]
      %v4020 = vld [vmem:[%s3957 + $0x4c0] sm:$0xff]
      %v4021 = vld [vmem:[%s3957 + $0x4d0] sm:$0xff]
      %v4022 = vpack.c.bf16 %v3959, %v3958
      %v4023 = vpack.c.bf16 %v3961, %v3960
      %v4024 = vpack.c.bf16 %v3963, %v3962
      %v4025 = vpack.c.bf16 %v3965, %v3964
      %v4026 = vpack.c.bf16 %v3967, %v3966
      %v4027 = vpack.c.bf16 %v3969, %v3968
      %v4028 = vpack.c.bf16 %v3971, %v3970
      %v4029 = vpack.c.bf16 %v3973, %v3972
      %v4030 = vpack.c.bf16 %v3975, %v3974
      %v4031 = vpack.c.bf16 %v3977, %v3976
      %v4032 = vpack.c.bf16 %v3979, %v3978
      %v4033 = vpack.c.bf16 %v3981, %v3980
      %v4034 = vpack.c.bf16 %v3983, %v3982
      %v4035 = vpack.c.bf16 %v3985, %v3984
      %v4036 = vpack.c.bf16 %v3987, %v3986
      %v4037 = vpack.c.bf16 %v3989, %v3988
      %v4038 = vpack.c.bf16 %v3991, %v3990
      %v4039 = vpack.c.bf16 %v3993, %v3992
      %v4040 = vpack.c.bf16 %v3995, %v3994
      %v4041 = vpack.c.bf16 %v3997, %v3996
      %v4042 = vpack.c.bf16 %v3999, %v3998
      %v4043 = vpack.c.bf16 %v4001, %v4000
      %v4044 = vpack.c.bf16 %v4003, %v4002
      %v4045 = vpack.c.bf16 %v4005, %v4004
      %v4046 = vpack.c.bf16 %v4007, %v4006
      %v4047 = vpack.c.bf16 %v4009, %v4008
      %v4048 = vpack.c.bf16 %v4011, %v4010
      %v4049 = vpack.c.bf16 %v4013, %v4012
      %v4050 = vpack.c.bf16 %v4015, %v4014
      %v4051 = vpack.c.bf16 %v4017, %v4016
      %v4052 = vpack.c.bf16 %v4019, %v4018
      %v4053 = vpack.c.bf16 %v4021, %v4020
      %4086 = vrot.lane.b32.xlu0 %v4022, 120
      %v4087 = vpop.permute.xlu0 %4086
      %4088 = vrot.lane.b32.xlu0 %v4023, 120
      %v4089 = vpop.permute.xlu0 %4088
      %4090 = vrot.lane.b32.xlu0 %v4024, 120
      %v4091 = vpop.permute.xlu0 %4090
      %4092 = vrot.lane.b32.xlu0 %v4025, 120
      %v4093 = vpop.permute.xlu0 %4092
      %4094 = vrot.lane.b32.xlu0 %v4026, 120
      %v4095 = vpop.permute.xlu0 %4094
      %4096 = vrot.lane.b32.xlu0 %v4027, 120
      %v4097 = vpop.permute.xlu0 %4096
      %4098 = vrot.lane.b32.xlu0 %v4028, 120
      %v4099 = vpop.permute.xlu0 %4098
      %4100 = vrot.lane.b32.xlu0 %v4029, 120
      %v4101 = vpop.permute.xlu0 %4100
      %4102 = vrot.lane.b32.xlu0 %v4030, 120
      %v4103 = vpop.permute.xlu0 %4102
      %4104 = vrot.lane.b32.xlu0 %v4031, 120
      %v4105 = vpop.permute.xlu0 %4104
      %4106 = vrot.lane.b32.xlu0 %v4032, 120
      %v4107 = vpop.permute.xlu0 %4106
      %4108 = vrot.lane.b32.xlu0 %v4033, 120
      %v4109 = vpop.permute.xlu0 %4108
      %4110 = vrot.lane.b32.xlu0 %v4034, 120
      %v4111 = vpop.permute.xlu0 %4110
      %4112 = vrot.lane.b32.xlu0 %v4035, 120
      %v4113 = vpop.permute.xlu0 %4112
      %4114 = vrot.lane.b32.xlu0 %v4036, 120
      %v4115 = vpop.permute.xlu0 %4114
      %4116 = vrot.lane.b32.xlu0 %v4037, 120
      %v4117 = vpop.permute.xlu0 %4116
      %4118 = vrot.lane.b32.xlu0 %v4038, 120
      %v4119 = vpop.permute.xlu0 %4118
      %4120 = vrot.lane.b32.xlu0 %v4039, 120
      %v4121 = vpop.permute.xlu0 %4120
      %4122 = vrot.lane.b32.xlu0 %v4040, 120
      %v4123 = vpop.permute.xlu0 %4122
      %4124 = vrot.lane.b32.xlu0 %v4041, 120
      %v4125 = vpop.permute.xlu0 %4124
      %4126 = vrot.lane.b32.xlu0 %v4042, 120
      %v4127 = vpop.permute.xlu0 %4126
      %4128 = vrot.lane.b32.xlu0 %v4043, 120
      %v4129 = vpop.permute.xlu0 %4128
      %4130 = vrot.lane.b32.xlu0 %v4044, 120
      %v4131 = vpop.permute.xlu0 %4130
      %4132 = vrot.lane.b32.xlu0 %v4045, 120
      %v4133 = vpop.permute.xlu0 %4132
      %4134 = vrot.lane.b32.xlu0 %v4046, 120
      %v4135 = vpop.permute.xlu0 %4134
      %4136 = vrot.lane.b32.xlu0 %v4047, 120
      %v4137 = vpop.permute.xlu0 %4136
      %4138 = vrot.lane.b32.xlu0 %v4048, 120
      %v4139 = vpop.permute.xlu0 %4138
      %4140 = vrot.lane.b32.xlu0 %v4049, 120
      %v4141 = vpop.permute.xlu0 %4140
      %4142 = vrot.lane.b32.xlu0 %v4050, 120
      %v4143 = vpop.permute.xlu0 %4142
      %4144 = vrot.lane.b32.xlu0 %v4051, 120
      %v4145 = vpop.permute.xlu0 %4144
      %4146 = vrot.lane.b32.xlu0 %v4052, 120
      %v4147 = vpop.permute.xlu0 %4146
      %4148 = vrot.lane.b32.xlu0 %v4053, 120
      %v4149 = vpop.permute.xlu0 %4148
      %vm4182 = vcmask 1048512
      %4183 = vst.msk [vmem:[#allocation2] sm:$0xff] %vm4182, %v4087
      %4184 = vst.msk [vmem:[#allocation2 + $0x18] sm:$0xff] %vm4182, %v4089
      %4185 = vst.msk [vmem:[#allocation2 + $0x30] sm:$0xff] %vm4182, %v4091
      %4186 = vst.msk [vmem:[#allocation2 + $0x48] sm:$0xff] %vm4182, %v4093
      %4187 = vst.msk [vmem:[#allocation2 + $0x60] sm:$0xff] %vm4182, %v4095
      %4188 = vst.msk [vmem:[#allocation2 + $0x78] sm:$0xff] %vm4182, %v4097
      %4189 = vst.msk [vmem:[#allocation2 + $0x90] sm:$0xff] %vm4182, %v4099
      %4190 = vst.msk [vmem:[#allocation2 + $0xa8] sm:$0xff] %vm4182, %v4101
      %4191 = vst.msk [vmem:[#allocation2 + $0xc0] sm:$0xff] %vm4182, %v4103
      %4192 = vst.msk [vmem:[#allocation2 + $0xd8] sm:$0xff] %vm4182, %v4105
      %4193 = vst.msk [vmem:[#allocation2 + $0xf0] sm:$0xff] %vm4182, %v4107
      %4194 = vst.msk [vmem:[#allocation2 + $0x108] sm:$0xff] %vm4182, %v4109
      %4195 = vst.msk [vmem:[#allocation2 + $0x120] sm:$0xff] %vm4182, %v4111
      %4196 = vst.msk [vmem:[#allocation2 + $0x138] sm:$0xff] %vm4182, %v4113
      %4197 = vst.msk [vmem:[#allocation2 + $0x150] sm:$0xff] %vm4182, %v4115
      %4198 = vst.msk [vmem:[#allocation2 + $0x168] sm:$0xff] %vm4182, %v4117
      %4199 = vst.msk [vmem:[#allocation2 + $0x180] sm:$0xff] %vm4182, %v4119
      %4200 = vst.msk [vmem:[#allocation2 + $0x198] sm:$0xff] %vm4182, %v4121
      %4201 = vst.msk [vmem:[#allocation2 + $0x1b0] sm:$0xff] %vm4182, %v4123
      %4202 = vst.msk [vmem:[#allocation2 + $0x1c8] sm:$0xff] %vm4182, %v4125
      %4203 = vst.msk [vmem:[#allocation2 + $0x1e0] sm:$0xff] %vm4182, %v4127
      %4204 = vst.msk [vmem:[#allocation2 + $0x1f8] sm:$0xff] %vm4182, %v4129
      %4205 = vst.msk [vmem:[#allocation2 + $0x210] sm:$0xff] %vm4182, %v4131
      %4206 = vst.msk [vmem:[#allocation2 + $0x228] sm:$0xff] %vm4182, %v4133
      %4207 = vst.msk [vmem:[#allocation2 + $0x240] sm:$0xff] %vm4182, %v4135
      %4208 = vst.msk [vmem:[#allocation2 + $0x258] sm:$0xff] %vm4182, %v4137
      %4209 = vst.msk [vmem:[#allocation2 + $0x270] sm:$0xff] %vm4182, %v4139
      %4210 = vst.msk [vmem:[#allocation2 + $0x288] sm:$0xff] %vm4182, %v4141
      %4211 = vst.msk [vmem:[#allocation2 + $0x2a0] sm:$0xff] %vm4182, %v4143
      %4212 = vst.msk [vmem:[#allocation2 + $0x2b8] sm:$0xff] %vm4182, %v4145
      %4213 = vst.msk [vmem:[#allocation2 + $0x2d0] sm:$0xff] %vm4182, %v4147
      %4214 = vst.msk [vmem:[#allocation2 + $0x2e8] sm:$0xff] %vm4182, %v4149
      %v4215 = vld [vmem:[%s3957 + $0x1] sm:$0xff]
      %v4216 = vld [vmem:[%s3957 + $0x11] sm:$0xff]
      %v4217 = vld [vmem:[%s3957 + $0x21] sm:$0xff]
      %v4218 = vld [vmem:[%s3957 + $0x31] sm:$0xff]
      %v4219 = vld [vmem:[%s3957 + $0x41] sm:$0xff]
      %v4220 = vld [vmem:[%s3957 + $0x51] sm:$0xff]
      %v4221 = vld [vmem:[%s3957 + $0x61] sm:$0xff]
      %v4222 = vld [vmem:[%s3957 + $0x71] sm:$0xff]
      %v4223 = vld [vmem:[%s3957 + $0xa1] sm:$0xff]
      %v4224 = vld [vmem:[%s3957 + $0xb1] sm:$0xff]
      %v4225 = vld [vmem:[%s3957 + $0xc1] sm:$0xff]
      %v4226 = vld [vmem:[%s3957 + $0xd1] sm:$0xff]
      %v4227 = vld [vmem:[%s3957 + $0xe1] sm:$0xff]
      %v4228 = vld [vmem:[%s3957 + $0xf1] sm:$0xff]
      %v4229 = vld [vmem:[%s3957 + $0x101] sm:$0xff]
      %v4230 = vld [vmem:[%s3957 + $0x111] sm:$0xff]
      %v4231 = vld [vmem:[%s3957 + $0x141] sm:$0xff]
      %v4232 = vld [vmem:[%s3957 + $0x151] sm:$0xff]
      %v4233 = vld [vmem:[%s3957 + $0x161] sm:$0xff]
      %v4234 = vld [vmem:[%s3957 + $0x171] sm:$0xff]
      %v4235 = vld [vmem:[%s3957 + $0x181] sm:$0xff]
      %v4236 = vld [vmem:[%s3957 + $0x191] sm:$0xff]
      %v4237 = vld [vmem:[%s3957 + $0x1a1] sm:$0xff]
      %v4238 = vld [vmem:[%s3957 + $0x1b1] sm:$0xff]
      %v4239 = vld [vmem:[%s3957 + $0x1e1] sm:$0xff]
      %v4240 = vld [vmem:[%s3957 + $0x1f1] sm:$0xff]
      %v4241 = vld [vmem:[%s3957 + $0x201] sm:$0xff]
      %v4242 = vld [vmem:[%s3957 + $0x211] sm:$0xff]
      %v4243 = vld [vmem:[%s3957 + $0x221] sm:$0xff]
      %v4244 = vld [vmem:[%s3957 + $0x231] sm:$0xff]
      %v4245 = vld [vmem:[%s3957 + $0x241] sm:$0xff]
      %v4246 = vld [vmem:[%s3957 + $0x251] sm:$0xff]
      %v4247 = vld [vmem:[%s3957 + $0x281] sm:$0xff]
      %v4248 = vld [vmem:[%s3957 + $0x291] sm:$0xff]
      %v4249 = vld [vmem:[%s3957 + $0x2a1] sm:$0xff]
      %v4250 = vld [vmem:[%s3957 + $0x2b1] sm:$0xff]
      %v4251 = vld [vmem:[%s3957 + $0x2c1] sm:$0xff]
      %v4252 = vld [vmem:[%s3957 + $0x2d1] sm:$0xff]
      %v4253 = vld [vmem:[%s3957 + $0x2e1] sm:$0xff]
      %v4254 = vld [vmem:[%s3957 + $0x2f1] sm:$0xff]
      %v4255 = vld [vmem:[%s3957 + $0x321] sm:$0xff]
      %v4256 = vld [vmem:[%s3957 + $0x331] sm:$0xff]
      %v4257 = vld [vmem:[%s3957 + $0x341] sm:$0xff]
      %v4258 = vld [vmem:[%s3957 + $0x351] sm:$0xff]
      %v4259 = vld [vmem:[%s3957 + $0x361] sm:$0xff]
      %v4260 = vld [vmem:[%s3957 + $0x371] sm:$0xff]
      %v4261 = vld [vmem:[%s3957 + $0x381] sm:$0xff]
      %v4262 = vld [vmem:[%s3957 + $0x391] sm:$0xff]
      %v4263 = vld [vmem:[%s3957 + $0x3c1] sm:$0xff]
      %v4264 = vld [vmem:[%s3957 + $0x3d1] sm:$0xff]
      %v4265 = vld [vmem:[%s3957 + $0x3e1] sm:$0xff]
      %v4266 = vld [vmem:[%s3957 + $0x3f1] sm:$0xff]
      %v4267 = vld [vmem:[%s3957 + $0x401] sm:$0xff]
      %v4268 = vld [vmem:[%s3957 + $0x411] sm:$0xff]
      %v4269 = vld [vmem:[%s3957 + $0x421] sm:$0xff]
      %v4270 = vld [vmem:[%s3957 + $0x431] sm:$0xff]
      %v4271 = vld [vmem:[%s3957 + $0x461] sm:$0xff]
      %v4272 = vld [vmem:[%s3957 + $0x471] sm:$0xff]
      %v4273 = vld [vmem:[%s3957 + $0x481] sm:$0xff]
      %v4274 = vld [vmem:[%s3957 + $0x491] sm:$0xff]
      %v4275 = vld [vmem:[%s3957 + $0x4a1] sm:$0xff]
      %v4276 = vld [vmem:[%s3957 + $0x4b1] sm:$0xff]
      %v4277 = vld [vmem:[%s3957 + $0x4c1] sm:$0xff]
      %v4278 = vld [vmem:[%s3957 + $0x4d1] sm:$0xff]
      %v4279 = vpack.c.bf16 %v4216, %v4215
      %v4280 = vpack.c.bf16 %v4218, %v4217
      %v4281 = vpack.c.bf16 %v4220, %v4219
      %v4282 = vpack.c.bf16 %v4222, %v4221
      %v4283 = vpack.c.bf16 %v4224, %v4223
      %v4284 = vpack.c.bf16 %v4226, %v4225
      %v4285 = vpack.c.bf16 %v4228, %v4227
      %v4286 = vpack.c.bf16 %v4230, %v4229
      %v4287 = vpack.c.bf16 %v4232, %v4231
      %v4288 = vpack.c.bf16 %v4234, %v4233
      %v4289 = vpack.c.bf16 %v4236, %v4235
      %v4290 = vpack.c.bf16 %v4238, %v4237
      %v4291 = vpack.c.bf16 %v4240, %v4239
      %v4292 = vpack.c.bf16 %v4242, %v4241
      %v4293 = vpack.c.bf16 %v4244, %v4243
      %v4294 = vpack.c.bf16 %v4246, %v4245
      %v4295 = vpack.c.bf16 %v4248, %v4247
      %v4296 = vpack.c.bf16 %v4250, %v4249
      %v4297 = vpack.c.bf16 %v4252, %v4251
      %v4298 = vpack.c.bf16 %v4254, %v4253
      %v4299 = vpack.c.bf16 %v4256, %v4255
      %v4300 = vpack.c.bf16 %v4258, %v4257
      %v4301 = vpack.c.bf16 %v4260, %v4259
      %v4302 = vpack.c.bf16 %v4262, %v4261
      %v4303 = vpack.c.bf16 %v4264, %v4263
      %v4304 = vpack.c.bf16 %v4266, %v4265
      %v4305 = vpack.c.bf16 %v4268, %v4267
      %v4306 = vpack.c.bf16 %v4270, %v4269
      %v4307 = vpack.c.bf16 %v4272, %v4271
      %v4308 = vpack.c.bf16 %v4274, %v4273
      %v4309 = vpack.c.bf16 %v4276, %v4275
      %v4310 = vpack.c.bf16 %v4278, %v4277
      %4311 = vst.msk [vmem:[#allocation2 + $0x8] sm:$0xff] %vm316, %v4279
      %4312 = vst.msk [vmem:[#allocation2 + $0x20] sm:$0xff] %vm316, %v4280
      %4313 = vst.msk [vmem:[#allocation2 + $0x38] sm:$0xff] %vm316, %v4281
      %4314 = vst.msk [vmem:[#allocation2 + $0x50] sm:$0xff] %vm316, %v4282
      %4315 = vst.msk [vmem:[#allocation2 + $0x68] sm:$0xff] %vm316, %v4283
      %4316 = vst.msk [vmem:[#allocation2 + $0x80] sm:$0xff] %vm316, %v4284
      %4317 = vst.msk [vmem:[#allocation2 + $0x98] sm:$0xff] %vm316, %v4285
      %4318 = vst.msk [vmem:[#allocation2 + $0xb0] sm:$0xff] %vm316, %v4286
      %4319 = vst.msk [vmem:[#allocation2 + $0xc8] sm:$0xff] %vm316, %v4287
      %4320 = vst.msk [vmem:[#allocation2 + $0xe0] sm:$0xff] %vm316, %v4288
      %4321 = vst.msk [vmem:[#allocation2 + $0xf8] sm:$0xff] %vm316, %v4289
      %4322 = vst.msk [vmem:[#allocation2 + $0x110] sm:$0xff] %vm316, %v4290
      %4323 = vst.msk [vmem:[#allocation2 + $0x128] sm:$0xff] %vm316, %v4291
      %4324 = vst.msk [vmem:[#allocation2 + $0x140] sm:$0xff] %vm316, %v4292
      %4325 = vst.msk [vmem:[#allocation2 + $0x158] sm:$0xff] %vm316, %v4293
      %4326 = vst.msk [vmem:[#allocation2 + $0x170] sm:$0xff] %vm316, %v4294
      %4327 = vst.msk [vmem:[#allocation2 + $0x188] sm:$0xff] %vm316, %v4295
      %4328 = vst.msk [vmem:[#allocation2 + $0x1a0] sm:$0xff] %vm316, %v4296
      %4329 = vst.msk [vmem:[#allocation2 + $0x1b8] sm:$0xff] %vm316, %v4297
      %4330 = vst.msk [vmem:[#allocation2 + $0x1d0] sm:$0xff] %vm316, %v4298
      %4331 = vst.msk [vmem:[#allocation2 + $0x1e8] sm:$0xff] %vm316, %v4299
      %4332 = vst.msk [vmem:[#allocation2 + $0x200] sm:$0xff] %vm316, %v4300
      %4333 = vst.msk [vmem:[#allocation2 + $0x218] sm:$0xff] %vm316, %v4301
      %4334 = vst.msk [vmem:[#allocation2 + $0x230] sm:$0xff] %vm316, %v4302
      %4335 = vst.msk [vmem:[#allocation2 + $0x248] sm:$0xff] %vm316, %v4303
      %4336 = vst.msk [vmem:[#allocation2 + $0x260] sm:$0xff] %vm316, %v4304
      %4337 = vst.msk [vmem:[#allocation2 + $0x278] sm:$0xff] %vm316, %v4305
      %4338 = vst.msk [vmem:[#allocation2 + $0x290] sm:$0xff] %vm316, %v4306
      %4339 = vst.msk [vmem:[#allocation2 + $0x2a8] sm:$0xff] %vm316, %v4307
      %4340 = vst.msk [vmem:[#allocation2 + $0x2c0] sm:$0xff] %vm316, %v4308
      %4341 = vst.msk [vmem:[#allocation2 + $0x2d8] sm:$0xff] %vm316, %v4309
      %4342 = vst.msk [vmem:[#allocation2 + $0x2f0] sm:$0xff] %vm316, %v4310
      %v4343 = vld [vmem:[%s3957 + $0x2] sm:$0xff]
      %v4344 = vld [vmem:[%s3957 + $0x12] sm:$0xff]
      %v4345 = vld [vmem:[%s3957 + $0x22] sm:$0xff]
      %v4346 = vld [vmem:[%s3957 + $0x32] sm:$0xff]
      %v4347 = vld [vmem:[%s3957 + $0x42] sm:$0xff]
      %v4348 = vld [vmem:[%s3957 + $0x52] sm:$0xff]
      %v4349 = vld [vmem:[%s3957 + $0x62] sm:$0xff]
      %v4350 = vld [vmem:[%s3957 + $0x72] sm:$0xff]
      %v4351 = vld [vmem:[%s3957 + $0xa2] sm:$0xff]
      %v4352 = vld [vmem:[%s3957 + $0xb2] sm:$0xff]
      %v4353 = vld [vmem:[%s3957 + $0xc2] sm:$0xff]
      %v4354 = vld [vmem:[%s3957 + $0xd2] sm:$0xff]
      %v4355 = vld [vmem:[%s3957 + $0xe2] sm:$0xff]
      %v4356 = vld [vmem:[%s3957 + $0xf2] sm:$0xff]
      %v4357 = vld [vmem:[%s3957 + $0x102] sm:$0xff]
      %v4358 = vld [vmem:[%s3957 + $0x112] sm:$0xff]
      %v4359 = vld [vmem:[%s3957 + $0x142] sm:$0xff]
      %v4360 = vld [vmem:[%s3957 + $0x152] sm:$0xff]
      %v4361 = vld [vmem:[%s3957 + $0x162] sm:$0xff]
      %v4362 = vld [vmem:[%s3957 + $0x172] sm:$0xff]
      %v4363 = vld [vmem:[%s3957 + $0x182] sm:$0xff]
      %v4364 = vld [vmem:[%s3957 + $0x192] sm:$0xff]
      %v4365 = vld [vmem:[%s3957 + $0x1a2] sm:$0xff]
      %v4366 = vld [vmem:[%s3957 + $0x1b2] sm:$0xff]
      %v4367 = vld [vmem:[%s3957 + $0x1e2] sm:$0xff]
      %v4368 = vld [vmem:[%s3957 + $0x1f2] sm:$0xff]
      %v4369 = vld [vmem:[%s3957 + $0x202] sm:$0xff]
      %v4370 = vld [vmem:[%s3957 + $0x212] sm:$0xff]
      %v4371 = vld [vmem:[%s3957 + $0x222] sm:$0xff]
      %v4372 = vld [vmem:[%s3957 + $0x232] sm:$0xff]
      %v4373 = vld [vmem:[%s3957 + $0x242] sm:$0xff]
      %v4374 = vld [vmem:[%s3957 + $0x252] sm:$0xff]
      %v4375 = vld [vmem:[%s3957 + $0x282] sm:$0xff]
      %v4376 = vld [vmem:[%s3957 + $0x292] sm:$0xff]
      %v4377 = vld [vmem:[%s3957 + $0x2a2] sm:$0xff]
      %v4378 = vld [vmem:[%s3957 + $0x2b2] sm:$0xff]
      %v4379 = vld [vmem:[%s3957 + $0x2c2] sm:$0xff]
      %v4380 = vld [vmem:[%s3957 + $0x2d2] sm:$0xff]
      %v4381 = vld [vmem:[%s3957 + $0x2e2] sm:$0xff]
      %v4382 = vld [vmem:[%s3957 + $0x2f2] sm:$0xff]
      %v4383 = vld [vmem:[%s3957 + $0x322] sm:$0xff]
      %v4384 = vld [vmem:[%s3957 + $0x332] sm:$0xff]
      %v4385 = vld [vmem:[%s3957 + $0x342] sm:$0xff]
      %v4386 = vld [vmem:[%s3957 + $0x352] sm:$0xff]
      %v4387 = vld [vmem:[%s3957 + $0x362] sm:$0xff]
      %v4388 = vld [vmem:[%s3957 + $0x372] sm:$0xff]
      %v4389 = vld [vmem:[%s3957 + $0x382] sm:$0xff]
      %v4390 = vld [vmem:[%s3957 + $0x392] sm:$0xff]
      %v4391 = vld [vmem:[%s3957 + $0x3c2] sm:$0xff]
      %v4392 = vld [vmem:[%s3957 + $0x3d2] sm:$0xff]
      %v4393 = vld [vmem:[%s3957 + $0x3e2] sm:$0xff]
      %v4394 = vld [vmem:[%s3957 + $0x3f2] sm:$0xff]
      %v4395 = vld [vmem:[%s3957 + $0x402] sm:$0xff]
      %v4396 = vld [vmem:[%s3957 + $0x412] sm:$0xff]
      %v4397 = vld [vmem:[%s3957 + $0x422] sm:$0xff]
      %v4398 = vld [vmem:[%s3957 + $0x432] sm:$0xff]
      %v4399 = vld [vmem:[%s3957 + $0x462] sm:$0xff]
      %v4400 = vld [vmem:[%s3957 + $0x472] sm:$0xff]
      %v4401 = vld [vmem:[%s3957 + $0x482] sm:$0xff]
      %v4402 = vld [vmem:[%s3957 + $0x492] sm:$0xff]
      %v4403 = vld [vmem:[%s3957 + $0x4a2] sm:$0xff]
      %v4404 = vld [vmem:[%s3957 + $0x4b2] sm:$0xff]
      %v4405 = vld [vmem:[%s3957 + $0x4c2] sm:$0xff]
      %v4406 = vld [vmem:[%s3957 + $0x4d2] sm:$0xff]
      %v4407 = vpack.c.bf16 %v4344, %v4343
      %v4408 = vpack.c.bf16 %v4346, %v4345
      %v4409 = vpack.c.bf16 %v4348, %v4347
      %v4410 = vpack.c.bf16 %v4350, %v4349
      %v4411 = vpack.c.bf16 %v4352, %v4351
      %v4412 = vpack.c.bf16 %v4354, %v4353
      %v4413 = vpack.c.bf16 %v4356, %v4355
      %v4414 = vpack.c.bf16 %v4358, %v4357
      %v4415 = vpack.c.bf16 %v4360, %v4359
      %v4416 = vpack.c.bf16 %v4362, %v4361
      %v4417 = vpack.c.bf16 %v4364, %v4363
      %v4418 = vpack.c.bf16 %v4366, %v4365
      %v4419 = vpack.c.bf16 %v4368, %v4367
      %v4420 = vpack.c.bf16 %v4370, %v4369
      %v4421 = vpack.c.bf16 %v4372, %v4371
      %v4422 = vpack.c.bf16 %v4374, %v4373
      %v4423 = vpack.c.bf16 %v4376, %v4375
      %v4424 = vpack.c.bf16 %v4378, %v4377
      %v4425 = vpack.c.bf16 %v4380, %v4379
      %v4426 = vpack.c.bf16 %v4382, %v4381
      %v4427 = vpack.c.bf16 %v4384, %v4383
      %v4428 = vpack.c.bf16 %v4386, %v4385
      %v4429 = vpack.c.bf16 %v4388, %v4387
      %v4430 = vpack.c.bf16 %v4390, %v4389
      %v4431 = vpack.c.bf16 %v4392, %v4391
      %v4432 = vpack.c.bf16 %v4394, %v4393
      %v4433 = vpack.c.bf16 %v4396, %v4395
      %v4434 = vpack.c.bf16 %v4398, %v4397
      %v4435 = vpack.c.bf16 %v4400, %v4399
      %v4436 = vpack.c.bf16 %v4402, %v4401
      %v4437 = vpack.c.bf16 %v4404, %v4403
      %v4438 = vpack.c.bf16 %v4406, %v4405
      %4471 = vrot.lane.b32.xlu0 %v4407, 8
      %v4472 = vpop.permute.xlu0 %4471
      %4473 = vrot.lane.b32.xlu0 %v4408, 8
      %v4474 = vpop.permute.xlu0 %4473
      %4475 = vrot.lane.b32.xlu0 %v4409, 8
      %v4476 = vpop.permute.xlu0 %4475
      %4477 = vrot.lane.b32.xlu0 %v4410, 8
      %v4478 = vpop.permute.xlu0 %4477
      %4479 = vrot.lane.b32.xlu0 %v4411, 8
      %v4480 = vpop.permute.xlu0 %4479
      %4481 = vrot.lane.b32.xlu0 %v4412, 8
      %v4482 = vpop.permute.xlu0 %4481
      %4483 = vrot.lane.b32.xlu0 %v4413, 8
      %v4484 = vpop.permute.xlu0 %4483
      %4485 = vrot.lane.b32.xlu0 %v4414, 8
      %v4486 = vpop.permute.xlu0 %4485
      %4487 = vrot.lane.b32.xlu0 %v4415, 8
      %v4488 = vpop.permute.xlu0 %4487
      %4489 = vrot.lane.b32.xlu0 %v4416, 8
      %v4490 = vpop.permute.xlu0 %4489
      %4491 = vrot.lane.b32.xlu0 %v4417, 8
      %v4492 = vpop.permute.xlu0 %4491
      %4493 = vrot.lane.b32.xlu0 %v4418, 8
      %v4494 = vpop.permute.xlu0 %4493
      %4495 = vrot.lane.b32.xlu0 %v4419, 8
      %v4496 = vpop.permute.xlu0 %4495
      %4497 = vrot.lane.b32.xlu0 %v4420, 8
      %v4498 = vpop.permute.xlu0 %4497
      %4499 = vrot.lane.b32.xlu0 %v4421, 8
      %v4500 = vpop.permute.xlu0 %4499
      %4501 = vrot.lane.b32.xlu0 %v4422, 8
      %v4502 = vpop.permute.xlu0 %4501
      %4503 = vrot.lane.b32.xlu0 %v4423, 8
      %v4504 = vpop.permute.xlu0 %4503
      %4505 = vrot.lane.b32.xlu0 %v4424, 8
      %v4506 = vpop.permute.xlu0 %4505
      %4507 = vrot.lane.b32.xlu0 %v4425, 8
      %v4508 = vpop.permute.xlu0 %4507
      %4509 = vrot.lane.b32.xlu0 %v4426, 8
      %v4510 = vpop.permute.xlu0 %4509
      %4511 = vrot.lane.b32.xlu0 %v4427, 8
      %v4512 = vpop.permute.xlu0 %4511
      %4513 = vrot.lane.b32.xlu0 %v4428, 8
      %v4514 = vpop.permute.xlu0 %4513
      %4515 = vrot.lane.b32.xlu0 %v4429, 8
      %v4516 = vpop.permute.xlu0 %4515
      %4517 = vrot.lane.b32.xlu0 %v4430, 8
      %v4518 = vpop.permute.xlu0 %4517
      %4519 = vrot.lane.b32.xlu0 %v4431, 8
      %v4520 = vpop.permute.xlu0 %4519
      %4521 = vrot.lane.b32.xlu0 %v4432, 8
      %v4522 = vpop.permute.xlu0 %4521
      %4523 = vrot.lane.b32.xlu0 %v4433, 8
      %v4524 = vpop.permute.xlu0 %4523
      %4525 = vrot.lane.b32.xlu0 %v4434, 8
      %v4526 = vpop.permute.xlu0 %4525
      %4527 = vrot.lane.b32.xlu0 %v4435, 8
      %v4528 = vpop.permute.xlu0 %4527
      %4529 = vrot.lane.b32.xlu0 %v4436, 8
      %v4530 = vpop.permute.xlu0 %4529
      %4531 = vrot.lane.b32.xlu0 %v4437, 8
      %v4532 = vpop.permute.xlu0 %4531
      %4533 = vrot.lane.b32.xlu0 %v4438, 8
      %v4534 = vpop.permute.xlu0 %4533
      %4567 = vst.msk [vmem:[#allocation2 + $0x8] sm:$0xff] %vm573, %v4472
      %4568 = vst.msk [vmem:[#allocation2 + $0x20] sm:$0xff] %vm573, %v4474
      %4569 = vst.msk [vmem:[#allocation2 + $0x38] sm:$0xff] %vm573, %v4476
      %4570 = vst.msk [vmem:[#allocation2 + $0x50] sm:$0xff] %vm573, %v4478
      %4571 = vst.msk [vmem:[#allocation2 + $0x68] sm:$0xff] %vm573, %v4480
      %4572 = vst.msk [vmem:[#allocation2 + $0x80] sm:$0xff] %vm573, %v4482
      %4573 = vst.msk [vmem:[#allocation2 + $0x98] sm:$0xff] %vm573, %v4484
      %4574 = vst.msk [vmem:[#allocation2 + $0xb0] sm:$0xff] %vm573, %v4486
      %4575 = vst.msk [vmem:[#allocation2 + $0xc8] sm:$0xff] %vm573, %v4488
      %4576 = vst.msk [vmem:[#allocation2 + $0xe0] sm:$0xff] %vm573, %v4490
      %4577 = vst.msk [vmem:[#allocation2 + $0xf8] sm:$0xff] %vm573, %v4492
      %4578 = vst.msk [vmem:[#allocation2 + $0x110] sm:$0xff] %vm573, %v4494
      %4579 = vst.msk [vmem:[#allocation2 + $0x128] sm:$0xff] %vm573, %v4496
      %4580 = vst.msk [vmem:[#allocation2 + $0x140] sm:$0xff] %vm573, %v4498
      %4581 = vst.msk [vmem:[#allocation2 + $0x158] sm:$0xff] %vm573, %v4500
      %4582 = vst.msk [vmem:[#allocation2 + $0x170] sm:$0xff] %vm573, %v4502
      %4583 = vst.msk [vmem:[#allocation2 + $0x188] sm:$0xff] %vm573, %v4504
      %4584 = vst.msk [vmem:[#allocation2 + $0x1a0] sm:$0xff] %vm573, %v4506
      %4585 = vst.msk [vmem:[#allocation2 + $0x1b8] sm:$0xff] %vm573, %v4508
      %4586 = vst.msk [vmem:[#allocation2 + $0x1d0] sm:$0xff] %vm573, %v4510
      %4587 = vst.msk [vmem:[#allocation2 + $0x1e8] sm:$0xff] %vm573, %v4512
      %4588 = vst.msk [vmem:[#allocation2 + $0x200] sm:$0xff] %vm573, %v4514
      %4589 = vst.msk [vmem:[#allocation2 + $0x218] sm:$0xff] %vm573, %v4516
      %4590 = vst.msk [vmem:[#allocation2 + $0x230] sm:$0xff] %vm573, %v4518
      %4591 = vst.msk [vmem:[#allocation2 + $0x248] sm:$0xff] %vm573, %v4520
      %4592 = vst.msk [vmem:[#allocation2 + $0x260] sm:$0xff] %vm573, %v4522
      %4593 = vst.msk [vmem:[#allocation2 + $0x278] sm:$0xff] %vm573, %v4524
      %4594 = vst.msk [vmem:[#allocation2 + $0x290] sm:$0xff] %vm573, %v4526
      %4595 = vst.msk [vmem:[#allocation2 + $0x2a8] sm:$0xff] %vm573, %v4528
      %4596 = vst.msk [vmem:[#allocation2 + $0x2c0] sm:$0xff] %vm573, %v4530
      %4597 = vst.msk [vmem:[#allocation2 + $0x2d8] sm:$0xff] %vm573, %v4532
      %4598 = vst.msk [vmem:[#allocation2 + $0x2f0] sm:$0xff] %vm573, %v4534
      %s4599 = sadd.s32 %s217, 2
      %s4600 = smul.u32 %s4599, 160
      %s4601 = scalar_lea.vmem %s207, %s4600
      %v4602 = vld [vmem:[%s4601] sm:$0xff]
      %v4603 = vld [vmem:[%s4601 + $0x10] sm:$0xff]
      %v4604 = vld [vmem:[%s4601 + $0x20] sm:$0xff]
      %v4605 = vld [vmem:[%s4601 + $0x30] sm:$0xff]
      %v4606 = vld [vmem:[%s4601 + $0x40] sm:$0xff]
      %v4607 = vld [vmem:[%s4601 + $0x50] sm:$0xff]
      %v4608 = vld [vmem:[%s4601 + $0x60] sm:$0xff]
      %v4609 = vld [vmem:[%s4601 + $0x70] sm:$0xff]
      %v4610 = vld [vmem:[%s4601 + $0xa0] sm:$0xff]
      %v4611 = vld [vmem:[%s4601 + $0xb0] sm:$0xff]
      %v4612 = vld [vmem:[%s4601 + $0xc0] sm:$0xff]
      %v4613 = vld [vmem:[%s4601 + $0xd0] sm:$0xff]
      %v4614 = vld [vmem:[%s4601 + $0xe0] sm:$0xff]
      %v4615 = vld [vmem:[%s4601 + $0xf0] sm:$0xff]
      %v4616 = vld [vmem:[%s4601 + $0x100] sm:$0xff]
      %v4617 = vld [vmem:[%s4601 + $0x110] sm:$0xff]
      %v4618 = vld [vmem:[%s4601 + $0x140] sm:$0xff]
      %v4619 = vld [vmem:[%s4601 + $0x150] sm:$0xff]
      %v4620 = vld [vmem:[%s4601 + $0x160] sm:$0xff]
      %v4621 = vld [vmem:[%s4601 + $0x170] sm:$0xff]
      %v4622 = vld [vmem:[%s4601 + $0x180] sm:$0xff]
      %v4623 = vld [vmem:[%s4601 + $0x190] sm:$0xff]
      %v4624 = vld [vmem:[%s4601 + $0x1a0] sm:$0xff]
      %v4625 = vld [vmem:[%s4601 + $0x1b0] sm:$0xff]
      %v4626 = vld [vmem:[%s4601 + $0x1e0] sm:$0xff]
      %v4627 = vld [vmem:[%s4601 + $0x1f0] sm:$0xff]
      %v4628 = vld [vmem:[%s4601 + $0x200] sm:$0xff]
      %v4629 = vld [vmem:[%s4601 + $0x210] sm:$0xff]
      %v4630 = vld [vmem:[%s4601 + $0x220] sm:$0xff]
      %v4631 = vld [vmem:[%s4601 + $0x230] sm:$0xff]
      %v4632 = vld [vmem:[%s4601 + $0x240] sm:$0xff]
      %v4633 = vld [vmem:[%s4601 + $0x250] sm:$0xff]
      %v4634 = vld [vmem:[%s4601 + $0x280] sm:$0xff]
      %v4635 = vld [vmem:[%s4601 + $0x290] sm:$0xff]
      %v4636 = vld [vmem:[%s4601 + $0x2a0] sm:$0xff]
      %v4637 = vld [vmem:[%s4601 + $0x2b0] sm:$0xff]
      %v4638 = vld [vmem:[%s4601 + $0x2c0] sm:$0xff]
      %v4639 = vld [vmem:[%s4601 + $0x2d0] sm:$0xff]
      %v4640 = vld [vmem:[%s4601 + $0x2e0] sm:$0xff]
      %v4641 = vld [vmem:[%s4601 + $0x2f0] sm:$0xff]
      %v4642 = vld [vmem:[%s4601 + $0x320] sm:$0xff]
      %v4643 = vld [vmem:[%s4601 + $0x330] sm:$0xff]
      %v4644 = vld [vmem:[%s4601 + $0x340] sm:$0xff]
      %v4645 = vld [vmem:[%s4601 + $0x350] sm:$0xff]
      %v4646 = vld [vmem:[%s4601 + $0x360] sm:$0xff]
      %v4647 = vld [vmem:[%s4601 + $0x370] sm:$0xff]
      %v4648 = vld [vmem:[%s4601 + $0x380] sm:$0xff]
      %v4649 = vld [vmem:[%s4601 + $0x390] sm:$0xff]
      %v4650 = vld [vmem:[%s4601 + $0x3c0] sm:$0xff]
      %v4651 = vld [vmem:[%s4601 + $0x3d0] sm:$0xff]
      %v4652 = vld [vmem:[%s4601 + $0x3e0] sm:$0xff]
      %v4653 = vld [vmem:[%s4601 + $0x3f0] sm:$0xff]
      %v4654 = vld [vmem:[%s4601 + $0x400] sm:$0xff]
      %v4655 = vld [vmem:[%s4601 + $0x410] sm:$0xff]
      %v4656 = vld [vmem:[%s4601 + $0x420] sm:$0xff]
      %v4657 = vld [vmem:[%s4601 + $0x430] sm:$0xff]
      %v4658 = vld [vmem:[%s4601 + $0x460] sm:$0xff]
      %v4659 = vld [vmem:[%s4601 + $0x470] sm:$0xff]
      %v4660 = vld [vmem:[%s4601 + $0x480] sm:$0xff]
      %v4661 = vld [vmem:[%s4601 + $0x490] sm:$0xff]
      %v4662 = vld [vmem:[%s4601 + $0x4a0] sm:$0xff]
      %v4663 = vld [vmem:[%s4601 + $0x4b0] sm:$0xff]
      %v4664 = vld [vmem:[%s4601 + $0x4c0] sm:$0xff]
      %v4665 = vld [vmem:[%s4601 + $0x4d0] sm:$0xff]
      %v4666 = vpack.c.bf16 %v4603, %v4602
      %v4667 = vpack.c.bf16 %v4605, %v4604
      %v4668 = vpack.c.bf16 %v4607, %v4606
      %v4669 = vpack.c.bf16 %v4609, %v4608
      %v4670 = vpack.c.bf16 %v4611, %v4610
      %v4671 = vpack.c.bf16 %v4613, %v4612
      %v4672 = vpack.c.bf16 %v4615, %v4614
      %v4673 = vpack.c.bf16 %v4617, %v4616
      %v4674 = vpack.c.bf16 %v4619, %v4618
      %v4675 = vpack.c.bf16 %v4621, %v4620
      %v4676 = vpack.c.bf16 %v4623, %v4622
      %v4677 = vpack.c.bf16 %v4625, %v4624
      %v4678 = vpack.c.bf16 %v4627, %v4626
      %v4679 = vpack.c.bf16 %v4629, %v4628
      %v4680 = vpack.c.bf16 %v4631, %v4630
      %v4681 = vpack.c.bf16 %v4633, %v4632
      %v4682 = vpack.c.bf16 %v4635, %v4634
      %v4683 = vpack.c.bf16 %v4637, %v4636
      %v4684 = vpack.c.bf16 %v4639, %v4638
      %v4685 = vpack.c.bf16 %v4641, %v4640
      %v4686 = vpack.c.bf16 %v4643, %v4642
      %v4687 = vpack.c.bf16 %v4645, %v4644
      %v4688 = vpack.c.bf16 %v4647, %v4646
      %v4689 = vpack.c.bf16 %v4649, %v4648
      %v4690 = vpack.c.bf16 %v4651, %v4650
      %v4691 = vpack.c.bf16 %v4653, %v4652
      %v4692 = vpack.c.bf16 %v4655, %v4654
      %v4693 = vpack.c.bf16 %v4657, %v4656
      %v4694 = vpack.c.bf16 %v4659, %v4658
      %v4695 = vpack.c.bf16 %v4661, %v4660
      %v4696 = vpack.c.bf16 %v4663, %v4662
      %v4697 = vpack.c.bf16 %v4665, %v4664
      %4730 = vrot.lane.b32.xlu0 %v4666, 16
      %v4731 = vpop.permute.xlu0 %4730
      %4732 = vrot.lane.b32.xlu0 %v4667, 16
      %v4733 = vpop.permute.xlu0 %4732
      %4734 = vrot.lane.b32.xlu0 %v4668, 16
      %v4735 = vpop.permute.xlu0 %4734
      %4736 = vrot.lane.b32.xlu0 %v4669, 16
      %v4737 = vpop.permute.xlu0 %4736
      %4738 = vrot.lane.b32.xlu0 %v4670, 16
      %v4739 = vpop.permute.xlu0 %4738
      %4740 = vrot.lane.b32.xlu0 %v4671, 16
      %v4741 = vpop.permute.xlu0 %4740
      %4742 = vrot.lane.b32.xlu0 %v4672, 16
      %v4743 = vpop.permute.xlu0 %4742
      %4744 = vrot.lane.b32.xlu0 %v4673, 16
      %v4745 = vpop.permute.xlu0 %4744
      %4746 = vrot.lane.b32.xlu0 %v4674, 16
      %v4747 = vpop.permute.xlu0 %4746
      %4748 = vrot.lane.b32.xlu0 %v4675, 16
      %v4749 = vpop.permute.xlu0 %4748
      %4750 = vrot.lane.b32.xlu0 %v4676, 16
      %v4751 = vpop.permute.xlu0 %4750
      %4752 = vrot.lane.b32.xlu0 %v4677, 16
      %v4753 = vpop.permute.xlu0 %4752
      %4754 = vrot.lane.b32.xlu0 %v4678, 16
      %v4755 = vpop.permute.xlu0 %4754
      %4756 = vrot.lane.b32.xlu0 %v4679, 16
      %v4757 = vpop.permute.xlu0 %4756
      %4758 = vrot.lane.b32.xlu0 %v4680, 16
      %v4759 = vpop.permute.xlu0 %4758
      %4760 = vrot.lane.b32.xlu0 %v4681, 16
      %v4761 = vpop.permute.xlu0 %4760
      %4762 = vrot.lane.b32.xlu0 %v4682, 16
      %v4763 = vpop.permute.xlu0 %4762
      %4764 = vrot.lane.b32.xlu0 %v4683, 16
      %v4765 = vpop.permute.xlu0 %4764
      %4766 = vrot.lane.b32.xlu0 %v4684, 16
      %v4767 = vpop.permute.xlu0 %4766
      %4768 = vrot.lane.b32.xlu0 %v4685, 16
      %v4769 = vpop.permute.xlu0 %4768
      %4770 = vrot.lane.b32.xlu0 %v4686, 16
      %v4771 = vpop.permute.xlu0 %4770
      %4772 = vrot.lane.b32.xlu0 %v4687, 16
      %v4773 = vpop.permute.xlu0 %4772
      %4774 = vrot.lane.b32.xlu0 %v4688, 16
      %v4775 = vpop.permute.xlu0 %4774
      %4776 = vrot.lane.b32.xlu0 %v4689, 16
      %v4777 = vpop.permute.xlu0 %4776
      %4778 = vrot.lane.b32.xlu0 %v4690, 16
      %v4779 = vpop.permute.xlu0 %4778
      %4780 = vrot.lane.b32.xlu0 %v4691, 16
      %v4781 = vpop.permute.xlu0 %4780
      %4782 = vrot.lane.b32.xlu0 %v4692, 16
      %v4783 = vpop.permute.xlu0 %4782
      %4784 = vrot.lane.b32.xlu0 %v4693, 16
      %v4785 = vpop.permute.xlu0 %4784
      %4786 = vrot.lane.b32.xlu0 %v4694, 16
      %v4787 = vpop.permute.xlu0 %4786
      %4788 = vrot.lane.b32.xlu0 %v4695, 16
      %v4789 = vpop.permute.xlu0 %4788
      %4790 = vrot.lane.b32.xlu0 %v4696, 16
      %v4791 = vpop.permute.xlu0 %4790
      %4792 = vrot.lane.b32.xlu0 %v4697, 16
      %v4793 = vpop.permute.xlu0 %4792
      %4826 = vst.msk [vmem:[#allocation2 + $0x8] sm:$0xff] %vm830, %v4731
      %4827 = vst.msk [vmem:[#allocation2 + $0x20] sm:$0xff] %vm830, %v4733
      %4828 = vst.msk [vmem:[#allocation2 + $0x38] sm:$0xff] %vm830, %v4735
      %4829 = vst.msk [vmem:[#allocation2 + $0x50] sm:$0xff] %vm830, %v4737
      %4830 = vst.msk [vmem:[#allocation2 + $0x68] sm:$0xff] %vm830, %v4739
      %4831 = vst.msk [vmem:[#allocation2 + $0x80] sm:$0xff] %vm830, %v4741
      %4832 = vst.msk [vmem:[#allocation2 + $0x98] sm:$0xff] %vm830, %v4743
      %4833 = vst.msk [vmem:[#allocation2 + $0xb0] sm:$0xff] %vm830, %v4745
      %4834 = vst.msk [vmem:[#allocation2 + $0xc8] sm:$0xff] %vm830, %v4747
      %4835 = vst.msk [vmem:[#allocation2 + $0xe0] sm:$0xff] %vm830, %v4749
      %4836 = vst.msk [vmem:[#allocation2 + $0xf8] sm:$0xff] %vm830, %v4751
      %4837 = vst.msk [vmem:[#allocation2 + $0x110] sm:$0xff] %vm830, %v4753
      %4838 = vst.msk [vmem:[#allocation2 + $0x128] sm:$0xff] %vm830, %v4755
      %4839 = vst.msk [vmem:[#allocation2 + $0x140] sm:$0xff] %vm830, %v4757
      %4840 = vst.msk [vmem:[#allocation2 + $0x158] sm:$0xff] %vm830, %v4759
      %4841 = vst.msk [vmem:[#allocation2 + $0x170] sm:$0xff] %vm830, %v4761
      %4842 = vst.msk [vmem:[#allocation2 + $0x188] sm:$0xff] %vm830, %v4763
      %4843 = vst.msk [vmem:[#allocation2 + $0x1a0] sm:$0xff] %vm830, %v4765
      %4844 = vst.msk [vmem:[#allocation2 + $0x1b8] sm:$0xff] %vm830, %v4767
      %4845 = vst.msk [vmem:[#allocation2 + $0x1d0] sm:$0xff] %vm830, %v4769
      %4846 = vst.msk [vmem:[#allocation2 + $0x1e8] sm:$0xff] %vm830, %v4771
      %4847 = vst.msk [vmem:[#allocation2 + $0x200] sm:$0xff] %vm830, %v4773
      %4848 = vst.msk [vmem:[#allocation2 + $0x218] sm:$0xff] %vm830, %v4775
      %4849 = vst.msk [vmem:[#allocation2 + $0x230] sm:$0xff] %vm830, %v4777
      %4850 = vst.msk [vmem:[#allocation2 + $0x248] sm:$0xff] %vm830, %v4779
      %4851 = vst.msk [vmem:[#allocation2 + $0x260] sm:$0xff] %vm830, %v4781
      %4852 = vst.msk [vmem:[#allocation2 + $0x278] sm:$0xff] %vm830, %v4783
      %4853 = vst.msk [vmem:[#allocation2 + $0x290] sm:$0xff] %vm830, %v4785
      %4854 = vst.msk [vmem:[#allocation2 + $0x2a8] sm:$0xff] %vm830, %v4787
      %4855 = vst.msk [vmem:[#allocation2 + $0x2c0] sm:$0xff] %vm830, %v4789
      %4856 = vst.msk [vmem:[#allocation2 + $0x2d8] sm:$0xff] %vm830, %v4791
      %4857 = vst.msk [vmem:[#allocation2 + $0x2f0] sm:$0xff] %vm830, %v4793
      %v4858 = vld [vmem:[%s4601 + $0x1] sm:$0xff]
      %v4859 = vld [vmem:[%s4601 + $0x11] sm:$0xff]
      %v4860 = vld [vmem:[%s4601 + $0x21] sm:$0xff]
      %v4861 = vld [vmem:[%s4601 + $0x31] sm:$0xff]
      %v4862 = vld [vmem:[%s4601 + $0x41] sm:$0xff]
      %v4863 = vld [vmem:[%s4601 + $0x51] sm:$0xff]
      %v4864 = vld [vmem:[%s4601 + $0x61] sm:$0xff]
      %v4865 = vld [vmem:[%s4601 + $0x71] sm:$0xff]
      %v4866 = vld [vmem:[%s4601 + $0xa1] sm:$0xff]
      %v4867 = vld [vmem:[%s4601 + $0xb1] sm:$0xff]
      %v4868 = vld [vmem:[%s4601 + $0xc1] sm:$0xff]
      %v4869 = vld [vmem:[%s4601 + $0xd1] sm:$0xff]
      %v4870 = vld [vmem:[%s4601 + $0xe1] sm:$0xff]
      %v4871 = vld [vmem:[%s4601 + $0xf1] sm:$0xff]
      %v4872 = vld [vmem:[%s4601 + $0x101] sm:$0xff]
      %v4873 = vld [vmem:[%s4601 + $0x111] sm:$0xff]
      %v4874 = vld [vmem:[%s4601 + $0x141] sm:$0xff]
      %v4875 = vld [vmem:[%s4601 + $0x151] sm:$0xff]
      %v4876 = vld [vmem:[%s4601 + $0x161] sm:$0xff]
      %v4877 = vld [vmem:[%s4601 + $0x171] sm:$0xff]
      %v4878 = vld [vmem:[%s4601 + $0x181] sm:$0xff]
      %v4879 = vld [vmem:[%s4601 + $0x191] sm:$0xff]
      %v4880 = vld [vmem:[%s4601 + $0x1a1] sm:$0xff]
      %v4881 = vld [vmem:[%s4601 + $0x1b1] sm:$0xff]
      %v4882 = vld [vmem:[%s4601 + $0x1e1] sm:$0xff]
      %v4883 = vld [vmem:[%s4601 + $0x1f1] sm:$0xff]
      %v4884 = vld [vmem:[%s4601 + $0x201] sm:$0xff]
      %v4885 = vld [vmem:[%s4601 + $0x211] sm:$0xff]
      %v4886 = vld [vmem:[%s4601 + $0x221] sm:$0xff]
      %v4887 = vld [vmem:[%s4601 + $0x231] sm:$0xff]
      %v4888 = vld [vmem:[%s4601 + $0x241] sm:$0xff]
      %v4889 = vld [vmem:[%s4601 + $0x251] sm:$0xff]
      %v4890 = vld [vmem:[%s4601 + $0x281] sm:$0xff]
      %v4891 = vld [vmem:[%s4601 + $0x291] sm:$0xff]
      %v4892 = vld [vmem:[%s4601 + $0x2a1] sm:$0xff]
      %v4893 = vld [vmem:[%s4601 + $0x2b1] sm:$0xff]
      %v4894 = vld [vmem:[%s4601 + $0x2c1] sm:$0xff]
      %v4895 = vld [vmem:[%s4601 + $0x2d1] sm:$0xff]
      %v4896 = vld [vmem:[%s4601 + $0x2e1] sm:$0xff]
      %v4897 = vld [vmem:[%s4601 + $0x2f1] sm:$0xff]
      %v4898 = vld [vmem:[%s4601 + $0x321] sm:$0xff]
      %v4899 = vld [vmem:[%s4601 + $0x331] sm:$0xff]
      %v4900 = vld [vmem:[%s4601 + $0x341] sm:$0xff]
      %v4901 = vld [vmem:[%s4601 + $0x351] sm:$0xff]
      %v4902 = vld [vmem:[%s4601 + $0x361] sm:$0xff]
      %v4903 = vld [vmem:[%s4601 + $0x371] sm:$0xff]
      %v4904 = vld [vmem:[%s4601 + $0x381] sm:$0xff]
      %v4905 = vld [vmem:[%s4601 + $0x391] sm:$0xff]
      %v4906 = vld [vmem:[%s4601 + $0x3c1] sm:$0xff]
      %v4907 = vld [vmem:[%s4601 + $0x3d1] sm:$0xff]
      %v4908 = vld [vmem:[%s4601 + $0x3e1] sm:$0xff]
      %v4909 = vld [vmem:[%s4601 + $0x3f1] sm:$0xff]
      %v4910 = vld [vmem:[%s4601 + $0x401] sm:$0xff]
      %v4911 = vld [vmem:[%s4601 + $0x411] sm:$0xff]
      %v4912 = vld [vmem:[%s4601 + $0x421] sm:$0xff]
      %v4913 = vld [vmem:[%s4601 + $0x431] sm:$0xff]
      %v4914 = vld [vmem:[%s4601 + $0x461] sm:$0xff]
      %v4915 = vld [vmem:[%s4601 + $0x471] sm:$0xff]
      %v4916 = vld [vmem:[%s4601 + $0x481] sm:$0xff]
      %v4917 = vld [vmem:[%s4601 + $0x491] sm:$0xff]
      %v4918 = vld [vmem:[%s4601 + $0x4a1] sm:$0xff]
      %v4919 = vld [vmem:[%s4601 + $0x4b1] sm:$0xff]
      %v4920 = vld [vmem:[%s4601 + $0x4c1] sm:$0xff]
      %v4921 = vld [vmem:[%s4601 + $0x4d1] sm:$0xff]
      %v4922 = vpack.c.bf16 %v4859, %v4858
      %v4923 = vpack.c.bf16 %v4861, %v4860
      %v4924 = vpack.c.bf16 %v4863, %v4862
      %v4925 = vpack.c.bf16 %v4865, %v4864
      %v4926 = vpack.c.bf16 %v4867, %v4866
      %v4927 = vpack.c.bf16 %v4869, %v4868
      %v4928 = vpack.c.bf16 %v4871, %v4870
      %v4929 = vpack.c.bf16 %v4873, %v4872
      %v4930 = vpack.c.bf16 %v4875, %v4874
      %v4931 = vpack.c.bf16 %v4877, %v4876
      %v4932 = vpack.c.bf16 %v4879, %v4878
      %v4933 = vpack.c.bf16 %v4881, %v4880
      %v4934 = vpack.c.bf16 %v4883, %v4882
      %v4935 = vpack.c.bf16 %v4885, %v4884
      %v4936 = vpack.c.bf16 %v4887, %v4886
      %v4937 = vpack.c.bf16 %v4889, %v4888
      %v4938 = vpack.c.bf16 %v4891, %v4890
      %v4939 = vpack.c.bf16 %v4893, %v4892
      %v4940 = vpack.c.bf16 %v4895, %v4894
      %v4941 = vpack.c.bf16 %v4897, %v4896
      %v4942 = vpack.c.bf16 %v4899, %v4898
      %v4943 = vpack.c.bf16 %v4901, %v4900
      %v4944 = vpack.c.bf16 %v4903, %v4902
      %v4945 = vpack.c.bf16 %v4905, %v4904
      %v4946 = vpack.c.bf16 %v4907, %v4906
      %v4947 = vpack.c.bf16 %v4909, %v4908
      %v4948 = vpack.c.bf16 %v4911, %v4910
      %v4949 = vpack.c.bf16 %v4913, %v4912
      %v4950 = vpack.c.bf16 %v4915, %v4914
      %v4951 = vpack.c.bf16 %v4917, %v4916
      %v4952 = vpack.c.bf16 %v4919, %v4918
      %v4953 = vpack.c.bf16 %v4921, %v4920
      %4986 = vrot.lane.b32.xlu0 %v4922, 24
      %v4987 = vpop.permute.xlu0 %4986
      %4988 = vrot.lane.b32.xlu0 %v4923, 24
      %v4989 = vpop.permute.xlu0 %4988
      %4990 = vrot.lane.b32.xlu0 %v4924, 24
      %v4991 = vpop.permute.xlu0 %4990
      %4992 = vrot.lane.b32.xlu0 %v4925, 24
      %v4993 = vpop.permute.xlu0 %4992
      %4994 = vrot.lane.b32.xlu0 %v4926, 24
      %v4995 = vpop.permute.xlu0 %4994
      %4996 = vrot.lane.b32.xlu0 %v4927, 24
      %v4997 = vpop.permute.xlu0 %4996
      %4998 = vrot.lane.b32.xlu0 %v4928, 24
      %v4999 = vpop.permute.xlu0 %4998
      %5000 = vrot.lane.b32.xlu0 %v4929, 24
      %v5001 = vpop.permute.xlu0 %5000
      %5002 = vrot.lane.b32.xlu0 %v4930, 24
      %v5003 = vpop.permute.xlu0 %5002
      %5004 = vrot.lane.b32.xlu0 %v4931, 24
      %v5005 = vpop.permute.xlu0 %5004
      %5006 = vrot.lane.b32.xlu0 %v4932, 24
      %v5007 = vpop.permute.xlu0 %5006
      %5008 = vrot.lane.b32.xlu0 %v4933, 24
      %v5009 = vpop.permute.xlu0 %5008
      %5010 = vrot.lane.b32.xlu0 %v4934, 24
      %v5011 = vpop.permute.xlu0 %5010
      %5012 = vrot.lane.b32.xlu0 %v4935, 24
      %v5013 = vpop.permute.xlu0 %5012
      %5014 = vrot.lane.b32.xlu0 %v4936, 24
      %v5015 = vpop.permute.xlu0 %5014
      %5016 = vrot.lane.b32.xlu0 %v4937, 24
      %v5017 = vpop.permute.xlu0 %5016
      %5018 = vrot.lane.b32.xlu0 %v4938, 24
      %v5019 = vpop.permute.xlu0 %5018
      %5020 = vrot.lane.b32.xlu0 %v4939, 24
      %v5021 = vpop.permute.xlu0 %5020
      %5022 = vrot.lane.b32.xlu0 %v4940, 24
      %v5023 = vpop.permute.xlu0 %5022
      %5024 = vrot.lane.b32.xlu0 %v4941, 24
      %v5025 = vpop.permute.xlu0 %5024
      %5026 = vrot.lane.b32.xlu0 %v4942, 24
      %v5027 = vpop.permute.xlu0 %5026
      %5028 = vrot.lane.b32.xlu0 %v4943, 24
      %v5029 = vpop.permute.xlu0 %5028
      %5030 = vrot.lane.b32.xlu0 %v4944, 24
      %v5031 = vpop.permute.xlu0 %5030
      %5032 = vrot.lane.b32.xlu0 %v4945, 24
      %v5033 = vpop.permute.xlu0 %5032
      %5034 = vrot.lane.b32.xlu0 %v4946, 24
      %v5035 = vpop.permute.xlu0 %5034
      %5036 = vrot.lane.b32.xlu0 %v4947, 24
      %v5037 = vpop.permute.xlu0 %5036
      %5038 = vrot.lane.b32.xlu0 %v4948, 24
      %v5039 = vpop.permute.xlu0 %5038
      %5040 = vrot.lane.b32.xlu0 %v4949, 24
      %v5041 = vpop.permute.xlu0 %5040
      %5042 = vrot.lane.b32.xlu0 %v4950, 24
      %v5043 = vpop.permute.xlu0 %5042
      %5044 = vrot.lane.b32.xlu0 %v4951, 24
      %v5045 = vpop.permute.xlu0 %5044
      %5046 = vrot.lane.b32.xlu0 %v4952, 24
      %v5047 = vpop.permute.xlu0 %5046
      %5048 = vrot.lane.b32.xlu0 %v4953, 24
      %v5049 = vpop.permute.xlu0 %5048
      %5082 = vst.msk [vmem:[#allocation2 + $0x8] sm:$0xff] %vm1089, %v4987
      %5083 = vst.msk [vmem:[#allocation2 + $0x20] sm:$0xff] %vm1089, %v4989
      %5084 = vst.msk [vmem:[#allocation2 + $0x38] sm:$0xff] %vm1089, %v4991
      %5085 = vst.msk [vmem:[#allocation2 + $0x50] sm:$0xff] %vm1089, %v4993
      %5086 = vst.msk [vmem:[#allocation2 + $0x68] sm:$0xff] %vm1089, %v4995
      %5087 = vst.msk [vmem:[#allocation2 + $0x80] sm:$0xff] %vm1089, %v4997
      %5088 = vst.msk [vmem:[#allocation2 + $0x98] sm:$0xff] %vm1089, %v4999
      %5089 = vst.msk [vmem:[#allocation2 + $0xb0] sm:$0xff] %vm1089, %v5001
      %5090 = vst.msk [vmem:[#allocation2 + $0xc8] sm:$0xff] %vm1089, %v5003
      %5091 = vst.msk [vmem:[#allocation2 + $0xe0] sm:$0xff] %vm1089, %v5005
      %5092 = vst.msk [vmem:[#allocation2 + $0xf8] sm:$0xff] %vm1089, %v5007
      %5093 = vst.msk [vmem:[#allocation2 + $0x110] sm:$0xff] %vm1089, %v5009
      %5094 = vst.msk [vmem:[#allocation2 + $0x128] sm:$0xff] %vm1089, %v5011
      %5095 = vst.msk [vmem:[#allocation2 + $0x140] sm:$0xff] %vm1089, %v5013
      %5096 = vst.msk [vmem:[#allocation2 + $0x158] sm:$0xff] %vm1089, %v5015
      %5097 = vst.msk [vmem:[#allocation2 + $0x170] sm:$0xff] %vm1089, %v5017
      %5098 = vst.msk [vmem:[#allocation2 + $0x188] sm:$0xff] %vm1089, %v5019
      %5099 = vst.msk [vmem:[#allocation2 + $0x1a0] sm:$0xff] %vm1089, %v5021
      %5100 = vst.msk [vmem:[#allocation2 + $0x1b8] sm:$0xff] %vm1089, %v5023
      %5101 = vst.msk [vmem:[#allocation2 + $0x1d0] sm:$0xff] %vm1089, %v5025
      %5102 = vst.msk [vmem:[#allocation2 + $0x1e8] sm:$0xff] %vm1089, %v5027
      %5103 = vst.msk [vmem:[#allocation2 + $0x200] sm:$0xff] %vm1089, %v5029
      %5104 = vst.msk [vmem:[#allocation2 + $0x218] sm:$0xff] %vm1089, %v5031
      %5105 = vst.msk [vmem:[#allocation2 + $0x230] sm:$0xff] %vm1089, %v5033
      %5106 = vst.msk [vmem:[#allocation2 + $0x248] sm:$0xff] %vm1089, %v5035
      %5107 = vst.msk [vmem:[#allocation2 + $0x260] sm:$0xff] %vm1089, %v5037
      %5108 = vst.msk [vmem:[#allocation2 + $0x278] sm:$0xff] %vm1089, %v5039
      %5109 = vst.msk [vmem:[#allocation2 + $0x290] sm:$0xff] %vm1089, %v5041
      %5110 = vst.msk [vmem:[#allocation2 + $0x2a8] sm:$0xff] %vm1089, %v5043
      %5111 = vst.msk [vmem:[#allocation2 + $0x2c0] sm:$0xff] %vm1089, %v5045
      %5112 = vst.msk [vmem:[#allocation2 + $0x2d8] sm:$0xff] %vm1089, %v5047
      %5113 = vst.msk [vmem:[#allocation2 + $0x2f0] sm:$0xff] %vm1089, %v5049
      %v5114 = vld [vmem:[%s4601 + $0x2] sm:$0xff]
      %v5115 = vld [vmem:[%s4601 + $0x12] sm:$0xff]
      %v5116 = vld [vmem:[%s4601 + $0x22] sm:$0xff]
      %v5117 = vld [vmem:[%s4601 + $0x32] sm:$0xff]
      %v5118 = vld [vmem:[%s4601 + $0x42] sm:$0xff]
      %v5119 = vld [vmem:[%s4601 + $0x52] sm:$0xff]
      %v5120 = vld [vmem:[%s4601 + $0x62] sm:$0xff]
      %v5121 = vld [vmem:[%s4601 + $0x72] sm:$0xff]
      %v5122 = vld [vmem:[%s4601 + $0xa2] sm:$0xff]
      %v5123 = vld [vmem:[%s4601 + $0xb2] sm:$0xff]
      %v5124 = vld [vmem:[%s4601 + $0xc2] sm:$0xff]
      %v5125 = vld [vmem:[%s4601 + $0xd2] sm:$0xff]
      %v5126 = vld [vmem:[%s4601 + $0xe2] sm:$0xff]
      %v5127 = vld [vmem:[%s4601 + $0xf2] sm:$0xff]
      %v5128 = vld [vmem:[%s4601 + $0x102] sm:$0xff]
      %v5129 = vld [vmem:[%s4601 + $0x112] sm:$0xff]
      %v5130 = vld [vmem:[%s4601 + $0x142] sm:$0xff]
      %v5131 = vld [vmem:[%s4601 + $0x152] sm:$0xff]
      %v5132 = vld [vmem:[%s4601 + $0x162] sm:$0xff]
      %v5133 = vld [vmem:[%s4601 + $0x172] sm:$0xff]
      %v5134 = vld [vmem:[%s4601 + $0x182] sm:$0xff]
      %v5135 = vld [vmem:[%s4601 + $0x192] sm:$0xff]
      %v5136 = vld [vmem:[%s4601 + $0x1a2] sm:$0xff]
      %v5137 = vld [vmem:[%s4601 + $0x1b2] sm:$0xff]
      %v5138 = vld [vmem:[%s4601 + $0x1e2] sm:$0xff]
      %v5139 = vld [vmem:[%s4601 + $0x1f2] sm:$0xff]
      %v5140 = vld [vmem:[%s4601 + $0x202] sm:$0xff]
      %v5141 = vld [vmem:[%s4601 + $0x212] sm:$0xff]
      %v5142 = vld [vmem:[%s4601 + $0x222] sm:$0xff]
      %v5143 = vld [vmem:[%s4601 + $0x232] sm:$0xff]
      %v5144 = vld [vmem:[%s4601 + $0x242] sm:$0xff]
      %v5145 = vld [vmem:[%s4601 + $0x252] sm:$0xff]
      %v5146 = vld [vmem:[%s4601 + $0x282] sm:$0xff]
      %v5147 = vld [vmem:[%s4601 + $0x292] sm:$0xff]
      %v5148 = vld [vmem:[%s4601 + $0x2a2] sm:$0xff]
      %v5149 = vld [vmem:[%s4601 + $0x2b2] sm:$0xff]
      %v5150 = vld [vmem:[%s4601 + $0x2c2] sm:$0xff]
      %v5151 = vld [vmem:[%s4601 + $0x2d2] sm:$0xff]
      %v5152 = vld [vmem:[%s4601 + $0x2e2] sm:$0xff]
      %v5153 = vld [vmem:[%s4601 + $0x2f2] sm:$0xff]
      %v5154 = vld [vmem:[%s4601 + $0x322] sm:$0xff]
      %v5155 = vld [vmem:[%s4601 + $0x332] sm:$0xff]
      %v5156 = vld [vmem:[%s4601 + $0x342] sm:$0xff]
      %v5157 = vld [vmem:[%s4601 + $0x352] sm:$0xff]
      %v5158 = vld [vmem:[%s4601 + $0x362] sm:$0xff]
      %v5159 = vld [vmem:[%s4601 + $0x372] sm:$0xff]
      %v5160 = vld [vmem:[%s4601 + $0x382] sm:$0xff]
      %v5161 = vld [vmem:[%s4601 + $0x392] sm:$0xff]
      %v5162 = vld [vmem:[%s4601 + $0x3c2] sm:$0xff]
      %v5163 = vld [vmem:[%s4601 + $0x3d2] sm:$0xff]
      %v5164 = vld [vmem:[%s4601 + $0x3e2] sm:$0xff]
      %v5165 = vld [vmem:[%s4601 + $0x3f2] sm:$0xff]
      %v5166 = vld [vmem:[%s4601 + $0x402] sm:$0xff]
      %v5167 = vld [vmem:[%s4601 + $0x412] sm:$0xff]
      %v5168 = vld [vmem:[%s4601 + $0x422] sm:$0xff]
      %v5169 = vld [vmem:[%s4601 + $0x432] sm:$0xff]
      %v5170 = vld [vmem:[%s4601 + $0x462] sm:$0xff]
      %v5171 = vld [vmem:[%s4601 + $0x472] sm:$0xff]
      %v5172 = vld [vmem:[%s4601 + $0x482] sm:$0xff]
      %v5173 = vld [vmem:[%s4601 + $0x492] sm:$0xff]
      %v5174 = vld [vmem:[%s4601 + $0x4a2] sm:$0xff]
      %v5175 = vld [vmem:[%s4601 + $0x4b2] sm:$0xff]
      %v5176 = vld [vmem:[%s4601 + $0x4c2] sm:$0xff]
      %v5177 = vld [vmem:[%s4601 + $0x4d2] sm:$0xff]
      %v5178 = vpack.c.bf16 %v5115, %v5114
      %v5179 = vpack.c.bf16 %v5117, %v5116
      %v5180 = vpack.c.bf16 %v5119, %v5118
      %v5181 = vpack.c.bf16 %v5121, %v5120
      %v5182 = vpack.c.bf16 %v5123, %v5122
      %v5183 = vpack.c.bf16 %v5125, %v5124
      %v5184 = vpack.c.bf16 %v5127, %v5126
      %v5185 = vpack.c.bf16 %v5129, %v5128
      %v5186 = vpack.c.bf16 %v5131, %v5130
      %v5187 = vpack.c.bf16 %v5133, %v5132
      %v5188 = vpack.c.bf16 %v5135, %v5134
      %v5189 = vpack.c.bf16 %v5137, %v5136
      %v5190 = vpack.c.bf16 %v5139, %v5138
      %v5191 = vpack.c.bf16 %v5141, %v5140
      %v5192 = vpack.c.bf16 %v5143, %v5142
      %v5193 = vpack.c.bf16 %v5145, %v5144
      %v5194 = vpack.c.bf16 %v5147, %v5146
      %v5195 = vpack.c.bf16 %v5149, %v5148
      %v5196 = vpack.c.bf16 %v5151, %v5150
      %v5197 = vpack.c.bf16 %v5153, %v5152
      %v5198 = vpack.c.bf16 %v5155, %v5154
      %v5199 = vpack.c.bf16 %v5157, %v5156
      %v5200 = vpack.c.bf16 %v5159, %v5158
      %v5201 = vpack.c.bf16 %v5161, %v5160
      %v5202 = vpack.c.bf16 %v5163, %v5162
      %v5203 = vpack.c.bf16 %v5165, %v5164
      %v5204 = vpack.c.bf16 %v5167, %v5166
      %v5205 = vpack.c.bf16 %v5169, %v5168
      %v5206 = vpack.c.bf16 %v5171, %v5170
      %v5207 = vpack.c.bf16 %v5173, %v5172
      %v5208 = vpack.c.bf16 %v5175, %v5174
      %v5209 = vpack.c.bf16 %v5177, %v5176
      %5242 = vrot.lane.b32.xlu0 %v5178, 32
      %v5243 = vpop.permute.xlu0 %5242
      %5244 = vrot.lane.b32.xlu0 %v5179, 32
      %v5245 = vpop.permute.xlu0 %5244
      %5246 = vrot.lane.b32.xlu0 %v5180, 32
      %v5247 = vpop.permute.xlu0 %5246
      %5248 = vrot.lane.b32.xlu0 %v5181, 32
      %v5249 = vpop.permute.xlu0 %5248
      %5250 = vrot.lane.b32.xlu0 %v5182, 32
      %v5251 = vpop.permute.xlu0 %5250
      %5252 = vrot.lane.b32.xlu0 %v5183, 32
      %v5253 = vpop.permute.xlu0 %5252
      %5254 = vrot.lane.b32.xlu0 %v5184, 32
      %v5255 = vpop.permute.xlu0 %5254
      %5256 = vrot.lane.b32.xlu0 %v5185, 32
      %v5257 = vpop.permute.xlu0 %5256
      %5258 = vrot.lane.b32.xlu0 %v5186, 32
      %v5259 = vpop.permute.xlu0 %5258
      %5260 = vrot.lane.b32.xlu0 %v5187, 32
      %v5261 = vpop.permute.xlu0 %5260
      %5262 = vrot.lane.b32.xlu0 %v5188, 32
      %v5263 = vpop.permute.xlu0 %5262
      %5264 = vrot.lane.b32.xlu0 %v5189, 32
      %v5265 = vpop.permute.xlu0 %5264
      %5266 = vrot.lane.b32.xlu0 %v5190, 32
      %v5267 = vpop.permute.xlu0 %5266
      %5268 = vrot.lane.b32.xlu0 %v5191, 32
      %v5269 = vpop.permute.xlu0 %5268
      %5270 = vrot.lane.b32.xlu0 %v5192, 32
      %v5271 = vpop.permute.xlu0 %5270
      %5272 = vrot.lane.b32.xlu0 %v5193, 32
      %v5273 = vpop.permute.xlu0 %5272
      %5274 = vrot.lane.b32.xlu0 %v5194, 32
      %v5275 = vpop.permute.xlu0 %5274
      %5276 = vrot.lane.b32.xlu0 %v5195, 32
      %v5277 = vpop.permute.xlu0 %5276
      %5278 = vrot.lane.b32.xlu0 %v5196, 32
      %v5279 = vpop.permute.xlu0 %5278
      %5280 = vrot.lane.b32.xlu0 %v5197, 32
      %v5281 = vpop.permute.xlu0 %5280
      %5282 = vrot.lane.b32.xlu0 %v5198, 32
      %v5283 = vpop.permute.xlu0 %5282
      %5284 = vrot.lane.b32.xlu0 %v5199, 32
      %v5285 = vpop.permute.xlu0 %5284
      %5286 = vrot.lane.b32.xlu0 %v5200, 32
      %v5287 = vpop.permute.xlu0 %5286
      %5288 = vrot.lane.b32.xlu0 %v5201, 32
      %v5289 = vpop.permute.xlu0 %5288
      %5290 = vrot.lane.b32.xlu0 %v5202, 32
      %v5291 = vpop.permute.xlu0 %5290
      %5292 = vrot.lane.b32.xlu0 %v5203, 32
      %v5293 = vpop.permute.xlu0 %5292
      %5294 = vrot.lane.b32.xlu0 %v5204, 32
      %v5295 = vpop.permute.xlu0 %5294
      %5296 = vrot.lane.b32.xlu0 %v5205, 32
      %v5297 = vpop.permute.xlu0 %5296
      %5298 = vrot.lane.b32.xlu0 %v5206, 32
      %v5299 = vpop.permute.xlu0 %5298
      %5300 = vrot.lane.b32.xlu0 %v5207, 32
      %v5301 = vpop.permute.xlu0 %5300
      %5302 = vrot.lane.b32.xlu0 %v5208, 32
      %v5303 = vpop.permute.xlu0 %5302
      %5304 = vrot.lane.b32.xlu0 %v5209, 32
      %v5305 = vpop.permute.xlu0 %5304
      %5338 = vst.msk [vmem:[#allocation2 + $0x8] sm:$0xff] %vm1346, %v5243
      %5339 = vst.msk [vmem:[#allocation2 + $0x20] sm:$0xff] %vm1346, %v5245
      %5340 = vst.msk [vmem:[#allocation2 + $0x38] sm:$0xff] %vm1346, %v5247
      %5341 = vst.msk [vmem:[#allocation2 + $0x50] sm:$0xff] %vm1346, %v5249
      %5342 = vst.msk [vmem:[#allocation2 + $0x68] sm:$0xff] %vm1346, %v5251
      %5343 = vst.msk [vmem:[#allocation2 + $0x80] sm:$0xff] %vm1346, %v5253
      %5344 = vst.msk [vmem:[#allocation2 + $0x98] sm:$0xff] %vm1346, %v5255
      %5345 = vst.msk [vmem:[#allocation2 + $0xb0] sm:$0xff] %vm1346, %v5257
      %5346 = vst.msk [vmem:[#allocation2 + $0xc8] sm:$0xff] %vm1346, %v5259
      %5347 = vst.msk [vmem:[#allocation2 + $0xe0] sm:$0xff] %vm1346, %v5261
      %5348 = vst.msk [vmem:[#allocation2 + $0xf8] sm:$0xff] %vm1346, %v5263
      %5349 = vst.msk [vmem:[#allocation2 + $0x110] sm:$0xff] %vm1346, %v5265
      %5350 = vst.msk [vmem:[#allocation2 + $0x128] sm:$0xff] %vm1346, %v5267
      %5351 = vst.msk [vmem:[#allocation2 + $0x140] sm:$0xff] %vm1346, %v5269
      %5352 = vst.msk [vmem:[#allocation2 + $0x158] sm:$0xff] %vm1346, %v5271
      %5353 = vst.msk [vmem:[#allocation2 + $0x170] sm:$0xff] %vm1346, %v5273
      %5354 = vst.msk [vmem:[#allocation2 + $0x188] sm:$0xff] %vm1346, %v5275
      %5355 = vst.msk [vmem:[#allocation2 + $0x1a0] sm:$0xff] %vm1346, %v5277
      %5356 = vst.msk [vmem:[#allocation2 + $0x1b8] sm:$0xff] %vm1346, %v5279
      %5357 = vst.msk [vmem:[#allocation2 + $0x1d0] sm:$0xff] %vm1346, %v5281
      %5358 = vst.msk [vmem:[#allocation2 + $0x1e8] sm:$0xff] %vm1346, %v5283
      %5359 = vst.msk [vmem:[#allocation2 + $0x200] sm:$0xff] %vm1346, %v5285
      %5360 = vst.msk [vmem:[#allocation2 + $0x218] sm:$0xff] %vm1346, %v5287
      %5361 = vst.msk [vmem:[#allocation2 + $0x230] sm:$0xff] %vm1346, %v5289
      %5362 = vst.msk [vmem:[#allocation2 + $0x248] sm:$0xff] %vm1346, %v5291
      %5363 = vst.msk [vmem:[#allocation2 + $0x260] sm:$0xff] %vm1346, %v5293
      %5364 = vst.msk [vmem:[#allocation2 + $0x278] sm:$0xff] %vm1346, %v5295
      %5365 = vst.msk [vmem:[#allocation2 + $0x290] sm:$0xff] %vm1346, %v5297
      %5366 = vst.msk [vmem:[#allocation2 + $0x2a8] sm:$0xff] %vm1346, %v5299
      %5367 = vst.msk [vmem:[#allocation2 + $0x2c0] sm:$0xff] %vm1346, %v5301
      %5368 = vst.msk [vmem:[#allocation2 + $0x2d8] sm:$0xff] %vm1346, %v5303
      %5369 = vst.msk [vmem:[#allocation2 + $0x2f0] sm:$0xff] %vm1346, %v5305
      %s5370 = sadd.s32 16, %s4600
      %s5371 = scalar_lea.vmem %s207, %s5370
      %v5372 = vld [vmem:[%s5371] sm:$0xff]
      %v5373 = vld [vmem:[%s5371 + $0x10] sm:$0xff]
      %v5374 = vld [vmem:[%s5371 + $0x20] sm:$0xff]
      %v5375 = vld [vmem:[%s5371 + $0x30] sm:$0xff]
      %v5376 = vld [vmem:[%s5371 + $0x40] sm:$0xff]
      %v5377 = vld [vmem:[%s5371 + $0x50] sm:$0xff]
      %v5378 = vld [vmem:[%s5371 + $0x60] sm:$0xff]
      %v5379 = vld [vmem:[%s5371 + $0x70] sm:$0xff]
      %v5380 = vld [vmem:[%s5371 + $0xa0] sm:$0xff]
      %v5381 = vld [vmem:[%s5371 + $0xb0] sm:$0xff]
      %v5382 = vld [vmem:[%s5371 + $0xc0] sm:$0xff]
      %v5383 = vld [vmem:[%s5371 + $0xd0] sm:$0xff]
      %v5384 = vld [vmem:[%s5371 + $0xe0] sm:$0xff]
      %v5385 = vld [vmem:[%s5371 + $0xf0] sm:$0xff]
      %v5386 = vld [vmem:[%s5371 + $0x100] sm:$0xff]
      %v5387 = vld [vmem:[%s5371 + $0x110] sm:$0xff]
      %v5388 = vld [vmem:[%s5371 + $0x140] sm:$0xff]
      %v5389 = vld [vmem:[%s5371 + $0x150] sm:$0xff]
      %v5390 = vld [vmem:[%s5371 + $0x160] sm:$0xff]
      %v5391 = vld [vmem:[%s5371 + $0x170] sm:$0xff]
      %v5392 = vld [vmem:[%s5371 + $0x180] sm:$0xff]
      %v5393 = vld [vmem:[%s5371 + $0x190] sm:$0xff]
      %v5394 = vld [vmem:[%s5371 + $0x1a0] sm:$0xff]
      %v5395 = vld [vmem:[%s5371 + $0x1b0] sm:$0xff]
      %v5396 = vld [vmem:[%s5371 + $0x1e0] sm:$0xff]
      %v5397 = vld [vmem:[%s5371 + $0x1f0] sm:$0xff]
      %v5398 = vld [vmem:[%s5371 + $0x200] sm:$0xff]
      %v5399 = vld [vmem:[%s5371 + $0x210] sm:$0xff]
      %v5400 = vld [vmem:[%s5371 + $0x220] sm:$0xff]
      %v5401 = vld [vmem:[%s5371 + $0x230] sm:$0xff]
      %v5402 = vld [vmem:[%s5371 + $0x240] sm:$0xff]
      %v5403 = vld [vmem:[%s5371 + $0x250] sm:$0xff]
      %v5404 = vld [vmem:[%s5371 + $0x280] sm:$0xff]
      %v5405 = vld [vmem:[%s5371 + $0x290] sm:$0xff]
      %v5406 = vld [vmem:[%s5371 + $0x2a0] sm:$0xff]
      %v5407 = vld [vmem:[%s5371 + $0x2b0] sm:$0xff]
      %v5408 = vld [vmem:[%s5371 + $0x2c0] sm:$0xff]
      %v5409 = vld [vmem:[%s5371 + $0x2d0] sm:$0xff]
      %v5410 = vld [vmem:[%s5371 + $0x2e0] sm:$0xff]
      %v5411 = vld [vmem:[%s5371 + $0x2f0] sm:$0xff]
      %v5412 = vld [vmem:[%s5371 + $0x320] sm:$0xff]
      %v5413 = vld [vmem:[%s5371 + $0x330] sm:$0xff]
      %v5414 = vld [vmem:[%s5371 + $0x340] sm:$0xff]
      %v5415 = vld [vmem:[%s5371 + $0x350] sm:$0xff]
      %v5416 = vld [vmem:[%s5371 + $0x360] sm:$0xff]
      %v5417 = vld [vmem:[%s5371 + $0x370] sm:$0xff]
      %v5418 = vld [vmem:[%s5371 + $0x380] sm:$0xff]
      %v5419 = vld [vmem:[%s5371 + $0x390] sm:$0xff]
      %v5420 = vld [vmem:[%s5371 + $0x3c0] sm:$0xff]
      %v5421 = vld [vmem:[%s5371 + $0x3d0] sm:$0xff]
      %v5422 = vld [vmem:[%s5371 + $0x3e0] sm:$0xff]
      %v5423 = vld [vmem:[%s5371 + $0x3f0] sm:$0xff]
      %v5424 = vld [vmem:[%s5371 + $0x400] sm:$0xff]
      %v5425 = vld [vmem:[%s5371 + $0x410] sm:$0xff]
      %v5426 = vld [vmem:[%s5371 + $0x420] sm:$0xff]
      %v5427 = vld [vmem:[%s5371 + $0x430] sm:$0xff]
      %v5428 = vld [vmem:[%s5371 + $0x460] sm:$0xff]
      %v5429 = vld [vmem:[%s5371 + $0x470] sm:$0xff]
      %v5430 = vld [vmem:[%s5371 + $0x480] sm:$0xff]
      %v5431 = vld [vmem:[%s5371 + $0x490] sm:$0xff]
      %v5432 = vld [vmem:[%s5371 + $0x4a0] sm:$0xff]
      %v5433 = vld [vmem:[%s5371 + $0x4b0] sm:$0xff]
      %v5434 = vld [vmem:[%s5371 + $0x4c0] sm:$0xff]
      %v5435 = vld [vmem:[%s5371 + $0x4d0] sm:$0xff]
      %v5436 = vpack.c.bf16 %v5373, %v5372
      %v5437 = vpack.c.bf16 %v5375, %v5374
      %v5438 = vpack.c.bf16 %v5377, %v5376
      %v5439 = vpack.c.bf16 %v5379, %v5378
      %v5440 = vpack.c.bf16 %v5381, %v5380
      %v5441 = vpack.c.bf16 %v5383, %v5382
      %v5442 = vpack.c.bf16 %v5385, %v5384
      %v5443 = vpack.c.bf16 %v5387, %v5386
      %v5444 = vpack.c.bf16 %v5389, %v5388
      %v5445 = vpack.c.bf16 %v5391, %v5390
      %v5446 = vpack.c.bf16 %v5393, %v5392
      %v5447 = vpack.c.bf16 %v5395, %v5394
      %v5448 = vpack.c.bf16 %v5397, %v5396
      %v5449 = vpack.c.bf16 %v5399, %v5398
      %v5450 = vpack.c.bf16 %v5401, %v5400
      %v5451 = vpack.c.bf16 %v5403, %v5402
      %v5452 = vpack.c.bf16 %v5405, %v5404
      %v5453 = vpack.c.bf16 %v5407, %v5406
      %v5454 = vpack.c.bf16 %v5409, %v5408
      %v5455 = vpack.c.bf16 %v5411, %v5410
      %v5456 = vpack.c.bf16 %v5413, %v5412
      %v5457 = vpack.c.bf16 %v5415, %v5414
      %v5458 = vpack.c.bf16 %v5417, %v5416
      %v5459 = vpack.c.bf16 %v5419, %v5418
      %v5460 = vpack.c.bf16 %v5421, %v5420
      %v5461 = vpack.c.bf16 %v5423, %v5422
      %v5462 = vpack.c.bf16 %v5425, %v5424
      %v5463 = vpack.c.bf16 %v5427, %v5426
      %v5464 = vpack.c.bf16 %v5429, %v5428
      %v5465 = vpack.c.bf16 %v5431, %v5430
      %v5466 = vpack.c.bf16 %v5433, %v5432
      %v5467 = vpack.c.bf16 %v5435, %v5434
      %5500 = vrot.lane.b32.xlu0 %v5436, 40
      %v5501 = vpop.permute.xlu0 %5500
      %5502 = vrot.lane.b32.xlu0 %v5437, 40
      %v5503 = vpop.permute.xlu0 %5502
      %5504 = vrot.lane.b32.xlu0 %v5438, 40
      %v5505 = vpop.permute.xlu0 %5504
      %5506 = vrot.lane.b32.xlu0 %v5439, 40
      %v5507 = vpop.permute.xlu0 %5506
      %5508 = vrot.lane.b32.xlu0 %v5440, 40
      %v5509 = vpop.permute.xlu0 %5508
      %5510 = vrot.lane.b32.xlu0 %v5441, 40
      %v5511 = vpop.permute.xlu0 %5510
      %5512 = vrot.lane.b32.xlu0 %v5442, 40
      %v5513 = vpop.permute.xlu0 %5512
      %5514 = vrot.lane.b32.xlu0 %v5443, 40
      %v5515 = vpop.permute.xlu0 %5514
      %5516 = vrot.lane.b32.xlu0 %v5444, 40
      %v5517 = vpop.permute.xlu0 %5516
      %5518 = vrot.lane.b32.xlu0 %v5445, 40
      %v5519 = vpop.permute.xlu0 %5518
      %5520 = vrot.lane.b32.xlu0 %v5446, 40
      %v5521 = vpop.permute.xlu0 %5520
      %5522 = vrot.lane.b32.xlu0 %v5447, 40
      %v5523 = vpop.permute.xlu0 %5522
      %5524 = vrot.lane.b32.xlu0 %v5448, 40
      %v5525 = vpop.permute.xlu0 %5524
      %5526 = vrot.lane.b32.xlu0 %v5449, 40
      %v5527 = vpop.permute.xlu0 %5526
      %5528 = vrot.lane.b32.xlu0 %v5450, 40
      %v5529 = vpop.permute.xlu0 %5528
      %5530 = vrot.lane.b32.xlu0 %v5451, 40
      %v5531 = vpop.permute.xlu0 %5530
      %5532 = vrot.lane.b32.xlu0 %v5452, 40
      %v5533 = vpop.permute.xlu0 %5532
      %5534 = vrot.lane.b32.xlu0 %v5453, 40
      %v5535 = vpop.permute.xlu0 %5534
      %5536 = vrot.lane.b32.xlu0 %v5454, 40
      %v5537 = vpop.permute.xlu0 %5536
      %5538 = vrot.lane.b32.xlu0 %v5455, 40
      %v5539 = vpop.permute.xlu0 %5538
      %5540 = vrot.lane.b32.xlu0 %v5456, 40
      %v5541 = vpop.permute.xlu0 %5540
      %5542 = vrot.lane.b32.xlu0 %v5457, 40
      %v5543 = vpop.permute.xlu0 %5542
      %5544 = vrot.lane.b32.xlu0 %v5458, 40
      %v5545 = vpop.permute.xlu0 %5544
      %5546 = vrot.lane.b32.xlu0 %v5459, 40
      %v5547 = vpop.permute.xlu0 %5546
      %5548 = vrot.lane.b32.xlu0 %v5460, 40
      %v5549 = vpop.permute.xlu0 %5548
      %5550 = vrot.lane.b32.xlu0 %v5461, 40
      %v5551 = vpop.permute.xlu0 %5550
      %5552 = vrot.lane.b32.xlu0 %v5462, 40
      %v5553 = vpop.permute.xlu0 %5552
      %5554 = vrot.lane.b32.xlu0 %v5463, 40
      %v5555 = vpop.permute.xlu0 %5554
      %5556 = vrot.lane.b32.xlu0 %v5464, 40
      %v5557 = vpop.permute.xlu0 %5556
      %5558 = vrot.lane.b32.xlu0 %v5465, 40
      %v5559 = vpop.permute.xlu0 %5558
      %5560 = vrot.lane.b32.xlu0 %v5466, 40
      %v5561 = vpop.permute.xlu0 %5560
      %5562 = vrot.lane.b32.xlu0 %v5467, 40
      %v5563 = vpop.permute.xlu0 %5562
      %5596 = vst.msk [vmem:[#allocation2 + $0x8] sm:$0xff] %vm1603, %v5501
      %5597 = vst.msk [vmem:[#allocation2 + $0x20] sm:$0xff] %vm1603, %v5503
      %5598 = vst.msk [vmem:[#allocation2 + $0x38] sm:$0xff] %vm1603, %v5505
      %5599 = vst.msk [vmem:[#allocation2 + $0x50] sm:$0xff] %vm1603, %v5507
      %5600 = vst.msk [vmem:[#allocation2 + $0x68] sm:$0xff] %vm1603, %v5509
      %5601 = vst.msk [vmem:[#allocation2 + $0x80] sm:$0xff] %vm1603, %v5511
      %5602 = vst.msk [vmem:[#allocation2 + $0x98] sm:$0xff] %vm1603, %v5513
      %5603 = vst.msk [vmem:[#allocation2 + $0xb0] sm:$0xff] %vm1603, %v5515
      %5604 = vst.msk [vmem:[#allocation2 + $0xc8] sm:$0xff] %vm1603, %v5517
      %5605 = vst.msk [vmem:[#allocation2 + $0xe0] sm:$0xff] %vm1603, %v5519
      %5606 = vst.msk [vmem:[#allocation2 + $0xf8] sm:$0xff] %vm1603, %v5521
      %5607 = vst.msk [vmem:[#allocation2 + $0x110] sm:$0xff] %vm1603, %v5523
      %5608 = vst.msk [vmem:[#allocation2 + $0x128] sm:$0xff] %vm1603, %v5525
      %5609 = vst.msk [vmem:[#allocation2 + $0x140] sm:$0xff] %vm1603, %v5527
      %5610 = vst.msk [vmem:[#allocation2 + $0x158] sm:$0xff] %vm1603, %v5529
      %5611 = vst.msk [vmem:[#allocation2 + $0x170] sm:$0xff] %vm1603, %v5531
      %5612 = vst.msk [vmem:[#allocation2 + $0x188] sm:$0xff] %vm1603, %v5533
      %5613 = vst.msk [vmem:[#allocation2 + $0x1a0] sm:$0xff] %vm1603, %v5535
      %5614 = vst.msk [vmem:[#allocation2 + $0x1b8] sm:$0xff] %vm1603, %v5537
      %5615 = vst.msk [vmem:[#allocation2 + $0x1d0] sm:$0xff] %vm1603, %v5539
      %5616 = vst.msk [vmem:[#allocation2 + $0x1e8] sm:$0xff] %vm1603, %v5541
      %5617 = vst.msk [vmem:[#allocation2 + $0x200] sm:$0xff] %vm1603, %v5543
      %5618 = vst.msk [vmem:[#allocation2 + $0x218] sm:$0xff] %vm1603, %v5545
      %5619 = vst.msk [vmem:[#allocation2 + $0x230] sm:$0xff] %vm1603, %v5547
      %5620 = vst.msk [vmem:[#allocation2 + $0x248] sm:$0xff] %vm1603, %v5549
      %5621 = vst.msk [vmem:[#allocation2 + $0x260] sm:$0xff] %vm1603, %v5551
      %5622 = vst.msk [vmem:[#allocation2 + $0x278] sm:$0xff] %vm1603, %v5553
      %5623 = vst.msk [vmem:[#allocation2 + $0x290] sm:$0xff] %vm1603, %v5555
      %5624 = vst.msk [vmem:[#allocation2 + $0x2a8] sm:$0xff] %vm1603, %v5557
      %5625 = vst.msk [vmem:[#allocation2 + $0x2c0] sm:$0xff] %vm1603, %v5559
      %5626 = vst.msk [vmem:[#allocation2 + $0x2d8] sm:$0xff] %vm1603, %v5561
      %5627 = vst.msk [vmem:[#allocation2 + $0x2f0] sm:$0xff] %vm1603, %v5563
      %v5628 = vld [vmem:[%s5371 + $0x1] sm:$0xff]
      %v5629 = vld [vmem:[%s5371 + $0x11] sm:$0xff]
      %v5630 = vld [vmem:[%s5371 + $0x21] sm:$0xff]
      %v5631 = vld [vmem:[%s5371 + $0x31] sm:$0xff]
      %v5632 = vld [vmem:[%s5371 + $0x41] sm:$0xff]
      %v5633 = vld [vmem:[%s5371 + $0x51] sm:$0xff]
      %v5634 = vld [vmem:[%s5371 + $0x61] sm:$0xff]
      %v5635 = vld [vmem:[%s5371 + $0x71] sm:$0xff]
      %v5636 = vld [vmem:[%s5371 + $0xa1] sm:$0xff]
      %v5637 = vld [vmem:[%s5371 + $0xb1] sm:$0xff]
      %v5638 = vld [vmem:[%s5371 + $0xc1] sm:$0xff]
      %v5639 = vld [vmem:[%s5371 + $0xd1] sm:$0xff]
      %v5640 = vld [vmem:[%s5371 + $0xe1] sm:$0xff]
      %v5641 = vld [vmem:[%s5371 + $0xf1] sm:$0xff]
      %v5642 = vld [vmem:[%s5371 + $0x101] sm:$0xff]
      %v5643 = vld [vmem:[%s5371 + $0x111] sm:$0xff]
      %v5644 = vld [vmem:[%s5371 + $0x141] sm:$0xff]
      %v5645 = vld [vmem:[%s5371 + $0x151] sm:$0xff]
      %v5646 = vld [vmem:[%s5371 + $0x161] sm:$0xff]
      %v5647 = vld [vmem:[%s5371 + $0x171] sm:$0xff]
      %v5648 = vld [vmem:[%s5371 + $0x181] sm:$0xff]
      %v5649 = vld [vmem:[%s5371 + $0x191] sm:$0xff]
      %v5650 = vld [vmem:[%s5371 + $0x1a1] sm:$0xff]
      %v5651 = vld [vmem:[%s5371 + $0x1b1] sm:$0xff]
      %v5652 = vld [vmem:[%s5371 + $0x1e1] sm:$0xff]
      %v5653 = vld [vmem:[%s5371 + $0x1f1] sm:$0xff]
      %v5654 = vld [vmem:[%s5371 + $0x201] sm:$0xff]
      %v5655 = vld [vmem:[%s5371 + $0x211] sm:$0xff]
      %v5656 = vld [vmem:[%s5371 + $0x221] sm:$0xff]
      %v5657 = vld [vmem:[%s5371 + $0x231] sm:$0xff]
      %v5658 = vld [vmem:[%s5371 + $0x241] sm:$0xff]
      %v5659 = vld [vmem:[%s5371 + $0x251] sm:$0xff]
      %v5660 = vld [vmem:[%s5371 + $0x281] sm:$0xff]
      %v5661 = vld [vmem:[%s5371 + $0x291] sm:$0xff]
      %v5662 = vld [vmem:[%s5371 + $0x2a1] sm:$0xff]
      %v5663 = vld [vmem:[%s5371 + $0x2b1] sm:$0xff]
      %v5664 = vld [vmem:[%s5371 + $0x2c1] sm:$0xff]
      %v5665 = vld [vmem:[%s5371 + $0x2d1] sm:$0xff]
      %v5666 = vld [vmem:[%s5371 + $0x2e1] sm:$0xff]
      %v5667 = vld [vmem:[%s5371 + $0x2f1] sm:$0xff]
      %v5668 = vld [vmem:[%s5371 + $0x321] sm:$0xff]
      %v5669 = vld [vmem:[%s5371 + $0x331] sm:$0xff]
      %v5670 = vld [vmem:[%s5371 + $0x341] sm:$0xff]
      %v5671 = vld [vmem:[%s5371 + $0x351] sm:$0xff]
      %v5672 = vld [vmem:[%s5371 + $0x361] sm:$0xff]
      %v5673 = vld [vmem:[%s5371 + $0x371] sm:$0xff]
      %v5674 = vld [vmem:[%s5371 + $0x381] sm:$0xff]
      %v5675 = vld [vmem:[%s5371 + $0x391] sm:$0xff]
      %v5676 = vld [vmem:[%s5371 + $0x3c1] sm:$0xff]
      %v5677 = vld [vmem:[%s5371 + $0x3d1] sm:$0xff]
      %v5678 = vld [vmem:[%s5371 + $0x3e1] sm:$0xff]
      %v5679 = vld [vmem:[%s5371 + $0x3f1] sm:$0xff]
      %v5680 = vld [vmem:[%s5371 + $0x401] sm:$0xff]
      %v5681 = vld [vmem:[%s5371 + $0x411] sm:$0xff]
      %v5682 = vld [vmem:[%s5371 + $0x421] sm:$0xff]
      %v5683 = vld [vmem:[%s5371 + $0x431] sm:$0xff]
      %v5684 = vld [vmem:[%s5371 + $0x461] sm:$0xff]
      %v5685 = vld [vmem:[%s5371 + $0x471] sm:$0xff]
      %v5686 = vld [vmem:[%s5371 + $0x481] sm:$0xff]
      %v5687 = vld [vmem:[%s5371 + $0x491] sm:$0xff]
      %v5688 = vld [vmem:[%s5371 + $0x4a1] sm:$0xff]
      %v5689 = vld [vmem:[%s5371 + $0x4b1] sm:$0xff]
      %v5690 = vld [vmem:[%s5371 + $0x4c1] sm:$0xff]
      %v5691 = vld [vmem:[%s5371 + $0x4d1] sm:$0xff]
      %v5692 = vpack.c.bf16 %v5629, %v5628
      %v5693 = vpack.c.bf16 %v5631, %v5630
      %v5694 = vpack.c.bf16 %v5633, %v5632
      %v5695 = vpack.c.bf16 %v5635, %v5634
      %v5696 = vpack.c.bf16 %v5637, %v5636
      %v5697 = vpack.c.bf16 %v5639, %v5638
      %v5698 = vpack.c.bf16 %v5641, %v5640
      %v5699 = vpack.c.bf16 %v5643, %v5642
      %v5700 = vpack.c.bf16 %v5645, %v5644
      %v5701 = vpack.c.bf16 %v5647, %v5646
      %v5702 = vpack.c.bf16 %v5649, %v5648
      %v5703 = vpack.c.bf16 %v5651, %v5650
      %v5704 = vpack.c.bf16 %v5653, %v5652
      %v5705 = vpack.c.bf16 %v5655, %v5654
      %v5706 = vpack.c.bf16 %v5657, %v5656
      %v5707 = vpack.c.bf16 %v5659, %v5658
      %v5708 = vpack.c.bf16 %v5661, %v5660
      %v5709 = vpack.c.bf16 %v5663, %v5662
      %v5710 = vpack.c.bf16 %v5665, %v5664
      %v5711 = vpack.c.bf16 %v5667, %v5666
      %v5712 = vpack.c.bf16 %v5669, %v5668
      %v5713 = vpack.c.bf16 %v5671, %v5670
      %v5714 = vpack.c.bf16 %v5673, %v5672
      %v5715 = vpack.c.bf16 %v5675, %v5674
      %v5716 = vpack.c.bf16 %v5677, %v5676
      %v5717 = vpack.c.bf16 %v5679, %v5678
      %v5718 = vpack.c.bf16 %v5681, %v5680
      %v5719 = vpack.c.bf16 %v5683, %v5682
      %v5720 = vpack.c.bf16 %v5685, %v5684
      %v5721 = vpack.c.bf16 %v5687, %v5686
      %v5722 = vpack.c.bf16 %v5689, %v5688
      %v5723 = vpack.c.bf16 %v5691, %v5690
      %5756 = vrot.lane.b32.xlu0 %v5692, 48
      %v5757 = vpop.permute.xlu0 %5756
      %5758 = vrot.lane.b32.xlu0 %v5693, 48
      %v5759 = vpop.permute.xlu0 %5758
      %5760 = vrot.lane.b32.xlu0 %v5694, 48
      %v5761 = vpop.permute.xlu0 %5760
      %5762 = vrot.lane.b32.xlu0 %v5695, 48
      %v5763 = vpop.permute.xlu0 %5762
      %5764 = vrot.lane.b32.xlu0 %v5696, 48
      %v5765 = vpop.permute.xlu0 %5764
      %5766 = vrot.lane.b32.xlu0 %v5697, 48
      %v5767 = vpop.permute.xlu0 %5766
      %5768 = vrot.lane.b32.xlu0 %v5698, 48
      %v5769 = vpop.permute.xlu0 %5768
      %5770 = vrot.lane.b32.xlu0 %v5699, 48
      %v5771 = vpop.permute.xlu0 %5770
      %5772 = vrot.lane.b32.xlu0 %v5700, 48
      %v5773 = vpop.permute.xlu0 %5772
      %5774 = vrot.lane.b32.xlu0 %v5701, 48
      %v5775 = vpop.permute.xlu0 %5774
      %5776 = vrot.lane.b32.xlu0 %v5702, 48
      %v5777 = vpop.permute.xlu0 %5776
      %5778 = vrot.lane.b32.xlu0 %v5703, 48
      %v5779 = vpop.permute.xlu0 %5778
      %5780 = vrot.lane.b32.xlu0 %v5704, 48
      %v5781 = vpop.permute.xlu0 %5780
      %5782 = vrot.lane.b32.xlu0 %v5705, 48
      %v5783 = vpop.permute.xlu0 %5782
      %5784 = vrot.lane.b32.xlu0 %v5706, 48
      %v5785 = vpop.permute.xlu0 %5784
      %5786 = vrot.lane.b32.xlu0 %v5707, 48
      %v5787 = vpop.permute.xlu0 %5786
      %5788 = vrot.lane.b32.xlu0 %v5708, 48
      %v5789 = vpop.permute.xlu0 %5788
      %5790 = vrot.lane.b32.xlu0 %v5709, 48
      %v5791 = vpop.permute.xlu0 %5790
      %5792 = vrot.lane.b32.xlu0 %v5710, 48
      %v5793 = vpop.permute.xlu0 %5792
      %5794 = vrot.lane.b32.xlu0 %v5711, 48
      %v5795 = vpop.permute.xlu0 %5794
      %5796 = vrot.lane.b32.xlu0 %v5712, 48
      %v5797 = vpop.permute.xlu0 %5796
      %5798 = vrot.lane.b32.xlu0 %v5713, 48
      %v5799 = vpop.permute.xlu0 %5798
      %5800 = vrot.lane.b32.xlu0 %v5714, 48
      %v5801 = vpop.permute.xlu0 %5800
      %5802 = vrot.lane.b32.xlu0 %v5715, 48
      %v5803 = vpop.permute.xlu0 %5802
      %5804 = vrot.lane.b32.xlu0 %v5716, 48
      %v5805 = vpop.permute.xlu0 %5804
      %5806 = vrot.lane.b32.xlu0 %v5717, 48
      %v5807 = vpop.permute.xlu0 %5806
      %5808 = vrot.lane.b32.xlu0 %v5718, 48
      %v5809 = vpop.permute.xlu0 %5808
      %5810 = vrot.lane.b32.xlu0 %v5719, 48
      %v5811 = vpop.permute.xlu0 %5810
      %5812 = vrot.lane.b32.xlu0 %v5720, 48
      %v5813 = vpop.permute.xlu0 %5812
      %5814 = vrot.lane.b32.xlu0 %v5721, 48
      %v5815 = vpop.permute.xlu0 %5814
      %5816 = vrot.lane.b32.xlu0 %v5722, 48
      %v5817 = vpop.permute.xlu0 %5816
      %5818 = vrot.lane.b32.xlu0 %v5723, 48
      %v5819 = vpop.permute.xlu0 %5818
      %5852 = vst.msk [vmem:[#allocation2 + $0x8] sm:$0xff] %vm1862, %v5757
      %5853 = vst.msk [vmem:[#allocation2 + $0x20] sm:$0xff] %vm1862, %v5759
      %5854 = vst.msk [vmem:[#allocation2 + $0x38] sm:$0xff] %vm1862, %v5761
      %5855 = vst.msk [vmem:[#allocation2 + $0x50] sm:$0xff] %vm1862, %v5763
      %5856 = vst.msk [vmem:[#allocation2 + $0x68] sm:$0xff] %vm1862, %v5765
      %5857 = vst.msk [vmem:[#allocation2 + $0x80] sm:$0xff] %vm1862, %v5767
      %5858 = vst.msk [vmem:[#allocation2 + $0x98] sm:$0xff] %vm1862, %v5769
      %5859 = vst.msk [vmem:[#allocation2 + $0xb0] sm:$0xff] %vm1862, %v5771
      %5860 = vst.msk [vmem:[#allocation2 + $0xc8] sm:$0xff] %vm1862, %v5773
      %5861 = vst.msk [vmem:[#allocation2 + $0xe0] sm:$0xff] %vm1862, %v5775
      %5862 = vst.msk [vmem:[#allocation2 + $0xf8] sm:$0xff] %vm1862, %v5777
      %5863 = vst.msk [vmem:[#allocation2 + $0x110] sm:$0xff] %vm1862, %v5779
      %5864 = vst.msk [vmem:[#allocation2 + $0x128] sm:$0xff] %vm1862, %v5781
      %5865 = vst.msk [vmem:[#allocation2 + $0x140] sm:$0xff] %vm1862, %v5783
      %5866 = vst.msk [vmem:[#allocation2 + $0x158] sm:$0xff] %vm1862, %v5785
      %5867 = vst.msk [vmem:[#allocation2 + $0x170] sm:$0xff] %vm1862, %v5787
      %5868 = vst.msk [vmem:[#allocation2 + $0x188] sm:$0xff] %vm1862, %v5789
      %5869 = vst.msk [vmem:[#allocation2 + $0x1a0] sm:$0xff] %vm1862, %v5791
      %5870 = vst.msk [vmem:[#allocation2 + $0x1b8] sm:$0xff] %vm1862, %v5793
      %5871 = vst.msk [vmem:[#allocation2 + $0x1d0] sm:$0xff] %vm1862, %v5795
      %5872 = vst.msk [vmem:[#allocation2 + $0x1e8] sm:$0xff] %vm1862, %v5797
      %5873 = vst.msk [vmem:[#allocation2 + $0x200] sm:$0xff] %vm1862, %v5799
      %5874 = vst.msk [vmem:[#allocation2 + $0x218] sm:$0xff] %vm1862, %v5801
      %5875 = vst.msk [vmem:[#allocation2 + $0x230] sm:$0xff] %vm1862, %v5803
      %5876 = vst.msk [vmem:[#allocation2 + $0x248] sm:$0xff] %vm1862, %v5805
      %5877 = vst.msk [vmem:[#allocation2 + $0x260] sm:$0xff] %vm1862, %v5807
      %5878 = vst.msk [vmem:[#allocation2 + $0x278] sm:$0xff] %vm1862, %v5809
      %5879 = vst.msk [vmem:[#allocation2 + $0x290] sm:$0xff] %vm1862, %v5811
      %5880 = vst.msk [vmem:[#allocation2 + $0x2a8] sm:$0xff] %vm1862, %v5813
      %5881 = vst.msk [vmem:[#allocation2 + $0x2c0] sm:$0xff] %vm1862, %v5815
      %5882 = vst.msk [vmem:[#allocation2 + $0x2d8] sm:$0xff] %vm1862, %v5817
      %5883 = vst.msk [vmem:[#allocation2 + $0x2f0] sm:$0xff] %vm1862, %v5819
      %v5884 = vld [vmem:[%s5371 + $0x2] sm:$0xff]
      %v5885 = vld [vmem:[%s5371 + $0x12] sm:$0xff]
      %v5886 = vld [vmem:[%s5371 + $0x22] sm:$0xff]
      %v5887 = vld [vmem:[%s5371 + $0x32] sm:$0xff]
      %v5888 = vld [vmem:[%s5371 + $0x42] sm:$0xff]
      %v5889 = vld [vmem:[%s5371 + $0x52] sm:$0xff]
      %v5890 = vld [vmem:[%s5371 + $0x62] sm:$0xff]
      %v5891 = vld [vmem:[%s5371 + $0x72] sm:$0xff]
      %v5892 = vld [vmem:[%s5371 + $0xa2] sm:$0xff]
      %v5893 = vld [vmem:[%s5371 + $0xb2] sm:$0xff]
      %v5894 = vld [vmem:[%s5371 + $0xc2] sm:$0xff]
      %v5895 = vld [vmem:[%s5371 + $0xd2] sm:$0xff]
      %v5896 = vld [vmem:[%s5371 + $0xe2] sm:$0xff]
      %v5897 = vld [vmem:[%s5371 + $0xf2] sm:$0xff]
      %v5898 = vld [vmem:[%s5371 + $0x102] sm:$0xff]
      %v5899 = vld [vmem:[%s5371 + $0x112] sm:$0xff]
      %v5900 = vld [vmem:[%s5371 + $0x142] sm:$0xff]
      %v5901 = vld [vmem:[%s5371 + $0x152] sm:$0xff]
      %v5902 = vld [vmem:[%s5371 + $0x162] sm:$0xff]
      %v5903 = vld [vmem:[%s5371 + $0x172] sm:$0xff]
      %v5904 = vld [vmem:[%s5371 + $0x182] sm:$0xff]
      %v5905 = vld [vmem:[%s5371 + $0x192] sm:$0xff]
      %v5906 = vld [vmem:[%s5371 + $0x1a2] sm:$0xff]
      %v5907 = vld [vmem:[%s5371 + $0x1b2] sm:$0xff]
      %v5908 = vld [vmem:[%s5371 + $0x1e2] sm:$0xff]
      %v5909 = vld [vmem:[%s5371 + $0x1f2] sm:$0xff]
      %v5910 = vld [vmem:[%s5371 + $0x202] sm:$0xff]
      %v5911 = vld [vmem:[%s5371 + $0x212] sm:$0xff]
      %v5912 = vld [vmem:[%s5371 + $0x222] sm:$0xff]
      %v5913 = vld [vmem:[%s5371 + $0x232] sm:$0xff]
      %v5914 = vld [vmem:[%s5371 + $0x242] sm:$0xff]
      %v5915 = vld [vmem:[%s5371 + $0x252] sm:$0xff]
      %v5916 = vld [vmem:[%s5371 + $0x282] sm:$0xff]
      %v5917 = vld [vmem:[%s5371 + $0x292] sm:$0xff]
      %v5918 = vld [vmem:[%s5371 + $0x2a2] sm:$0xff]
      %v5919 = vld [vmem:[%s5371 + $0x2b2] sm:$0xff]
      %v5920 = vld [vmem:[%s5371 + $0x2c2] sm:$0xff]
      %v5921 = vld [vmem:[%s5371 + $0x2d2] sm:$0xff]
      %v5922 = vld [vmem:[%s5371 + $0x2e2] sm:$0xff]
      %v5923 = vld [vmem:[%s5371 + $0x2f2] sm:$0xff]
      %v5924 = vld [vmem:[%s5371 + $0x322] sm:$0xff]
      %v5925 = vld [vmem:[%s5371 + $0x332] sm:$0xff]
      %v5926 = vld [vmem:[%s5371 + $0x342] sm:$0xff]
      %v5927 = vld [vmem:[%s5371 + $0x352] sm:$0xff]
      %v5928 = vld [vmem:[%s5371 + $0x362] sm:$0xff]
      %v5929 = vld [vmem:[%s5371 + $0x372] sm:$0xff]
      %v5930 = vld [vmem:[%s5371 + $0x382] sm:$0xff]
      %v5931 = vld [vmem:[%s5371 + $0x392] sm:$0xff]
      %v5932 = vld [vmem:[%s5371 + $0x3c2] sm:$0xff]
      %v5933 = vld [vmem:[%s5371 + $0x3d2] sm:$0xff]
      %v5934 = vld [vmem:[%s5371 + $0x3e2] sm:$0xff]
      %v5935 = vld [vmem:[%s5371 + $0x3f2] sm:$0xff]
      %v5936 = vld [vmem:[%s5371 + $0x402] sm:$0xff]
      %v5937 = vld [vmem:[%s5371 + $0x412] sm:$0xff]
      %v5938 = vld [vmem:[%s5371 + $0x422] sm:$0xff]
      %v5939 = vld [vmem:[%s5371 + $0x432] sm:$0xff]
      %v5940 = vld [vmem:[%s5371 + $0x462] sm:$0xff]
      %v5941 = vld [vmem:[%s5371 + $0x472] sm:$0xff]
      %v5942 = vld [vmem:[%s5371 + $0x482] sm:$0xff]
      %v5943 = vld [vmem:[%s5371 + $0x492] sm:$0xff]
      %v5944 = vld [vmem:[%s5371 + $0x4a2] sm:$0xff]
      %v5945 = vld [vmem:[%s5371 + $0x4b2] sm:$0xff]
      %v5946 = vld [vmem:[%s5371 + $0x4c2] sm:$0xff]
      %v5947 = vld [vmem:[%s5371 + $0x4d2] sm:$0xff]
      %v5948 = vpack.c.bf16 %v5885, %v5884
      %v5949 = vpack.c.bf16 %v5887, %v5886
      %v5950 = vpack.c.bf16 %v5889, %v5888
      %v5951 = vpack.c.bf16 %v5891, %v5890
      %v5952 = vpack.c.bf16 %v5893, %v5892
      %v5953 = vpack.c.bf16 %v5895, %v5894
      %v5954 = vpack.c.bf16 %v5897, %v5896
      %v5955 = vpack.c.bf16 %v5899, %v5898
      %v5956 = vpack.c.bf16 %v5901, %v5900
      %v5957 = vpack.c.bf16 %v5903, %v5902
      %v5958 = vpack.c.bf16 %v5905, %v5904
      %v5959 = vpack.c.bf16 %v5907, %v5906
      %v5960 = vpack.c.bf16 %v5909, %v5908
      %v5961 = vpack.c.bf16 %v5911, %v5910
      %v5962 = vpack.c.bf16 %v5913, %v5912
      %v5963 = vpack.c.bf16 %v5915, %v5914
      %v5964 = vpack.c.bf16 %v5917, %v5916
      %v5965 = vpack.c.bf16 %v5919, %v5918
      %v5966 = vpack.c.bf16 %v5921, %v5920
      %v5967 = vpack.c.bf16 %v5923, %v5922
      %v5968 = vpack.c.bf16 %v5925, %v5924
      %v5969 = vpack.c.bf16 %v5927, %v5926
      %v5970 = vpack.c.bf16 %v5929, %v5928
      %v5971 = vpack.c.bf16 %v5931, %v5930
      %v5972 = vpack.c.bf16 %v5933, %v5932
      %v5973 = vpack.c.bf16 %v5935, %v5934
      %v5974 = vpack.c.bf16 %v5937, %v5936
      %v5975 = vpack.c.bf16 %v5939, %v5938
      %v5976 = vpack.c.bf16 %v5941, %v5940
      %v5977 = vpack.c.bf16 %v5943, %v5942
      %v5978 = vpack.c.bf16 %v5945, %v5944
      %v5979 = vpack.c.bf16 %v5947, %v5946
      %6012 = vrot.lane.b32.xlu0 %v5948, 56
      %v6013 = vpop.permute.xlu0 %6012
      %6014 = vrot.lane.b32.xlu0 %v5949, 56
      %v6015 = vpop.permute.xlu0 %6014
      %6016 = vrot.lane.b32.xlu0 %v5950, 56
      %v6017 = vpop.permute.xlu0 %6016
      %6018 = vrot.lane.b32.xlu0 %v5951, 56
      %v6019 = vpop.permute.xlu0 %6018
      %6020 = vrot.lane.b32.xlu0 %v5952, 56
      %v6021 = vpop.permute.xlu0 %6020
      %6022 = vrot.lane.b32.xlu0 %v5953, 56
      %v6023 = vpop.permute.xlu0 %6022
      %6024 = vrot.lane.b32.xlu0 %v5954, 56
      %v6025 = vpop.permute.xlu0 %6024
      %6026 = vrot.lane.b32.xlu0 %v5955, 56
      %v6027 = vpop.permute.xlu0 %6026
      %6028 = vrot.lane.b32.xlu0 %v5956, 56
      %v6029 = vpop.permute.xlu0 %6028
      %6030 = vrot.lane.b32.xlu0 %v5957, 56
      %v6031 = vpop.permute.xlu0 %6030
      %6032 = vrot.lane.b32.xlu0 %v5958, 56
      %v6033 = vpop.permute.xlu0 %6032
      %6034 = vrot.lane.b32.xlu0 %v5959, 56
      %v6035 = vpop.permute.xlu0 %6034
      %6036 = vrot.lane.b32.xlu0 %v5960, 56
      %v6037 = vpop.permute.xlu0 %6036
      %6038 = vrot.lane.b32.xlu0 %v5961, 56
      %v6039 = vpop.permute.xlu0 %6038
      %6040 = vrot.lane.b32.xlu0 %v5962, 56
      %v6041 = vpop.permute.xlu0 %6040
      %6042 = vrot.lane.b32.xlu0 %v5963, 56
      %v6043 = vpop.permute.xlu0 %6042
      %6044 = vrot.lane.b32.xlu0 %v5964, 56
      %v6045 = vpop.permute.xlu0 %6044
      %6046 = vrot.lane.b32.xlu0 %v5965, 56
      %v6047 = vpop.permute.xlu0 %6046
      %6048 = vrot.lane.b32.xlu0 %v5966, 56
      %v6049 = vpop.permute.xlu0 %6048
      %6050 = vrot.lane.b32.xlu0 %v5967, 56
      %v6051 = vpop.permute.xlu0 %6050
      %6052 = vrot.lane.b32.xlu0 %v5968, 56
      %v6053 = vpop.permute.xlu0 %6052
      %6054 = vrot.lane.b32.xlu0 %v5969, 56
      %v6055 = vpop.permute.xlu0 %6054
      %6056 = vrot.lane.b32.xlu0 %v5970, 56
      %v6057 = vpop.permute.xlu0 %6056
      %6058 = vrot.lane.b32.xlu0 %v5971, 56
      %v6059 = vpop.permute.xlu0 %6058
      %6060 = vrot.lane.b32.xlu0 %v5972, 56
      %v6061 = vpop.permute.xlu0 %6060
      %6062 = vrot.lane.b32.xlu0 %v5973, 56
      %v6063 = vpop.permute.xlu0 %6062
      %6064 = vrot.lane.b32.xlu0 %v5974, 56
      %v6065 = vpop.permute.xlu0 %6064
      %6066 = vrot.lane.b32.xlu0 %v5975, 56
      %v6067 = vpop.permute.xlu0 %6066
      %6068 = vrot.lane.b32.xlu0 %v5976, 56
      %v6069 = vpop.permute.xlu0 %6068
      %6070 = vrot.lane.b32.xlu0 %v5977, 56
      %v6071 = vpop.permute.xlu0 %6070
      %6072 = vrot.lane.b32.xlu0 %v5978, 56
      %v6073 = vpop.permute.xlu0 %6072
      %6074 = vrot.lane.b32.xlu0 %v5979, 56
      %v6075 = vpop.permute.xlu0 %6074
      %6108 = vst.msk [vmem:[#allocation2 + $0x8] sm:$0xff] %vm2119, %v6013
      %6109 = vst.msk [vmem:[#allocation2 + $0x20] sm:$0xff] %vm2119, %v6015
      %6110 = vst.msk [vmem:[#allocation2 + $0x38] sm:$0xff] %vm2119, %v6017
      %6111 = vst.msk [vmem:[#allocation2 + $0x50] sm:$0xff] %vm2119, %v6019
      %6112 = vst.msk [vmem:[#allocation2 + $0x68] sm:$0xff] %vm2119, %v6021
      %6113 = vst.msk [vmem:[#allocation2 + $0x80] sm:$0xff] %vm2119, %v6023
      %6114 = vst.msk [vmem:[#allocation2 + $0x98] sm:$0xff] %vm2119, %v6025
      %6115 = vst.msk [vmem:[#allocation2 + $0xb0] sm:$0xff] %vm2119, %v6027
      %6116 = vst.msk [vmem:[#allocation2 + $0xc8] sm:$0xff] %vm2119, %v6029
      %6117 = vst.msk [vmem:[#allocation2 + $0xe0] sm:$0xff] %vm2119, %v6031
      %6118 = vst.msk [vmem:[#allocation2 + $0xf8] sm:$0xff] %vm2119, %v6033
      %6119 = vst.msk [vmem:[#allocation2 + $0x110] sm:$0xff] %vm2119, %v6035
      %6120 = vst.msk [vmem:[#allocation2 + $0x128] sm:$0xff] %vm2119, %v6037
      %6121 = vst.msk [vmem:[#allocation2 + $0x140] sm:$0xff] %vm2119, %v6039
      %6122 = vst.msk [vmem:[#allocation2 + $0x158] sm:$0xff] %vm2119, %v6041
      %6123 = vst.msk [vmem:[#allocation2 + $0x170] sm:$0xff] %vm2119, %v6043
      %6124 = vst.msk [vmem:[#allocation2 + $0x188] sm:$0xff] %vm2119, %v6045
      %6125 = vst.msk [vmem:[#allocation2 + $0x1a0] sm:$0xff] %vm2119, %v6047
      %6126 = vst.msk [vmem:[#allocation2 + $0x1b8] sm:$0xff] %vm2119, %v6049
      %6127 = vst.msk [vmem:[#allocation2 + $0x1d0] sm:$0xff] %vm2119, %v6051
      %6128 = vst.msk [vmem:[#allocation2 + $0x1e8] sm:$0xff] %vm2119, %v6053
      %6129 = vst.msk [vmem:[#allocation2 + $0x200] sm:$0xff] %vm2119, %v6055
      %6130 = vst.msk [vmem:[#allocation2 + $0x218] sm:$0xff] %vm2119, %v6057
      %6131 = vst.msk [vmem:[#allocation2 + $0x230] sm:$0xff] %vm2119, %v6059
      %6132 = vst.msk [vmem:[#allocation2 + $0x248] sm:$0xff] %vm2119, %v6061
      %6133 = vst.msk [vmem:[#allocation2 + $0x260] sm:$0xff] %vm2119, %v6063
      %6134 = vst.msk [vmem:[#allocation2 + $0x278] sm:$0xff] %vm2119, %v6065
      %6135 = vst.msk [vmem:[#allocation2 + $0x290] sm:$0xff] %vm2119, %v6067
      %6136 = vst.msk [vmem:[#allocation2 + $0x2a8] sm:$0xff] %vm2119, %v6069
      %6137 = vst.msk [vmem:[#allocation2 + $0x2c0] sm:$0xff] %vm2119, %v6071
      %6138 = vst.msk [vmem:[#allocation2 + $0x2d8] sm:$0xff] %vm2119, %v6073
      %6139 = vst.msk [vmem:[#allocation2 + $0x2f0] sm:$0xff] %vm2119, %v6075
      %s6140 = sadd.s32 32, %s4600
      %s6141 = scalar_lea.vmem %s207, %s6140
      %v6142 = vld [vmem:[%s6141] sm:$0xff]
      %v6143 = vld [vmem:[%s6141 + $0x10] sm:$0xff]
      %v6144 = vld [vmem:[%s6141 + $0x20] sm:$0xff]
      %v6145 = vld [vmem:[%s6141 + $0x30] sm:$0xff]
      %v6146 = vld [vmem:[%s6141 + $0x40] sm:$0xff]
      %v6147 = vld [vmem:[%s6141 + $0x50] sm:$0xff]
      %v6148 = vld [vmem:[%s6141 + $0x60] sm:$0xff]
      %v6149 = vld [vmem:[%s6141 + $0x70] sm:$0xff]
      %v6150 = vld [vmem:[%s6141 + $0xa0] sm:$0xff]
      %v6151 = vld [vmem:[%s6141 + $0xb0] sm:$0xff]
      %v6152 = vld [vmem:[%s6141 + $0xc0] sm:$0xff]
      %v6153 = vld [vmem:[%s6141 + $0xd0] sm:$0xff]
      %v6154 = vld [vmem:[%s6141 + $0xe0] sm:$0xff]
      %v6155 = vld [vmem:[%s6141 + $0xf0] sm:$0xff]
      %v6156 = vld [vmem:[%s6141 + $0x100] sm:$0xff]
      %v6157 = vld [vmem:[%s6141 + $0x110] sm:$0xff]
      %v6158 = vld [vmem:[%s6141 + $0x140] sm:$0xff]
      %v6159 = vld [vmem:[%s6141 + $0x150] sm:$0xff]
      %v6160 = vld [vmem:[%s6141 + $0x160] sm:$0xff]
      %v6161 = vld [vmem:[%s6141 + $0x170] sm:$0xff]
      %v6162 = vld [vmem:[%s6141 + $0x180] sm:$0xff]
      %v6163 = vld [vmem:[%s6141 + $0x190] sm:$0xff]
      %v6164 = vld [vmem:[%s6141 + $0x1a0] sm:$0xff]
      %v6165 = vld [vmem:[%s6141 + $0x1b0] sm:$0xff]
      %v6166 = vld [vmem:[%s6141 + $0x1e0] sm:$0xff]
      %v6167 = vld [vmem:[%s6141 + $0x1f0] sm:$0xff]
      %v6168 = vld [vmem:[%s6141 + $0x200] sm:$0xff]
      %v6169 = vld [vmem:[%s6141 + $0x210] sm:$0xff]
      %v6170 = vld [vmem:[%s6141 + $0x220] sm:$0xff]
      %v6171 = vld [vmem:[%s6141 + $0x230] sm:$0xff]
      %v6172 = vld [vmem:[%s6141 + $0x240] sm:$0xff]
      %v6173 = vld [vmem:[%s6141 + $0x250] sm:$0xff]
      %v6174 = vld [vmem:[%s6141 + $0x280] sm:$0xff]
      %v6175 = vld [vmem:[%s6141 + $0x290] sm:$0xff]
      %v6176 = vld [vmem:[%s6141 + $0x2a0] sm:$0xff]
      %v6177 = vld [vmem:[%s6141 + $0x2b0] sm:$0xff]
      %v6178 = vld [vmem:[%s6141 + $0x2c0] sm:$0xff]
      %v6179 = vld [vmem:[%s6141 + $0x2d0] sm:$0xff]
      %v6180 = vld [vmem:[%s6141 + $0x2e0] sm:$0xff]
      %v6181 = vld [vmem:[%s6141 + $0x2f0] sm:$0xff]
      %v6182 = vld [vmem:[%s6141 + $0x320] sm:$0xff]
      %v6183 = vld [vmem:[%s6141 + $0x330] sm:$0xff]
      %v6184 = vld [vmem:[%s6141 + $0x340] sm:$0xff]
      %v6185 = vld [vmem:[%s6141 + $0x350] sm:$0xff]
      %v6186 = vld [vmem:[%s6141 + $0x360] sm:$0xff]
      %v6187 = vld [vmem:[%s6141 + $0x370] sm:$0xff]
      %v6188 = vld [vmem:[%s6141 + $0x380] sm:$0xff]
      %v6189 = vld [vmem:[%s6141 + $0x390] sm:$0xff]
      %v6190 = vld [vmem:[%s6141 + $0x3c0] sm:$0xff]
      %v6191 = vld [vmem:[%s6141 + $0x3d0] sm:$0xff]
      %v6192 = vld [vmem:[%s6141 + $0x3e0] sm:$0xff]
      %v6193 = vld [vmem:[%s6141 + $0x3f0] sm:$0xff]
      %v6194 = vld [vmem:[%s6141 + $0x400] sm:$0xff]
      %v6195 = vld [vmem:[%s6141 + $0x410] sm:$0xff]
      %v6196 = vld [vmem:[%s6141 + $0x420] sm:$0xff]
      %v6197 = vld [vmem:[%s6141 + $0x430] sm:$0xff]
      %v6198 = vld [vmem:[%s6141 + $0x460] sm:$0xff]
      %v6199 = vld [vmem:[%s6141 + $0x470] sm:$0xff]
      %v6200 = vld [vmem:[%s6141 + $0x480] sm:$0xff]
      %v6201 = vld [vmem:[%s6141 + $0x490] sm:$0xff]
      %v6202 = vld [vmem:[%s6141 + $0x4a0] sm:$0xff]
      %v6203 = vld [vmem:[%s6141 + $0x4b0] sm:$0xff]
      %v6204 = vld [vmem:[%s6141 + $0x4c0] sm:$0xff]
      %v6205 = vld [vmem:[%s6141 + $0x4d0] sm:$0xff]
      %v6206 = vpack.c.bf16 %v6143, %v6142
      %v6207 = vpack.c.bf16 %v6145, %v6144
      %v6208 = vpack.c.bf16 %v6147, %v6146
      %v6209 = vpack.c.bf16 %v6149, %v6148
      %v6210 = vpack.c.bf16 %v6151, %v6150
      %v6211 = vpack.c.bf16 %v6153, %v6152
      %v6212 = vpack.c.bf16 %v6155, %v6154
      %v6213 = vpack.c.bf16 %v6157, %v6156
      %v6214 = vpack.c.bf16 %v6159, %v6158
      %v6215 = vpack.c.bf16 %v6161, %v6160
      %v6216 = vpack.c.bf16 %v6163, %v6162
      %v6217 = vpack.c.bf16 %v6165, %v6164
      %v6218 = vpack.c.bf16 %v6167, %v6166
      %v6219 = vpack.c.bf16 %v6169, %v6168
      %v6220 = vpack.c.bf16 %v6171, %v6170
      %v6221 = vpack.c.bf16 %v6173, %v6172
      %v6222 = vpack.c.bf16 %v6175, %v6174
      %v6223 = vpack.c.bf16 %v6177, %v6176
      %v6224 = vpack.c.bf16 %v6179, %v6178
      %v6225 = vpack.c.bf16 %v6181, %v6180
      %v6226 = vpack.c.bf16 %v6183, %v6182
      %v6227 = vpack.c.bf16 %v6185, %v6184
      %v6228 = vpack.c.bf16 %v6187, %v6186
      %v6229 = vpack.c.bf16 %v6189, %v6188
      %v6230 = vpack.c.bf16 %v6191, %v6190
      %v6231 = vpack.c.bf16 %v6193, %v6192
      %v6232 = vpack.c.bf16 %v6195, %v6194
      %v6233 = vpack.c.bf16 %v6197, %v6196
      %v6234 = vpack.c.bf16 %v6199, %v6198
      %v6235 = vpack.c.bf16 %v6201, %v6200
      %v6236 = vpack.c.bf16 %v6203, %v6202
      %v6237 = vpack.c.bf16 %v6205, %v6204
      %6270 = vrot.lane.b32.xlu0 %v6206, 64
      %v6271 = vpop.permute.xlu0 %6270
      %6272 = vrot.lane.b32.xlu0 %v6207, 64
      %v6273 = vpop.permute.xlu0 %6272
      %6274 = vrot.lane.b32.xlu0 %v6208, 64
      %v6275 = vpop.permute.xlu0 %6274
      %6276 = vrot.lane.b32.xlu0 %v6209, 64
      %v6277 = vpop.permute.xlu0 %6276
      %6278 = vrot.lane.b32.xlu0 %v6210, 64
      %v6279 = vpop.permute.xlu0 %6278
      %6280 = vrot.lane.b32.xlu0 %v6211, 64
      %v6281 = vpop.permute.xlu0 %6280
      %6282 = vrot.lane.b32.xlu0 %v6212, 64
      %v6283 = vpop.permute.xlu0 %6282
      %6284 = vrot.lane.b32.xlu0 %v6213, 64
      %v6285 = vpop.permute.xlu0 %6284
      %6286 = vrot.lane.b32.xlu0 %v6214, 64
      %v6287 = vpop.permute.xlu0 %6286
      %6288 = vrot.lane.b32.xlu0 %v6215, 64
      %v6289 = vpop.permute.xlu0 %6288
      %6290 = vrot.lane.b32.xlu0 %v6216, 64
      %v6291 = vpop.permute.xlu0 %6290
      %6292 = vrot.lane.b32.xlu0 %v6217, 64
      %v6293 = vpop.permute.xlu0 %6292
      %6294 = vrot.lane.b32.xlu0 %v6218, 64
      %v6295 = vpop.permute.xlu0 %6294
      %6296 = vrot.lane.b32.xlu0 %v6219, 64
      %v6297 = vpop.permute.xlu0 %6296
      %6298 = vrot.lane.b32.xlu0 %v6220, 64
      %v6299 = vpop.permute.xlu0 %6298
      %6300 = vrot.lane.b32.xlu0 %v6221, 64
      %v6301 = vpop.permute.xlu0 %6300
      %6302 = vrot.lane.b32.xlu0 %v6222, 64
      %v6303 = vpop.permute.xlu0 %6302
      %6304 = vrot.lane.b32.xlu0 %v6223, 64
      %v6305 = vpop.permute.xlu0 %6304
      %6306 = vrot.lane.b32.xlu0 %v6224, 64
      %v6307 = vpop.permute.xlu0 %6306
      %6308 = vrot.lane.b32.xlu0 %v6225, 64
      %v6309 = vpop.permute.xlu0 %6308
      %6310 = vrot.lane.b32.xlu0 %v6226, 64
      %v6311 = vpop.permute.xlu0 %6310
      %6312 = vrot.lane.b32.xlu0 %v6227, 64
      %v6313 = vpop.permute.xlu0 %6312
      %6314 = vrot.lane.b32.xlu0 %v6228, 64
      %v6315 = vpop.permute.xlu0 %6314
      %6316 = vrot.lane.b32.xlu0 %v6229, 64
      %v6317 = vpop.permute.xlu0 %6316
      %6318 = vrot.lane.b32.xlu0 %v6230, 64
      %v6319 = vpop.permute.xlu0 %6318
      %6320 = vrot.lane.b32.xlu0 %v6231, 64
      %v6321 = vpop.permute.xlu0 %6320
      %6322 = vrot.lane.b32.xlu0 %v6232, 64
      %v6323 = vpop.permute.xlu0 %6322
      %6324 = vrot.lane.b32.xlu0 %v6233, 64
      %v6325 = vpop.permute.xlu0 %6324
      %6326 = vrot.lane.b32.xlu0 %v6234, 64
      %v6327 = vpop.permute.xlu0 %6326
      %6328 = vrot.lane.b32.xlu0 %v6235, 64
      %v6329 = vpop.permute.xlu0 %6328
      %6330 = vrot.lane.b32.xlu0 %v6236, 64
      %v6331 = vpop.permute.xlu0 %6330
      %6332 = vrot.lane.b32.xlu0 %v6237, 64
      %v6333 = vpop.permute.xlu0 %6332
      %6366 = vst.msk [vmem:[#allocation2 + $0x8] sm:$0xff] %vm2376, %v6271
      %6367 = vst.msk [vmem:[#allocation2 + $0x20] sm:$0xff] %vm2376, %v6273
      %6368 = vst.msk [vmem:[#allocation2 + $0x38] sm:$0xff] %vm2376, %v6275
      %6369 = vst.msk [vmem:[#allocation2 + $0x50] sm:$0xff] %vm2376, %v6277
      %6370 = vst.msk [vmem:[#allocation2 + $0x68] sm:$0xff] %vm2376, %v6279
      %6371 = vst.msk [vmem:[#allocation2 + $0x80] sm:$0xff] %vm2376, %v6281
      %6372 = vst.msk [vmem:[#allocation2 + $0x98] sm:$0xff] %vm2376, %v6283
      %6373 = vst.msk [vmem:[#allocation2 + $0xb0] sm:$0xff] %vm2376, %v6285
      %6374 = vst.msk [vmem:[#allocation2 + $0xc8] sm:$0xff] %vm2376, %v6287
      %6375 = vst.msk [vmem:[#allocation2 + $0xe0] sm:$0xff] %vm2376, %v6289
      %6376 = vst.msk [vmem:[#allocation2 + $0xf8] sm:$0xff] %vm2376, %v6291
      %6377 = vst.msk [vmem:[#allocation2 + $0x110] sm:$0xff] %vm2376, %v6293
      %6378 = vst.msk [vmem:[#allocation2 + $0x128] sm:$0xff] %vm2376, %v6295
      %6379 = vst.msk [vmem:[#allocation2 + $0x140] sm:$0xff] %vm2376, %v6297
      %6380 = vst.msk [vmem:[#allocation2 + $0x158] sm:$0xff] %vm2376, %v6299
      %6381 = vst.msk [vmem:[#allocation2 + $0x170] sm:$0xff] %vm2376, %v6301
      %6382 = vst.msk [vmem:[#allocation2 + $0x188] sm:$0xff] %vm2376, %v6303
      %6383 = vst.msk [vmem:[#allocation2 + $0x1a0] sm:$0xff] %vm2376, %v6305
      %6384 = vst.msk [vmem:[#allocation2 + $0x1b8] sm:$0xff] %vm2376, %v6307
      %6385 = vst.msk [vmem:[#allocation2 + $0x1d0] sm:$0xff] %vm2376, %v6309
      %6386 = vst.msk [vmem:[#allocation2 + $0x1e8] sm:$0xff] %vm2376, %v6311
      %6387 = vst.msk [vmem:[#allocation2 + $0x200] sm:$0xff] %vm2376, %v6313
      %6388 = vst.msk [vmem:[#allocation2 + $0x218] sm:$0xff] %vm2376, %v6315
      %6389 = vst.msk [vmem:[#allocation2 + $0x230] sm:$0xff] %vm2376, %v6317
      %6390 = vst.msk [vmem:[#allocation2 + $0x248] sm:$0xff] %vm2376, %v6319
      %6391 = vst.msk [vmem:[#allocation2 + $0x260] sm:$0xff] %vm2376, %v6321
      %6392 = vst.msk [vmem:[#allocation2 + $0x278] sm:$0xff] %vm2376, %v6323
      %6393 = vst.msk [vmem:[#allocation2 + $0x290] sm:$0xff] %vm2376, %v6325
      %6394 = vst.msk [vmem:[#allocation2 + $0x2a8] sm:$0xff] %vm2376, %v6327
      %6395 = vst.msk [vmem:[#allocation2 + $0x2c0] sm:$0xff] %vm2376, %v6329
      %6396 = vst.msk [vmem:[#allocation2 + $0x2d8] sm:$0xff] %vm2376, %v6331
      %6397 = vst.msk [vmem:[#allocation2 + $0x2f0] sm:$0xff] %vm2376, %v6333
      %v6398 = vld [vmem:[%s6141 + $0x1] sm:$0xff]
      %v6399 = vld [vmem:[%s6141 + $0x11] sm:$0xff]
      %v6400 = vld [vmem:[%s6141 + $0x21] sm:$0xff]
      %v6401 = vld [vmem:[%s6141 + $0x31] sm:$0xff]
      %v6402 = vld [vmem:[%s6141 + $0x41] sm:$0xff]
      %v6403 = vld [vmem:[%s6141 + $0x51] sm:$0xff]
      %v6404 = vld [vmem:[%s6141 + $0x61] sm:$0xff]
      %v6405 = vld [vmem:[%s6141 + $0x71] sm:$0xff]
      %v6406 = vld [vmem:[%s6141 + $0xa1] sm:$0xff]
      %v6407 = vld [vmem:[%s6141 + $0xb1] sm:$0xff]
      %v6408 = vld [vmem:[%s6141 + $0xc1] sm:$0xff]
      %v6409 = vld [vmem:[%s6141 + $0xd1] sm:$0xff]
      %v6410 = vld [vmem:[%s6141 + $0xe1] sm:$0xff]
      %v6411 = vld [vmem:[%s6141 + $0xf1] sm:$0xff]
      %v6412 = vld [vmem:[%s6141 + $0x101] sm:$0xff]
      %v6413 = vld [vmem:[%s6141 + $0x111] sm:$0xff]
      %v6414 = vld [vmem:[%s6141 + $0x141] sm:$0xff]
      %v6415 = vld [vmem:[%s6141 + $0x151] sm:$0xff]
      %v6416 = vld [vmem:[%s6141 + $0x161] sm:$0xff]
      %v6417 = vld [vmem:[%s6141 + $0x171] sm:$0xff]
      %v6418 = vld [vmem:[%s6141 + $0x181] sm:$0xff]
      %v6419 = vld [vmem:[%s6141 + $0x191] sm:$0xff]
      %v6420 = vld [vmem:[%s6141 + $0x1a1] sm:$0xff]
      %v6421 = vld [vmem:[%s6141 + $0x1b1] sm:$0xff]
      %v6422 = vld [vmem:[%s6141 + $0x1e1] sm:$0xff]
      %v6423 = vld [vmem:[%s6141 + $0x1f1] sm:$0xff]
      %v6424 = vld [vmem:[%s6141 + $0x201] sm:$0xff]
      %v6425 = vld [vmem:[%s6141 + $0x211] sm:$0xff]
      %v6426 = vld [vmem:[%s6141 + $0x221] sm:$0xff]
      %v6427 = vld [vmem:[%s6141 + $0x231] sm:$0xff]
      %v6428 = vld [vmem:[%s6141 + $0x241] sm:$0xff]
      %v6429 = vld [vmem:[%s6141 + $0x251] sm:$0xff]
      %v6430 = vld [vmem:[%s6141 + $0x281] sm:$0xff]
      %v6431 = vld [vmem:[%s6141 + $0x291] sm:$0xff]
      %v6432 = vld [vmem:[%s6141 + $0x2a1] sm:$0xff]
      %v6433 = vld [vmem:[%s6141 + $0x2b1] sm:$0xff]
      %v6434 = vld [vmem:[%s6141 + $0x2c1] sm:$0xff]
      %v6435 = vld [vmem:[%s6141 + $0x2d1] sm:$0xff]
      %v6436 = vld [vmem:[%s6141 + $0x2e1] sm:$0xff]
      %v6437 = vld [vmem:[%s6141 + $0x2f1] sm:$0xff]
      %v6438 = vld [vmem:[%s6141 + $0x321] sm:$0xff]
      %v6439 = vld [vmem:[%s6141 + $0x331] sm:$0xff]
      %v6440 = vld [vmem:[%s6141 + $0x341] sm:$0xff]
      %v6441 = vld [vmem:[%s6141 + $0x351] sm:$0xff]
      %v6442 = vld [vmem:[%s6141 + $0x361] sm:$0xff]
      %v6443 = vld [vmem:[%s6141 + $0x371] sm:$0xff]
      %v6444 = vld [vmem:[%s6141 + $0x381] sm:$0xff]
      %v6445 = vld [vmem:[%s6141 + $0x391] sm:$0xff]
      %v6446 = vld [vmem:[%s6141 + $0x3c1] sm:$0xff]
      %v6447 = vld [vmem:[%s6141 + $0x3d1] sm:$0xff]
      %v6448 = vld [vmem:[%s6141 + $0x3e1] sm:$0xff]
      %v6449 = vld [vmem:[%s6141 + $0x3f1] sm:$0xff]
      %v6450 = vld [vmem:[%s6141 + $0x401] sm:$0xff]
      %v6451 = vld [vmem:[%s6141 + $0x411] sm:$0xff]
      %v6452 = vld [vmem:[%s6141 + $0x421] sm:$0xff]
      %v6453 = vld [vmem:[%s6141 + $0x431] sm:$0xff]
      %v6454 = vld [vmem:[%s6141 + $0x461] sm:$0xff]
      %v6455 = vld [vmem:[%s6141 + $0x471] sm:$0xff]
      %v6456 = vld [vmem:[%s6141 + $0x481] sm:$0xff]
      %v6457 = vld [vmem:[%s6141 + $0x491] sm:$0xff]
      %v6458 = vld [vmem:[%s6141 + $0x4a1] sm:$0xff]
      %v6459 = vld [vmem:[%s6141 + $0x4b1] sm:$0xff]
      %v6460 = vld [vmem:[%s6141 + $0x4c1] sm:$0xff]
      %v6461 = vld [vmem:[%s6141 + $0x4d1] sm:$0xff]
      %v6462 = vpack.c.bf16 %v6399, %v6398
      %v6463 = vpack.c.bf16 %v6401, %v6400
      %v6464 = vpack.c.bf16 %v6403, %v6402
      %v6465 = vpack.c.bf16 %v6405, %v6404
      %v6466 = vpack.c.bf16 %v6407, %v6406
      %v6467 = vpack.c.bf16 %v6409, %v6408
      %v6468 = vpack.c.bf16 %v6411, %v6410
      %v6469 = vpack.c.bf16 %v6413, %v6412
      %v6470 = vpack.c.bf16 %v6415, %v6414
      %v6471 = vpack.c.bf16 %v6417, %v6416
      %v6472 = vpack.c.bf16 %v6419, %v6418
      %v6473 = vpack.c.bf16 %v6421, %v6420
      %v6474 = vpack.c.bf16 %v6423, %v6422
      %v6475 = vpack.c.bf16 %v6425, %v6424
      %v6476 = vpack.c.bf16 %v6427, %v6426
      %v6477 = vpack.c.bf16 %v6429, %v6428
      %v6478 = vpack.c.bf16 %v6431, %v6430
      %v6479 = vpack.c.bf16 %v6433, %v6432
      %v6480 = vpack.c.bf16 %v6435, %v6434
      %v6481 = vpack.c.bf16 %v6437, %v6436
      %v6482 = vpack.c.bf16 %v6439, %v6438
      %v6483 = vpack.c.bf16 %v6441, %v6440
      %v6484 = vpack.c.bf16 %v6443, %v6442
      %v6485 = vpack.c.bf16 %v6445, %v6444
      %v6486 = vpack.c.bf16 %v6447, %v6446
      %v6487 = vpack.c.bf16 %v6449, %v6448
      %v6488 = vpack.c.bf16 %v6451, %v6450
      %v6489 = vpack.c.bf16 %v6453, %v6452
      %v6490 = vpack.c.bf16 %v6455, %v6454
      %v6491 = vpack.c.bf16 %v6457, %v6456
      %v6492 = vpack.c.bf16 %v6459, %v6458
      %v6493 = vpack.c.bf16 %v6461, %v6460
      %6526 = vrot.lane.b32.xlu0 %v6462, 72
      %v6527 = vpop.permute.xlu0 %6526
      %6528 = vrot.lane.b32.xlu0 %v6463, 72
      %v6529 = vpop.permute.xlu0 %6528
      %6530 = vrot.lane.b32.xlu0 %v6464, 72
      %v6531 = vpop.permute.xlu0 %6530
      %6532 = vrot.lane.b32.xlu0 %v6465, 72
      %v6533 = vpop.permute.xlu0 %6532
      %6534 = vrot.lane.b32.xlu0 %v6466, 72
      %v6535 = vpop.permute.xlu0 %6534
      %6536 = vrot.lane.b32.xlu0 %v6467, 72
      %v6537 = vpop.permute.xlu0 %6536
      %6538 = vrot.lane.b32.xlu0 %v6468, 72
      %v6539 = vpop.permute.xlu0 %6538
      %6540 = vrot.lane.b32.xlu0 %v6469, 72
      %v6541 = vpop.permute.xlu0 %6540
      %6542 = vrot.lane.b32.xlu0 %v6470, 72
      %v6543 = vpop.permute.xlu0 %6542
      %6544 = vrot.lane.b32.xlu0 %v6471, 72
      %v6545 = vpop.permute.xlu0 %6544
      %6546 = vrot.lane.b32.xlu0 %v6472, 72
      %v6547 = vpop.permute.xlu0 %6546
      %6548 = vrot.lane.b32.xlu0 %v6473, 72
      %v6549 = vpop.permute.xlu0 %6548
      %6550 = vrot.lane.b32.xlu0 %v6474, 72
      %v6551 = vpop.permute.xlu0 %6550
      %6552 = vrot.lane.b32.xlu0 %v6475, 72
      %v6553 = vpop.permute.xlu0 %6552
      %6554 = vrot.lane.b32.xlu0 %v6476, 72
      %v6555 = vpop.permute.xlu0 %6554
      %6556 = vrot.lane.b32.xlu0 %v6477, 72
      %v6557 = vpop.permute.xlu0 %6556
      %6558 = vrot.lane.b32.xlu0 %v6478, 72
      %v6559 = vpop.permute.xlu0 %6558
      %6560 = vrot.lane.b32.xlu0 %v6479, 72
      %v6561 = vpop.permute.xlu0 %6560
      %6562 = vrot.lane.b32.xlu0 %v6480, 72
      %v6563 = vpop.permute.xlu0 %6562
      %6564 = vrot.lane.b32.xlu0 %v6481, 72
      %v6565 = vpop.permute.xlu0 %6564
      %6566 = vrot.lane.b32.xlu0 %v6482, 72
      %v6567 = vpop.permute.xlu0 %6566
      %6568 = vrot.lane.b32.xlu0 %v6483, 72
      %v6569 = vpop.permute.xlu0 %6568
      %6570 = vrot.lane.b32.xlu0 %v6484, 72
      %v6571 = vpop.permute.xlu0 %6570
      %6572 = vrot.lane.b32.xlu0 %v6485, 72
      %v6573 = vpop.permute.xlu0 %6572
      %6574 = vrot.lane.b32.xlu0 %v6486, 72
      %v6575 = vpop.permute.xlu0 %6574
      %6576 = vrot.lane.b32.xlu0 %v6487, 72
      %v6577 = vpop.permute.xlu0 %6576
      %6578 = vrot.lane.b32.xlu0 %v6488, 72
      %v6579 = vpop.permute.xlu0 %6578
      %6580 = vrot.lane.b32.xlu0 %v6489, 72
      %v6581 = vpop.permute.xlu0 %6580
      %6582 = vrot.lane.b32.xlu0 %v6490, 72
      %v6583 = vpop.permute.xlu0 %6582
      %6584 = vrot.lane.b32.xlu0 %v6491, 72
      %v6585 = vpop.permute.xlu0 %6584
      %6586 = vrot.lane.b32.xlu0 %v6492, 72
      %v6587 = vpop.permute.xlu0 %6586
      %6588 = vrot.lane.b32.xlu0 %v6493, 72
      %v6589 = vpop.permute.xlu0 %6588
      %6622 = vst.msk [vmem:[#allocation2 + $0x8] sm:$0xff] %vm2636, %v6527
      %6623 = vst.msk [vmem:[#allocation2 + $0x20] sm:$0xff] %vm2636, %v6529
      %6624 = vst.msk [vmem:[#allocation2 + $0x38] sm:$0xff] %vm2636, %v6531
      %6625 = vst.msk [vmem:[#allocation2 + $0x50] sm:$0xff] %vm2636, %v6533
      %6626 = vst.msk [vmem:[#allocation2 + $0x68] sm:$0xff] %vm2636, %v6535
      %6627 = vst.msk [vmem:[#allocation2 + $0x80] sm:$0xff] %vm2636, %v6537
      %6628 = vst.msk [vmem:[#allocation2 + $0x98] sm:$0xff] %vm2636, %v6539
      %6629 = vst.msk [vmem:[#allocation2 + $0xb0] sm:$0xff] %vm2636, %v6541
      %6630 = vst.msk [vmem:[#allocation2 + $0xc8] sm:$0xff] %vm2636, %v6543
      %6631 = vst.msk [vmem:[#allocation2 + $0xe0] sm:$0xff] %vm2636, %v6545
      %6632 = vst.msk [vmem:[#allocation2 + $0xf8] sm:$0xff] %vm2636, %v6547
      %6633 = vst.msk [vmem:[#allocation2 + $0x110] sm:$0xff] %vm2636, %v6549
      %6634 = vst.msk [vmem:[#allocation2 + $0x128] sm:$0xff] %vm2636, %v6551
      %6635 = vst.msk [vmem:[#allocation2 + $0x140] sm:$0xff] %vm2636, %v6553
      %6636 = vst.msk [vmem:[#allocation2 + $0x158] sm:$0xff] %vm2636, %v6555
      %6637 = vst.msk [vmem:[#allocation2 + $0x170] sm:$0xff] %vm2636, %v6557
      %6638 = vst.msk [vmem:[#allocation2 + $0x188] sm:$0xff] %vm2636, %v6559
      %6639 = vst.msk [vmem:[#allocation2 + $0x1a0] sm:$0xff] %vm2636, %v6561
      %6640 = vst.msk [vmem:[#allocation2 + $0x1b8] sm:$0xff] %vm2636, %v6563
      %6641 = vst.msk [vmem:[#allocation2 + $0x1d0] sm:$0xff] %vm2636, %v6565
      %6642 = vst.msk [vmem:[#allocation2 + $0x1e8] sm:$0xff] %vm2636, %v6567
      %6643 = vst.msk [vmem:[#allocation2 + $0x200] sm:$0xff] %vm2636, %v6569
      %6644 = vst.msk [vmem:[#allocation2 + $0x218] sm:$0xff] %vm2636, %v6571
      %6645 = vst.msk [vmem:[#allocation2 + $0x230] sm:$0xff] %vm2636, %v6573
      %6646 = vst.msk [vmem:[#allocation2 + $0x248] sm:$0xff] %vm2636, %v6575
      %6647 = vst.msk [vmem:[#allocation2 + $0x260] sm:$0xff] %vm2636, %v6577
      %6648 = vst.msk [vmem:[#allocation2 + $0x278] sm:$0xff] %vm2636, %v6579
      %6649 = vst.msk [vmem:[#allocation2 + $0x290] sm:$0xff] %vm2636, %v6581
      %6650 = vst.msk [vmem:[#allocation2 + $0x2a8] sm:$0xff] %vm2636, %v6583
      %6651 = vst.msk [vmem:[#allocation2 + $0x2c0] sm:$0xff] %vm2636, %v6585
      %6652 = vst.msk [vmem:[#allocation2 + $0x2d8] sm:$0xff] %vm2636, %v6587
      %6653 = vst.msk [vmem:[#allocation2 + $0x2f0] sm:$0xff] %vm2636, %v6589
      %v6654 = vld [vmem:[%s6141 + $0x2] sm:$0xff]
      %v6655 = vld [vmem:[%s6141 + $0x12] sm:$0xff]
      %v6656 = vld [vmem:[%s6141 + $0x22] sm:$0xff]
      %v6657 = vld [vmem:[%s6141 + $0x32] sm:$0xff]
      %v6658 = vld [vmem:[%s6141 + $0x42] sm:$0xff]
      %v6659 = vld [vmem:[%s6141 + $0x52] sm:$0xff]
      %v6660 = vld [vmem:[%s6141 + $0x62] sm:$0xff]
      %v6661 = vld [vmem:[%s6141 + $0x72] sm:$0xff]
      %v6662 = vld [vmem:[%s6141 + $0xa2] sm:$0xff]
      %v6663 = vld [vmem:[%s6141 + $0xb2] sm:$0xff]
      %v6664 = vld [vmem:[%s6141 + $0xc2] sm:$0xff]
      %v6665 = vld [vmem:[%s6141 + $0xd2] sm:$0xff]
      %v6666 = vld [vmem:[%s6141 + $0xe2] sm:$0xff]
      %v6667 = vld [vmem:[%s6141 + $0xf2] sm:$0xff]
      %v6668 = vld [vmem:[%s6141 + $0x102] sm:$0xff]
      %v6669 = vld [vmem:[%s6141 + $0x112] sm:$0xff]
      %v6670 = vld [vmem:[%s6141 + $0x142] sm:$0xff]
      %v6671 = vld [vmem:[%s6141 + $0x152] sm:$0xff]
      %v6672 = vld [vmem:[%s6141 + $0x162] sm:$0xff]
      %v6673 = vld [vmem:[%s6141 + $0x172] sm:$0xff]
      %v6674 = vld [vmem:[%s6141 + $0x182] sm:$0xff]
      %v6675 = vld [vmem:[%s6141 + $0x192] sm:$0xff]
      %v6676 = vld [vmem:[%s6141 + $0x1a2] sm:$0xff]
      %v6677 = vld [vmem:[%s6141 + $0x1b2] sm:$0xff]
      %v6678 = vld [vmem:[%s6141 + $0x1e2] sm:$0xff]
      %v6679 = vld [vmem:[%s6141 + $0x1f2] sm:$0xff]
      %v6680 = vld [vmem:[%s6141 + $0x202] sm:$0xff]
      %v6681 = vld [vmem:[%s6141 + $0x212] sm:$0xff]
      %v6682 = vld [vmem:[%s6141 + $0x222] sm:$0xff]
      %v6683 = vld [vmem:[%s6141 + $0x232] sm:$0xff]
      %v6684 = vld [vmem:[%s6141 + $0x242] sm:$0xff]
      %v6685 = vld [vmem:[%s6141 + $0x252] sm:$0xff]
      %v6686 = vld [vmem:[%s6141 + $0x282] sm:$0xff]
      %v6687 = vld [vmem:[%s6141 + $0x292] sm:$0xff]
      %v6688 = vld [vmem:[%s6141 + $0x2a2] sm:$0xff]
      %v6689 = vld [vmem:[%s6141 + $0x2b2] sm:$0xff]
      %v6690 = vld [vmem:[%s6141 + $0x2c2] sm:$0xff]
      %v6691 = vld [vmem:[%s6141 + $0x2d2] sm:$0xff]
      %v6692 = vld [vmem:[%s6141 + $0x2e2] sm:$0xff]
      %v6693 = vld [vmem:[%s6141 + $0x2f2] sm:$0xff]
      %v6694 = vld [vmem:[%s6141 + $0x322] sm:$0xff]
      %v6695 = vld [vmem:[%s6141 + $0x332] sm:$0xff]
      %v6696 = vld [vmem:[%s6141 + $0x342] sm:$0xff]
      %v6697 = vld [vmem:[%s6141 + $0x352] sm:$0xff]
      %v6698 = vld [vmem:[%s6141 + $0x362] sm:$0xff]
      %v6699 = vld [vmem:[%s6141 + $0x372] sm:$0xff]
      %v6700 = vld [vmem:[%s6141 + $0x382] sm:$0xff]
      %v6701 = vld [vmem:[%s6141 + $0x392] sm:$0xff]
      %v6702 = vld [vmem:[%s6141 + $0x3c2] sm:$0xff]
      %v6703 = vld [vmem:[%s6141 + $0x3d2] sm:$0xff]
      %v6704 = vld [vmem:[%s6141 + $0x3e2] sm:$0xff]
      %v6705 = vld [vmem:[%s6141 + $0x3f2] sm:$0xff]
      %v6706 = vld [vmem:[%s6141 + $0x402] sm:$0xff]
      %v6707 = vld [vmem:[%s6141 + $0x412] sm:$0xff]
      %v6708 = vld [vmem:[%s6141 + $0x422] sm:$0xff]
      %v6709 = vld [vmem:[%s6141 + $0x432] sm:$0xff]
      %v6710 = vld [vmem:[%s6141 + $0x462] sm:$0xff]
      %v6711 = vld [vmem:[%s6141 + $0x472] sm:$0xff]
      %v6712 = vld [vmem:[%s6141 + $0x482] sm:$0xff]
      %v6713 = vld [vmem:[%s6141 + $0x492] sm:$0xff]
      %v6714 = vld [vmem:[%s6141 + $0x4a2] sm:$0xff]
      %v6715 = vld [vmem:[%s6141 + $0x4b2] sm:$0xff]
      %v6716 = vld [vmem:[%s6141 + $0x4c2] sm:$0xff]
      %v6717 = vld [vmem:[%s6141 + $0x4d2] sm:$0xff]
      %v6718 = vpack.c.bf16 %v6655, %v6654
      %v6719 = vpack.c.bf16 %v6657, %v6656
      %v6720 = vpack.c.bf16 %v6659, %v6658
      %v6721 = vpack.c.bf16 %v6661, %v6660
      %v6722 = vpack.c.bf16 %v6663, %v6662
      %v6723 = vpack.c.bf16 %v6665, %v6664
      %v6724 = vpack.c.bf16 %v6667, %v6666
      %v6725 = vpack.c.bf16 %v6669, %v6668
      %v6726 = vpack.c.bf16 %v6671, %v6670
      %v6727 = vpack.c.bf16 %v6673, %v6672
      %v6728 = vpack.c.bf16 %v6675, %v6674
      %v6729 = vpack.c.bf16 %v6677, %v6676
      %v6730 = vpack.c.bf16 %v6679, %v6678
      %v6731 = vpack.c.bf16 %v6681, %v6680
      %v6732 = vpack.c.bf16 %v6683, %v6682
      %v6733 = vpack.c.bf16 %v6685, %v6684
      %v6734 = vpack.c.bf16 %v6687, %v6686
      %v6735 = vpack.c.bf16 %v6689, %v6688
      %v6736 = vpack.c.bf16 %v6691, %v6690
      %v6737 = vpack.c.bf16 %v6693, %v6692
      %v6738 = vpack.c.bf16 %v6695, %v6694
      %v6739 = vpack.c.bf16 %v6697, %v6696
      %v6740 = vpack.c.bf16 %v6699, %v6698
      %v6741 = vpack.c.bf16 %v6701, %v6700
      %v6742 = vpack.c.bf16 %v6703, %v6702
      %v6743 = vpack.c.bf16 %v6705, %v6704
      %v6744 = vpack.c.bf16 %v6707, %v6706
      %v6745 = vpack.c.bf16 %v6709, %v6708
      %v6746 = vpack.c.bf16 %v6711, %v6710
      %v6747 = vpack.c.bf16 %v6713, %v6712
      %v6748 = vpack.c.bf16 %v6715, %v6714
      %v6749 = vpack.c.bf16 %v6717, %v6716
      %6782 = vrot.lane.b32.xlu0 %v6718, 80
      %v6783 = vpop.permute.xlu0 %6782
      %6784 = vrot.lane.b32.xlu0 %v6719, 80
      %v6785 = vpop.permute.xlu0 %6784
      %6786 = vrot.lane.b32.xlu0 %v6720, 80
      %v6787 = vpop.permute.xlu0 %6786
      %6788 = vrot.lane.b32.xlu0 %v6721, 80
      %v6789 = vpop.permute.xlu0 %6788
      %6790 = vrot.lane.b32.xlu0 %v6722, 80
      %v6791 = vpop.permute.xlu0 %6790
      %6792 = vrot.lane.b32.xlu0 %v6723, 80
      %v6793 = vpop.permute.xlu0 %6792
      %6794 = vrot.lane.b32.xlu0 %v6724, 80
      %v6795 = vpop.permute.xlu0 %6794
      %6796 = vrot.lane.b32.xlu0 %v6725, 80
      %v6797 = vpop.permute.xlu0 %6796
      %6798 = vrot.lane.b32.xlu0 %v6726, 80
      %v6799 = vpop.permute.xlu0 %6798
      %6800 = vrot.lane.b32.xlu0 %v6727, 80
      %v6801 = vpop.permute.xlu0 %6800
      %6802 = vrot.lane.b32.xlu0 %v6728, 80
      %v6803 = vpop.permute.xlu0 %6802
      %6804 = vrot.lane.b32.xlu0 %v6729, 80
      %v6805 = vpop.permute.xlu0 %6804
      %6806 = vrot.lane.b32.xlu0 %v6730, 80
      %v6807 = vpop.permute.xlu0 %6806
      %6808 = vrot.lane.b32.xlu0 %v6731, 80
      %v6809 = vpop.permute.xlu0 %6808
      %6810 = vrot.lane.b32.xlu0 %v6732, 80
      %v6811 = vpop.permute.xlu0 %6810
      %6812 = vrot.lane.b32.xlu0 %v6733, 80
      %v6813 = vpop.permute.xlu0 %6812
      %6814 = vrot.lane.b32.xlu0 %v6734, 80
      %v6815 = vpop.permute.xlu0 %6814
      %6816 = vrot.lane.b32.xlu0 %v6735, 80
      %v6817 = vpop.permute.xlu0 %6816
      %6818 = vrot.lane.b32.xlu0 %v6736, 80
      %v6819 = vpop.permute.xlu0 %6818
      %6820 = vrot.lane.b32.xlu0 %v6737, 80
      %v6821 = vpop.permute.xlu0 %6820
      %6822 = vrot.lane.b32.xlu0 %v6738, 80
      %v6823 = vpop.permute.xlu0 %6822
      %6824 = vrot.lane.b32.xlu0 %v6739, 80
      %v6825 = vpop.permute.xlu0 %6824
      %6826 = vrot.lane.b32.xlu0 %v6740, 80
      %v6827 = vpop.permute.xlu0 %6826
      %6828 = vrot.lane.b32.xlu0 %v6741, 80
      %v6829 = vpop.permute.xlu0 %6828
      %6830 = vrot.lane.b32.xlu0 %v6742, 80
      %v6831 = vpop.permute.xlu0 %6830
      %6832 = vrot.lane.b32.xlu0 %v6743, 80
      %v6833 = vpop.permute.xlu0 %6832
      %6834 = vrot.lane.b32.xlu0 %v6744, 80
      %v6835 = vpop.permute.xlu0 %6834
      %6836 = vrot.lane.b32.xlu0 %v6745, 80
      %v6837 = vpop.permute.xlu0 %6836
      %6838 = vrot.lane.b32.xlu0 %v6746, 80
      %v6839 = vpop.permute.xlu0 %6838
      %6840 = vrot.lane.b32.xlu0 %v6747, 80
      %v6841 = vpop.permute.xlu0 %6840
      %6842 = vrot.lane.b32.xlu0 %v6748, 80
      %v6843 = vpop.permute.xlu0 %6842
      %6844 = vrot.lane.b32.xlu0 %v6749, 80
      %v6845 = vpop.permute.xlu0 %6844
      %6878 = vst.msk [vmem:[#allocation2 + $0x8] sm:$0xff] %vm2893, %v6783
      %6879 = vst.msk [vmem:[#allocation2 + $0x20] sm:$0xff] %vm2893, %v6785
      %6880 = vst.msk [vmem:[#allocation2 + $0x38] sm:$0xff] %vm2893, %v6787
      %6881 = vst.msk [vmem:[#allocation2 + $0x50] sm:$0xff] %vm2893, %v6789
      %6882 = vst.msk [vmem:[#allocation2 + $0x68] sm:$0xff] %vm2893, %v6791
      %6883 = vst.msk [vmem:[#allocation2 + $0x80] sm:$0xff] %vm2893, %v6793
      %6884 = vst.msk [vmem:[#allocation2 + $0x98] sm:$0xff] %vm2893, %v6795
      %6885 = vst.msk [vmem:[#allocation2 + $0xb0] sm:$0xff] %vm2893, %v6797
      %6886 = vst.msk [vmem:[#allocation2 + $0xc8] sm:$0xff] %vm2893, %v6799
      %6887 = vst.msk [vmem:[#allocation2 + $0xe0] sm:$0xff] %vm2893, %v6801
      %6888 = vst.msk [vmem:[#allocation2 + $0xf8] sm:$0xff] %vm2893, %v6803
      %6889 = vst.msk [vmem:[#allocation2 + $0x110] sm:$0xff] %vm2893, %v6805
      %6890 = vst.msk [vmem:[#allocation2 + $0x128] sm:$0xff] %vm2893, %v6807
      %6891 = vst.msk [vmem:[#allocation2 + $0x140] sm:$0xff] %vm2893, %v6809
      %6892 = vst.msk [vmem:[#allocation2 + $0x158] sm:$0xff] %vm2893, %v6811
      %6893 = vst.msk [vmem:[#allocation2 + $0x170] sm:$0xff] %vm2893, %v6813
      %6894 = vst.msk [vmem:[#allocation2 + $0x188] sm:$0xff] %vm2893, %v6815
      %6895 = vst.msk [vmem:[#allocation2 + $0x1a0] sm:$0xff] %vm2893, %v6817
      %6896 = vst.msk [vmem:[#allocation2 + $0x1b8] sm:$0xff] %vm2893, %v6819
      %6897 = vst.msk [vmem:[#allocation2 + $0x1d0] sm:$0xff] %vm2893, %v6821
      %6898 = vst.msk [vmem:[#allocation2 + $0x1e8] sm:$0xff] %vm2893, %v6823
      %6899 = vst.msk [vmem:[#allocation2 + $0x200] sm:$0xff] %vm2893, %v6825
      %6900 = vst.msk [vmem:[#allocation2 + $0x218] sm:$0xff] %vm2893, %v6827
      %6901 = vst.msk [vmem:[#allocation2 + $0x230] sm:$0xff] %vm2893, %v6829
      %6902 = vst.msk [vmem:[#allocation2 + $0x248] sm:$0xff] %vm2893, %v6831
      %6903 = vst.msk [vmem:[#allocation2 + $0x260] sm:$0xff] %vm2893, %v6833
      %6904 = vst.msk [vmem:[#allocation2 + $0x278] sm:$0xff] %vm2893, %v6835
      %6905 = vst.msk [vmem:[#allocation2 + $0x290] sm:$0xff] %vm2893, %v6837
      %6906 = vst.msk [vmem:[#allocation2 + $0x2a8] sm:$0xff] %vm2893, %v6839
      %6907 = vst.msk [vmem:[#allocation2 + $0x2c0] sm:$0xff] %vm2893, %v6841
      %6908 = vst.msk [vmem:[#allocation2 + $0x2d8] sm:$0xff] %vm2893, %v6843
      %6909 = vst.msk [vmem:[#allocation2 + $0x2f0] sm:$0xff] %vm2893, %v6845
      %s6910 = sadd.s32 %s217, 3
      %s6911 = smul.u32 %s6910, 160
      %s6912 = scalar_lea.vmem %s207, %s6911
      %v6913 = vld [vmem:[%s6912] sm:$0xff]
      %v6914 = vld [vmem:[%s6912 + $0x10] sm:$0xff]
      %v6915 = vld [vmem:[%s6912 + $0x20] sm:$0xff]
      %v6916 = vld [vmem:[%s6912 + $0x30] sm:$0xff]
      %v6917 = vld [vmem:[%s6912 + $0x40] sm:$0xff]
      %v6918 = vld [vmem:[%s6912 + $0x50] sm:$0xff]
      %v6919 = vld [vmem:[%s6912 + $0x60] sm:$0xff]
      %v6920 = vld [vmem:[%s6912 + $0x70] sm:$0xff]
      %v6921 = vld [vmem:[%s6912 + $0xa0] sm:$0xff]
      %v6922 = vld [vmem:[%s6912 + $0xb0] sm:$0xff]
      %v6923 = vld [vmem:[%s6912 + $0xc0] sm:$0xff]
      %v6924 = vld [vmem:[%s6912 + $0xd0] sm:$0xff]
      %v6925 = vld [vmem:[%s6912 + $0xe0] sm:$0xff]
      %v6926 = vld [vmem:[%s6912 + $0xf0] sm:$0xff]
      %v6927 = vld [vmem:[%s6912 + $0x100] sm:$0xff]
      %v6928 = vld [vmem:[%s6912 + $0x110] sm:$0xff]
      %v6929 = vld [vmem:[%s6912 + $0x140] sm:$0xff]
      %v6930 = vld [vmem:[%s6912 + $0x150] sm:$0xff]
      %v6931 = vld [vmem:[%s6912 + $0x160] sm:$0xff]
      %v6932 = vld [vmem:[%s6912 + $0x170] sm:$0xff]
      %v6933 = vld [vmem:[%s6912 + $0x180] sm:$0xff]
      %v6934 = vld [vmem:[%s6912 + $0x190] sm:$0xff]
      %v6935 = vld [vmem:[%s6912 + $0x1a0] sm:$0xff]
      %v6936 = vld [vmem:[%s6912 + $0x1b0] sm:$0xff]
      %v6937 = vld [vmem:[%s6912 + $0x1e0] sm:$0xff]
      %v6938 = vld [vmem:[%s6912 + $0x1f0] sm:$0xff]
      %v6939 = vld [vmem:[%s6912 + $0x200] sm:$0xff]
      %v6940 = vld [vmem:[%s6912 + $0x210] sm:$0xff]
      %v6941 = vld [vmem:[%s6912 + $0x220] sm:$0xff]
      %v6942 = vld [vmem:[%s6912 + $0x230] sm:$0xff]
      %v6943 = vld [vmem:[%s6912 + $0x240] sm:$0xff]
      %v6944 = vld [vmem:[%s6912 + $0x250] sm:$0xff]
      %v6945 = vld [vmem:[%s6912 + $0x280] sm:$0xff]
      %v6946 = vld [vmem:[%s6912 + $0x290] sm:$0xff]
      %v6947 = vld [vmem:[%s6912 + $0x2a0] sm:$0xff]
      %v6948 = vld [vmem:[%s6912 + $0x2b0] sm:$0xff]
      %v6949 = vld [vmem:[%s6912 + $0x2c0] sm:$0xff]
      %v6950 = vld [vmem:[%s6912 + $0x2d0] sm:$0xff]
      %v6951 = vld [vmem:[%s6912 + $0x2e0] sm:$0xff]
      %v6952 = vld [vmem:[%s6912 + $0x2f0] sm:$0xff]
      %v6953 = vld [vmem:[%s6912 + $0x320] sm:$0xff]
      %v6954 = vld [vmem:[%s6912 + $0x330] sm:$0xff]
      %v6955 = vld [vmem:[%s6912 + $0x340] sm:$0xff]
      %v6956 = vld [vmem:[%s6912 + $0x350] sm:$0xff]
      %v6957 = vld [vmem:[%s6912 + $0x360] sm:$0xff]
      %v6958 = vld [vmem:[%s6912 + $0x370] sm:$0xff]
      %v6959 = vld [vmem:[%s6912 + $0x380] sm:$0xff]
      %v6960 = vld [vmem:[%s6912 + $0x390] sm:$0xff]
      %v6961 = vld [vmem:[%s6912 + $0x3c0] sm:$0xff]
      %v6962 = vld [vmem:[%s6912 + $0x3d0] sm:$0xff]
      %v6963 = vld [vmem:[%s6912 + $0x3e0] sm:$0xff]
      %v6964 = vld [vmem:[%s6912 + $0x3f0] sm:$0xff]
      %v6965 = vld [vmem:[%s6912 + $0x400] sm:$0xff]
      %v6966 = vld [vmem:[%s6912 + $0x410] sm:$0xff]
      %v6967 = vld [vmem:[%s6912 + $0x420] sm:$0xff]
      %v6968 = vld [vmem:[%s6912 + $0x430] sm:$0xff]
      %v6969 = vld [vmem:[%s6912 + $0x460] sm:$0xff]
      %v6970 = vld [vmem:[%s6912 + $0x470] sm:$0xff]
      %v6971 = vld [vmem:[%s6912 + $0x480] sm:$0xff]
      %v6972 = vld [vmem:[%s6912 + $0x490] sm:$0xff]
      %v6973 = vld [vmem:[%s6912 + $0x4a0] sm:$0xff]
      %v6974 = vld [vmem:[%s6912 + $0x4b0] sm:$0xff]
      %v6975 = vld [vmem:[%s6912 + $0x4c0] sm:$0xff]
      %v6976 = vld [vmem:[%s6912 + $0x4d0] sm:$0xff]
      %v6977 = vpack.c.bf16 %v6914, %v6913
      %v6978 = vpack.c.bf16 %v6916, %v6915
      %v6979 = vpack.c.bf16 %v6918, %v6917
      %v6980 = vpack.c.bf16 %v6920, %v6919
      %v6981 = vpack.c.bf16 %v6922, %v6921
      %v6982 = vpack.c.bf16 %v6924, %v6923
      %v6983 = vpack.c.bf16 %v6926, %v6925
      %v6984 = vpack.c.bf16 %v6928, %v6927
      %v6985 = vpack.c.bf16 %v6930, %v6929
      %v6986 = vpack.c.bf16 %v6932, %v6931
      %v6987 = vpack.c.bf16 %v6934, %v6933
      %v6988 = vpack.c.bf16 %v6936, %v6935
      %v6989 = vpack.c.bf16 %v6938, %v6937
      %v6990 = vpack.c.bf16 %v6940, %v6939
      %v6991 = vpack.c.bf16 %v6942, %v6941
      %v6992 = vpack.c.bf16 %v6944, %v6943
      %v6993 = vpack.c.bf16 %v6946, %v6945
      %v6994 = vpack.c.bf16 %v6948, %v6947
      %v6995 = vpack.c.bf16 %v6950, %v6949
      %v6996 = vpack.c.bf16 %v6952, %v6951
      %v6997 = vpack.c.bf16 %v6954, %v6953
      %v6998 = vpack.c.bf16 %v6956, %v6955
      %v6999 = vpack.c.bf16 %v6958, %v6957
      %v7000 = vpack.c.bf16 %v6960, %v6959
      %v7001 = vpack.c.bf16 %v6962, %v6961
      %v7002 = vpack.c.bf16 %v6964, %v6963
      %v7003 = vpack.c.bf16 %v6966, %v6965
      %v7004 = vpack.c.bf16 %v6968, %v6967
      %v7005 = vpack.c.bf16 %v6970, %v6969
      %v7006 = vpack.c.bf16 %v6972, %v6971
      %v7007 = vpack.c.bf16 %v6974, %v6973
      %v7008 = vpack.c.bf16 %v6976, %v6975
      %7041 = vrot.lane.b32.xlu0 %v6977, 88
      %v7042 = vpop.permute.xlu0 %7041
      %7043 = vrot.lane.b32.xlu0 %v6978, 88
      %v7044 = vpop.permute.xlu0 %7043
      %7045 = vrot.lane.b32.xlu0 %v6979, 88
      %v7046 = vpop.permute.xlu0 %7045
      %7047 = vrot.lane.b32.xlu0 %v6980, 88
      %v7048 = vpop.permute.xlu0 %7047
      %7049 = vrot.lane.b32.xlu0 %v6981, 88
      %v7050 = vpop.permute.xlu0 %7049
      %7051 = vrot.lane.b32.xlu0 %v6982, 88
      %v7052 = vpop.permute.xlu0 %7051
      %7053 = vrot.lane.b32.xlu0 %v6983, 88
      %v7054 = vpop.permute.xlu0 %7053
      %7055 = vrot.lane.b32.xlu0 %v6984, 88
      %v7056 = vpop.permute.xlu0 %7055
      %7057 = vrot.lane.b32.xlu0 %v6985, 88
      %v7058 = vpop.permute.xlu0 %7057
      %7059 = vrot.lane.b32.xlu0 %v6986, 88
      %v7060 = vpop.permute.xlu0 %7059
      %7061 = vrot.lane.b32.xlu0 %v6987, 88
      %v7062 = vpop.permute.xlu0 %7061
      %7063 = vrot.lane.b32.xlu0 %v6988, 88
      %v7064 = vpop.permute.xlu0 %7063
      %7065 = vrot.lane.b32.xlu0 %v6989, 88
      %v7066 = vpop.permute.xlu0 %7065
      %7067 = vrot.lane.b32.xlu0 %v6990, 88
      %v7068 = vpop.permute.xlu0 %7067
      %7069 = vrot.lane.b32.xlu0 %v6991, 88
      %v7070 = vpop.permute.xlu0 %7069
      %7071 = vrot.lane.b32.xlu0 %v6992, 88
      %v7072 = vpop.permute.xlu0 %7071
      %7073 = vrot.lane.b32.xlu0 %v6993, 88
      %v7074 = vpop.permute.xlu0 %7073
      %7075 = vrot.lane.b32.xlu0 %v6994, 88
      %v7076 = vpop.permute.xlu0 %7075
      %7077 = vrot.lane.b32.xlu0 %v6995, 88
      %v7078 = vpop.permute.xlu0 %7077
      %7079 = vrot.lane.b32.xlu0 %v6996, 88
      %v7080 = vpop.permute.xlu0 %7079
      %7081 = vrot.lane.b32.xlu0 %v6997, 88
      %v7082 = vpop.permute.xlu0 %7081
      %7083 = vrot.lane.b32.xlu0 %v6998, 88
      %v7084 = vpop.permute.xlu0 %7083
      %7085 = vrot.lane.b32.xlu0 %v6999, 88
      %v7086 = vpop.permute.xlu0 %7085
      %7087 = vrot.lane.b32.xlu0 %v7000, 88
      %v7088 = vpop.permute.xlu0 %7087
      %7089 = vrot.lane.b32.xlu0 %v7001, 88
      %v7090 = vpop.permute.xlu0 %7089
      %7091 = vrot.lane.b32.xlu0 %v7002, 88
      %v7092 = vpop.permute.xlu0 %7091
      %7093 = vrot.lane.b32.xlu0 %v7003, 88
      %v7094 = vpop.permute.xlu0 %7093
      %7095 = vrot.lane.b32.xlu0 %v7004, 88
      %v7096 = vpop.permute.xlu0 %7095
      %7097 = vrot.lane.b32.xlu0 %v7005, 88
      %v7098 = vpop.permute.xlu0 %7097
      %7099 = vrot.lane.b32.xlu0 %v7006, 88
      %v7100 = vpop.permute.xlu0 %7099
      %7101 = vrot.lane.b32.xlu0 %v7007, 88
      %v7102 = vpop.permute.xlu0 %7101
      %7103 = vrot.lane.b32.xlu0 %v7008, 88
      %v7104 = vpop.permute.xlu0 %7103
      %7137 = vst.msk [vmem:[#allocation2 + $0x8] sm:$0xff] %vm3150, %v7042
      %7138 = vst.msk [vmem:[#allocation2 + $0x20] sm:$0xff] %vm3150, %v7044
      %7139 = vst.msk [vmem:[#allocation2 + $0x38] sm:$0xff] %vm3150, %v7046
      %7140 = vst.msk [vmem:[#allocation2 + $0x50] sm:$0xff] %vm3150, %v7048
      %7141 = vst.msk [vmem:[#allocation2 + $0x68] sm:$0xff] %vm3150, %v7050
      %7142 = vst.msk [vmem:[#allocation2 + $0x80] sm:$0xff] %vm3150, %v7052
      %7143 = vst.msk [vmem:[#allocation2 + $0x98] sm:$0xff] %vm3150, %v7054
      %7144 = vst.msk [vmem:[#allocation2 + $0xb0] sm:$0xff] %vm3150, %v7056
      %7145 = vst.msk [vmem:[#allocation2 + $0xc8] sm:$0xff] %vm3150, %v7058
      %7146 = vst.msk [vmem:[#allocation2 + $0xe0] sm:$0xff] %vm3150, %v7060
      %7147 = vst.msk [vmem:[#allocation2 + $0xf8] sm:$0xff] %vm3150, %v7062
      %7148 = vst.msk [vmem:[#allocation2 + $0x110] sm:$0xff] %vm3150, %v7064
      %7149 = vst.msk [vmem:[#allocation2 + $0x128] sm:$0xff] %vm3150, %v7066
      %7150 = vst.msk [vmem:[#allocation2 + $0x140] sm:$0xff] %vm3150, %v7068
      %7151 = vst.msk [vmem:[#allocation2 + $0x158] sm:$0xff] %vm3150, %v7070
      %7152 = vst.msk [vmem:[#allocation2 + $0x170] sm:$0xff] %vm3150, %v7072
      %7153 = vst.msk [vmem:[#allocation2 + $0x188] sm:$0xff] %vm3150, %v7074
      %7154 = vst.msk [vmem:[#allocation2 + $0x1a0] sm:$0xff] %vm3150, %v7076
      %7155 = vst.msk [vmem:[#allocation2 + $0x1b8] sm:$0xff] %vm3150, %v7078
      %7156 = vst.msk [vmem:[#allocation2 + $0x1d0] sm:$0xff] %vm3150, %v7080
      %7157 = vst.msk [vmem:[#allocation2 + $0x1e8] sm:$0xff] %vm3150, %v7082
      %7158 = vst.msk [vmem:[#allocation2 + $0x200] sm:$0xff] %vm3150, %v7084
      %7159 = vst.msk [vmem:[#allocation2 + $0x218] sm:$0xff] %vm3150, %v7086
      %7160 = vst.msk [vmem:[#allocation2 + $0x230] sm:$0xff] %vm3150, %v7088
      %7161 = vst.msk [vmem:[#allocation2 + $0x248] sm:$0xff] %vm3150, %v7090
      %7162 = vst.msk [vmem:[#allocation2 + $0x260] sm:$0xff] %vm3150, %v7092
      %7163 = vst.msk [vmem:[#allocation2 + $0x278] sm:$0xff] %vm3150, %v7094
      %7164 = vst.msk [vmem:[#allocation2 + $0x290] sm:$0xff] %vm3150, %v7096
      %7165 = vst.msk [vmem:[#allocation2 + $0x2a8] sm:$0xff] %vm3150, %v7098
      %7166 = vst.msk [vmem:[#allocation2 + $0x2c0] sm:$0xff] %vm3150, %v7100
      %7167 = vst.msk [vmem:[#allocation2 + $0x2d8] sm:$0xff] %vm3150, %v7102
      %7168 = vst.msk [vmem:[#allocation2 + $0x2f0] sm:$0xff] %vm3150, %v7104
      %v7169 = vld [vmem:[%s6912 + $0x1] sm:$0xff]
      %v7170 = vld [vmem:[%s6912 + $0x11] sm:$0xff]
      %v7171 = vld [vmem:[%s6912 + $0x21] sm:$0xff]
      %v7172 = vld [vmem:[%s6912 + $0x31] sm:$0xff]
      %v7173 = vld [vmem:[%s6912 + $0x41] sm:$0xff]
      %v7174 = vld [vmem:[%s6912 + $0x51] sm:$0xff]
      %v7175 = vld [vmem:[%s6912 + $0x61] sm:$0xff]
      %v7176 = vld [vmem:[%s6912 + $0x71] sm:$0xff]
      %v7177 = vld [vmem:[%s6912 + $0xa1] sm:$0xff]
      %v7178 = vld [vmem:[%s6912 + $0xb1] sm:$0xff]
      %v7179 = vld [vmem:[%s6912 + $0xc1] sm:$0xff]
      %v7180 = vld [vmem:[%s6912 + $0xd1] sm:$0xff]
      %v7181 = vld [vmem:[%s6912 + $0xe1] sm:$0xff]
      %v7182 = vld [vmem:[%s6912 + $0xf1] sm:$0xff]
      %v7183 = vld [vmem:[%s6912 + $0x101] sm:$0xff]
      %v7184 = vld [vmem:[%s6912 + $0x111] sm:$0xff]
      %v7185 = vld [vmem:[%s6912 + $0x141] sm:$0xff]
      %v7186 = vld [vmem:[%s6912 + $0x151] sm:$0xff]
      %v7187 = vld [vmem:[%s6912 + $0x161] sm:$0xff]
      %v7188 = vld [vmem:[%s6912 + $0x171] sm:$0xff]
      %v7189 = vld [vmem:[%s6912 + $0x181] sm:$0xff]
      %v7190 = vld [vmem:[%s6912 + $0x191] sm:$0xff]
      %v7191 = vld [vmem:[%s6912 + $0x1a1] sm:$0xff]
      %v7192 = vld [vmem:[%s6912 + $0x1b1] sm:$0xff]
      %v7193 = vld [vmem:[%s6912 + $0x1e1] sm:$0xff]
      %v7194 = vld [vmem:[%s6912 + $0x1f1] sm:$0xff]
      %v7195 = vld [vmem:[%s6912 + $0x201] sm:$0xff]
      %v7196 = vld [vmem:[%s6912 + $0x211] sm:$0xff]
      %v7197 = vld [vmem:[%s6912 + $0x221] sm:$0xff]
      %v7198 = vld [vmem:[%s6912 + $0x231] sm:$0xff]
      %v7199 = vld [vmem:[%s6912 + $0x241] sm:$0xff]
      %v7200 = vld [vmem:[%s6912 + $0x251] sm:$0xff]
      %v7201 = vld [vmem:[%s6912 + $0x281] sm:$0xff]
      %v7202 = vld [vmem:[%s6912 + $0x291] sm:$0xff]
      %v7203 = vld [vmem:[%s6912 + $0x2a1] sm:$0xff]
      %v7204 = vld [vmem:[%s6912 + $0x2b1] sm:$0xff]
      %v7205 = vld [vmem:[%s6912 + $0x2c1] sm:$0xff]
      %v7206 = vld [vmem:[%s6912 + $0x2d1] sm:$0xff]
      %v7207 = vld [vmem:[%s6912 + $0x2e1] sm:$0xff]
      %v7208 = vld [vmem:[%s6912 + $0x2f1] sm:$0xff]
      %v7209 = vld [vmem:[%s6912 + $0x321] sm:$0xff]
      %v7210 = vld [vmem:[%s6912 + $0x331] sm:$0xff]
      %v7211 = vld [vmem:[%s6912 + $0x341] sm:$0xff]
      %v7212 = vld [vmem:[%s6912 + $0x351] sm:$0xff]
      %v7213 = vld [vmem:[%s6912 + $0x361] sm:$0xff]
      %v7214 = vld [vmem:[%s6912 + $0x371] sm:$0xff]
      %v7215 = vld [vmem:[%s6912 + $0x381] sm:$0xff]
      %v7216 = vld [vmem:[%s6912 + $0x391] sm:$0xff]
      %v7217 = vld [vmem:[%s6912 + $0x3c1] sm:$0xff]
      %v7218 = vld [vmem:[%s6912 + $0x3d1] sm:$0xff]
      %v7219 = vld [vmem:[%s6912 + $0x3e1] sm:$0xff]
      %v7220 = vld [vmem:[%s6912 + $0x3f1] sm:$0xff]
      %v7221 = vld [vmem:[%s6912 + $0x401] sm:$0xff]
      %v7222 = vld [vmem:[%s6912 + $0x411] sm:$0xff]
      %v7223 = vld [vmem:[%s6912 + $0x421] sm:$0xff]
      %v7224 = vld [vmem:[%s6912 + $0x431] sm:$0xff]
      %v7225 = vld [vmem:[%s6912 + $0x461] sm:$0xff]
      %v7226 = vld [vmem:[%s6912 + $0x471] sm:$0xff]
      %v7227 = vld [vmem:[%s6912 + $0x481] sm:$0xff]
      %v7228 = vld [vmem:[%s6912 + $0x491] sm:$0xff]
      %v7229 = vld [vmem:[%s6912 + $0x4a1] sm:$0xff]
      %v7230 = vld [vmem:[%s6912 + $0x4b1] sm:$0xff]
      %v7231 = vld [vmem:[%s6912 + $0x4c1] sm:$0xff]
      %v7232 = vld [vmem:[%s6912 + $0x4d1] sm:$0xff]
      %v7233 = vpack.c.bf16 %v7170, %v7169
      %v7234 = vpack.c.bf16 %v7172, %v7171
      %v7235 = vpack.c.bf16 %v7174, %v7173
      %v7236 = vpack.c.bf16 %v7176, %v7175
      %v7237 = vpack.c.bf16 %v7178, %v7177
      %v7238 = vpack.c.bf16 %v7180, %v7179
      %v7239 = vpack.c.bf16 %v7182, %v7181
      %v7240 = vpack.c.bf16 %v7184, %v7183
      %v7241 = vpack.c.bf16 %v7186, %v7185
      %v7242 = vpack.c.bf16 %v7188, %v7187
      %v7243 = vpack.c.bf16 %v7190, %v7189
      %v7244 = vpack.c.bf16 %v7192, %v7191
      %v7245 = vpack.c.bf16 %v7194, %v7193
      %v7246 = vpack.c.bf16 %v7196, %v7195
      %v7247 = vpack.c.bf16 %v7198, %v7197
      %v7248 = vpack.c.bf16 %v7200, %v7199
      %v7249 = vpack.c.bf16 %v7202, %v7201
      %v7250 = vpack.c.bf16 %v7204, %v7203
      %v7251 = vpack.c.bf16 %v7206, %v7205
      %v7252 = vpack.c.bf16 %v7208, %v7207
      %v7253 = vpack.c.bf16 %v7210, %v7209
      %v7254 = vpack.c.bf16 %v7212, %v7211
      %v7255 = vpack.c.bf16 %v7214, %v7213
      %v7256 = vpack.c.bf16 %v7216, %v7215
      %v7257 = vpack.c.bf16 %v7218, %v7217
      %v7258 = vpack.c.bf16 %v7220, %v7219
      %v7259 = vpack.c.bf16 %v7222, %v7221
      %v7260 = vpack.c.bf16 %v7224, %v7223
      %v7261 = vpack.c.bf16 %v7226, %v7225
      %v7262 = vpack.c.bf16 %v7228, %v7227
      %v7263 = vpack.c.bf16 %v7230, %v7229
      %v7264 = vpack.c.bf16 %v7232, %v7231
      %7297 = vrot.lane.b32.xlu0 %v7233, 96
      %v7298 = vpop.permute.xlu0 %7297
      %7299 = vrot.lane.b32.xlu0 %v7234, 96
      %v7300 = vpop.permute.xlu0 %7299
      %7301 = vrot.lane.b32.xlu0 %v7235, 96
      %v7302 = vpop.permute.xlu0 %7301
      %7303 = vrot.lane.b32.xlu0 %v7236, 96
      %v7304 = vpop.permute.xlu0 %7303
      %7305 = vrot.lane.b32.xlu0 %v7237, 96
      %v7306 = vpop.permute.xlu0 %7305
      %7307 = vrot.lane.b32.xlu0 %v7238, 96
      %v7308 = vpop.permute.xlu0 %7307
      %7309 = vrot.lane.b32.xlu0 %v7239, 96
      %v7310 = vpop.permute.xlu0 %7309
      %7311 = vrot.lane.b32.xlu0 %v7240, 96
      %v7312 = vpop.permute.xlu0 %7311
      %7313 = vrot.lane.b32.xlu0 %v7241, 96
      %v7314 = vpop.permute.xlu0 %7313
      %7315 = vrot.lane.b32.xlu0 %v7242, 96
      %v7316 = vpop.permute.xlu0 %7315
      %7317 = vrot.lane.b32.xlu0 %v7243, 96
      %v7318 = vpop.permute.xlu0 %7317
      %7319 = vrot.lane.b32.xlu0 %v7244, 96
      %v7320 = vpop.permute.xlu0 %7319
      %7321 = vrot.lane.b32.xlu0 %v7245, 96
      %v7322 = vpop.permute.xlu0 %7321
      %7323 = vrot.lane.b32.xlu0 %v7246, 96
      %v7324 = vpop.permute.xlu0 %7323
      %7325 = vrot.lane.b32.xlu0 %v7247, 96
      %v7326 = vpop.permute.xlu0 %7325
      %7327 = vrot.lane.b32.xlu0 %v7248, 96
      %v7328 = vpop.permute.xlu0 %7327
      %7329 = vrot.lane.b32.xlu0 %v7249, 96
      %v7330 = vpop.permute.xlu0 %7329
      %7331 = vrot.lane.b32.xlu0 %v7250, 96
      %v7332 = vpop.permute.xlu0 %7331
      %7333 = vrot.lane.b32.xlu0 %v7251, 96
      %v7334 = vpop.permute.xlu0 %7333
      %7335 = vrot.lane.b32.xlu0 %v7252, 96
      %v7336 = vpop.permute.xlu0 %7335
      %7337 = vrot.lane.b32.xlu0 %v7253, 96
      %v7338 = vpop.permute.xlu0 %7337
      %7339 = vrot.lane.b32.xlu0 %v7254, 96
      %v7340 = vpop.permute.xlu0 %7339
      %7341 = vrot.lane.b32.xlu0 %v7255, 96
      %v7342 = vpop.permute.xlu0 %7341
      %7343 = vrot.lane.b32.xlu0 %v7256, 96
      %v7344 = vpop.permute.xlu0 %7343
      %7345 = vrot.lane.b32.xlu0 %v7257, 96
      %v7346 = vpop.permute.xlu0 %7345
      %7347 = vrot.lane.b32.xlu0 %v7258, 96
      %v7348 = vpop.permute.xlu0 %7347
      %7349 = vrot.lane.b32.xlu0 %v7259, 96
      %v7350 = vpop.permute.xlu0 %7349
      %7351 = vrot.lane.b32.xlu0 %v7260, 96
      %v7352 = vpop.permute.xlu0 %7351
      %7353 = vrot.lane.b32.xlu0 %v7261, 96
      %v7354 = vpop.permute.xlu0 %7353
      %7355 = vrot.lane.b32.xlu0 %v7262, 96
      %v7356 = vpop.permute.xlu0 %7355
      %7357 = vrot.lane.b32.xlu0 %v7263, 96
      %v7358 = vpop.permute.xlu0 %7357
      %7359 = vrot.lane.b32.xlu0 %v7264, 96
      %v7360 = vpop.permute.xlu0 %7359
      %7393 = vst.msk [vmem:[#allocation2 + $0x8] sm:$0xff] %vm3409, %v7298
      %7394 = vst.msk [vmem:[#allocation2 + $0x20] sm:$0xff] %vm3409, %v7300
      %7395 = vst.msk [vmem:[#allocation2 + $0x38] sm:$0xff] %vm3409, %v7302
      %7396 = vst.msk [vmem:[#allocation2 + $0x50] sm:$0xff] %vm3409, %v7304
      %7397 = vst.msk [vmem:[#allocation2 + $0x68] sm:$0xff] %vm3409, %v7306
      %7398 = vst.msk [vmem:[#allocation2 + $0x80] sm:$0xff] %vm3409, %v7308
      %7399 = vst.msk [vmem:[#allocation2 + $0x98] sm:$0xff] %vm3409, %v7310
      %7400 = vst.msk [vmem:[#allocation2 + $0xb0] sm:$0xff] %vm3409, %v7312
      %7401 = vst.msk [vmem:[#allocation2 + $0xc8] sm:$0xff] %vm3409, %v7314
      %7402 = vst.msk [vmem:[#allocation2 + $0xe0] sm:$0xff] %vm3409, %v7316
      %7403 = vst.msk [vmem:[#allocation2 + $0xf8] sm:$0xff] %vm3409, %v7318
      %7404 = vst.msk [vmem:[#allocation2 + $0x110] sm:$0xff] %vm3409, %v7320
      %7405 = vst.msk [vmem:[#allocation2 + $0x128] sm:$0xff] %vm3409, %v7322
      %7406 = vst.msk [vmem:[#allocation2 + $0x140] sm:$0xff] %vm3409, %v7324
      %7407 = vst.msk [vmem:[#allocation2 + $0x158] sm:$0xff] %vm3409, %v7326
      %7408 = vst.msk [vmem:[#allocation2 + $0x170] sm:$0xff] %vm3409, %v7328
      %7409 = vst.msk [vmem:[#allocation2 + $0x188] sm:$0xff] %vm3409, %v7330
      %7410 = vst.msk [vmem:[#allocation2 + $0x1a0] sm:$0xff] %vm3409, %v7332
      %7411 = vst.msk [vmem:[#allocation2 + $0x1b8] sm:$0xff] %vm3409, %v7334
      %7412 = vst.msk [vmem:[#allocation2 + $0x1d0] sm:$0xff] %vm3409, %v7336
      %7413 = vst.msk [vmem:[#allocation2 + $0x1e8] sm:$0xff] %vm3409, %v7338
      %7414 = vst.msk [vmem:[#allocation2 + $0x200] sm:$0xff] %vm3409, %v7340
      %7415 = vst.msk [vmem:[#allocation2 + $0x218] sm:$0xff] %vm3409, %v7342
      %7416 = vst.msk [vmem:[#allocation2 + $0x230] sm:$0xff] %vm3409, %v7344
      %7417 = vst.msk [vmem:[#allocation2 + $0x248] sm:$0xff] %vm3409, %v7346
      %7418 = vst.msk [vmem:[#allocation2 + $0x260] sm:$0xff] %vm3409, %v7348
      %7419 = vst.msk [vmem:[#allocation2 + $0x278] sm:$0xff] %vm3409, %v7350
      %7420 = vst.msk [vmem:[#allocation2 + $0x290] sm:$0xff] %vm3409, %v7352
      %7421 = vst.msk [vmem:[#allocation2 + $0x2a8] sm:$0xff] %vm3409, %v7354
      %7422 = vst.msk [vmem:[#allocation2 + $0x2c0] sm:$0xff] %vm3409, %v7356
      %7423 = vst.msk [vmem:[#allocation2 + $0x2d8] sm:$0xff] %vm3409, %v7358
      %7424 = vst.msk [vmem:[#allocation2 + $0x2f0] sm:$0xff] %vm3409, %v7360
      %v7425 = vld [vmem:[%s6912 + $0x2] sm:$0xff]
      %v7426 = vld [vmem:[%s6912 + $0x12] sm:$0xff]
      %v7427 = vld [vmem:[%s6912 + $0x22] sm:$0xff]
      %v7428 = vld [vmem:[%s6912 + $0x32] sm:$0xff]
      %v7429 = vld [vmem:[%s6912 + $0x42] sm:$0xff]
      %v7430 = vld [vmem:[%s6912 + $0x52] sm:$0xff]
      %v7431 = vld [vmem:[%s6912 + $0x62] sm:$0xff]
      %v7432 = vld [vmem:[%s6912 + $0x72] sm:$0xff]
      %v7433 = vld [vmem:[%s6912 + $0xa2] sm:$0xff]
      %v7434 = vld [vmem:[%s6912 + $0xb2] sm:$0xff]
      %v7435 = vld [vmem:[%s6912 + $0xc2] sm:$0xff]
      %v7436 = vld [vmem:[%s6912 + $0xd2] sm:$0xff]
      %v7437 = vld [vmem:[%s6912 + $0xe2] sm:$0xff]
      %v7438 = vld [vmem:[%s6912 + $0xf2] sm:$0xff]
      %v7439 = vld [vmem:[%s6912 + $0x102] sm:$0xff]
      %v7440 = vld [vmem:[%s6912 + $0x112] sm:$0xff]
      %v7441 = vld [vmem:[%s6912 + $0x142] sm:$0xff]
      %v7442 = vld [vmem:[%s6912 + $0x152] sm:$0xff]
      %v7443 = vld [vmem:[%s6912 + $0x162] sm:$0xff]
      %v7444 = vld [vmem:[%s6912 + $0x172] sm:$0xff]
      %v7445 = vld [vmem:[%s6912 + $0x182] sm:$0xff]
      %v7446 = vld [vmem:[%s6912 + $0x192] sm:$0xff]
      %v7447 = vld [vmem:[%s6912 + $0x1a2] sm:$0xff]
      %v7448 = vld [vmem:[%s6912 + $0x1b2] sm:$0xff]
      %v7449 = vld [vmem:[%s6912 + $0x1e2] sm:$0xff]
      %v7450 = vld [vmem:[%s6912 + $0x1f2] sm:$0xff]
      %v7451 = vld [vmem:[%s6912 + $0x202] sm:$0xff]
      %v7452 = vld [vmem:[%s6912 + $0x212] sm:$0xff]
      %v7453 = vld [vmem:[%s6912 + $0x222] sm:$0xff]
      %v7454 = vld [vmem:[%s6912 + $0x232] sm:$0xff]
      %v7455 = vld [vmem:[%s6912 + $0x242] sm:$0xff]
      %v7456 = vld [vmem:[%s6912 + $0x252] sm:$0xff]
      %v7457 = vld [vmem:[%s6912 + $0x282] sm:$0xff]
      %v7458 = vld [vmem:[%s6912 + $0x292] sm:$0xff]
      %v7459 = vld [vmem:[%s6912 + $0x2a2] sm:$0xff]
      %v7460 = vld [vmem:[%s6912 + $0x2b2] sm:$0xff]
      %v7461 = vld [vmem:[%s6912 + $0x2c2] sm:$0xff]
      %v7462 = vld [vmem:[%s6912 + $0x2d2] sm:$0xff]
      %v7463 = vld [vmem:[%s6912 + $0x2e2] sm:$0xff]
      %v7464 = vld [vmem:[%s6912 + $0x2f2] sm:$0xff]
      %v7465 = vld [vmem:[%s6912 + $0x322] sm:$0xff]
      %v7466 = vld [vmem:[%s6912 + $0x332] sm:$0xff]
      %v7467 = vld [vmem:[%s6912 + $0x342] sm:$0xff]
      %v7468 = vld [vmem:[%s6912 + $0x352] sm:$0xff]
      %v7469 = vld [vmem:[%s6912 + $0x362] sm:$0xff]
      %v7470 = vld [vmem:[%s6912 + $0x372] sm:$0xff]
      %v7471 = vld [vmem:[%s6912 + $0x382] sm:$0xff]
      %v7472 = vld [vmem:[%s6912 + $0x392] sm:$0xff]
      %v7473 = vld [vmem:[%s6912 + $0x3c2] sm:$0xff]
      %v7474 = vld [vmem:[%s6912 + $0x3d2] sm:$0xff]
      %v7475 = vld [vmem:[%s6912 + $0x3e2] sm:$0xff]
      %v7476 = vld [vmem:[%s6912 + $0x3f2] sm:$0xff]
      %v7477 = vld [vmem:[%s6912 + $0x402] sm:$0xff]
      %v7478 = vld [vmem:[%s6912 + $0x412] sm:$0xff]
      %v7479 = vld [vmem:[%s6912 + $0x422] sm:$0xff]
      %v7480 = vld [vmem:[%s6912 + $0x432] sm:$0xff]
      %v7481 = vld [vmem:[%s6912 + $0x462] sm:$0xff]
      %v7482 = vld [vmem:[%s6912 + $0x472] sm:$0xff]
      %v7483 = vld [vmem:[%s6912 + $0x482] sm:$0xff]
      %v7484 = vld [vmem:[%s6912 + $0x492] sm:$0xff]
      %v7485 = vld [vmem:[%s6912 + $0x4a2] sm:$0xff]
      %v7486 = vld [vmem:[%s6912 + $0x4b2] sm:$0xff]
      %v7487 = vld [vmem:[%s6912 + $0x4c2] sm:$0xff]
      %v7488 = vld [vmem:[%s6912 + $0x4d2] sm:$0xff]
      %v7489 = vpack.c.bf16 %v7426, %v7425
      %v7490 = vpack.c.bf16 %v7428, %v7427
      %v7491 = vpack.c.bf16 %v7430, %v7429
      %v7492 = vpack.c.bf16 %v7432, %v7431
      %v7493 = vpack.c.bf16 %v7434, %v7433
      %v7494 = vpack.c.bf16 %v7436, %v7435
      %v7495 = vpack.c.bf16 %v7438, %v7437
      %v7496 = vpack.c.bf16 %v7440, %v7439
      %v7497 = vpack.c.bf16 %v7442, %v7441
      %v7498 = vpack.c.bf16 %v7444, %v7443
      %v7499 = vpack.c.bf16 %v7446, %v7445
      %v7500 = vpack.c.bf16 %v7448, %v7447
      %v7501 = vpack.c.bf16 %v7450, %v7449
      %v7502 = vpack.c.bf16 %v7452, %v7451
      %v7503 = vpack.c.bf16 %v7454, %v7453
      %v7504 = vpack.c.bf16 %v7456, %v7455
      %v7505 = vpack.c.bf16 %v7458, %v7457
      %v7506 = vpack.c.bf16 %v7460, %v7459
      %v7507 = vpack.c.bf16 %v7462, %v7461
      %v7508 = vpack.c.bf16 %v7464, %v7463
      %v7509 = vpack.c.bf16 %v7466, %v7465
      %v7510 = vpack.c.bf16 %v7468, %v7467
      %v7511 = vpack.c.bf16 %v7470, %v7469
      %v7512 = vpack.c.bf16 %v7472, %v7471
      %v7513 = vpack.c.bf16 %v7474, %v7473
      %v7514 = vpack.c.bf16 %v7476, %v7475
      %v7515 = vpack.c.bf16 %v7478, %v7477
      %v7516 = vpack.c.bf16 %v7480, %v7479
      %v7517 = vpack.c.bf16 %v7482, %v7481
      %v7518 = vpack.c.bf16 %v7484, %v7483
      %v7519 = vpack.c.bf16 %v7486, %v7485
      %v7520 = vpack.c.bf16 %v7488, %v7487
      %7553 = vrot.lane.b32.xlu0 %v7489, 104
      %v7554 = vpop.permute.xlu0 %7553
      %7555 = vrot.lane.b32.xlu0 %v7490, 104
      %v7556 = vpop.permute.xlu0 %7555
      %7557 = vrot.lane.b32.xlu0 %v7491, 104
      %v7558 = vpop.permute.xlu0 %7557
      %7559 = vrot.lane.b32.xlu0 %v7492, 104
      %v7560 = vpop.permute.xlu0 %7559
      %7561 = vrot.lane.b32.xlu0 %v7493, 104
      %v7562 = vpop.permute.xlu0 %7561
      %7563 = vrot.lane.b32.xlu0 %v7494, 104
      %v7564 = vpop.permute.xlu0 %7563
      %7565 = vrot.lane.b32.xlu0 %v7495, 104
      %v7566 = vpop.permute.xlu0 %7565
      %7567 = vrot.lane.b32.xlu0 %v7496, 104
      %v7568 = vpop.permute.xlu0 %7567
      %7569 = vrot.lane.b32.xlu0 %v7497, 104
      %v7570 = vpop.permute.xlu0 %7569
      %7571 = vrot.lane.b32.xlu0 %v7498, 104
      %v7572 = vpop.permute.xlu0 %7571
      %7573 = vrot.lane.b32.xlu0 %v7499, 104
      %v7574 = vpop.permute.xlu0 %7573
      %7575 = vrot.lane.b32.xlu0 %v7500, 104
      %v7576 = vpop.permute.xlu0 %7575
      %7577 = vrot.lane.b32.xlu0 %v7501, 104
      %v7578 = vpop.permute.xlu0 %7577
      %7579 = vrot.lane.b32.xlu0 %v7502, 104
      %v7580 = vpop.permute.xlu0 %7579
      %7581 = vrot.lane.b32.xlu0 %v7503, 104
      %v7582 = vpop.permute.xlu0 %7581
      %7583 = vrot.lane.b32.xlu0 %v7504, 104
      %v7584 = vpop.permute.xlu0 %7583
      %7585 = vrot.lane.b32.xlu0 %v7505, 104
      %v7586 = vpop.permute.xlu0 %7585
      %7587 = vrot.lane.b32.xlu0 %v7506, 104
      %v7588 = vpop.permute.xlu0 %7587
      %7589 = vrot.lane.b32.xlu0 %v7507, 104
      %v7590 = vpop.permute.xlu0 %7589
      %7591 = vrot.lane.b32.xlu0 %v7508, 104
      %v7592 = vpop.permute.xlu0 %7591
      %7593 = vrot.lane.b32.xlu0 %v7509, 104
      %v7594 = vpop.permute.xlu0 %7593
      %7595 = vrot.lane.b32.xlu0 %v7510, 104
      %v7596 = vpop.permute.xlu0 %7595
      %7597 = vrot.lane.b32.xlu0 %v7511, 104
      %v7598 = vpop.permute.xlu0 %7597
      %7599 = vrot.lane.b32.xlu0 %v7512, 104
      %v7600 = vpop.permute.xlu0 %7599
      %7601 = vrot.lane.b32.xlu0 %v7513, 104
      %v7602 = vpop.permute.xlu0 %7601
      %7603 = vrot.lane.b32.xlu0 %v7514, 104
      %v7604 = vpop.permute.xlu0 %7603
      %7605 = vrot.lane.b32.xlu0 %v7515, 104
      %v7606 = vpop.permute.xlu0 %7605
      %7607 = vrot.lane.b32.xlu0 %v7516, 104
      %v7608 = vpop.permute.xlu0 %7607
      %7609 = vrot.lane.b32.xlu0 %v7517, 104
      %v7610 = vpop.permute.xlu0 %7609
      %7611 = vrot.lane.b32.xlu0 %v7518, 104
      %v7612 = vpop.permute.xlu0 %7611
      %7613 = vrot.lane.b32.xlu0 %v7519, 104
      %v7614 = vpop.permute.xlu0 %7613
      %7615 = vrot.lane.b32.xlu0 %v7520, 104
      %v7616 = vpop.permute.xlu0 %7615
      %7649 = vst.msk [vmem:[#allocation2 + $0x8] sm:$0xff] %vm3666, %v7554
      %7650 = vst.msk [vmem:[#allocation2 + $0x20] sm:$0xff] %vm3666, %v7556
      %7651 = vst.msk [vmem:[#allocation2 + $0x38] sm:$0xff] %vm3666, %v7558
      %7652 = vst.msk [vmem:[#allocation2 + $0x50] sm:$0xff] %vm3666, %v7560
      %7653 = vst.msk [vmem:[#allocation2 + $0x68] sm:$0xff] %vm3666, %v7562
      %7654 = vst.msk [vmem:[#allocation2 + $0x80] sm:$0xff] %vm3666, %v7564
      %7655 = vst.msk [vmem:[#allocation2 + $0x98] sm:$0xff] %vm3666, %v7566
      %7656 = vst.msk [vmem:[#allocation2 + $0xb0] sm:$0xff] %vm3666, %v7568
      %7657 = vst.msk [vmem:[#allocation2 + $0xc8] sm:$0xff] %vm3666, %v7570
      %7658 = vst.msk [vmem:[#allocation2 + $0xe0] sm:$0xff] %vm3666, %v7572
      %7659 = vst.msk [vmem:[#allocation2 + $0xf8] sm:$0xff] %vm3666, %v7574
      %7660 = vst.msk [vmem:[#allocation2 + $0x110] sm:$0xff] %vm3666, %v7576
      %7661 = vst.msk [vmem:[#allocation2 + $0x128] sm:$0xff] %vm3666, %v7578
      %7662 = vst.msk [vmem:[#allocation2 + $0x140] sm:$0xff] %vm3666, %v7580
      %7663 = vst.msk [vmem:[#allocation2 + $0x158] sm:$0xff] %vm3666, %v7582
      %7664 = vst.msk [vmem:[#allocation2 + $0x170] sm:$0xff] %vm3666, %v7584
      %7665 = vst.msk [vmem:[#allocation2 + $0x188] sm:$0xff] %vm3666, %v7586
      %7666 = vst.msk [vmem:[#allocation2 + $0x1a0] sm:$0xff] %vm3666, %v7588
      %7667 = vst.msk [vmem:[#allocation2 + $0x1b8] sm:$0xff] %vm3666, %v7590
      %7668 = vst.msk [vmem:[#allocation2 + $0x1d0] sm:$0xff] %vm3666, %v7592
      %7669 = vst.msk [vmem:[#allocation2 + $0x1e8] sm:$0xff] %vm3666, %v7594
      %7670 = vst.msk [vmem:[#allocation2 + $0x200] sm:$0xff] %vm3666, %v7596
      %7671 = vst.msk [vmem:[#allocation2 + $0x218] sm:$0xff] %vm3666, %v7598
      %7672 = vst.msk [vmem:[#allocation2 + $0x230] sm:$0xff] %vm3666, %v7600
      %7673 = vst.msk [vmem:[#allocation2 + $0x248] sm:$0xff] %vm3666, %v7602
      %7674 = vst.msk [vmem:[#allocation2 + $0x260] sm:$0xff] %vm3666, %v7604
      %7675 = vst.msk [vmem:[#allocation2 + $0x278] sm:$0xff] %vm3666, %v7606
      %7676 = vst.msk [vmem:[#allocation2 + $0x290] sm:$0xff] %vm3666, %v7608
      %7677 = vst.msk [vmem:[#allocation2 + $0x2a8] sm:$0xff] %vm3666, %v7610
      %7678 = vst.msk [vmem:[#allocation2 + $0x2c0] sm:$0xff] %vm3666, %v7612
      %7679 = vst.msk [vmem:[#allocation2 + $0x2d8] sm:$0xff] %vm3666, %v7614
      %7680 = vst.msk [vmem:[#allocation2 + $0x2f0] sm:$0xff] %vm3666, %v7616
      %s7681 = sadd.s32 16, %s6911
      %s7682 = scalar_lea.vmem %s207, %s7681
      %v7683 = vld [vmem:[%s7682] sm:$0xff]
      %v7684 = vld [vmem:[%s7682 + $0x10] sm:$0xff]
      %v7685 = vld [vmem:[%s7682 + $0x20] sm:$0xff]
      %v7686 = vld [vmem:[%s7682 + $0x30] sm:$0xff]
      %v7687 = vld [vmem:[%s7682 + $0x40] sm:$0xff]
      %v7688 = vld [vmem:[%s7682 + $0x50] sm:$0xff]
      %v7689 = vld [vmem:[%s7682 + $0x60] sm:$0xff]
      %v7690 = vld [vmem:[%s7682 + $0x70] sm:$0xff]
      %v7691 = vld [vmem:[%s7682 + $0xa0] sm:$0xff]
      %v7692 = vld [vmem:[%s7682 + $0xb0] sm:$0xff]
      %v7693 = vld [vmem:[%s7682 + $0xc0] sm:$0xff]
      %v7694 = vld [vmem:[%s7682 + $0xd0] sm:$0xff]
      %v7695 = vld [vmem:[%s7682 + $0xe0] sm:$0xff]
      %v7696 = vld [vmem:[%s7682 + $0xf0] sm:$0xff]
      %v7697 = vld [vmem:[%s7682 + $0x100] sm:$0xff]
      %v7698 = vld [vmem:[%s7682 + $0x110] sm:$0xff]
      %v7699 = vld [vmem:[%s7682 + $0x140] sm:$0xff]
      %v7700 = vld [vmem:[%s7682 + $0x150] sm:$0xff]
      %v7701 = vld [vmem:[%s7682 + $0x160] sm:$0xff]
      %v7702 = vld [vmem:[%s7682 + $0x170] sm:$0xff]
      %v7703 = vld [vmem:[%s7682 + $0x180] sm:$0xff]
      %v7704 = vld [vmem:[%s7682 + $0x190] sm:$0xff]
      %v7705 = vld [vmem:[%s7682 + $0x1a0] sm:$0xff]
      %v7706 = vld [vmem:[%s7682 + $0x1b0] sm:$0xff]
      %v7707 = vld [vmem:[%s7682 + $0x1e0] sm:$0xff]
      %v7708 = vld [vmem:[%s7682 + $0x1f0] sm:$0xff]
      %v7709 = vld [vmem:[%s7682 + $0x200] sm:$0xff]
      %v7710 = vld [vmem:[%s7682 + $0x210] sm:$0xff]
      %v7711 = vld [vmem:[%s7682 + $0x220] sm:$0xff]
      %v7712 = vld [vmem:[%s7682 + $0x230] sm:$0xff]
      %v7713 = vld [vmem:[%s7682 + $0x240] sm:$0xff]
      %v7714 = vld [vmem:[%s7682 + $0x250] sm:$0xff]
      %v7715 = vld [vmem:[%s7682 + $0x280] sm:$0xff]
      %v7716 = vld [vmem:[%s7682 + $0x290] sm:$0xff]
      %v7717 = vld [vmem:[%s7682 + $0x2a0] sm:$0xff]
      %v7718 = vld [vmem:[%s7682 + $0x2b0] sm:$0xff]
      %v7719 = vld [vmem:[%s7682 + $0x2c0] sm:$0xff]
      %v7720 = vld [vmem:[%s7682 + $0x2d0] sm:$0xff]
      %v7721 = vld [vmem:[%s7682 + $0x2e0] sm:$0xff]
      %v7722 = vld [vmem:[%s7682 + $0x2f0] sm:$0xff]
      %v7723 = vld [vmem:[%s7682 + $0x320] sm:$0xff]
      %v7724 = vld [vmem:[%s7682 + $0x330] sm:$0xff]
      %v7725 = vld [vmem:[%s7682 + $0x340] sm:$0xff]
      %v7726 = vld [vmem:[%s7682 + $0x350] sm:$0xff]
      %v7727 = vld [vmem:[%s7682 + $0x360] sm:$0xff]
      %v7728 = vld [vmem:[%s7682 + $0x370] sm:$0xff]
      %v7729 = vld [vmem:[%s7682 + $0x380] sm:$0xff]
      %v7730 = vld [vmem:[%s7682 + $0x390] sm:$0xff]
      %v7731 = vld [vmem:[%s7682 + $0x3c0] sm:$0xff]
      %v7732 = vld [vmem:[%s7682 + $0x3d0] sm:$0xff]
      %v7733 = vld [vmem:[%s7682 + $0x3e0] sm:$0xff]
      %v7734 = vld [vmem:[%s7682 + $0x3f0] sm:$0xff]
      %v7735 = vld [vmem:[%s7682 + $0x400] sm:$0xff]
      %v7736 = vld [vmem:[%s7682 + $0x410] sm:$0xff]
      %v7737 = vld [vmem:[%s7682 + $0x420] sm:$0xff]
      %v7738 = vld [vmem:[%s7682 + $0x430] sm:$0xff]
      %v7739 = vld [vmem:[%s7682 + $0x460] sm:$0xff]
      %v7740 = vld [vmem:[%s7682 + $0x470] sm:$0xff]
      %v7741 = vld [vmem:[%s7682 + $0x480] sm:$0xff]
      %v7742 = vld [vmem:[%s7682 + $0x490] sm:$0xff]
      %v7743 = vld [vmem:[%s7682 + $0x4a0] sm:$0xff]
      %v7744 = vld [vmem:[%s7682 + $0x4b0] sm:$0xff]
      %v7745 = vld [vmem:[%s7682 + $0x4c0] sm:$0xff]
      %v7746 = vld [vmem:[%s7682 + $0x4d0] sm:$0xff]
      %v7747 = vpack.c.bf16 %v7684, %v7683
      %v7748 = vpack.c.bf16 %v7686, %v7685
      %v7749 = vpack.c.bf16 %v7688, %v7687
      %v7750 = vpack.c.bf16 %v7690, %v7689
      %v7751 = vpack.c.bf16 %v7692, %v7691
      %v7752 = vpack.c.bf16 %v7694, %v7693
      %v7753 = vpack.c.bf16 %v7696, %v7695
      %v7754 = vpack.c.bf16 %v7698, %v7697
      %v7755 = vpack.c.bf16 %v7700, %v7699
      %v7756 = vpack.c.bf16 %v7702, %v7701
      %v7757 = vpack.c.bf16 %v7704, %v7703
      %v7758 = vpack.c.bf16 %v7706, %v7705
      %v7759 = vpack.c.bf16 %v7708, %v7707
      %v7760 = vpack.c.bf16 %v7710, %v7709
      %v7761 = vpack.c.bf16 %v7712, %v7711
      %v7762 = vpack.c.bf16 %v7714, %v7713
      %v7763 = vpack.c.bf16 %v7716, %v7715
      %v7764 = vpack.c.bf16 %v7718, %v7717
      %v7765 = vpack.c.bf16 %v7720, %v7719
      %v7766 = vpack.c.bf16 %v7722, %v7721
      %v7767 = vpack.c.bf16 %v7724, %v7723
      %v7768 = vpack.c.bf16 %v7726, %v7725
      %v7769 = vpack.c.bf16 %v7728, %v7727
      %v7770 = vpack.c.bf16 %v7730, %v7729
      %v7771 = vpack.c.bf16 %v7732, %v7731
      %v7772 = vpack.c.bf16 %v7734, %v7733
      %v7773 = vpack.c.bf16 %v7736, %v7735
      %v7774 = vpack.c.bf16 %v7738, %v7737
      %v7775 = vpack.c.bf16 %v7740, %v7739
      %v7776 = vpack.c.bf16 %v7742, %v7741
      %v7777 = vpack.c.bf16 %v7744, %v7743
      %v7778 = vpack.c.bf16 %v7746, %v7745
      %7811 = vrot.lane.b32.xlu0 %v7747, 112
      %v7812 = vpop.permute.xlu0 %7811
      %7813 = vrot.lane.b32.xlu0 %v7748, 112
      %v7814 = vpop.permute.xlu0 %7813
      %7815 = vrot.lane.b32.xlu0 %v7749, 112
      %v7816 = vpop.permute.xlu0 %7815
      %7817 = vrot.lane.b32.xlu0 %v7750, 112
      %v7818 = vpop.permute.xlu0 %7817
      %7819 = vrot.lane.b32.xlu0 %v7751, 112
      %v7820 = vpop.permute.xlu0 %7819
      %7821 = vrot.lane.b32.xlu0 %v7752, 112
      %v7822 = vpop.permute.xlu0 %7821
      %7823 = vrot.lane.b32.xlu0 %v7753, 112
      %v7824 = vpop.permute.xlu0 %7823
      %7825 = vrot.lane.b32.xlu0 %v7754, 112
      %v7826 = vpop.permute.xlu0 %7825
      %7827 = vrot.lane.b32.xlu0 %v7755, 112
      %v7828 = vpop.permute.xlu0 %7827
      %7829 = vrot.lane.b32.xlu0 %v7756, 112
      %v7830 = vpop.permute.xlu0 %7829
      %7831 = vrot.lane.b32.xlu0 %v7757, 112
      %v7832 = vpop.permute.xlu0 %7831
      %7833 = vrot.lane.b32.xlu0 %v7758, 112
      %v7834 = vpop.permute.xlu0 %7833
      %7835 = vrot.lane.b32.xlu0 %v7759, 112
      %v7836 = vpop.permute.xlu0 %7835
      %7837 = vrot.lane.b32.xlu0 %v7760, 112
      %v7838 = vpop.permute.xlu0 %7837
      %7839 = vrot.lane.b32.xlu0 %v7761, 112
      %v7840 = vpop.permute.xlu0 %7839
      %7841 = vrot.lane.b32.xlu0 %v7762, 112
      %v7842 = vpop.permute.xlu0 %7841
      %7843 = vrot.lane.b32.xlu0 %v7763, 112
      %v7844 = vpop.permute.xlu0 %7843
      %7845 = vrot.lane.b32.xlu0 %v7764, 112
      %v7846 = vpop.permute.xlu0 %7845
      %7847 = vrot.lane.b32.xlu0 %v7765, 112
      %v7848 = vpop.permute.xlu0 %7847
      %7849 = vrot.lane.b32.xlu0 %v7766, 112
      %v7850 = vpop.permute.xlu0 %7849
      %7851 = vrot.lane.b32.xlu0 %v7767, 112
      %v7852 = vpop.permute.xlu0 %7851
      %7853 = vrot.lane.b32.xlu0 %v7768, 112
      %v7854 = vpop.permute.xlu0 %7853
      %7855 = vrot.lane.b32.xlu0 %v7769, 112
      %v7856 = vpop.permute.xlu0 %7855
      %7857 = vrot.lane.b32.xlu0 %v7770, 112
      %v7858 = vpop.permute.xlu0 %7857
      %7859 = vrot.lane.b32.xlu0 %v7771, 112
      %v7860 = vpop.permute.xlu0 %7859
      %7861 = vrot.lane.b32.xlu0 %v7772, 112
      %v7862 = vpop.permute.xlu0 %7861
      %7863 = vrot.lane.b32.xlu0 %v7773, 112
      %v7864 = vpop.permute.xlu0 %7863
      %7865 = vrot.lane.b32.xlu0 %v7774, 112
      %v7866 = vpop.permute.xlu0 %7865
      %7867 = vrot.lane.b32.xlu0 %v7775, 112
      %v7868 = vpop.permute.xlu0 %7867
      %7869 = vrot.lane.b32.xlu0 %v7776, 112
      %v7870 = vpop.permute.xlu0 %7869
      %7871 = vrot.lane.b32.xlu0 %v7777, 112
      %v7872 = vpop.permute.xlu0 %7871
      %7873 = vrot.lane.b32.xlu0 %v7778, 112
      %v7874 = vpop.permute.xlu0 %7873
      %7907 = vst.msk [vmem:[#allocation2 + $0x8] sm:$0xff] %vm3923, %v7812
      %7908 = vst.msk [vmem:[#allocation2 + $0x20] sm:$0xff] %vm3923, %v7814
      %7909 = vst.msk [vmem:[#allocation2 + $0x38] sm:$0xff] %vm3923, %v7816
      %7910 = vst.msk [vmem:[#allocation2 + $0x50] sm:$0xff] %vm3923, %v7818
      %7911 = vst.msk [vmem:[#allocation2 + $0x68] sm:$0xff] %vm3923, %v7820
      %7912 = vst.msk [vmem:[#allocation2 + $0x80] sm:$0xff] %vm3923, %v7822
      %7913 = vst.msk [vmem:[#allocation2 + $0x98] sm:$0xff] %vm3923, %v7824
      %7914 = vst.msk [vmem:[#allocation2 + $0xb0] sm:$0xff] %vm3923, %v7826
      %7915 = vst.msk [vmem:[#allocation2 + $0xc8] sm:$0xff] %vm3923, %v7828
      %7916 = vst.msk [vmem:[#allocation2 + $0xe0] sm:$0xff] %vm3923, %v7830
      %7917 = vst.msk [vmem:[#allocation2 + $0xf8] sm:$0xff] %vm3923, %v7832
      %7918 = vst.msk [vmem:[#allocation2 + $0x110] sm:$0xff] %vm3923, %v7834
      %7919 = vst.msk [vmem:[#allocation2 + $0x128] sm:$0xff] %vm3923, %v7836
      %7920 = vst.msk [vmem:[#allocation2 + $0x140] sm:$0xff] %vm3923, %v7838
      %7921 = vst.msk [vmem:[#allocation2 + $0x158] sm:$0xff] %vm3923, %v7840
      %7922 = vst.msk [vmem:[#allocation2 + $0x170] sm:$0xff] %vm3923, %v7842
      %7923 = vst.msk [vmem:[#allocation2 + $0x188] sm:$0xff] %vm3923, %v7844
      %7924 = vst.msk [vmem:[#allocation2 + $0x1a0] sm:$0xff] %vm3923, %v7846
      %7925 = vst.msk [vmem:[#allocation2 + $0x1b8] sm:$0xff] %vm3923, %v7848
      %7926 = vst.msk [vmem:[#allocation2 + $0x1d0] sm:$0xff] %vm3923, %v7850
      %7927 = vst.msk [vmem:[#allocation2 + $0x1e8] sm:$0xff] %vm3923, %v7852
      %7928 = vst.msk [vmem:[#allocation2 + $0x200] sm:$0xff] %vm3923, %v7854
      %7929 = vst.msk [vmem:[#allocation2 + $0x218] sm:$0xff] %vm3923, %v7856
      %7930 = vst.msk [vmem:[#allocation2 + $0x230] sm:$0xff] %vm3923, %v7858
      %7931 = vst.msk [vmem:[#allocation2 + $0x248] sm:$0xff] %vm3923, %v7860
      %7932 = vst.msk [vmem:[#allocation2 + $0x260] sm:$0xff] %vm3923, %v7862
      %7933 = vst.msk [vmem:[#allocation2 + $0x278] sm:$0xff] %vm3923, %v7864
      %7934 = vst.msk [vmem:[#allocation2 + $0x290] sm:$0xff] %vm3923, %v7866
      %7935 = vst.msk [vmem:[#allocation2 + $0x2a8] sm:$0xff] %vm3923, %v7868
      %7936 = vst.msk [vmem:[#allocation2 + $0x2c0] sm:$0xff] %vm3923, %v7870
      %7937 = vst.msk [vmem:[#allocation2 + $0x2d8] sm:$0xff] %vm3923, %v7872
      %7938 = vst.msk [vmem:[#allocation2 + $0x2f0] sm:$0xff] %vm3923, %v7874
      %v7939 = vld [vmem:[%s7682 + $0x1] sm:$0xff]
      %v7940 = vld [vmem:[%s7682 + $0x11] sm:$0xff]
      %v7941 = vld [vmem:[%s7682 + $0x21] sm:$0xff]
      %v7942 = vld [vmem:[%s7682 + $0x31] sm:$0xff]
      %v7943 = vld [vmem:[%s7682 + $0x41] sm:$0xff]
      %v7944 = vld [vmem:[%s7682 + $0x51] sm:$0xff]
      %v7945 = vld [vmem:[%s7682 + $0x61] sm:$0xff]
      %v7946 = vld [vmem:[%s7682 + $0x71] sm:$0xff]
      %v7947 = vld [vmem:[%s7682 + $0xa1] sm:$0xff]
      %v7948 = vld [vmem:[%s7682 + $0xb1] sm:$0xff]
      %v7949 = vld [vmem:[%s7682 + $0xc1] sm:$0xff]
      %v7950 = vld [vmem:[%s7682 + $0xd1] sm:$0xff]
      %v7951 = vld [vmem:[%s7682 + $0xe1] sm:$0xff]
      %v7952 = vld [vmem:[%s7682 + $0xf1] sm:$0xff]
      %v7953 = vld [vmem:[%s7682 + $0x101] sm:$0xff]
      %v7954 = vld [vmem:[%s7682 + $0x111] sm:$0xff]
      %v7955 = vld [vmem:[%s7682 + $0x141] sm:$0xff]
      %v7956 = vld [vmem:[%s7682 + $0x151] sm:$0xff]
      %v7957 = vld [vmem:[%s7682 + $0x161] sm:$0xff]
      %v7958 = vld [vmem:[%s7682 + $0x171] sm:$0xff]
      %v7959 = vld [vmem:[%s7682 + $0x181] sm:$0xff]
      %v7960 = vld [vmem:[%s7682 + $0x191] sm:$0xff]
      %v7961 = vld [vmem:[%s7682 + $0x1a1] sm:$0xff]
      %v7962 = vld [vmem:[%s7682 + $0x1b1] sm:$0xff]
      %v7963 = vld [vmem:[%s7682 + $0x1e1] sm:$0xff]
      %v7964 = vld [vmem:[%s7682 + $0x1f1] sm:$0xff]
      %v7965 = vld [vmem:[%s7682 + $0x201] sm:$0xff]
      %v7966 = vld [vmem:[%s7682 + $0x211] sm:$0xff]
      %v7967 = vld [vmem:[%s7682 + $0x221] sm:$0xff]
      %v7968 = vld [vmem:[%s7682 + $0x231] sm:$0xff]
      %v7969 = vld [vmem:[%s7682 + $0x241] sm:$0xff]
      %v7970 = vld [vmem:[%s7682 + $0x251] sm:$0xff]
      %v7971 = vld [vmem:[%s7682 + $0x281] sm:$0xff]
      %v7972 = vld [vmem:[%s7682 + $0x291] sm:$0xff]
      %v7973 = vld [vmem:[%s7682 + $0x2a1] sm:$0xff]
      %v7974 = vld [vmem:[%s7682 + $0x2b1] sm:$0xff]
      %v7975 = vld [vmem:[%s7682 + $0x2c1] sm:$0xff]
      %v7976 = vld [vmem:[%s7682 + $0x2d1] sm:$0xff]
      %v7977 = vld [vmem:[%s7682 + $0x2e1] sm:$0xff]
      %v7978 = vld [vmem:[%s7682 + $0x2f1] sm:$0xff]
      %v7979 = vld [vmem:[%s7682 + $0x321] sm:$0xff]
      %v7980 = vld [vmem:[%s7682 + $0x331] sm:$0xff]
      %v7981 = vld [vmem:[%s7682 + $0x341] sm:$0xff]
      %v7982 = vld [vmem:[%s7682 + $0x351] sm:$0xff]
      %v7983 = vld [vmem:[%s7682 + $0x361] sm:$0xff]
      %v7984 = vld [vmem:[%s7682 + $0x371] sm:$0xff]
      %v7985 = vld [vmem:[%s7682 + $0x381] sm:$0xff]
      %v7986 = vld [vmem:[%s7682 + $0x391] sm:$0xff]
      %v7987 = vld [vmem:[%s7682 + $0x3c1] sm:$0xff]
      %v7988 = vld [vmem:[%s7682 + $0x3d1] sm:$0xff]
      %v7989 = vld [vmem:[%s7682 + $0x3e1] sm:$0xff]
      %v7990 = vld [vmem:[%s7682 + $0x3f1] sm:$0xff]
      %v7991 = vld [vmem:[%s7682 + $0x401] sm:$0xff]
      %v7992 = vld [vmem:[%s7682 + $0x411] sm:$0xff]
      %v7993 = vld [vmem:[%s7682 + $0x421] sm:$0xff]
      %v7994 = vld [vmem:[%s7682 + $0x431] sm:$0xff]
      %v7995 = vld [vmem:[%s7682 + $0x461] sm:$0xff]
      %v7996 = vld [vmem:[%s7682 + $0x471] sm:$0xff]
      %v7997 = vld [vmem:[%s7682 + $0x481] sm:$0xff]
      %v7998 = vld [vmem:[%s7682 + $0x491] sm:$0xff]
      %v7999 = vld [vmem:[%s7682 + $0x4a1] sm:$0xff]
      %v8000 = vld [vmem:[%s7682 + $0x4b1] sm:$0xff]
      %v8001 = vld [vmem:[%s7682 + $0x4c1] sm:$0xff]
      %v8002 = vld [vmem:[%s7682 + $0x4d1] sm:$0xff]
      %v8003 = vpack.c.bf16 %v7940, %v7939
      %v8004 = vpack.c.bf16 %v7942, %v7941
      %v8005 = vpack.c.bf16 %v7944, %v7943
      %v8006 = vpack.c.bf16 %v7946, %v7945
      %v8007 = vpack.c.bf16 %v7948, %v7947
      %v8008 = vpack.c.bf16 %v7950, %v7949
      %v8009 = vpack.c.bf16 %v7952, %v7951
      %v8010 = vpack.c.bf16 %v7954, %v7953
      %v8011 = vpack.c.bf16 %v7956, %v7955
      %v8012 = vpack.c.bf16 %v7958, %v7957
      %v8013 = vpack.c.bf16 %v7960, %v7959
      %v8014 = vpack.c.bf16 %v7962, %v7961
      %v8015 = vpack.c.bf16 %v7964, %v7963
      %v8016 = vpack.c.bf16 %v7966, %v7965
      %v8017 = vpack.c.bf16 %v7968, %v7967
      %v8018 = vpack.c.bf16 %v7970, %v7969
      %v8019 = vpack.c.bf16 %v7972, %v7971
      %v8020 = vpack.c.bf16 %v7974, %v7973
      %v8021 = vpack.c.bf16 %v7976, %v7975
      %v8022 = vpack.c.bf16 %v7978, %v7977
      %v8023 = vpack.c.bf16 %v7980, %v7979
      %v8024 = vpack.c.bf16 %v7982, %v7981
      %v8025 = vpack.c.bf16 %v7984, %v7983
      %v8026 = vpack.c.bf16 %v7986, %v7985
      %v8027 = vpack.c.bf16 %v7988, %v7987
      %v8028 = vpack.c.bf16 %v7990, %v7989
      %v8029 = vpack.c.bf16 %v7992, %v7991
      %v8030 = vpack.c.bf16 %v7994, %v7993
      %v8031 = vpack.c.bf16 %v7996, %v7995
      %v8032 = vpack.c.bf16 %v7998, %v7997
      %v8033 = vpack.c.bf16 %v8000, %v7999
      %v8034 = vpack.c.bf16 %v8002, %v8001
      %8067 = vrot.lane.b32.xlu0 %v8003, 120
      %v8068 = vpop.permute.xlu0 %8067
      %8069 = vrot.lane.b32.xlu0 %v8004, 120
      %v8070 = vpop.permute.xlu0 %8069
      %8071 = vrot.lane.b32.xlu0 %v8005, 120
      %v8072 = vpop.permute.xlu0 %8071
      %8073 = vrot.lane.b32.xlu0 %v8006, 120
      %v8074 = vpop.permute.xlu0 %8073
      %8075 = vrot.lane.b32.xlu0 %v8007, 120
      %v8076 = vpop.permute.xlu0 %8075
      %8077 = vrot.lane.b32.xlu0 %v8008, 120
      %v8078 = vpop.permute.xlu0 %8077
      %8079 = vrot.lane.b32.xlu0 %v8009, 120
      %v8080 = vpop.permute.xlu0 %8079
      %8081 = vrot.lane.b32.xlu0 %v8010, 120
      %v8082 = vpop.permute.xlu0 %8081
      %8083 = vrot.lane.b32.xlu0 %v8011, 120
      %v8084 = vpop.permute.xlu0 %8083
      %8085 = vrot.lane.b32.xlu0 %v8012, 120
      %v8086 = vpop.permute.xlu0 %8085
      %8087 = vrot.lane.b32.xlu0 %v8013, 120
      %v8088 = vpop.permute.xlu0 %8087
      %8089 = vrot.lane.b32.xlu0 %v8014, 120
      %v8090 = vpop.permute.xlu0 %8089
      %8091 = vrot.lane.b32.xlu0 %v8015, 120
      %v8092 = vpop.permute.xlu0 %8091
      %8093 = vrot.lane.b32.xlu0 %v8016, 120
      %v8094 = vpop.permute.xlu0 %8093
      %8095 = vrot.lane.b32.xlu0 %v8017, 120
      %v8096 = vpop.permute.xlu0 %8095
      %8097 = vrot.lane.b32.xlu0 %v8018, 120
      %v8098 = vpop.permute.xlu0 %8097
      %8099 = vrot.lane.b32.xlu0 %v8019, 120
      %v8100 = vpop.permute.xlu0 %8099
      %8101 = vrot.lane.b32.xlu0 %v8020, 120
      %v8102 = vpop.permute.xlu0 %8101
      %8103 = vrot.lane.b32.xlu0 %v8021, 120
      %v8104 = vpop.permute.xlu0 %8103
      %8105 = vrot.lane.b32.xlu0 %v8022, 120
      %v8106 = vpop.permute.xlu0 %8105
      %8107 = vrot.lane.b32.xlu0 %v8023, 120
      %v8108 = vpop.permute.xlu0 %8107
      %8109 = vrot.lane.b32.xlu0 %v8024, 120
      %v8110 = vpop.permute.xlu0 %8109
      %8111 = vrot.lane.b32.xlu0 %v8025, 120
      %v8112 = vpop.permute.xlu0 %8111
      %8113 = vrot.lane.b32.xlu0 %v8026, 120
      %v8114 = vpop.permute.xlu0 %8113
      %8115 = vrot.lane.b32.xlu0 %v8027, 120
      %v8116 = vpop.permute.xlu0 %8115
      %8117 = vrot.lane.b32.xlu0 %v8028, 120
      %v8118 = vpop.permute.xlu0 %8117
      %8119 = vrot.lane.b32.xlu0 %v8029, 120
      %v8120 = vpop.permute.xlu0 %8119
      %8121 = vrot.lane.b32.xlu0 %v8030, 120
      %v8122 = vpop.permute.xlu0 %8121
      %8123 = vrot.lane.b32.xlu0 %v8031, 120
      %v8124 = vpop.permute.xlu0 %8123
      %8125 = vrot.lane.b32.xlu0 %v8032, 120
      %v8126 = vpop.permute.xlu0 %8125
      %8127 = vrot.lane.b32.xlu0 %v8033, 120
      %v8128 = vpop.permute.xlu0 %8127
      %8129 = vrot.lane.b32.xlu0 %v8034, 120
      %v8130 = vpop.permute.xlu0 %8129
      %8163 = vst.msk [vmem:[#allocation2 + $0x8] sm:$0xff] %vm4182, %v8068
      %8164 = vst.msk [vmem:[#allocation2 + $0x20] sm:$0xff] %vm4182, %v8070
      %8165 = vst.msk [vmem:[#allocation2 + $0x38] sm:$0xff] %vm4182, %v8072
      %8166 = vst.msk [vmem:[#allocation2 + $0x50] sm:$0xff] %vm4182, %v8074
      %8167 = vst.msk [vmem:[#allocation2 + $0x68] sm:$0xff] %vm4182, %v8076
      %8168 = vst.msk [vmem:[#allocation2 + $0x80] sm:$0xff] %vm4182, %v8078
      %8169 = vst.msk [vmem:[#allocation2 + $0x98] sm:$0xff] %vm4182, %v8080
      %8170 = vst.msk [vmem:[#allocation2 + $0xb0] sm:$0xff] %vm4182, %v8082
      %8171 = vst.msk [vmem:[#allocation2 + $0xc8] sm:$0xff] %vm4182, %v8084
      %8172 = vst.msk [vmem:[#allocation2 + $0xe0] sm:$0xff] %vm4182, %v8086
      %8173 = vst.msk [vmem:[#allocation2 + $0xf8] sm:$0xff] %vm4182, %v8088
      %8174 = vst.msk [vmem:[#allocation2 + $0x110] sm:$0xff] %vm4182, %v8090
      %8175 = vst.msk [vmem:[#allocation2 + $0x128] sm:$0xff] %vm4182, %v8092
      %8176 = vst.msk [vmem:[#allocation2 + $0x140] sm:$0xff] %vm4182, %v8094
      %8177 = vst.msk [vmem:[#allocation2 + $0x158] sm:$0xff] %vm4182, %v8096
      %8178 = vst.msk [vmem:[#allocation2 + $0x170] sm:$0xff] %vm4182, %v8098
      %8179 = vst.msk [vmem:[#allocation2 + $0x188] sm:$0xff] %vm4182, %v8100
      %8180 = vst.msk [vmem:[#allocation2 + $0x1a0] sm:$0xff] %vm4182, %v8102
      %8181 = vst.msk [vmem:[#allocation2 + $0x1b8] sm:$0xff] %vm4182, %v8104
      %8182 = vst.msk [vmem:[#allocation2 + $0x1d0] sm:$0xff] %vm4182, %v8106
      %8183 = vst.msk [vmem:[#allocation2 + $0x1e8] sm:$0xff] %vm4182, %v8108
      %8184 = vst.msk [vmem:[#allocation2 + $0x200] sm:$0xff] %vm4182, %v8110
      %8185 = vst.msk [vmem:[#allocation2 + $0x218] sm:$0xff] %vm4182, %v8112
      %8186 = vst.msk [vmem:[#allocation2 + $0x230] sm:$0xff] %vm4182, %v8114
      %8187 = vst.msk [vmem:[#allocation2 + $0x248] sm:$0xff] %vm4182, %v8116
      %8188 = vst.msk [vmem:[#allocation2 + $0x260] sm:$0xff] %vm4182, %v8118
      %8189 = vst.msk [vmem:[#allocation2 + $0x278] sm:$0xff] %vm4182, %v8120
      %8190 = vst.msk [vmem:[#allocation2 + $0x290] sm:$0xff] %vm4182, %v8122
      %8191 = vst.msk [vmem:[#allocation2 + $0x2a8] sm:$0xff] %vm4182, %v8124
      %8192 = vst.msk [vmem:[#allocation2 + $0x2c0] sm:$0xff] %vm4182, %v8126
      %8193 = vst.msk [vmem:[#allocation2 + $0x2d8] sm:$0xff] %vm4182, %v8128
      %8194 = vst.msk [vmem:[#allocation2 + $0x2f0] sm:$0xff] %vm4182, %v8130
      %v8195 = vld [vmem:[%s7682 + $0x2] sm:$0xff]
      %v8196 = vld [vmem:[%s7682 + $0x12] sm:$0xff]
      %v8197 = vld [vmem:[%s7682 + $0x22] sm:$0xff]
      %v8198 = vld [vmem:[%s7682 + $0x32] sm:$0xff]
      %v8199 = vld [vmem:[%s7682 + $0x42] sm:$0xff]
      %v8200 = vld [vmem:[%s7682 + $0x52] sm:$0xff]
      %v8201 = vld [vmem:[%s7682 + $0x62] sm:$0xff]
      %v8202 = vld [vmem:[%s7682 + $0x72] sm:$0xff]
      %v8203 = vld [vmem:[%s7682 + $0xa2] sm:$0xff]
      %v8204 = vld [vmem:[%s7682 + $0xb2] sm:$0xff]
      %v8205 = vld [vmem:[%s7682 + $0xc2] sm:$0xff]
      %v8206 = vld [vmem:[%s7682 + $0xd2] sm:$0xff]
      %v8207 = vld [vmem:[%s7682 + $0xe2] sm:$0xff]
      %v8208 = vld [vmem:[%s7682 + $0xf2] sm:$0xff]
      %v8209 = vld [vmem:[%s7682 + $0x102] sm:$0xff]
      %v8210 = vld [vmem:[%s7682 + $0x112] sm:$0xff]
      %v8211 = vld [vmem:[%s7682 + $0x142] sm:$0xff]
      %v8212 = vld [vmem:[%s7682 + $0x152] sm:$0xff]
      %v8213 = vld [vmem:[%s7682 + $0x162] sm:$0xff]
      %v8214 = vld [vmem:[%s7682 + $0x172] sm:$0xff]
      %v8215 = vld [vmem:[%s7682 + $0x182] sm:$0xff]
      %v8216 = vld [vmem:[%s7682 + $0x192] sm:$0xff]
      %v8217 = vld [vmem:[%s7682 + $0x1a2] sm:$0xff]
      %v8218 = vld [vmem:[%s7682 + $0x1b2] sm:$0xff]
      %v8219 = vld [vmem:[%s7682 + $0x1e2] sm:$0xff]
      %v8220 = vld [vmem:[%s7682 + $0x1f2] sm:$0xff]
      %v8221 = vld [vmem:[%s7682 + $0x202] sm:$0xff]
      %v8222 = vld [vmem:[%s7682 + $0x212] sm:$0xff]
      %v8223 = vld [vmem:[%s7682 + $0x222] sm:$0xff]
      %v8224 = vld [vmem:[%s7682 + $0x232] sm:$0xff]
      %v8225 = vld [vmem:[%s7682 + $0x242] sm:$0xff]
      %v8226 = vld [vmem:[%s7682 + $0x252] sm:$0xff]
      %v8227 = vld [vmem:[%s7682 + $0x282] sm:$0xff]
      %v8228 = vld [vmem:[%s7682 + $0x292] sm:$0xff]
      %v8229 = vld [vmem:[%s7682 + $0x2a2] sm:$0xff]
      %v8230 = vld [vmem:[%s7682 + $0x2b2] sm:$0xff]
      %v8231 = vld [vmem:[%s7682 + $0x2c2] sm:$0xff]
      %v8232 = vld [vmem:[%s7682 + $0x2d2] sm:$0xff]
      %v8233 = vld [vmem:[%s7682 + $0x2e2] sm:$0xff]
      %v8234 = vld [vmem:[%s7682 + $0x2f2] sm:$0xff]
      %v8235 = vld [vmem:[%s7682 + $0x322] sm:$0xff]
      %v8236 = vld [vmem:[%s7682 + $0x332] sm:$0xff]
      %v8237 = vld [vmem:[%s7682 + $0x342] sm:$0xff]
      %v8238 = vld [vmem:[%s7682 + $0x352] sm:$0xff]
      %v8239 = vld [vmem:[%s7682 + $0x362] sm:$0xff]
      %v8240 = vld [vmem:[%s7682 + $0x372] sm:$0xff]
      %v8241 = vld [vmem:[%s7682 + $0x382] sm:$0xff]
      %v8242 = vld [vmem:[%s7682 + $0x392] sm:$0xff]
      %v8243 = vld [vmem:[%s7682 + $0x3c2] sm:$0xff]
      %v8244 = vld [vmem:[%s7682 + $0x3d2] sm:$0xff]
      %v8245 = vld [vmem:[%s7682 + $0x3e2] sm:$0xff]
      %v8246 = vld [vmem:[%s7682 + $0x3f2] sm:$0xff]
      %v8247 = vld [vmem:[%s7682 + $0x402] sm:$0xff]
      %v8248 = vld [vmem:[%s7682 + $0x412] sm:$0xff]
      %v8249 = vld [vmem:[%s7682 + $0x422] sm:$0xff]
      %v8250 = vld [vmem:[%s7682 + $0x432] sm:$0xff]
      %v8251 = vld [vmem:[%s7682 + $0x462] sm:$0xff]
      %v8252 = vld [vmem:[%s7682 + $0x472] sm:$0xff]
      %v8253 = vld [vmem:[%s7682 + $0x482] sm:$0xff]
      %v8254 = vld [vmem:[%s7682 + $0x492] sm:$0xff]
      %v8255 = vld [vmem:[%s7682 + $0x4a2] sm:$0xff]
      %v8256 = vld [vmem:[%s7682 + $0x4b2] sm:$0xff]
      %v8257 = vld [vmem:[%s7682 + $0x4c2] sm:$0xff]
      %v8258 = vld [vmem:[%s7682 + $0x4d2] sm:$0xff]
      %v8259 = vpack.c.bf16 %v8196, %v8195
      %v8260 = vpack.c.bf16 %v8198, %v8197
      %v8261 = vpack.c.bf16 %v8200, %v8199
      %v8262 = vpack.c.bf16 %v8202, %v8201
      %v8263 = vpack.c.bf16 %v8204, %v8203
      %v8264 = vpack.c.bf16 %v8206, %v8205
      %v8265 = vpack.c.bf16 %v8208, %v8207
      %v8266 = vpack.c.bf16 %v8210, %v8209
      %v8267 = vpack.c.bf16 %v8212, %v8211
      %v8268 = vpack.c.bf16 %v8214, %v8213
      %v8269 = vpack.c.bf16 %v8216, %v8215
      %v8270 = vpack.c.bf16 %v8218, %v8217
      %v8271 = vpack.c.bf16 %v8220, %v8219
      %v8272 = vpack.c.bf16 %v8222, %v8221
      %v8273 = vpack.c.bf16 %v8224, %v8223
      %v8274 = vpack.c.bf16 %v8226, %v8225
      %v8275 = vpack.c.bf16 %v8228, %v8227
      %v8276 = vpack.c.bf16 %v8230, %v8229
      %v8277 = vpack.c.bf16 %v8232, %v8231
      %v8278 = vpack.c.bf16 %v8234, %v8233
      %v8279 = vpack.c.bf16 %v8236, %v8235
      %v8280 = vpack.c.bf16 %v8238, %v8237
      %v8281 = vpack.c.bf16 %v8240, %v8239
      %v8282 = vpack.c.bf16 %v8242, %v8241
      %v8283 = vpack.c.bf16 %v8244, %v8243
      %v8284 = vpack.c.bf16 %v8246, %v8245
      %v8285 = vpack.c.bf16 %v8248, %v8247
      %v8286 = vpack.c.bf16 %v8250, %v8249
      %v8287 = vpack.c.bf16 %v8252, %v8251
      %v8288 = vpack.c.bf16 %v8254, %v8253
      %v8289 = vpack.c.bf16 %v8256, %v8255
      %v8290 = vpack.c.bf16 %v8258, %v8257
      %8291 = vst.msk [vmem:[#allocation2 + $0x10] sm:$0xff] %vm316, %v8259
      %8292 = vst.msk [vmem:[#allocation2 + $0x28] sm:$0xff] %vm316, %v8260
      %8293 = vst.msk [vmem:[#allocation2 + $0x40] sm:$0xff] %vm316, %v8261
      %8294 = vst.msk [vmem:[#allocation2 + $0x58] sm:$0xff] %vm316, %v8262
      %8295 = vst.msk [vmem:[#allocation2 + $0x70] sm:$0xff] %vm316, %v8263
      %8296 = vst.msk [vmem:[#allocation2 + $0x88] sm:$0xff] %vm316, %v8264
      %8297 = vst.msk [vmem:[#allocation2 + $0xa0] sm:$0xff] %vm316, %v8265
      %8298 = vst.msk [vmem:[#allocation2 + $0xb8] sm:$0xff] %vm316, %v8266
      %8299 = vst.msk [vmem:[#allocation2 + $0xd0] sm:$0xff] %vm316, %v8267
      %8300 = vst.msk [vmem:[#allocation2 + $0xe8] sm:$0xff] %vm316, %v8268
      %8301 = vst.msk [vmem:[#allocation2 + $0x100] sm:$0xff] %vm316, %v8269
      %8302 = vst.msk [vmem:[#allocation2 + $0x118] sm:$0xff] %vm316, %v8270
      %8303 = vst.msk [vmem:[#allocation2 + $0x130] sm:$0xff] %vm316, %v8271
      %8304 = vst.msk [vmem:[#allocation2 + $0x148] sm:$0xff] %vm316, %v8272
      %8305 = vst.msk [vmem:[#allocation2 + $0x160] sm:$0xff] %vm316, %v8273
      %8306 = vst.msk [vmem:[#allocation2 + $0x178] sm:$0xff] %vm316, %v8274
      %8307 = vst.msk [vmem:[#allocation2 + $0x190] sm:$0xff] %vm316, %v8275
      %8308 = vst.msk [vmem:[#allocation2 + $0x1a8] sm:$0xff] %vm316, %v8276
      %8309 = vst.msk [vmem:[#allocation2 + $0x1c0] sm:$0xff] %vm316, %v8277
      %8310 = vst.msk [vmem:[#allocation2 + $0x1d8] sm:$0xff] %vm316, %v8278
      %8311 = vst.msk [vmem:[#allocation2 + $0x1f0] sm:$0xff] %vm316, %v8279
      %8312 = vst.msk [vmem:[#allocation2 + $0x208] sm:$0xff] %vm316, %v8280
      %8313 = vst.msk [vmem:[#allocation2 + $0x220] sm:$0xff] %vm316, %v8281
      %8314 = vst.msk [vmem:[#allocation2 + $0x238] sm:$0xff] %vm316, %v8282
      %8315 = vst.msk [vmem:[#allocation2 + $0x250] sm:$0xff] %vm316, %v8283
      %8316 = vst.msk [vmem:[#allocation2 + $0x268] sm:$0xff] %vm316, %v8284
      %8317 = vst.msk [vmem:[#allocation2 + $0x280] sm:$0xff] %vm316, %v8285
      %8318 = vst.msk [vmem:[#allocation2 + $0x298] sm:$0xff] %vm316, %v8286
      %8319 = vst.msk [vmem:[#allocation2 + $0x2b0] sm:$0xff] %vm316, %v8287
      %8320 = vst.msk [vmem:[#allocation2 + $0x2c8] sm:$0xff] %vm316, %v8288
      %8321 = vst.msk [vmem:[#allocation2 + $0x2e0] sm:$0xff] %vm316, %v8289
      %8322 = vst.msk [vmem:[#allocation2 + $0x2f8] sm:$0xff] %vm316, %v8290
      %s8323 = sadd.s32 32, %s6911
      %s8324 = scalar_lea.vmem %s207, %s8323
      %v8325 = vld [vmem:[%s8324] sm:$0xff]
      %v8326 = vld [vmem:[%s8324 + $0x10] sm:$0xff]
      %v8327 = vld [vmem:[%s8324 + $0x20] sm:$0xff]
      %v8328 = vld [vmem:[%s8324 + $0x30] sm:$0xff]
      %v8329 = vld [vmem:[%s8324 + $0x40] sm:$0xff]
      %v8330 = vld [vmem:[%s8324 + $0x50] sm:$0xff]
      %v8331 = vld [vmem:[%s8324 + $0x60] sm:$0xff]
      %v8332 = vld [vmem:[%s8324 + $0x70] sm:$0xff]
      %v8333 = vld [vmem:[%s8324 + $0xa0] sm:$0xff]
      %v8334 = vld [vmem:[%s8324 + $0xb0] sm:$0xff]
      %v8335 = vld [vmem:[%s8324 + $0xc0] sm:$0xff]
      %v8336 = vld [vmem:[%s8324 + $0xd0] sm:$0xff]
      %v8337 = vld [vmem:[%s8324 + $0xe0] sm:$0xff]
      %v8338 = vld [vmem:[%s8324 + $0xf0] sm:$0xff]
      %v8339 = vld [vmem:[%s8324 + $0x100] sm:$0xff]
      %v8340 = vld [vmem:[%s8324 + $0x110] sm:$0xff]
      %v8341 = vld [vmem:[%s8324 + $0x140] sm:$0xff]
      %v8342 = vld [vmem:[%s8324 + $0x150] sm:$0xff]
      %v8343 = vld [vmem:[%s8324 + $0x160] sm:$0xff]
      %v8344 = vld [vmem:[%s8324 + $0x170] sm:$0xff]
      %v8345 = vld [vmem:[%s8324 + $0x180] sm:$0xff]
      %v8346 = vld [vmem:[%s8324 + $0x190] sm:$0xff]
      %v8347 = vld [vmem:[%s8324 + $0x1a0] sm:$0xff]
      %v8348 = vld [vmem:[%s8324 + $0x1b0] sm:$0xff]
      %v8349 = vld [vmem:[%s8324 + $0x1e0] sm:$0xff]
      %v8350 = vld [vmem:[%s8324 + $0x1f0] sm:$0xff]
      %v8351 = vld [vmem:[%s8324 + $0x200] sm:$0xff]
      %v8352 = vld [vmem:[%s8324 + $0x210] sm:$0xff]
      %v8353 = vld [vmem:[%s8324 + $0x220] sm:$0xff]
      %v8354 = vld [vmem:[%s8324 + $0x230] sm:$0xff]
      %v8355 = vld [vmem:[%s8324 + $0x240] sm:$0xff]
      %v8356 = vld [vmem:[%s8324 + $0x250] sm:$0xff]
      %v8357 = vld [vmem:[%s8324 + $0x280] sm:$0xff]
      %v8358 = vld [vmem:[%s8324 + $0x290] sm:$0xff]
      %v8359 = vld [vmem:[%s8324 + $0x2a0] sm:$0xff]
      %v8360 = vld [vmem:[%s8324 + $0x2b0] sm:$0xff]
      %v8361 = vld [vmem:[%s8324 + $0x2c0] sm:$0xff]
      %v8362 = vld [vmem:[%s8324 + $0x2d0] sm:$0xff]
      %v8363 = vld [vmem:[%s8324 + $0x2e0] sm:$0xff]
      %v8364 = vld [vmem:[%s8324 + $0x2f0] sm:$0xff]
      %v8365 = vld [vmem:[%s8324 + $0x320] sm:$0xff]
      %v8366 = vld [vmem:[%s8324 + $0x330] sm:$0xff]
      %v8367 = vld [vmem:[%s8324 + $0x340] sm:$0xff]
      %v8368 = vld [vmem:[%s8324 + $0x350] sm:$0xff]
      %v8369 = vld [vmem:[%s8324 + $0x360] sm:$0xff]
      %v8370 = vld [vmem:[%s8324 + $0x370] sm:$0xff]
      %v8371 = vld [vmem:[%s8324 + $0x380] sm:$0xff]
      %v8372 = vld [vmem:[%s8324 + $0x390] sm:$0xff]
      %v8373 = vld [vmem:[%s8324 + $0x3c0] sm:$0xff]
      %v8374 = vld [vmem:[%s8324 + $0x3d0] sm:$0xff]
      %v8375 = vld [vmem:[%s8324 + $0x3e0] sm:$0xff]
      %v8376 = vld [vmem:[%s8324 + $0x3f0] sm:$0xff]
      %v8377 = vld [vmem:[%s8324 + $0x400] sm:$0xff]
      %v8378 = vld [vmem:[%s8324 + $0x410] sm:$0xff]
      %v8379 = vld [vmem:[%s8324 + $0x420] sm:$0xff]
      %v8380 = vld [vmem:[%s8324 + $0x430] sm:$0xff]
      %v8381 = vld [vmem:[%s8324 + $0x460] sm:$0xff]
      %v8382 = vld [vmem:[%s8324 + $0x470] sm:$0xff]
      %v8383 = vld [vmem:[%s8324 + $0x480] sm:$0xff]
      %v8384 = vld [vmem:[%s8324 + $0x490] sm:$0xff]
      %v8385 = vld [vmem:[%s8324 + $0x4a0] sm:$0xff]
      %v8386 = vld [vmem:[%s8324 + $0x4b0] sm:$0xff]
      %v8387 = vld [vmem:[%s8324 + $0x4c0] sm:$0xff]
      %v8388 = vld [vmem:[%s8324 + $0x4d0] sm:$0xff]
      %v8389 = vpack.c.bf16 %v8326, %v8325
      %v8390 = vpack.c.bf16 %v8328, %v8327
      %v8391 = vpack.c.bf16 %v8330, %v8329
      %v8392 = vpack.c.bf16 %v8332, %v8331
      %v8393 = vpack.c.bf16 %v8334, %v8333
      %v8394 = vpack.c.bf16 %v8336, %v8335
      %v8395 = vpack.c.bf16 %v8338, %v8337
      %v8396 = vpack.c.bf16 %v8340, %v8339
      %v8397 = vpack.c.bf16 %v8342, %v8341
      %v8398 = vpack.c.bf16 %v8344, %v8343
      %v8399 = vpack.c.bf16 %v8346, %v8345
      %v8400 = vpack.c.bf16 %v8348, %v8347
      %v8401 = vpack.c.bf16 %v8350, %v8349
      %v8402 = vpack.c.bf16 %v8352, %v8351
      %v8403 = vpack.c.bf16 %v8354, %v8353
      %v8404 = vpack.c.bf16 %v8356, %v8355
      %v8405 = vpack.c.bf16 %v8358, %v8357
      %v8406 = vpack.c.bf16 %v8360, %v8359
      %v8407 = vpack.c.bf16 %v8362, %v8361
      %v8408 = vpack.c.bf16 %v8364, %v8363
      %v8409 = vpack.c.bf16 %v8366, %v8365
      %v8410 = vpack.c.bf16 %v8368, %v8367
      %v8411 = vpack.c.bf16 %v8370, %v8369
      %v8412 = vpack.c.bf16 %v8372, %v8371
      %v8413 = vpack.c.bf16 %v8374, %v8373
      %v8414 = vpack.c.bf16 %v8376, %v8375
      %v8415 = vpack.c.bf16 %v8378, %v8377
      %v8416 = vpack.c.bf16 %v8380, %v8379
      %v8417 = vpack.c.bf16 %v8382, %v8381
      %v8418 = vpack.c.bf16 %v8384, %v8383
      %v8419 = vpack.c.bf16 %v8386, %v8385
      %v8420 = vpack.c.bf16 %v8388, %v8387
      %8453 = vrot.lane.b32.xlu0 %v8389, 8
      %v8454 = vpop.permute.xlu0 %8453
      %8455 = vrot.lane.b32.xlu0 %v8390, 8
      %v8456 = vpop.permute.xlu0 %8455
      %8457 = vrot.lane.b32.xlu0 %v8391, 8
      %v8458 = vpop.permute.xlu0 %8457
      %8459 = vrot.lane.b32.xlu0 %v8392, 8
      %v8460 = vpop.permute.xlu0 %8459
      %8461 = vrot.lane.b32.xlu0 %v8393, 8
      %v8462 = vpop.permute.xlu0 %8461
      %8463 = vrot.lane.b32.xlu0 %v8394, 8
      %v8464 = vpop.permute.xlu0 %8463
      %8465 = vrot.lane.b32.xlu0 %v8395, 8
      %v8466 = vpop.permute.xlu0 %8465
      %8467 = vrot.lane.b32.xlu0 %v8396, 8
      %v8468 = vpop.permute.xlu0 %8467
      %8469 = vrot.lane.b32.xlu0 %v8397, 8
      %v8470 = vpop.permute.xlu0 %8469
      %8471 = vrot.lane.b32.xlu0 %v8398, 8
      %v8472 = vpop.permute.xlu0 %8471
      %8473 = vrot.lane.b32.xlu0 %v8399, 8
      %v8474 = vpop.permute.xlu0 %8473
      %8475 = vrot.lane.b32.xlu0 %v8400, 8
      %v8476 = vpop.permute.xlu0 %8475
      %8477 = vrot.lane.b32.xlu0 %v8401, 8
      %v8478 = vpop.permute.xlu0 %8477
      %8479 = vrot.lane.b32.xlu0 %v8402, 8
      %v8480 = vpop.permute.xlu0 %8479
      %8481 = vrot.lane.b32.xlu0 %v8403, 8
      %v8482 = vpop.permute.xlu0 %8481
      %8483 = vrot.lane.b32.xlu0 %v8404, 8
      %v8484 = vpop.permute.xlu0 %8483
      %8485 = vrot.lane.b32.xlu0 %v8405, 8
      %v8486 = vpop.permute.xlu0 %8485
      %8487 = vrot.lane.b32.xlu0 %v8406, 8
      %v8488 = vpop.permute.xlu0 %8487
      %8489 = vrot.lane.b32.xlu0 %v8407, 8
      %v8490 = vpop.permute.xlu0 %8489
      %8491 = vrot.lane.b32.xlu0 %v8408, 8
      %v8492 = vpop.permute.xlu0 %8491
      %8493 = vrot.lane.b32.xlu0 %v8409, 8
      %v8494 = vpop.permute.xlu0 %8493
      %8495 = vrot.lane.b32.xlu0 %v8410, 8
      %v8496 = vpop.permute.xlu0 %8495
      %8497 = vrot.lane.b32.xlu0 %v8411, 8
      %v8498 = vpop.permute.xlu0 %8497
      %8499 = vrot.lane.b32.xlu0 %v8412, 8
      %v8500 = vpop.permute.xlu0 %8499
      %8501 = vrot.lane.b32.xlu0 %v8413, 8
      %v8502 = vpop.permute.xlu0 %8501
      %8503 = vrot.lane.b32.xlu0 %v8414, 8
      %v8504 = vpop.permute.xlu0 %8503
      %8505 = vrot.lane.b32.xlu0 %v8415, 8
      %v8506 = vpop.permute.xlu0 %8505
      %8507 = vrot.lane.b32.xlu0 %v8416, 8
      %v8508 = vpop.permute.xlu0 %8507
      %8509 = vrot.lane.b32.xlu0 %v8417, 8
      %v8510 = vpop.permute.xlu0 %8509
      %8511 = vrot.lane.b32.xlu0 %v8418, 8
      %v8512 = vpop.permute.xlu0 %8511
      %8513 = vrot.lane.b32.xlu0 %v8419, 8
      %v8514 = vpop.permute.xlu0 %8513
      %8515 = vrot.lane.b32.xlu0 %v8420, 8
      %v8516 = vpop.permute.xlu0 %8515
      %8549 = vst.msk [vmem:[#allocation2 + $0x10] sm:$0xff] %vm573, %v8454
      %8550 = vst.msk [vmem:[#allocation2 + $0x28] sm:$0xff] %vm573, %v8456
      %8551 = vst.msk [vmem:[#allocation2 + $0x40] sm:$0xff] %vm573, %v8458
      %8552 = vst.msk [vmem:[#allocation2 + $0x58] sm:$0xff] %vm573, %v8460
      %8553 = vst.msk [vmem:[#allocation2 + $0x70] sm:$0xff] %vm573, %v8462
      %8554 = vst.msk [vmem:[#allocation2 + $0x88] sm:$0xff] %vm573, %v8464
      %8555 = vst.msk [vmem:[#allocation2 + $0xa0] sm:$0xff] %vm573, %v8466
      %8556 = vst.msk [vmem:[#allocation2 + $0xb8] sm:$0xff] %vm573, %v8468
      %8557 = vst.msk [vmem:[#allocation2 + $0xd0] sm:$0xff] %vm573, %v8470
      %8558 = vst.msk [vmem:[#allocation2 + $0xe8] sm:$0xff] %vm573, %v8472
      %8559 = vst.msk [vmem:[#allocation2 + $0x100] sm:$0xff] %vm573, %v8474
      %8560 = vst.msk [vmem:[#allocation2 + $0x118] sm:$0xff] %vm573, %v8476
      %8561 = vst.msk [vmem:[#allocation2 + $0x130] sm:$0xff] %vm573, %v8478
      %8562 = vst.msk [vmem:[#allocation2 + $0x148] sm:$0xff] %vm573, %v8480
      %8563 = vst.msk [vmem:[#allocation2 + $0x160] sm:$0xff] %vm573, %v8482
      %8564 = vst.msk [vmem:[#allocation2 + $0x178] sm:$0xff] %vm573, %v8484
      %8565 = vst.msk [vmem:[#allocation2 + $0x190] sm:$0xff] %vm573, %v8486
      %8566 = vst.msk [vmem:[#allocation2 + $0x1a8] sm:$0xff] %vm573, %v8488
      %8567 = vst.msk [vmem:[#allocation2 + $0x1c0] sm:$0xff] %vm573, %v8490
      %8568 = vst.msk [vmem:[#allocation2 + $0x1d8] sm:$0xff] %vm573, %v8492
      %8569 = vst.msk [vmem:[#allocation2 + $0x1f0] sm:$0xff] %vm573, %v8494
      %8570 = vst.msk [vmem:[#allocation2 + $0x208] sm:$0xff] %vm573, %v8496
      %8571 = vst.msk [vmem:[#allocation2 + $0x220] sm:$0xff] %vm573, %v8498
      %8572 = vst.msk [vmem:[#allocation2 + $0x238] sm:$0xff] %vm573, %v8500
      %8573 = vst.msk [vmem:[#allocation2 + $0x250] sm:$0xff] %vm573, %v8502
      %8574 = vst.msk [vmem:[#allocation2 + $0x268] sm:$0xff] %vm573, %v8504
      %8575 = vst.msk [vmem:[#allocation2 + $0x280] sm:$0xff] %vm573, %v8506
      %8576 = vst.msk [vmem:[#allocation2 + $0x298] sm:$0xff] %vm573, %v8508
      %8577 = vst.msk [vmem:[#allocation2 + $0x2b0] sm:$0xff] %vm573, %v8510
      %8578 = vst.msk [vmem:[#allocation2 + $0x2c8] sm:$0xff] %vm573, %v8512
      %8579 = vst.msk [vmem:[#allocation2 + $0x2e0] sm:$0xff] %vm573, %v8514
      %8580 = vst.msk [vmem:[#allocation2 + $0x2f8] sm:$0xff] %vm573, %v8516
      %v8581 = vld [vmem:[%s8324 + $0x1] sm:$0xff]
      %v8582 = vld [vmem:[%s8324 + $0x11] sm:$0xff]
      %v8583 = vld [vmem:[%s8324 + $0x21] sm:$0xff]
      %v8584 = vld [vmem:[%s8324 + $0x31] sm:$0xff]
      %v8585 = vld [vmem:[%s8324 + $0x41] sm:$0xff]
      %v8586 = vld [vmem:[%s8324 + $0x51] sm:$0xff]
      %v8587 = vld [vmem:[%s8324 + $0x61] sm:$0xff]
      %v8588 = vld [vmem:[%s8324 + $0x71] sm:$0xff]
      %v8589 = vld [vmem:[%s8324 + $0xa1] sm:$0xff]
      %v8590 = vld [vmem:[%s8324 + $0xb1] sm:$0xff]
      %v8591 = vld [vmem:[%s8324 + $0xc1] sm:$0xff]
      %v8592 = vld [vmem:[%s8324 + $0xd1] sm:$0xff]
      %v8593 = vld [vmem:[%s8324 + $0xe1] sm:$0xff]
      %v8594 = vld [vmem:[%s8324 + $0xf1] sm:$0xff]
      %v8595 = vld [vmem:[%s8324 + $0x101] sm:$0xff]
      %v8596 = vld [vmem:[%s8324 + $0x111] sm:$0xff]
      %v8597 = vld [vmem:[%s8324 + $0x141] sm:$0xff]
      %v8598 = vld [vmem:[%s8324 + $0x151] sm:$0xff]
      %v8599 = vld [vmem:[%s8324 + $0x161] sm:$0xff]
      %v8600 = vld [vmem:[%s8324 + $0x171] sm:$0xff]
      %v8601 = vld [vmem:[%s8324 + $0x181] sm:$0xff]
      %v8602 = vld [vmem:[%s8324 + $0x191] sm:$0xff]
      %v8603 = vld [vmem:[%s8324 + $0x1a1] sm:$0xff]
      %v8604 = vld [vmem:[%s8324 + $0x1b1] sm:$0xff]
      %v8605 = vld [vmem:[%s8324 + $0x1e1] sm:$0xff]
      %v8606 = vld [vmem:[%s8324 + $0x1f1] sm:$0xff]
      %v8607 = vld [vmem:[%s8324 + $0x201] sm:$0xff]
      %v8608 = vld [vmem:[%s8324 + $0x211] sm:$0xff]
      %v8609 = vld [vmem:[%s8324 + $0x221] sm:$0xff]
      %v8610 = vld [vmem:[%s8324 + $0x231] sm:$0xff]
      %v8611 = vld [vmem:[%s8324 + $0x241] sm:$0xff]
      %v8612 = vld [vmem:[%s8324 + $0x251] sm:$0xff]
      %v8613 = vld [vmem:[%s8324 + $0x281] sm:$0xff]
      %v8614 = vld [vmem:[%s8324 + $0x291] sm:$0xff]
      %v8615 = vld [vmem:[%s8324 + $0x2a1] sm:$0xff]
      %v8616 = vld [vmem:[%s8324 + $0x2b1] sm:$0xff]
      %v8617 = vld [vmem:[%s8324 + $0x2c1] sm:$0xff]
      %v8618 = vld [vmem:[%s8324 + $0x2d1] sm:$0xff]
      %v8619 = vld [vmem:[%s8324 + $0x2e1] sm:$0xff]
      %v8620 = vld [vmem:[%s8324 + $0x2f1] sm:$0xff]
      %v8621 = vld [vmem:[%s8324 + $0x321] sm:$0xff]
      %v8622 = vld [vmem:[%s8324 + $0x331] sm:$0xff]
      %v8623 = vld [vmem:[%s8324 + $0x341] sm:$0xff]
      %v8624 = vld [vmem:[%s8324 + $0x351] sm:$0xff]
      %v8625 = vld [vmem:[%s8324 + $0x361] sm:$0xff]
      %v8626 = vld [vmem:[%s8324 + $0x371] sm:$0xff]
      %v8627 = vld [vmem:[%s8324 + $0x381] sm:$0xff]
      %v8628 = vld [vmem:[%s8324 + $0x391] sm:$0xff]
      %v8629 = vld [vmem:[%s8324 + $0x3c1] sm:$0xff]
      %v8630 = vld [vmem:[%s8324 + $0x3d1] sm:$0xff]
      %v8631 = vld [vmem:[%s8324 + $0x3e1] sm:$0xff]
      %v8632 = vld [vmem:[%s8324 + $0x3f1] sm:$0xff]
      %v8633 = vld [vmem:[%s8324 + $0x401] sm:$0xff]
      %v8634 = vld [vmem:[%s8324 + $0x411] sm:$0xff]
      %v8635 = vld [vmem:[%s8324 + $0x421] sm:$0xff]
      %v8636 = vld [vmem:[%s8324 + $0x431] sm:$0xff]
      %v8637 = vld [vmem:[%s8324 + $0x461] sm:$0xff]
      %v8638 = vld [vmem:[%s8324 + $0x471] sm:$0xff]
      %v8639 = vld [vmem:[%s8324 + $0x481] sm:$0xff]
      %v8640 = vld [vmem:[%s8324 + $0x491] sm:$0xff]
      %v8641 = vld [vmem:[%s8324 + $0x4a1] sm:$0xff]
      %v8642 = vld [vmem:[%s8324 + $0x4b1] sm:$0xff]
      %v8643 = vld [vmem:[%s8324 + $0x4c1] sm:$0xff]
      %v8644 = vld [vmem:[%s8324 + $0x4d1] sm:$0xff]
      %v8645 = vpack.c.bf16 %v8582, %v8581
      %v8646 = vpack.c.bf16 %v8584, %v8583
      %v8647 = vpack.c.bf16 %v8586, %v8585
      %v8648 = vpack.c.bf16 %v8588, %v8587
      %v8649 = vpack.c.bf16 %v8590, %v8589
      %v8650 = vpack.c.bf16 %v8592, %v8591
      %v8651 = vpack.c.bf16 %v8594, %v8593
      %v8652 = vpack.c.bf16 %v8596, %v8595
      %v8653 = vpack.c.bf16 %v8598, %v8597
      %v8654 = vpack.c.bf16 %v8600, %v8599
      %v8655 = vpack.c.bf16 %v8602, %v8601
      %v8656 = vpack.c.bf16 %v8604, %v8603
      %v8657 = vpack.c.bf16 %v8606, %v8605
      %v8658 = vpack.c.bf16 %v8608, %v8607
      %v8659 = vpack.c.bf16 %v8610, %v8609
      %v8660 = vpack.c.bf16 %v8612, %v8611
      %v8661 = vpack.c.bf16 %v8614, %v8613
      %v8662 = vpack.c.bf16 %v8616, %v8615
      %v8663 = vpack.c.bf16 %v8618, %v8617
      %v8664 = vpack.c.bf16 %v8620, %v8619
      %v8665 = vpack.c.bf16 %v8622, %v8621
      %v8666 = vpack.c.bf16 %v8624, %v8623
      %v8667 = vpack.c.bf16 %v8626, %v8625
      %v8668 = vpack.c.bf16 %v8628, %v8627
      %v8669 = vpack.c.bf16 %v8630, %v8629
      %v8670 = vpack.c.bf16 %v8632, %v8631
      %v8671 = vpack.c.bf16 %v8634, %v8633
      %v8672 = vpack.c.bf16 %v8636, %v8635
      %v8673 = vpack.c.bf16 %v8638, %v8637
      %v8674 = vpack.c.bf16 %v8640, %v8639
      %v8675 = vpack.c.bf16 %v8642, %v8641
      %v8676 = vpack.c.bf16 %v8644, %v8643
      %8709 = vrot.lane.b32.xlu0 %v8645, 16
      %v8710 = vpop.permute.xlu0 %8709
      %8711 = vrot.lane.b32.xlu0 %v8646, 16
      %v8712 = vpop.permute.xlu0 %8711
      %8713 = vrot.lane.b32.xlu0 %v8647, 16
      %v8714 = vpop.permute.xlu0 %8713
      %8715 = vrot.lane.b32.xlu0 %v8648, 16
      %v8716 = vpop.permute.xlu0 %8715
      %8717 = vrot.lane.b32.xlu0 %v8649, 16
      %v8718 = vpop.permute.xlu0 %8717
      %8719 = vrot.lane.b32.xlu0 %v8650, 16
      %v8720 = vpop.permute.xlu0 %8719
      %8721 = vrot.lane.b32.xlu0 %v8651, 16
      %v8722 = vpop.permute.xlu0 %8721
      %8723 = vrot.lane.b32.xlu0 %v8652, 16
      %v8724 = vpop.permute.xlu0 %8723
      %8725 = vrot.lane.b32.xlu0 %v8653, 16
      %v8726 = vpop.permute.xlu0 %8725
      %8727 = vrot.lane.b32.xlu0 %v8654, 16
      %v8728 = vpop.permute.xlu0 %8727
      %8729 = vrot.lane.b32.xlu0 %v8655, 16
      %v8730 = vpop.permute.xlu0 %8729
      %8731 = vrot.lane.b32.xlu0 %v8656, 16
      %v8732 = vpop.permute.xlu0 %8731
      %8733 = vrot.lane.b32.xlu0 %v8657, 16
      %v8734 = vpop.permute.xlu0 %8733
      %8735 = vrot.lane.b32.xlu0 %v8658, 16
      %v8736 = vpop.permute.xlu0 %8735
      %8737 = vrot.lane.b32.xlu0 %v8659, 16
      %v8738 = vpop.permute.xlu0 %8737
      %8739 = vrot.lane.b32.xlu0 %v8660, 16
      %v8740 = vpop.permute.xlu0 %8739
      %8741 = vrot.lane.b32.xlu0 %v8661, 16
      %v8742 = vpop.permute.xlu0 %8741
      %8743 = vrot.lane.b32.xlu0 %v8662, 16
      %v8744 = vpop.permute.xlu0 %8743
      %8745 = vrot.lane.b32.xlu0 %v8663, 16
      %v8746 = vpop.permute.xlu0 %8745
      %8747 = vrot.lane.b32.xlu0 %v8664, 16
      %v8748 = vpop.permute.xlu0 %8747
      %8749 = vrot.lane.b32.xlu0 %v8665, 16
      %v8750 = vpop.permute.xlu0 %8749
      %8751 = vrot.lane.b32.xlu0 %v8666, 16
      %v8752 = vpop.permute.xlu0 %8751
      %8753 = vrot.lane.b32.xlu0 %v8667, 16
      %v8754 = vpop.permute.xlu0 %8753
      %8755 = vrot.lane.b32.xlu0 %v8668, 16
      %v8756 = vpop.permute.xlu0 %8755
      %8757 = vrot.lane.b32.xlu0 %v8669, 16
      %v8758 = vpop.permute.xlu0 %8757
      %8759 = vrot.lane.b32.xlu0 %v8670, 16
      %v8760 = vpop.permute.xlu0 %8759
      %8761 = vrot.lane.b32.xlu0 %v8671, 16
      %v8762 = vpop.permute.xlu0 %8761
      %8763 = vrot.lane.b32.xlu0 %v8672, 16
      %v8764 = vpop.permute.xlu0 %8763
      %8765 = vrot.lane.b32.xlu0 %v8673, 16
      %v8766 = vpop.permute.xlu0 %8765
      %8767 = vrot.lane.b32.xlu0 %v8674, 16
      %v8768 = vpop.permute.xlu0 %8767
      %8769 = vrot.lane.b32.xlu0 %v8675, 16
      %v8770 = vpop.permute.xlu0 %8769
      %8771 = vrot.lane.b32.xlu0 %v8676, 16
      %v8772 = vpop.permute.xlu0 %8771
      %8805 = vst.msk [vmem:[#allocation2 + $0x10] sm:$0xff] %vm830, %v8710
      %8806 = vst.msk [vmem:[#allocation2 + $0x28] sm:$0xff] %vm830, %v8712
      %8807 = vst.msk [vmem:[#allocation2 + $0x40] sm:$0xff] %vm830, %v8714
      %8808 = vst.msk [vmem:[#allocation2 + $0x58] sm:$0xff] %vm830, %v8716
      %8809 = vst.msk [vmem:[#allocation2 + $0x70] sm:$0xff] %vm830, %v8718
      %8810 = vst.msk [vmem:[#allocation2 + $0x88] sm:$0xff] %vm830, %v8720
      %8811 = vst.msk [vmem:[#allocation2 + $0xa0] sm:$0xff] %vm830, %v8722
      %8812 = vst.msk [vmem:[#allocation2 + $0xb8] sm:$0xff] %vm830, %v8724
      %8813 = vst.msk [vmem:[#allocation2 + $0xd0] sm:$0xff] %vm830, %v8726
      %8814 = vst.msk [vmem:[#allocation2 + $0xe8] sm:$0xff] %vm830, %v8728
      %8815 = vst.msk [vmem:[#allocation2 + $0x100] sm:$0xff] %vm830, %v8730
      %8816 = vst.msk [vmem:[#allocation2 + $0x118] sm:$0xff] %vm830, %v8732
      %8817 = vst.msk [vmem:[#allocation2 + $0x130] sm:$0xff] %vm830, %v8734
      %8818 = vst.msk [vmem:[#allocation2 + $0x148] sm:$0xff] %vm830, %v8736
      %8819 = vst.msk [vmem:[#allocation2 + $0x160] sm:$0xff] %vm830, %v8738
      %8820 = vst.msk [vmem:[#allocation2 + $0x178] sm:$0xff] %vm830, %v8740
      %8821 = vst.msk [vmem:[#allocation2 + $0x190] sm:$0xff] %vm830, %v8742
      %8822 = vst.msk [vmem:[#allocation2 + $0x1a8] sm:$0xff] %vm830, %v8744
      %8823 = vst.msk [vmem:[#allocation2 + $0x1c0] sm:$0xff] %vm830, %v8746
      %8824 = vst.msk [vmem:[#allocation2 + $0x1d8] sm:$0xff] %vm830, %v8748
      %8825 = vst.msk [vmem:[#allocation2 + $0x1f0] sm:$0xff] %vm830, %v8750
      %8826 = vst.msk [vmem:[#allocation2 + $0x208] sm:$0xff] %vm830, %v8752
      %8827 = vst.msk [vmem:[#allocation2 + $0x220] sm:$0xff] %vm830, %v8754
      %8828 = vst.msk [vmem:[#allocation2 + $0x238] sm:$0xff] %vm830, %v8756
      %8829 = vst.msk [vmem:[#allocation2 + $0x250] sm:$0xff] %vm830, %v8758
      %8830 = vst.msk [vmem:[#allocation2 + $0x268] sm:$0xff] %vm830, %v8760
      %8831 = vst.msk [vmem:[#allocation2 + $0x280] sm:$0xff] %vm830, %v8762
      %8832 = vst.msk [vmem:[#allocation2 + $0x298] sm:$0xff] %vm830, %v8764
      %8833 = vst.msk [vmem:[#allocation2 + $0x2b0] sm:$0xff] %vm830, %v8766
      %8834 = vst.msk [vmem:[#allocation2 + $0x2c8] sm:$0xff] %vm830, %v8768
      %8835 = vst.msk [vmem:[#allocation2 + $0x2e0] sm:$0xff] %vm830, %v8770
      %8836 = vst.msk [vmem:[#allocation2 + $0x2f8] sm:$0xff] %vm830, %v8772
      %v8837 = vld [vmem:[%s8324 + $0x2] sm:$0xff]
      %v8838 = vld [vmem:[%s8324 + $0x12] sm:$0xff]
      %v8839 = vld [vmem:[%s8324 + $0x22] sm:$0xff]
      %v8840 = vld [vmem:[%s8324 + $0x32] sm:$0xff]
      %v8841 = vld [vmem:[%s8324 + $0x42] sm:$0xff]
      %v8842 = vld [vmem:[%s8324 + $0x52] sm:$0xff]
      %v8843 = vld [vmem:[%s8324 + $0x62] sm:$0xff]
      %v8844 = vld [vmem:[%s8324 + $0x72] sm:$0xff]
      %v8845 = vld [vmem:[%s8324 + $0xa2] sm:$0xff]
      %v8846 = vld [vmem:[%s8324 + $0xb2] sm:$0xff]
      %v8847 = vld [vmem:[%s8324 + $0xc2] sm:$0xff]
      %v8848 = vld [vmem:[%s8324 + $0xd2] sm:$0xff]
      %v8849 = vld [vmem:[%s8324 + $0xe2] sm:$0xff]
      %v8850 = vld [vmem:[%s8324 + $0xf2] sm:$0xff]
      %v8851 = vld [vmem:[%s8324 + $0x102] sm:$0xff]
      %v8852 = vld [vmem:[%s8324 + $0x112] sm:$0xff]
      %v8853 = vld [vmem:[%s8324 + $0x142] sm:$0xff]
      %v8854 = vld [vmem:[%s8324 + $0x152] sm:$0xff]
      %v8855 = vld [vmem:[%s8324 + $0x162] sm:$0xff]
      %v8856 = vld [vmem:[%s8324 + $0x172] sm:$0xff]
      %v8857 = vld [vmem:[%s8324 + $0x182] sm:$0xff]
      %v8858 = vld [vmem:[%s8324 + $0x192] sm:$0xff]
      %v8859 = vld [vmem:[%s8324 + $0x1a2] sm:$0xff]
      %v8860 = vld [vmem:[%s8324 + $0x1b2] sm:$0xff]
      %v8861 = vld [vmem:[%s8324 + $0x1e2] sm:$0xff]
      %v8862 = vld [vmem:[%s8324 + $0x1f2] sm:$0xff]
      %v8863 = vld [vmem:[%s8324 + $0x202] sm:$0xff]
      %v8864 = vld [vmem:[%s8324 + $0x212] sm:$0xff]
      %v8865 = vld [vmem:[%s8324 + $0x222] sm:$0xff]
      %v8866 = vld [vmem:[%s8324 + $0x232] sm:$0xff]
      %v8867 = vld [vmem:[%s8324 + $0x242] sm:$0xff]
      %v8868 = vld [vmem:[%s8324 + $0x252] sm:$0xff]
      %v8869 = vld [vmem:[%s8324 + $0x282] sm:$0xff]
      %v8870 = vld [vmem:[%s8324 + $0x292] sm:$0xff]
      %v8871 = vld [vmem:[%s8324 + $0x2a2] sm:$0xff]
      %v8872 = vld [vmem:[%s8324 + $0x2b2] sm:$0xff]
      %v8873 = vld [vmem:[%s8324 + $0x2c2] sm:$0xff]
      %v8874 = vld [vmem:[%s8324 + $0x2d2] sm:$0xff]
      %v8875 = vld [vmem:[%s8324 + $0x2e2] sm:$0xff]
      %v8876 = vld [vmem:[%s8324 + $0x2f2] sm:$0xff]
      %v8877 = vld [vmem:[%s8324 + $0x322] sm:$0xff]
      %v8878 = vld [vmem:[%s8324 + $0x332] sm:$0xff]
      %v8879 = vld [vmem:[%s8324 + $0x342] sm:$0xff]
      %v8880 = vld [vmem:[%s8324 + $0x352] sm:$0xff]
      %v8881 = vld [vmem:[%s8324 + $0x362] sm:$0xff]
      %v8882 = vld [vmem:[%s8324 + $0x372] sm:$0xff]
      %v8883 = vld [vmem:[%s8324 + $0x382] sm:$0xff]
      %v8884 = vld [vmem:[%s8324 + $0x392] sm:$0xff]
      %v8885 = vld [vmem:[%s8324 + $0x3c2] sm:$0xff]
      %v8886 = vld [vmem:[%s8324 + $0x3d2] sm:$0xff]
      %v8887 = vld [vmem:[%s8324 + $0x3e2] sm:$0xff]
      %v8888 = vld [vmem:[%s8324 + $0x3f2] sm:$0xff]
      %v8889 = vld [vmem:[%s8324 + $0x402] sm:$0xff]
      %v8890 = vld [vmem:[%s8324 + $0x412] sm:$0xff]
      %v8891 = vld [vmem:[%s8324 + $0x422] sm:$0xff]
      %v8892 = vld [vmem:[%s8324 + $0x432] sm:$0xff]
      %v8893 = vld [vmem:[%s8324 + $0x462] sm:$0xff]
      %v8894 = vld [vmem:[%s8324 + $0x472] sm:$0xff]
      %v8895 = vld [vmem:[%s8324 + $0x482] sm:$0xff]
      %v8896 = vld [vmem:[%s8324 + $0x492] sm:$0xff]
      %v8897 = vld [vmem:[%s8324 + $0x4a2] sm:$0xff]
      %v8898 = vld [vmem:[%s8324 + $0x4b2] sm:$0xff]
      %v8899 = vld [vmem:[%s8324 + $0x4c2] sm:$0xff]
      %v8900 = vld [vmem:[%s8324 + $0x4d2] sm:$0xff]
      %v8901 = vpack.c.bf16 %v8838, %v8837
      %v8902 = vpack.c.bf16 %v8840, %v8839
      %v8903 = vpack.c.bf16 %v8842, %v8841
      %v8904 = vpack.c.bf16 %v8844, %v8843
      %v8905 = vpack.c.bf16 %v8846, %v8845
      %v8906 = vpack.c.bf16 %v8848, %v8847
      %v8907 = vpack.c.bf16 %v8850, %v8849
      %v8908 = vpack.c.bf16 %v8852, %v8851
      %v8909 = vpack.c.bf16 %v8854, %v8853
      %v8910 = vpack.c.bf16 %v8856, %v8855
      %v8911 = vpack.c.bf16 %v8858, %v8857
      %v8912 = vpack.c.bf16 %v8860, %v8859
      %v8913 = vpack.c.bf16 %v8862, %v8861
      %v8914 = vpack.c.bf16 %v8864, %v8863
      %v8915 = vpack.c.bf16 %v8866, %v8865
      %v8916 = vpack.c.bf16 %v8868, %v8867
      %v8917 = vpack.c.bf16 %v8870, %v8869
      %v8918 = vpack.c.bf16 %v8872, %v8871
      %v8919 = vpack.c.bf16 %v8874, %v8873
      %v8920 = vpack.c.bf16 %v8876, %v8875
      %v8921 = vpack.c.bf16 %v8878, %v8877
      %v8922 = vpack.c.bf16 %v8880, %v8879
      %v8923 = vpack.c.bf16 %v8882, %v8881
      %v8924 = vpack.c.bf16 %v8884, %v8883
      %v8925 = vpack.c.bf16 %v8886, %v8885
      %v8926 = vpack.c.bf16 %v8888, %v8887
      %v8927 = vpack.c.bf16 %v8890, %v8889
      %v8928 = vpack.c.bf16 %v8892, %v8891
      %v8929 = vpack.c.bf16 %v8894, %v8893
      %v8930 = vpack.c.bf16 %v8896, %v8895
      %v8931 = vpack.c.bf16 %v8898, %v8897
      %v8932 = vpack.c.bf16 %v8900, %v8899
      %8965 = vrot.lane.b32.xlu0 %v8901, 24
      %v8966 = vpop.permute.xlu0 %8965
      %8967 = vrot.lane.b32.xlu0 %v8902, 24
      %v8968 = vpop.permute.xlu0 %8967
      %8969 = vrot.lane.b32.xlu0 %v8903, 24
      %v8970 = vpop.permute.xlu0 %8969
      %8971 = vrot.lane.b32.xlu0 %v8904, 24
      %v8972 = vpop.permute.xlu0 %8971
      %8973 = vrot.lane.b32.xlu0 %v8905, 24
      %v8974 = vpop.permute.xlu0 %8973
      %8975 = vrot.lane.b32.xlu0 %v8906, 24
      %v8976 = vpop.permute.xlu0 %8975
      %8977 = vrot.lane.b32.xlu0 %v8907, 24
      %v8978 = vpop.permute.xlu0 %8977
      %8979 = vrot.lane.b32.xlu0 %v8908, 24
      %v8980 = vpop.permute.xlu0 %8979
      %8981 = vrot.lane.b32.xlu0 %v8909, 24
      %v8982 = vpop.permute.xlu0 %8981
      %8983 = vrot.lane.b32.xlu0 %v8910, 24
      %v8984 = vpop.permute.xlu0 %8983
      %8985 = vrot.lane.b32.xlu0 %v8911, 24
      %v8986 = vpop.permute.xlu0 %8985
      %8987 = vrot.lane.b32.xlu0 %v8912, 24
      %v8988 = vpop.permute.xlu0 %8987
      %8989 = vrot.lane.b32.xlu0 %v8913, 24
      %v8990 = vpop.permute.xlu0 %8989
      %8991 = vrot.lane.b32.xlu0 %v8914, 24
      %v8992 = vpop.permute.xlu0 %8991
      %8993 = vrot.lane.b32.xlu0 %v8915, 24
      %v8994 = vpop.permute.xlu0 %8993
      %8995 = vrot.lane.b32.xlu0 %v8916, 24
      %v8996 = vpop.permute.xlu0 %8995
      %8997 = vrot.lane.b32.xlu0 %v8917, 24
      %v8998 = vpop.permute.xlu0 %8997
      %8999 = vrot.lane.b32.xlu0 %v8918, 24
      %v9000 = vpop.permute.xlu0 %8999
      %9001 = vrot.lane.b32.xlu0 %v8919, 24
      %v9002 = vpop.permute.xlu0 %9001
      %9003 = vrot.lane.b32.xlu0 %v8920, 24
      %v9004 = vpop.permute.xlu0 %9003
      %9005 = vrot.lane.b32.xlu0 %v8921, 24
      %v9006 = vpop.permute.xlu0 %9005
      %9007 = vrot.lane.b32.xlu0 %v8922, 24
      %v9008 = vpop.permute.xlu0 %9007
      %9009 = vrot.lane.b32.xlu0 %v8923, 24
      %v9010 = vpop.permute.xlu0 %9009
      %9011 = vrot.lane.b32.xlu0 %v8924, 24
      %v9012 = vpop.permute.xlu0 %9011
      %9013 = vrot.lane.b32.xlu0 %v8925, 24
      %v9014 = vpop.permute.xlu0 %9013
      %9015 = vrot.lane.b32.xlu0 %v8926, 24
      %v9016 = vpop.permute.xlu0 %9015
      %9017 = vrot.lane.b32.xlu0 %v8927, 24
      %v9018 = vpop.permute.xlu0 %9017
      %9019 = vrot.lane.b32.xlu0 %v8928, 24
      %v9020 = vpop.permute.xlu0 %9019
      %9021 = vrot.lane.b32.xlu0 %v8929, 24
      %v9022 = vpop.permute.xlu0 %9021
      %9023 = vrot.lane.b32.xlu0 %v8930, 24
      %v9024 = vpop.permute.xlu0 %9023
      %9025 = vrot.lane.b32.xlu0 %v8931, 24
      %v9026 = vpop.permute.xlu0 %9025
      %9027 = vrot.lane.b32.xlu0 %v8932, 24
      %v9028 = vpop.permute.xlu0 %9027
      %9061 = vst.msk [vmem:[#allocation2 + $0x10] sm:$0xff] %vm1089, %v8966
      %9062 = vst.msk [vmem:[#allocation2 + $0x28] sm:$0xff] %vm1089, %v8968
      %9063 = vst.msk [vmem:[#allocation2 + $0x40] sm:$0xff] %vm1089, %v8970
      %9064 = vst.msk [vmem:[#allocation2 + $0x58] sm:$0xff] %vm1089, %v8972
      %9065 = vst.msk [vmem:[#allocation2 + $0x70] sm:$0xff] %vm1089, %v8974
      %9066 = vst.msk [vmem:[#allocation2 + $0x88] sm:$0xff] %vm1089, %v8976
      %9067 = vst.msk [vmem:[#allocation2 + $0xa0] sm:$0xff] %vm1089, %v8978
      %9068 = vst.msk [vmem:[#allocation2 + $0xb8] sm:$0xff] %vm1089, %v8980
      %9069 = vst.msk [vmem:[#allocation2 + $0xd0] sm:$0xff] %vm1089, %v8982
      %9070 = vst.msk [vmem:[#allocation2 + $0xe8] sm:$0xff] %vm1089, %v8984
      %9071 = vst.msk [vmem:[#allocation2 + $0x100] sm:$0xff] %vm1089, %v8986
      %9072 = vst.msk [vmem:[#allocation2 + $0x118] sm:$0xff] %vm1089, %v8988
      %9073 = vst.msk [vmem:[#allocation2 + $0x130] sm:$0xff] %vm1089, %v8990
      %9074 = vst.msk [vmem:[#allocation2 + $0x148] sm:$0xff] %vm1089, %v8992
      %9075 = vst.msk [vmem:[#allocation2 + $0x160] sm:$0xff] %vm1089, %v8994
      %9076 = vst.msk [vmem:[#allocation2 + $0x178] sm:$0xff] %vm1089, %v8996
      %9077 = vst.msk [vmem:[#allocation2 + $0x190] sm:$0xff] %vm1089, %v8998
      %9078 = vst.msk [vmem:[#allocation2 + $0x1a8] sm:$0xff] %vm1089, %v9000
      %9079 = vst.msk [vmem:[#allocation2 + $0x1c0] sm:$0xff] %vm1089, %v9002
      %9080 = vst.msk [vmem:[#allocation2 + $0x1d8] sm:$0xff] %vm1089, %v9004
      %9081 = vst.msk [vmem:[#allocation2 + $0x1f0] sm:$0xff] %vm1089, %v9006
      %9082 = vst.msk [vmem:[#allocation2 + $0x208] sm:$0xff] %vm1089, %v9008
      %9083 = vst.msk [vmem:[#allocation2 + $0x220] sm:$0xff] %vm1089, %v9010
      %9084 = vst.msk [vmem:[#allocation2 + $0x238] sm:$0xff] %vm1089, %v9012
      %9085 = vst.msk [vmem:[#allocation2 + $0x250] sm:$0xff] %vm1089, %v9014
      %9086 = vst.msk [vmem:[#allocation2 + $0x268] sm:$0xff] %vm1089, %v9016
      %9087 = vst.msk [vmem:[#allocation2 + $0x280] sm:$0xff] %vm1089, %v9018
      %9088 = vst.msk [vmem:[#allocation2 + $0x298] sm:$0xff] %vm1089, %v9020
      %9089 = vst.msk [vmem:[#allocation2 + $0x2b0] sm:$0xff] %vm1089, %v9022
      %9090 = vst.msk [vmem:[#allocation2 + $0x2c8] sm:$0xff] %vm1089, %v9024
      %9091 = vst.msk [vmem:[#allocation2 + $0x2e0] sm:$0xff] %vm1089, %v9026
      %9092 = vst.msk [vmem:[#allocation2 + $0x2f8] sm:$0xff] %vm1089, %v9028
      %v9093 = vld [vmem:[#allocation2] sm:$0xff]
      %v9094 = vld [vmem:[#allocation2 + $0x8] sm:$0xff]
      %v9095 = vld [vmem:[#allocation2 + $0x10] sm:$0xff]
      %v9096 = vld [vmem:[#allocation2 + $0x18] sm:$0xff]
      %v9097 = vld [vmem:[#allocation2 + $0x20] sm:$0xff]
      %v9098 = vld [vmem:[#allocation2 + $0x28] sm:$0xff]
      %v9099 = vld [vmem:[#allocation2 + $0x30] sm:$0xff]
      %v9100 = vld [vmem:[#allocation2 + $0x38] sm:$0xff]
      %v9101 = vld [vmem:[#allocation2 + $0x40] sm:$0xff]
      %v9102 = vld [vmem:[#allocation2 + $0x48] sm:$0xff]
      %v9103 = vld [vmem:[#allocation2 + $0x50] sm:$0xff]
      %v9104 = vld [vmem:[#allocation2 + $0x58] sm:$0xff]
      %v9105 = vld [vmem:[#allocation2 + $0x60] sm:$0xff]
      %v9106 = vld [vmem:[#allocation2 + $0x68] sm:$0xff]
      %v9107 = vld [vmem:[#allocation2 + $0x70] sm:$0xff]
      %v9108 = vld [vmem:[#allocation2 + $0x78] sm:$0xff]
      %v9109 = vld [vmem:[#allocation2 + $0x80] sm:$0xff]
      %v9110 = vld [vmem:[#allocation2 + $0x88] sm:$0xff]
      %v9111 = vld [vmem:[#allocation2 + $0x90] sm:$0xff]
      %v9112 = vld [vmem:[#allocation2 + $0x98] sm:$0xff]
      %v9113 = vld [vmem:[#allocation2 + $0xa0] sm:$0xff]
      %v9114 = vld [vmem:[#allocation2 + $0xa8] sm:$0xff]
      %v9115 = vld [vmem:[#allocation2 + $0xb0] sm:$0xff]
      %v9116 = vld [vmem:[#allocation2 + $0xb8] sm:$0xff]
      %v9117 = vld [vmem:[#allocation2 + $0xc0] sm:$0xff]
      %v9118 = vld [vmem:[#allocation2 + $0xc8] sm:$0xff]
      %v9119 = vld [vmem:[#allocation2 + $0xd0] sm:$0xff]
      %v9120 = vld [vmem:[#allocation2 + $0xd8] sm:$0xff]
      %v9121 = vld [vmem:[#allocation2 + $0xe0] sm:$0xff]
      %v9122 = vld [vmem:[#allocation2 + $0xe8] sm:$0xff]
      %v9123 = vld [vmem:[#allocation2 + $0xf0] sm:$0xff]
      %v9124 = vld [vmem:[#allocation2 + $0xf8] sm:$0xff]
      %v9125 = vld [vmem:[#allocation2 + $0x100] sm:$0xff]
      %v9126 = vld [vmem:[#allocation2 + $0x108] sm:$0xff]
      %v9127 = vld [vmem:[#allocation2 + $0x110] sm:$0xff]
      %v9128 = vld [vmem:[#allocation2 + $0x118] sm:$0xff]
      %v9129 = vld [vmem:[#allocation2 + $0x120] sm:$0xff]
      %v9130 = vld [vmem:[#allocation2 + $0x128] sm:$0xff]
      %v9131 = vld [vmem:[#allocation2 + $0x130] sm:$0xff]
      %v9132 = vld [vmem:[#allocation2 + $0x138] sm:$0xff]
      %v9133 = vld [vmem:[#allocation2 + $0x140] sm:$0xff]
      %v9134 = vld [vmem:[#allocation2 + $0x148] sm:$0xff]
      %v9135 = vld [vmem:[#allocation2 + $0x150] sm:$0xff]
      %v9136 = vld [vmem:[#allocation2 + $0x158] sm:$0xff]
      %v9137 = vld [vmem:[#allocation2 + $0x160] sm:$0xff]
      %v9138 = vld [vmem:[#allocation2 + $0x168] sm:$0xff]
      %v9139 = vld [vmem:[#allocation2 + $0x170] sm:$0xff]
      %v9140 = vld [vmem:[#allocation2 + $0x178] sm:$0xff]
      %v9141 = vld [vmem:[#allocation2 + $0x180] sm:$0xff]
      %v9142 = vld [vmem:[#allocation2 + $0x188] sm:$0xff]
      %v9143 = vld [vmem:[#allocation2 + $0x190] sm:$0xff]
      %v9144 = vld [vmem:[#allocation2 + $0x198] sm:$0xff]
      %v9145 = vld [vmem:[#allocation2 + $0x1a0] sm:$0xff]
      %v9146 = vld [vmem:[#allocation2 + $0x1a8] sm:$0xff]
      %v9147 = vld [vmem:[#allocation2 + $0x1b0] sm:$0xff]
      %v9148 = vld [vmem:[#allocation2 + $0x1b8] sm:$0xff]
      %v9149 = vld [vmem:[#allocation2 + $0x1c0] sm:$0xff]
      %v9150 = vld [vmem:[#allocation2 + $0x1c8] sm:$0xff]
      %v9151 = vld [vmem:[#allocation2 + $0x1d0] sm:$0xff]
      %v9152 = vld [vmem:[#allocation2 + $0x1d8] sm:$0xff]
      %v9153 = vld [vmem:[#allocation2 + $0x1e0] sm:$0xff]
      %v9154 = vld [vmem:[#allocation2 + $0x1e8] sm:$0xff]
      %v9155 = vld [vmem:[#allocation2 + $0x1f0] sm:$0xff]
      %v9156 = vld [vmem:[#allocation2 + $0x1f8] sm:$0xff]
      %v9157 = vld [vmem:[#allocation2 + $0x200] sm:$0xff]
      %v9158 = vld [vmem:[#allocation2 + $0x208] sm:$0xff]
      %v9159 = vld [vmem:[#allocation2 + $0x210] sm:$0xff]
      %v9160 = vld [vmem:[#allocation2 + $0x218] sm:$0xff]
      %v9161 = vld [vmem:[#allocation2 + $0x220] sm:$0xff]
      %v9162 = vld [vmem:[#allocation2 + $0x228] sm:$0xff]
      %v9163 = vld [vmem:[#allocation2 + $0x230] sm:$0xff]
      %v9164 = vld [vmem:[#allocation2 + $0x238] sm:$0xff]
      %v9165 = vld [vmem:[#allocation2 + $0x240] sm:$0xff]
      %v9166 = vld [vmem:[#allocation2 + $0x248] sm:$0xff]
      %v9167 = vld [vmem:[#allocation2 + $0x250] sm:$0xff]
      %v9168 = vld [vmem:[#allocation2 + $0x258] sm:$0xff]
      %v9169 = vld [vmem:[#allocation2 + $0x260] sm:$0xff]
      %v9170 = vld [vmem:[#allocation2 + $0x268] sm:$0xff]
      %v9171 = vld [vmem:[#allocation2 + $0x270] sm:$0xff]
      %v9172 = vld [vmem:[#allocation2 + $0x278] sm:$0xff]
      %v9173 = vld [vmem:[#allocation2 + $0x280] sm:$0xff]
      %v9174 = vld [vmem:[#allocation2 + $0x288] sm:$0xff]
      %v9175 = vld [vmem:[#allocation2 + $0x290] sm:$0xff]
      %v9176 = vld [vmem:[#allocation2 + $0x298] sm:$0xff]
      %v9177 = vld [vmem:[#allocation2 + $0x2a0] sm:$0xff]
      %v9178 = vld [vmem:[#allocation2 + $0x2a8] sm:$0xff]
      %v9179 = vld [vmem:[#allocation2 + $0x2b0] sm:$0xff]
      %v9180 = vld [vmem:[#allocation2 + $0x2b8] sm:$0xff]
      %v9181 = vld [vmem:[#allocation2 + $0x2c0] sm:$0xff]
      %v9182 = vld [vmem:[#allocation2 + $0x2c8] sm:$0xff]
      %v9183 = vld [vmem:[#allocation2 + $0x2d0] sm:$0xff]
      %v9184 = vld [vmem:[#allocation2 + $0x2d8] sm:$0xff]
      %v9185 = vld [vmem:[#allocation2 + $0x2e0] sm:$0xff]
      %v9186 = vld [vmem:[#allocation2 + $0x2e8] sm:$0xff]
      %v9187 = vld [vmem:[#allocation2 + $0x2f0] sm:$0xff]
      %v9188 = vld [vmem:[#allocation2 + $0x2f8] sm:$0xff]
      %v9189 = vld [vmem:[%s1] sm:$0xf]
      %v9190 = vld [vmem:[%s1 + $0x4] sm:$0xf]
      %v9191 = vld [vmem:[%s1 + $0x8] sm:$0xf]
      %v9192 = vld [vmem:[%s1 + $0xc] sm:$0xf]
      %v9193 = vld [vmem:[%s1 + $0x10] sm:$0xf]
      %v9194 = vld [vmem:[%s1 + $0x14] sm:$0xf]
      %v9195 = vld [vmem:[%s1 + $0x18] sm:$0xf]
      %v9196 = vld [vmem:[%s1 + $0x1c] sm:$0xf]
      %v9197 = vld [vmem:[%s1 + $0x20] sm:$0xf]
      %v9198 = vld [vmem:[%s1 + $0x24] sm:$0xf]
      %v9199 = vld [vmem:[%s1 + $0x28] sm:$0xf]
      %v9200 = vld [vmem:[%s1 + $0x2c] sm:$0xf]
      %v9201 = vld [vmem:[%s1 + $0x30] sm:$0xf]
      %v9202 = vld [vmem:[%s1 + $0x34] sm:$0xf]
      %v9203 = vld [vmem:[%s1 + $0x38] sm:$0xf]
      %v9204 = vld [vmem:[%s1 + $0x3c] sm:$0xf]
      %v9205 = vld [vmem:[%s1 + $0x40] sm:$0xf]
      %v9206 = vld [vmem:[%s1 + $0x44] sm:$0xf]
      %v9207 = vld [vmem:[%s1 + $0x48] sm:$0xf]
      %v9208 = vld [vmem:[%s1 + $0x4c] sm:$0xf]
      %v9209 = vld [vmem:[%s1 + $0x50] sm:$0xf]
      %v9210 = vld [vmem:[%s1 + $0x54] sm:$0xf]
      %v9211 = vld [vmem:[%s1 + $0x58] sm:$0xf]
      %v9212 = vld [vmem:[%s1 + $0x5c] sm:$0xf]
      %v9213 = vld [vmem:[%s1 + $0x60] sm:$0xf]
      %v9214 = vld [vmem:[%s1 + $0x64] sm:$0xf]
      %v9215 = vld [vmem:[%s1 + $0x68] sm:$0xf]
      %v9216 = vld [vmem:[%s1 + $0x6c] sm:$0xf]
      %v9217 = vld [vmem:[%s1 + $0x70] sm:$0xf]
      %v9218 = vld [vmem:[%s1 + $0x74] sm:$0xf]
      %v9219 = vld [vmem:[%s1 + $0x78] sm:$0xf]
      %v9220 = vld [vmem:[%s1 + $0x7c] sm:$0xf]
      %v9221 = vld [vmem:[%s1 + $0x80] sm:$0xf]
      %v9222 = vld [vmem:[%s1 + $0x84] sm:$0xf]
      %v9223 = vld [vmem:[%s1 + $0x88] sm:$0xf]
      %v9224 = vld [vmem:[%s1 + $0x8c] sm:$0xf]
      %v9225 = vld [vmem:[%s2] sm:$0x1]
      %v9227 = vlaneseq
      %v9228 = vshrl.u32 %v9227, 7
      %v9229 = vsub.s32 0, %v9228
      %v9230 = vrot.slane %v9225, %v9229
      %v9268 = vunpack.c.l.b16 %v9189
      %v9269 = vunpack.c.l.b16 %v9190
      %v9270 = vunpack.c.l.b16 %v9191
      %v9271 = vunpack.c.l.b16 %v9192
      %v9272 = vunpack.c.l.b16 %v9193
      %v9273 = vunpack.c.l.b16 %v9194
      %v9274 = vunpack.c.l.b16 %v9195
      %v9275 = vunpack.c.l.b16 %v9196
      %v9276 = vunpack.c.l.b16 %v9197
      %v9277 = vunpack.c.l.b16 %v9198
      %v9278 = vunpack.c.l.b16 %v9199
      %v9279 = vunpack.c.l.b16 %v9200
      %v9280 = vunpack.c.l.b16 %v9201
      %v9281 = vunpack.c.l.b16 %v9202
      %v9282 = vunpack.c.l.b16 %v9203
      %v9283 = vunpack.c.l.b16 %v9204
      %v9284 = vunpack.c.l.b16 %v9205
      %v9285 = vunpack.c.l.b16 %v9206
      %v9286 = vunpack.c.l.b16 %v9207
      %v9287 = vunpack.c.l.b16 %v9208
      %v9288 = vunpack.c.l.b16 %v9209
      %v9289 = vunpack.c.l.b16 %v9210
      %v9290 = vunpack.c.l.b16 %v9211
      %v9291 = vunpack.c.l.b16 %v9212
      %v9292 = vunpack.c.l.b16 %v9213
      %v9293 = vunpack.c.l.b16 %v9214
      %v9294 = vunpack.c.l.b16 %v9215
      %v9295 = vunpack.c.l.b16 %v9216
      %v9296 = vunpack.c.l.b16 %v9217
      %v9297 = vunpack.c.l.b16 %v9218
      %v9298 = vunpack.c.l.b16 %v9219
      %v9299 = vunpack.c.l.b16 %v9220
      %v9300 = vunpack.c.l.b16 %v9221
      %v9301 = vunpack.c.l.b16 %v9222
      %v9302 = vunpack.c.l.b16 %v9223
      %v9303 = vunpack.c.l.b16 %v9224
      %v9304 = vpack.c.b16 %v9269, %v9268
      %v9305 = vpack.c.b16 %v9271, %v9270
      %v9306 = vpack.c.b16 %v9273, %v9272
      %v9307 = vpack.c.b16 %v9275, %v9274
      %v9308 = vpack.c.b16 %v9277, %v9276
      %v9309 = vpack.c.b16 %v9279, %v9278
      %v9310 = vpack.c.b16 %v9281, %v9280
      %v9311 = vpack.c.b16 %v9283, %v9282
      %v9312 = vpack.c.b16 %v9285, %v9284
      %v9313 = vpack.c.b16 %v9287, %v9286
      %v9314 = vpack.c.b16 %v9289, %v9288
      %v9315 = vpack.c.b16 %v9291, %v9290
      %v9316 = vpack.c.b16 %v9293, %v9292
      %v9317 = vpack.c.b16 %v9295, %v9294
      %v9318 = vpack.c.b16 %v9297, %v9296
      %v9319 = vpack.c.b16 %v9299, %v9298
      %v9320 = vpack.c.b16 %v9301, %v9300
      %v9321 = vpack.c.b16 %v9303, %v9302
      %vm9340 = vcmask 261120
      %v9342 = vsel %vm9340, %v9095, 0
      %v9345 = vsel %vm9340, %v9098, 0
      %v9348 = vsel %vm9340, %v9101, 0
      %v9351 = vsel %vm9340, %v9104, 0
      %v9354 = vsel %vm9340, %v9107, 0
      %v9357 = vsel %vm9340, %v9110, 0
      %v9360 = vsel %vm9340, %v9113, 0
      %v9363 = vsel %vm9340, %v9116, 0
      %v9366 = vsel %vm9340, %v9119, 0
      %v9369 = vsel %vm9340, %v9122, 0
      %v9372 = vsel %vm9340, %v9125, 0
      %v9375 = vsel %vm9340, %v9128, 0
      %v9378 = vsel %vm9340, %v9131, 0
      %v9381 = vsel %vm9340, %v9134, 0
      %v9384 = vsel %vm9340, %v9137, 0
      %v9387 = vsel %vm9340, %v9140, 0
      %v9390 = vsel %vm9340, %v9143, 0
      %v9393 = vsel %vm9340, %v9146, 0
      %v9396 = vsel %vm9340, %v9149, 0
      %v9399 = vsel %vm9340, %v9152, 0
      %v9402 = vsel %vm9340, %v9155, 0
      %v9405 = vsel %vm9340, %v9158, 0
      %v9408 = vsel %vm9340, %v9161, 0
      %v9411 = vsel %vm9340, %v9164, 0
      %v9414 = vsel %vm9340, %v9167, 0
      %v9417 = vsel %vm9340, %v9170, 0
      %v9420 = vsel %vm9340, %v9173, 0
      %v9423 = vsel %vm9340, %v9176, 0
      %v9426 = vsel %vm9340, %v9179, 0
      %v9429 = vsel %vm9340, %v9182, 0
      %v9432 = vsel %vm9340, %v9185, 0
      %v9435 = vsel %vm9340, %v9188, 0
      %9437 = vmatprep.subr.bf16.mxu0 0
      %9438 = vmatpush1.bf16.msra.mxu0 %v9304
      %9439 = vmatprep.subr.bf16.mxu0 0
      %9440 = vmatpush1.bf16.msra.mxu0 %v9305
      %9441 = vmatprep.subr.bf16.mxu0 0
      %9442 = vmatpush1.bf16.msra.mxu0 %v9306
      %9443 = vmatprep.subr.bf16.mxu0 0
      %9444 = vmatpush1.bf16.msra.mxu0 %v9307
      %9445 = vmatprep.subr.bf16.mxu0 0
      %9446 = vmatpush1.bf16.msra.mxu0 %v9308
      %9447 = vmatprep.subr.bf16.mxu0 0
      %9448 = vmatpush1.bf16.msra.mxu0 %v9309
      %9449 = vmatprep.subr.bf16.mxu0 0
      %9450 = vmatpush1.bf16.msra.mxu0 %v9310
      %9451 = vmatprep.subr.bf16.mxu0 0
      %9452 = vmatpush1.bf16.msra.mxu0 %v9311
      %9453 = vmatprep.subr.bf16.mxu0 0
      %9454 = vmatpush1.bf16.msra.mxu0 %v9312
      %9455 = vmatprep.subr.bf16.mxu0 0
      %9456 = vmatpush1.bf16.msra.mxu0 %v9313
      %9457 = vmatprep.subr.bf16.mxu0 0
      %9458 = vmatpush1.bf16.msra.mxu0 %v9314
      %9459 = vmatprep.subr.bf16.mxu0 0
      %9460 = vmatpush1.bf16.msra.mxu0 %v9315
      %9461 = vmatprep.subr.bf16.mxu0 0
      %9462 = vmatpush1.bf16.msra.mxu0 %v9316
      %9463 = vmatprep.subr.bf16.mxu0 0
      %9464 = vmatpush1.bf16.msra.mxu0 %v9317
      %9465 = vmatprep.subr.bf16.mxu0 0
      %9466 = vmatpush1.bf16.msra.mxu0 %v9318
      %9467 = vmatprep.subr.bf16.mxu0 0
      %9468 = vmatpush1.bf16.msra.mxu0 %v9319
      %9469 = vmatprep.mubr.bf16.mxu0 %v9094
      %9470 = vmatmul.mubr.bf16.gmra.mrb[0].mxu0 %v9093
      %v9471 = vpop.f32.mrb[0].mxu0
      %v9472 = vadd.f32 %v9230, %v9471
      %v9473 = vpop.f32.mrb[0].mxu0
      %v9474 = vpop.f32.mrb[0].mxu0
      %v9475 = vadd.f32 %v9230, %v9474
      %v9476 = vpop.f32.mrb[0].mxu0
      %9477 = vmatprep.mubr.bf16.mxu0 %v9097
      %9478 = vmatmul.mubr.bf16.gmra.mrb[0].mxu0 %v9096
      %v9479 = vpop.f32.mrb[0].mxu0
      %v9480 = vadd.f32 %v9230, %v9479
      %v9481 = vpop.f32.mrb[0].mxu0
      %v9482 = vpop.f32.mrb[0].mxu0
      %v9483 = vadd.f32 %v9230, %v9482
      %v9484 = vpop.f32.mrb[0].mxu0
      %9485 = vmatprep.mubr.bf16.mxu0 %v9100
      %9486 = vmatmul.mubr.bf16.gmra.mrb[0].mxu0 %v9099
      %v9487 = vpop.f32.mrb[0].mxu0
      %v9488 = vadd.f32 %v9230, %v9487
      %v9489 = vpop.f32.mrb[0].mxu0
      %v9490 = vpop.f32.mrb[0].mxu0
      %v9491 = vadd.f32 %v9230, %v9490
      %v9492 = vpop.f32.mrb[0].mxu0
      %9493 = vmatprep.mubr.bf16.mxu0 %v9103
      %9494 = vmatmul.mubr.bf16.gmra.mrb[0].mxu0 %v9102
      %v9495 = vpop.f32.mrb[0].mxu0
      %v9496 = vadd.f32 %v9230, %v9495
      %v9497 = vpop.f32.mrb[0].mxu0
      %v9498 = vpop.f32.mrb[0].mxu0
      %v9499 = vadd.f32 %v9230, %v9498
      %v9500 = vpop.f32.mrb[0].mxu0
      %9501 = vmatprep.mubr.bf16.mxu0 %v9106
      %9502 = vmatmul.mubr.bf16.gmra.mrb[0].mxu0 %v9105
      %v9503 = vpop.f32.mrb[0].mxu0
      %v9504 = vadd.f32 %v9230, %v9503
      %v9505 = vpop.f32.mrb[0].mxu0
      %v9506 = vpop.f32.mrb[0].mxu0
      %v9507 = vadd.f32 %v9230, %v9506
      %v9508 = vpop.f32.mrb[0].mxu0
      %9509 = vmatprep.mubr.bf16.mxu0 %v9109
      %9510 = vmatmul.mubr.bf16.gmra.mrb[0].mxu0 %v9108
      %v9511 = vpop.f32.mrb[0].mxu0
      %v9512 = vadd.f32 %v9230, %v9511
      %v9513 = vpop.f32.mrb[0].mxu0
      %v9514 = vpop.f32.mrb[0].mxu0
      %v9515 = vadd.f32 %v9230, %v9514
      %v9516 = vpop.f32.mrb[0].mxu0
      %9517 = vmatprep.mubr.bf16.mxu0 %v9112
      %9518 = vmatmul.mubr.bf16.gmra.mrb[0].mxu0 %v9111
      %v9519 = vpop.f32.mrb[0].mxu0
      %v9520 = vadd.f32 %v9230, %v9519
      %v9521 = vpop.f32.mrb[0].mxu0
      %v9522 = vpop.f32.mrb[0].mxu0
      %v9523 = vadd.f32 %v9230, %v9522
      %v9524 = vpop.f32.mrb[0].mxu0
      %9525 = vmatprep.mubr.bf16.mxu0 %v9115
      %9526 = vmatmul.mubr.bf16.gmra.mrb[0].mxu0 %v9114
      %v9527 = vpop.f32.mrb[0].mxu0
      %v9528 = vadd.f32 %v9230, %v9527
      %v9529 = vpop.f32.mrb[0].mxu0
      %v9530 = vpop.f32.mrb[0].mxu0
      %v9531 = vadd.f32 %v9230, %v9530
      %v9532 = vpop.f32.mrb[0].mxu0
      %9533 = vmatprep.mubr.bf16.mxu0 %v9118
      %9534 = vmatmul.mubr.bf16.gmra.mrb[0].mxu0 %v9117
      %v9535 = vpop.f32.mrb[0].mxu0
      %v9536 = vadd.f32 %v9230, %v9535
      %v9537 = vpop.f32.mrb[0].mxu0
      %v9538 = vpop.f32.mrb[0].mxu0
      %v9539 = vadd.f32 %v9230, %v9538
      %v9540 = vpop.f32.mrb[0].mxu0
      %9541 = vmatprep.mubr.bf16.mxu0 %v9121
      %9542 = vmatmul.mubr.bf16.gmra.mrb[0].mxu0 %v9120
      %v9543 = vpop.f32.mrb[0].mxu0
      %v9544 = vadd.f32 %v9230, %v9543
      %v9545 = vpop.f32.mrb[0].mxu0
      %v9546 = vpop.f32.mrb[0].mxu0
      %v9547 = vadd.f32 %v9230, %v9546
      %v9548 = vpop.f32.mrb[0].mxu0
      %9549 = vmatprep.mubr.bf16.mxu0 %v9124
      %9550 = vmatmul.mubr.bf16.gmra.mrb[0].mxu0 %v9123
      %v9551 = vpop.f32.mrb[0].mxu0
      %v9552 = vadd.f32 %v9230, %v9551
      %v9553 = vpop.f32.mrb[0].mxu0
      %v9554 = vpop.f32.mrb[0].mxu0
      %v9555 = vadd.f32 %v9230, %v9554
      %v9556 = vpop.f32.mrb[0].mxu0
      %9557 = vmatprep.mubr.bf16.mxu0 %v9127
      %9558 = vmatmul.mubr.bf16.gmra.mrb[0].mxu0 %v9126
      %v9559 = vpop.f32.mrb[0].mxu0
      %v9560 = vadd.f32 %v9230, %v9559
      %v9561 = vpop.f32.mrb[0].mxu0
      %v9562 = vpop.f32.mrb[0].mxu0
      %v9563 = vadd.f32 %v9230, %v9562
      %v9564 = vpop.f32.mrb[0].mxu0
      %9565 = vmatprep.mubr.bf16.mxu0 %v9130
      %9566 = vmatmul.mubr.bf16.gmra.mrb[0].mxu0 %v9129
      %v9567 = vpop.f32.mrb[0].mxu0
      %v9568 = vadd.f32 %v9230, %v9567
      %v9569 = vpop.f32.mrb[0].mxu0
      %v9570 = vpop.f32.mrb[0].mxu0
      %v9571 = vadd.f32 %v9230, %v9570
      %v9572 = vpop.f32.mrb[0].mxu0
      %9573 = vmatprep.mubr.bf16.mxu0 %v9133
      %9574 = vmatmul.mubr.bf16.gmra.mrb[0].mxu0 %v9132
      %v9575 = vpop.f32.mrb[0].mxu0
      %v9576 = vadd.f32 %v9230, %v9575
      %v9577 = vpop.f32.mrb[0].mxu0
      %v9578 = vpop.f32.mrb[0].mxu0
      %v9579 = vadd.f32 %v9230, %v9578
      %v9580 = vpop.f32.mrb[0].mxu0
      %9581 = vmatprep.mubr.bf16.mxu0 %v9136
      %9582 = vmatmul.mubr.bf16.gmra.mrb[0].mxu0 %v9135
      %v9583 = vpop.f32.mrb[0].mxu0
      %v9584 = vadd.f32 %v9230, %v9583
      %v9585 = vpop.f32.mrb[0].mxu0
      %v9586 = vpop.f32.mrb[0].mxu0
      %v9587 = vadd.f32 %v9230, %v9586
      %v9588 = vpop.f32.mrb[0].mxu0
      %9589 = vmatprep.mubr.bf16.mxu0 %v9139
      %9590 = vmatmul.mubr.bf16.gmra.mrb[0].mxu0 %v9138
      %v9591 = vpop.f32.mrb[0].mxu0
      %v9592 = vadd.f32 %v9230, %v9591
      %v9593 = vpop.f32.mrb[0].mxu0
      %v9594 = vpop.f32.mrb[0].mxu0
      %v9595 = vadd.f32 %v9230, %v9594
      %v9596 = vpop.f32.mrb[0].mxu0
      %9597 = vmatprep.mubr.bf16.mxu0 %v9142
      %9598 = vmatmul.mubr.bf16.gmra.mrb[0].mxu0 %v9141
      %v9599 = vpop.f32.mrb[0].mxu0
      %v9600 = vadd.f32 %v9230, %v9599
      %v9601 = vpop.f32.mrb[0].mxu0
      %v9602 = vpop.f32.mrb[0].mxu0
      %v9603 = vadd.f32 %v9230, %v9602
      %v9604 = vpop.f32.mrb[0].mxu0
      %9605 = vmatprep.mubr.bf16.mxu0 %v9145
      %9606 = vmatmul.mubr.bf16.gmra.mrb[0].mxu0 %v9144
      %v9607 = vpop.f32.mrb[0].mxu0
      %v9608 = vadd.f32 %v9230, %v9607
      %v9609 = vpop.f32.mrb[0].mxu0
      %v9610 = vpop.f32.mrb[0].mxu0
      %v9611 = vadd.f32 %v9230, %v9610
      %v9612 = vpop.f32.mrb[0].mxu0
      %9613 = vmatprep.mubr.bf16.mxu0 %v9148
      %9614 = vmatmul.mubr.bf16.gmra.mrb[0].mxu0 %v9147
      %v9615 = vpop.f32.mrb[0].mxu0
      %v9616 = vadd.f32 %v9230, %v9615
      %v9617 = vpop.f32.mrb[0].mxu0
      %v9618 = vpop.f32.mrb[0].mxu0
      %v9619 = vadd.f32 %v9230, %v9618
      %v9620 = vpop.f32.mrb[0].mxu0
      %9621 = vmatprep.mubr.bf16.mxu0 %v9151
      %9622 = vmatmul.mubr.bf16.gmra.mrb[0].mxu0 %v9150
      %v9623 = vpop.f32.mrb[0].mxu0
      %v9624 = vadd.f32 %v9230, %v9623
      %v9625 = vpop.f32.mrb[0].mxu0
      %v9626 = vpop.f32.mrb[0].mxu0
      %v9627 = vadd.f32 %v9230, %v9626
      %v9628 = vpop.f32.mrb[0].mxu0
      %9629 = vmatprep.mubr.bf16.mxu0 %v9154
      %9630 = vmatmul.mubr.bf16.gmra.mrb[0].mxu0 %v9153
      %v9631 = vpop.f32.mrb[0].mxu0
      %v9632 = vadd.f32 %v9230, %v9631
      %v9633 = vpop.f32.mrb[0].mxu0
      %v9634 = vpop.f32.mrb[0].mxu0
      %v9635 = vadd.f32 %v9230, %v9634
      %v9636 = vpop.f32.mrb[0].mxu0
      %9637 = vmatprep.mubr.bf16.mxu0 %v9157
      %9638 = vmatmul.mubr.bf16.gmra.mrb[0].mxu0 %v9156
      %v9639 = vpop.f32.mrb[0].mxu0
      %v9640 = vadd.f32 %v9230, %v9639
      %v9641 = vpop.f32.mrb[0].mxu0
      %v9642 = vpop.f32.mrb[0].mxu0
      %v9643 = vadd.f32 %v9230, %v9642
      %v9644 = vpop.f32.mrb[0].mxu0
      %9645 = vmatprep.mubr.bf16.mxu0 %v9160
      %9646 = vmatmul.mubr.bf16.gmra.mrb[0].mxu0 %v9159
      %v9647 = vpop.f32.mrb[0].mxu0
      %v9648 = vadd.f32 %v9230, %v9647
      %v9649 = vpop.f32.mrb[0].mxu0
      %v9650 = vpop.f32.mrb[0].mxu0
      %v9651 = vadd.f32 %v9230, %v9650
      %v9652 = vpop.f32.mrb[0].mxu0
      %9653 = vmatprep.mubr.bf16.mxu0 %v9163
      %9654 = vmatmul.mubr.bf16.gmra.mrb[0].mxu0 %v9162
      %v9655 = vpop.f32.mrb[0].mxu0
      %v9656 = vadd.f32 %v9230, %v9655
      %v9657 = vpop.f32.mrb[0].mxu0
      %v9658 = vpop.f32.mrb[0].mxu0
      %v9659 = vadd.f32 %v9230, %v9658
      %v9660 = vpop.f32.mrb[0].mxu0
      %9661 = vmatprep.mubr.bf16.mxu0 %v9166
      %9662 = vmatmul.mubr.bf16.gmra.mrb[0].mxu0 %v9165
      %v9663 = vpop.f32.mrb[0].mxu0
      %v9664 = vadd.f32 %v9230, %v9663
      %v9665 = vpop.f32.mrb[0].mxu0
      %v9666 = vpop.f32.mrb[0].mxu0
      %v9667 = vadd.f32 %v9230, %v9666
      %v9668 = vpop.f32.mrb[0].mxu0
      %9669 = vmatprep.mubr.bf16.mxu0 %v9169
      %9670 = vmatmul.mubr.bf16.gmra.mrb[0].mxu0 %v9168
      %v9671 = vpop.f32.mrb[0].mxu0
      %v9672 = vadd.f32 %v9230, %v9671
      %v9673 = vpop.f32.mrb[0].mxu0
      %v9674 = vpop.f32.mrb[0].mxu0
      %v9675 = vadd.f32 %v9230, %v9674
      %v9676 = vpop.f32.mrb[0].mxu0
      %9677 = vmatprep.mubr.bf16.mxu0 %v9172
      %9678 = vmatmul.mubr.bf16.gmra.mrb[0].mxu0 %v9171
      %v9679 = vpop.f32.mrb[0].mxu0
      %v9680 = vadd.f32 %v9230, %v9679
      %v9681 = vpop.f32.mrb[0].mxu0
      %v9682 = vpop.f32.mrb[0].mxu0
      %v9683 = vadd.f32 %v9230, %v9682
      %v9684 = vpop.f32.mrb[0].mxu0
      %9685 = vmatprep.mubr.bf16.mxu0 %v9175
      %9686 = vmatmul.mubr.bf16.gmra.mrb[0].mxu0 %v9174
      %v9687 = vpop.f32.mrb[0].mxu0
      %v9688 = vadd.f32 %v9230, %v9687
      %v9689 = vpop.f32.mrb[0].mxu0
      %v9690 = vpop.f32.mrb[0].mxu0
      %v9691 = vadd.f32 %v9230, %v9690
      %v9692 = vpop.f32.mrb[0].mxu0
      %9693 = vmatprep.mubr.bf16.mxu0 %v9178
      %9694 = vmatmul.mubr.bf16.gmra.mrb[0].mxu0 %v9177
      %v9695 = vpop.f32.mrb[0].mxu0
      %v9696 = vadd.f32 %v9230, %v9695
      %v9697 = vpop.f32.mrb[0].mxu0
      %v9698 = vpop.f32.mrb[0].mxu0
      %v9699 = vadd.f32 %v9230, %v9698
      %v9700 = vpop.f32.mrb[0].mxu0
      %9701 = vmatprep.mubr.bf16.mxu0 %v9181
      %9702 = vmatmul.mubr.bf16.gmra.mrb[0].mxu0 %v9180
      %v9703 = vpop.f32.mrb[0].mxu0
      %v9704 = vadd.f32 %v9230, %v9703
      %v9705 = vpop.f32.mrb[0].mxu0
      %v9706 = vpop.f32.mrb[0].mxu0
      %v9707 = vadd.f32 %v9230, %v9706
      %v9708 = vpop.f32.mrb[0].mxu0
      %9709 = vmatprep.mubr.bf16.mxu0 %v9184
      %9710 = vmatmul.mubr.bf16.gmra.mrb[0].mxu0 %v9183
      %v9711 = vpop.f32.mrb[0].mxu0
      %v9712 = vadd.f32 %v9230, %v9711
      %v9713 = vpop.f32.mrb[0].mxu0
      %v9714 = vpop.f32.mrb[0].mxu0
      %v9715 = vadd.f32 %v9230, %v9714
      %v9716 = vpop.f32.mrb[0].mxu0
      %9717 = vmatprep.mubr.bf16.mxu0 %v9187
      %9718 = vmatmul.mubr.bf16.gmra.mrb[0].mxu0 %v9186
      %v9719 = vpop.f32.mrb[0].mxu0
      %v9720 = vadd.f32 %v9230, %v9719
      %v9721 = vpop.f32.mrb[0].mxu0
      %v9722 = vpop.f32.mrb[0].mxu0
      %v9723 = vadd.f32 %v9230, %v9722
      %v9724 = vpop.f32.mrb[0].mxu0
      %9725 = vdwg.mxu0
      %9726 = vmatprep.subr.bf16.mxu0 0
      %9727 = vmatpush1.bf16.msra.mxu0 %v9320
      %9728 = vmatprep.subr.bf16.mxu0 0
      %9729 = vmatpush1.bf16.msra.mxu0 %v9321
      %9730 = vmatprep.subr.bf16.mxu0 0
      %9731 = vmatpush1.bf16.msra.mxu0 0
      %9732 = vmatprep.subr.bf16.mxu0 0
      %9733 = vmatpush1.bf16.msra.mxu0 0
      %9734 = vmatprep.subr.bf16.mxu0 0
      %9735 = vmatpush1.bf16.msra.mxu0 0
      %9736 = vmatprep.subr.bf16.mxu0 0
      %9737 = vmatpush1.bf16.msra.mxu0 0
      %9738 = vmatprep.subr.bf16.mxu0 0
      %9739 = vmatpush1.bf16.msra.mxu0 0
      %9740 = vmatprep.subr.bf16.mxu0 0
      %9741 = vmatpush1.bf16.msra.mxu0 0
      %9742 = vmatprep.subr.bf16.mxu0 0
      %9743 = vmatpush1.bf16.msra.mxu0 0
      %9744 = vmatprep.subr.bf16.mxu0 0
      %9745 = vmatpush1.bf16.msra.mxu0 0
      %9746 = vmatprep.subr.bf16.mxu0 0
      %9747 = vmatpush1.bf16.msra.mxu0 0
      %9748 = vmatprep.subr.bf16.mxu0 0
      %9749 = vmatpush1.bf16.msra.mxu0 0
      %9750 = vmatprep.subr.bf16.mxu0 0
      %9751 = vmatpush1.bf16.msra.mxu0 0
      %9752 = vmatprep.subr.bf16.mxu0 0
      %9753 = vmatpush1.bf16.msra.mxu0 0
      %9754 = vmatprep.subr.bf16.mxu0 0
      %9755 = vmatpush1.bf16.msra.mxu0 0
      %9756 = vmatprep.subr.bf16.mxu0 0
      %9757 = vmatpush1.bf16.msra.mxu0 0
      %9758 = vmatprep.mubr.bf16.mxu0 0
      %9759 = vmatmul.mubr.bf16.gmra.mrb[0].mxu0 %v9342
      %v9760 = vpop.f32.mrb[0].mxu0
      %v9761 = vadd.f32 %v9472, %v9760
      %v9762 = vpop.f32.mrb[0].mxu0
      %v9763 = vpop.f32.mrb[0].mxu0
      %v9764 = vadd.f32 %v9475, %v9763
      %v9765 = vpop.f32.mrb[0].mxu0
      %9766 = vmatprep.mubr.bf16.mxu0 0
      %9767 = vmatmul.mubr.bf16.gmra.mrb[0].mxu0 %v9345
      %v9768 = vpop.f32.mrb[0].mxu0
      %v9769 = vadd.f32 %v9480, %v9768
      %v9770 = vpop.f32.mrb[0].mxu0
      %v9771 = vpop.f32.mrb[0].mxu0
      %v9772 = vadd.f32 %v9483, %v9771
      %v9773 = vpop.f32.mrb[0].mxu0
      %9774 = vmatprep.mubr.bf16.mxu0 0
      %9775 = vmatmul.mubr.bf16.gmra.mrb[0].mxu0 %v9348
      %v9776 = vpop.f32.mrb[0].mxu0
      %v9777 = vadd.f32 %v9488, %v9776
      %v9778 = vpop.f32.mrb[0].mxu0
      %v9779 = vpop.f32.mrb[0].mxu0
      %v9780 = vadd.f32 %v9491, %v9779
      %v9781 = vpop.f32.mrb[0].mxu0
      %9782 = vmatprep.mubr.bf16.mxu0 0
      %9783 = vmatmul.mubr.bf16.gmra.mrb[0].mxu0 %v9351
      %v9784 = vpop.f32.mrb[0].mxu0
      %v9785 = vadd.f32 %v9496, %v9784
      %v9786 = vpop.f32.mrb[0].mxu0
      %v9787 = vpop.f32.mrb[0].mxu0
      %v9788 = vadd.f32 %v9499, %v9787
      %v9789 = vpop.f32.mrb[0].mxu0
      %9790 = vmatprep.mubr.bf16.mxu0 0
      %9791 = vmatmul.mubr.bf16.gmra.mrb[0].mxu0 %v9354
      %v9792 = vpop.f32.mrb[0].mxu0
      %v9793 = vadd.f32 %v9504, %v9792
      %v9794 = vpop.f32.mrb[0].mxu0
      %v9795 = vpop.f32.mrb[0].mxu0
      %v9796 = vadd.f32 %v9507, %v9795
      %v9797 = vpop.f32.mrb[0].mxu0
      %9798 = vmatprep.mubr.bf16.mxu0 0
      %9799 = vmatmul.mubr.bf16.gmra.mrb[0].mxu0 %v9357
      %v9800 = vpop.f32.mrb[0].mxu0
      %v9801 = vadd.f32 %v9512, %v9800
      %v9802 = vpop.f32.mrb[0].mxu0
      %v9803 = vpop.f32.mrb[0].mxu0
      %v9804 = vadd.f32 %v9515, %v9803
      %v9805 = vpop.f32.mrb[0].mxu0
      %9806 = vmatprep.mubr.bf16.mxu0 0
      %9807 = vmatmul.mubr.bf16.gmra.mrb[0].mxu0 %v9360
      %v9808 = vpop.f32.mrb[0].mxu0
      %v9809 = vadd.f32 %v9520, %v9808
      %v9810 = vpop.f32.mrb[0].mxu0
      %v9811 = vpop.f32.mrb[0].mxu0
      %v9812 = vadd.f32 %v9523, %v9811
      %v9813 = vpop.f32.mrb[0].mxu0
      %9814 = vmatprep.mubr.bf16.mxu0 0
      %9815 = vmatmul.mubr.bf16.gmra.mrb[0].mxu0 %v9363
      %v9816 = vpop.f32.mrb[0].mxu0
      %v9817 = vadd.f32 %v9528, %v9816
      %v9818 = vpop.f32.mrb[0].mxu0
      %v9819 = vpop.f32.mrb[0].mxu0
      %v9820 = vadd.f32 %v9531, %v9819
      %v9821 = vpop.f32.mrb[0].mxu0
      %9822 = vmatprep.mubr.bf16.mxu0 0
      %9823 = vmatmul.mubr.bf16.gmra.mrb[0].mxu0 %v9366
      %v9824 = vpop.f32.mrb[0].mxu0
      %v9825 = vadd.f32 %v9536, %v9824
      %v9826 = vpop.f32.mrb[0].mxu0
      %v9827 = vpop.f32.mrb[0].mxu0
      %v9828 = vadd.f32 %v9539, %v9827
      %v9829 = vpop.f32.mrb[0].mxu0
      %9830 = vmatprep.mubr.bf16.mxu0 0
      %9831 = vmatmul.mubr.bf16.gmra.mrb[0].mxu0 %v9369
      %v9832 = vpop.f32.mrb[0].mxu0
      %v9833 = vadd.f32 %v9544, %v9832
      %v9834 = vpop.f32.mrb[0].mxu0
      %v9835 = vpop.f32.mrb[0].mxu0
      %v9836 = vadd.f32 %v9547, %v9835
      %v9837 = vpop.f32.mrb[0].mxu0
      %9838 = vmatprep.mubr.bf16.mxu0 0
      %9839 = vmatmul.mubr.bf16.gmra.mrb[0].mxu0 %v9372
      %v9840 = vpop.f32.mrb[0].mxu0
      %v9841 = vadd.f32 %v9552, %v9840
      %v9842 = vpop.f32.mrb[0].mxu0
      %v9843 = vpop.f32.mrb[0].mxu0
      %v9844 = vadd.f32 %v9555, %v9843
      %v9845 = vpop.f32.mrb[0].mxu0
      %9846 = vmatprep.mubr.bf16.mxu0 0
      %9847 = vmatmul.mubr.bf16.gmra.mrb[0].mxu0 %v9375
      %v9848 = vpop.f32.mrb[0].mxu0
      %v9849 = vadd.f32 %v9560, %v9848
      %v9850 = vpop.f32.mrb[0].mxu0
      %v9851 = vpop.f32.mrb[0].mxu0
      %v9852 = vadd.f32 %v9563, %v9851
      %v9853 = vpop.f32.mrb[0].mxu0
      %9854 = vmatprep.mubr.bf16.mxu0 0
      %9855 = vmatmul.mubr.bf16.gmra.mrb[0].mxu0 %v9378
      %v9856 = vpop.f32.mrb[0].mxu0
      %v9857 = vadd.f32 %v9568, %v9856
      %v9858 = vpop.f32.mrb[0].mxu0
      %v9859 = vpop.f32.mrb[0].mxu0
      %v9860 = vadd.f32 %v9571, %v9859
      %v9861 = vpop.f32.mrb[0].mxu0
      %9862 = vmatprep.mubr.bf16.mxu0 0
      %9863 = vmatmul.mubr.bf16.gmra.mrb[0].mxu0 %v9381
      %v9864 = vpop.f32.mrb[0].mxu0
      %v9865 = vadd.f32 %v9576, %v9864
      %v9866 = vpop.f32.mrb[0].mxu0
      %v9867 = vpop.f32.mrb[0].mxu0
      %v9868 = vadd.f32 %v9579, %v9867
      %v9869 = vpop.f32.mrb[0].mxu0
      %9870 = vmatprep.mubr.bf16.mxu0 0
      %9871 = vmatmul.mubr.bf16.gmra.mrb[0].mxu0 %v9384
      %v9872 = vpop.f32.mrb[0].mxu0
      %v9873 = vadd.f32 %v9584, %v9872
      %v9874 = vpop.f32.mrb[0].mxu0
      %v9875 = vpop.f32.mrb[0].mxu0
      %v9876 = vadd.f32 %v9587, %v9875
      %v9877 = vpop.f32.mrb[0].mxu0
      %9878 = vmatprep.mubr.bf16.mxu0 0
      %9879 = vmatmul.mubr.bf16.gmra.mrb[0].mxu0 %v9387
      %v9880 = vpop.f32.mrb[0].mxu0
      %v9881 = vadd.f32 %v9592, %v9880
      %v9882 = vpop.f32.mrb[0].mxu0
      %v9883 = vpop.f32.mrb[0].mxu0
      %v9884 = vadd.f32 %v9595, %v9883
      %v9885 = vpop.f32.mrb[0].mxu0
      %9886 = vmatprep.mubr.bf16.mxu0 0
      %9887 = vmatmul.mubr.bf16.gmra.mrb[0].mxu0 %v9390
      %v9888 = vpop.f32.mrb[0].mxu0
      %v9889 = vadd.f32 %v9600, %v9888
      %v9890 = vpop.f32.mrb[0].mxu0
      %v9891 = vpop.f32.mrb[0].mxu0
      %v9892 = vadd.f32 %v9603, %v9891
      %v9893 = vpop.f32.mrb[0].mxu0
      %9894 = vmatprep.mubr.bf16.mxu0 0
      %9895 = vmatmul.mubr.bf16.gmra.mrb[0].mxu0 %v9393
      %v9896 = vpop.f32.mrb[0].mxu0
      %v9897 = vadd.f32 %v9608, %v9896
      %v9898 = vpop.f32.mrb[0].mxu0
      %v9899 = vpop.f32.mrb[0].mxu0
      %v9900 = vadd.f32 %v9611, %v9899
      %v9901 = vpop.f32.mrb[0].mxu0
      %9902 = vmatprep.mubr.bf16.mxu0 0
      %9903 = vmatmul.mubr.bf16.gmra.mrb[0].mxu0 %v9396
      %v9904 = vpop.f32.mrb[0].mxu0
      %v9905 = vadd.f32 %v9616, %v9904
      %v9906 = vpop.f32.mrb[0].mxu0
      %v9907 = vpop.f32.mrb[0].mxu0
      %v9908 = vadd.f32 %v9619, %v9907
      %v9909 = vpop.f32.mrb[0].mxu0
      %9910 = vmatprep.mubr.bf16.mxu0 0
      %9911 = vmatmul.mubr.bf16.gmra.mrb[0].mxu0 %v9399
      %v9912 = vpop.f32.mrb[0].mxu0
      %v9913 = vadd.f32 %v9624, %v9912
      %v9914 = vpop.f32.mrb[0].mxu0
      %v9915 = vpop.f32.mrb[0].mxu0
      %v9916 = vadd.f32 %v9627, %v9915
      %v9917 = vpop.f32.mrb[0].mxu0
      %9918 = vmatprep.mubr.bf16.mxu0 0
      %9919 = vmatmul.mubr.bf16.gmra.mrb[0].mxu0 %v9402
      %v9920 = vpop.f32.mrb[0].mxu0
      %v9921 = vadd.f32 %v9632, %v9920
      %v9922 = vpop.f32.mrb[0].mxu0
      %v9923 = vpop.f32.mrb[0].mxu0
      %v9924 = vadd.f32 %v9635, %v9923
      %v9925 = vpop.f32.mrb[0].mxu0
      %9926 = vmatprep.mubr.bf16.mxu0 0
      %9927 = vmatmul.mubr.bf16.gmra.mrb[0].mxu0 %v9405
      %v9928 = vpop.f32.mrb[0].mxu0
      %v9929 = vadd.f32 %v9640, %v9928
      %v9930 = vpop.f32.mrb[0].mxu0
      %v9931 = vpop.f32.mrb[0].mxu0
      %v9932 = vadd.f32 %v9643, %v9931
      %v9933 = vpop.f32.mrb[0].mxu0
      %9934 = vmatprep.mubr.bf16.mxu0 0
      %9935 = vmatmul.mubr.bf16.gmra.mrb[0].mxu0 %v9408
      %v9936 = vpop.f32.mrb[0].mxu0
      %v9937 = vadd.f32 %v9648, %v9936
      %v9938 = vpop.f32.mrb[0].mxu0
      %v9939 = vpop.f32.mrb[0].mxu0
      %v9940 = vadd.f32 %v9651, %v9939
      %v9941 = vpop.f32.mrb[0].mxu0
      %9942 = vmatprep.mubr.bf16.mxu0 0
      %9943 = vmatmul.mubr.bf16.gmra.mrb[0].mxu0 %v9411
      %v9944 = vpop.f32.mrb[0].mxu0
      %v9945 = vadd.f32 %v9656, %v9944
      %v9946 = vpop.f32.mrb[0].mxu0
      %v9947 = vpop.f32.mrb[0].mxu0
      %v9948 = vadd.f32 %v9659, %v9947
      %v9949 = vpop.f32.mrb[0].mxu0
      %9950 = vmatprep.mubr.bf16.mxu0 0
      %9951 = vmatmul.mubr.bf16.gmra.mrb[0].mxu0 %v9414
      %v9952 = vpop.f32.mrb[0].mxu0
      %v9953 = vadd.f32 %v9664, %v9952
      %v9954 = vpop.f32.mrb[0].mxu0
      %v9955 = vpop.f32.mrb[0].mxu0
      %v9956 = vadd.f32 %v9667, %v9955
      %v9957 = vpop.f32.mrb[0].mxu0
      %9958 = vmatprep.mubr.bf16.mxu0 0
      %9959 = vmatmul.mubr.bf16.gmra.mrb[0].mxu0 %v9417
      %v9960 = vpop.f32.mrb[0].mxu0
      %v9961 = vadd.f32 %v9672, %v9960
      %v9962 = vpop.f32.mrb[0].mxu0
      %v9963 = vpop.f32.mrb[0].mxu0
      %v9964 = vadd.f32 %v9675, %v9963
      %v9965 = vpop.f32.mrb[0].mxu0
      %9966 = vmatprep.mubr.bf16.mxu0 0
      %9967 = vmatmul.mubr.bf16.gmra.mrb[0].mxu0 %v9420
      %v9968 = vpop.f32.mrb[0].mxu0
      %v9969 = vadd.f32 %v9680, %v9968
      %v9970 = vpop.f32.mrb[0].mxu0
      %v9971 = vpop.f32.mrb[0].mxu0
      %v9972 = vadd.f32 %v9683, %v9971
      %v9973 = vpop.f32.mrb[0].mxu0
      %9974 = vmatprep.mubr.bf16.mxu0 0
      %9975 = vmatmul.mubr.bf16.gmra.mrb[0].mxu0 %v9423
      %v9976 = vpop.f32.mrb[0].mxu0
      %v9977 = vadd.f32 %v9688, %v9976
      %v9978 = vpop.f32.mrb[0].mxu0
      %v9979 = vpop.f32.mrb[0].mxu0
      %v9980 = vadd.f32 %v9691, %v9979
      %v9981 = vpop.f32.mrb[0].mxu0
      %9982 = vmatprep.mubr.bf16.mxu0 0
      %9983 = vmatmul.mubr.bf16.gmra.mrb[0].mxu0 %v9426
      %v9984 = vpop.f32.mrb[0].mxu0
      %v9985 = vadd.f32 %v9696, %v9984
      %v9986 = vpop.f32.mrb[0].mxu0
      %v9987 = vpop.f32.mrb[0].mxu0
      %v9988 = vadd.f32 %v9699, %v9987
      %v9989 = vpop.f32.mrb[0].mxu0
      %9990 = vmatprep.mubr.bf16.mxu0 0
      %9991 = vmatmul.mubr.bf16.gmra.mrb[0].mxu0 %v9429
      %v9992 = vpop.f32.mrb[0].mxu0
      %v9993 = vadd.f32 %v9704, %v9992
      %v9994 = vpop.f32.mrb[0].mxu0
      %v9995 = vpop.f32.mrb[0].mxu0
      %v9996 = vadd.f32 %v9707, %v9995
      %v9997 = vpop.f32.mrb[0].mxu0
      %9998 = vmatprep.mubr.bf16.mxu0 0
      %9999 = vmatmul.mubr.bf16.gmra.mrb[0].mxu0 %v9432
      %v10000 = vpop.f32.mrb[0].mxu0
      %v10001 = vadd.f32 %v9712, %v10000
      %v10002 = vpop.f32.mrb[0].mxu0
      %v10003 = vpop.f32.mrb[0].mxu0
      %v10004 = vadd.f32 %v9715, %v10003
      %v10005 = vpop.f32.mrb[0].mxu0
      %10006 = vmatprep.mubr.bf16.mxu0 0
      %10007 = vmatmul.mubr.bf16.gmra.mrb[0].mxu0 %v9435
      %v10008 = vpop.f32.mrb[0].mxu0
      %v10009 = vadd.f32 %v9720, %v10008
      %v10010 = vpop.f32.mrb[0].mxu0
      %v10011 = vpop.f32.mrb[0].mxu0
      %v10012 = vadd.f32 %v9723, %v10011
      %v10013 = vpop.f32.mrb[0].mxu0
      %10014 = vdwg.mxu0
      %v10015 = vmax.f32 %v9761, 0.0
      %v10016 = vmax.f32 %v9764, 0.0
      %v10017 = vmax.f32 %v9769, 0.0
      %v10018 = vmax.f32 %v9772, 0.0
      %v10019 = vmax.f32 %v9777, 0.0
      %v10020 = vmax.f32 %v9780, 0.0
      %v10021 = vmax.f32 %v9785, 0.0
      %v10022 = vmax.f32 %v9788, 0.0
      %v10023 = vmax.f32 %v9793, 0.0
      %v10024 = vmax.f32 %v9796, 0.0
      %v10025 = vmax.f32 %v9801, 0.0
      %v10026 = vmax.f32 %v9804, 0.0
      %v10027 = vmax.f32 %v9809, 0.0
      %v10028 = vmax.f32 %v9812, 0.0
      %v10029 = vmax.f32 %v9817, 0.0
      %v10030 = vmax.f32 %v9820, 0.0
      %v10031 = vmax.f32 %v9825, 0.0
      %v10032 = vmax.f32 %v9828, 0.0
      %v10033 = vmax.f32 %v9833, 0.0
      %v10034 = vmax.f32 %v9836, 0.0
      %v10035 = vmax.f32 %v9841, 0.0
      %v10036 = vmax.f32 %v9844, 0.0
      %v10037 = vmax.f32 %v9849, 0.0
      %v10038 = vmax.f32 %v9852, 0.0
      %v10039 = vmax.f32 %v9857, 0.0
      %v10040 = vmax.f32 %v9860, 0.0
      %v10041 = vmax.f32 %v9865, 0.0
      %v10042 = vmax.f32 %v9868, 0.0
      %v10043 = vmax.f32 %v9873, 0.0
      %v10044 = vmax.f32 %v9876, 0.0
      %v10045 = vmax.f32 %v9881, 0.0
      %v10046 = vmax.f32 %v9884, 0.0
      %v10047 = vmax.f32 %v9889, 0.0
      %v10048 = vmax.f32 %v9892, 0.0
      %v10049 = vmax.f32 %v9897, 0.0
      %v10050 = vmax.f32 %v9900, 0.0
      %v10051 = vmax.f32 %v9905, 0.0
      %v10052 = vmax.f32 %v9908, 0.0
      %v10053 = vmax.f32 %v9913, 0.0
      %v10054 = vmax.f32 %v9916, 0.0
      %v10055 = vmax.f32 %v9921, 0.0
      %v10056 = vmax.f32 %v9924, 0.0
      %v10057 = vmax.f32 %v9929, 0.0
      %v10058 = vmax.f32 %v9932, 0.0
      %v10059 = vmax.f32 %v9937, 0.0
      %v10060 = vmax.f32 %v9940, 0.0
      %v10061 = vmax.f32 %v9945, 0.0
      %v10062 = vmax.f32 %v9948, 0.0
      %v10063 = vmax.f32 %v9953, 0.0
      %v10064 = vmax.f32 %v9956, 0.0
      %v10065 = vmax.f32 %v9961, 0.0
      %v10066 = vmax.f32 %v9964, 0.0
      %v10067 = vmax.f32 %v9969, 0.0
      %v10068 = vmax.f32 %v9972, 0.0
      %v10069 = vmax.f32 %v9977, 0.0
      %v10070 = vmax.f32 %v9980, 0.0
      %v10071 = vmax.f32 %v9985, 0.0
      %v10072 = vmax.f32 %v9988, 0.0
      %v10073 = vmax.f32 %v9993, 0.0
      %v10074 = vmax.f32 %v9996, 0.0
      %v10075 = vmax.f32 %v10001, 0.0
      %v10076 = vmax.f32 %v10004, 0.0
      %v10077 = vmax.f32 %v10009, 0.0
      %v10078 = vmax.f32 %v10012, 0.0
      %v10079 = vpack.c.bf16 %v10016, %v10015
      %v10080 = vpack.c.bf16 %v10018, %v10017
      %v10081 = vpack.c.bf16 %v10020, %v10019
      %v10082 = vpack.c.bf16 %v10022, %v10021
      %v10083 = vpack.c.bf16 %v10024, %v10023
      %v10084 = vpack.c.bf16 %v10026, %v10025
      %v10085 = vpack.c.bf16 %v10028, %v10027
      %v10086 = vpack.c.bf16 %v10030, %v10029
      %v10087 = vpack.c.bf16 %v10032, %v10031
      %v10088 = vpack.c.bf16 %v10034, %v10033
      %v10089 = vpack.c.bf16 %v10036, %v10035
      %v10090 = vpack.c.bf16 %v10038, %v10037
      %v10091 = vpack.c.bf16 %v10040, %v10039
      %v10092 = vpack.c.bf16 %v10042, %v10041
      %v10093 = vpack.c.bf16 %v10044, %v10043
      %v10094 = vpack.c.bf16 %v10046, %v10045
      %v10095 = vpack.c.bf16 %v10048, %v10047
      %v10096 = vpack.c.bf16 %v10050, %v10049
      %v10097 = vpack.c.bf16 %v10052, %v10051
      %v10098 = vpack.c.bf16 %v10054, %v10053
      %v10099 = vpack.c.bf16 %v10056, %v10055
      %v10100 = vpack.c.bf16 %v10058, %v10057
      %v10101 = vpack.c.bf16 %v10060, %v10059
      %v10102 = vpack.c.bf16 %v10062, %v10061
      %v10103 = vpack.c.bf16 %v10064, %v10063
      %v10104 = vpack.c.bf16 %v10066, %v10065
      %v10105 = vpack.c.bf16 %v10068, %v10067
      %v10106 = vpack.c.bf16 %v10070, %v10069
      %v10107 = vpack.c.bf16 %v10072, %v10071
      %v10108 = vpack.c.bf16 %v10074, %v10073
      %v10109 = vpack.c.bf16 %v10076, %v10075
      %v10110 = vpack.c.bf16 %v10078, %v10077
      %v10111 = vld [vmem:[%s3] sm:$0xf]
      %v10112 = vld [vmem:[%s3 + $0x4] sm:$0xf]
      %v10113 = vld [vmem:[%s3 + $0x8] sm:$0xf]
      %v10114 = vld [vmem:[%s3 + $0xc] sm:$0xf]
      %v10115 = vld [vmem:[%s3 + $0x10] sm:$0x3]
      %v10121 = vunpack.c.l.b16 %v10111
      %v10122 = vunpack.c.l.b16 %v10112
      %v10123 = vunpack.c.l.b16 %v10113
      %v10124 = vunpack.c.l.b16 %v10114
      %v10125 = vunpack.c.l.b16 %v10115
      %v10126 = vpack.c.b16 %v10122, %v10121
      %v10127 = vpack.c.b16 %v10124, %v10123
      %v10128 = vpack.c.b16 %v10125, %v10125
      %vm10131 = vcmask 293888
      %v10133 = vsel %vm10131, %v10079, 0
      %v10136 = vsel %vm10131, %v10080, 0
      %v10139 = vsel %vm10131, %v10081, 0
      %v10142 = vsel %vm10131, %v10082, 0
      %v10145 = vsel %vm10131, %v10083, 0
      %v10148 = vsel %vm10131, %v10084, 0
      %v10151 = vsel %vm10131, %v10085, 0
      %v10154 = vsel %vm10131, %v10086, 0
      %v10157 = vsel %vm10131, %v10087, 0
      %v10160 = vsel %vm10131, %v10088, 0
      %v10163 = vsel %vm10131, %v10089, 0
      %v10166 = vsel %vm10131, %v10090, 0
      %v10169 = vsel %vm10131, %v10091, 0
      %v10172 = vsel %vm10131, %v10092, 0
      %v10175 = vsel %vm10131, %v10093, 0
      %v10178 = vsel %vm10131, %v10094, 0
      %v10181 = vsel %vm10131, %v10095, 0
      %v10184 = vsel %vm10131, %v10096, 0
      %v10187 = vsel %vm10131, %v10097, 0
      %v10190 = vsel %vm10131, %v10098, 0
      %v10193 = vsel %vm10131, %v10099, 0
      %v10196 = vsel %vm10131, %v10100, 0
      %v10199 = vsel %vm10131, %v10101, 0
      %v10202 = vsel %vm10131, %v10102, 0
      %v10205 = vsel %vm10131, %v10103, 0
      %v10208 = vsel %vm10131, %v10104, 0
      %v10211 = vsel %vm10131, %v10105, 0
      %v10214 = vsel %vm10131, %v10106, 0
      %v10217 = vsel %vm10131, %v10107, 0
      %v10220 = vsel %vm10131, %v10108, 0
      %v10223 = vsel %vm10131, %v10109, 0
      %v10226 = vsel %vm10131, %v10110, 0
      %vm10228 = vcmask 1041408
      %v10230 = vsel %vm10228, %v10128, 0
      %10232 = vmatprep.subr.bf16.mxu0 0
      %10233 = vmatpush1.bf16.msra.mxu0 %v10126
      %10234 = vmatprep.subr.bf16.mxu0 0
      %10235 = vmatpush1.bf16.msra.mxu0 %v10127
      %10236 = vmatprep.subr.bf16.mxu0 0
      %10237 = vmatpush1.bf16.msra.mxu0 %v10230
      %10238 = vmatprep.subr.bf16.mxu0 0
      %10239 = vmatpush1.bf16.msra.mxu0 0
      %10240 = vmatprep.subr.bf16.mxu0 0
      %10241 = vmatpush1.bf16.msra.mxu0 0
      %10242 = vmatprep.subr.bf16.mxu0 0
      %10243 = vmatpush1.bf16.msra.mxu0 0
      %10244 = vmatprep.subr.bf16.mxu0 0
      %10245 = vmatpush1.bf16.msra.mxu0 0
      %10246 = vmatprep.subr.bf16.mxu0 0
      %10247 = vmatpush1.bf16.msra.mxu0 0
      %10248 = vmatprep.subr.bf16.mxu0 0
      %10249 = vmatpush1.bf16.msra.mxu0 0
      %10250 = vmatprep.subr.bf16.mxu0 0
      %10251 = vmatpush1.bf16.msra.mxu0 0
      %10252 = vmatprep.subr.bf16.mxu0 0
      %10253 = vmatpush1.bf16.msra.mxu0 0
      %10254 = vmatprep.subr.bf16.mxu0 0
      %10255 = vmatpush1.bf16.msra.mxu0 0
      %10256 = vmatprep.subr.bf16.mxu0 0
      %10257 = vmatpush1.bf16.msra.mxu0 0
      %10258 = vmatprep.subr.bf16.mxu0 0
      %10259 = vmatpush1.bf16.msra.mxu0 0
      %10260 = vmatprep.subr.bf16.mxu0 0
      %10261 = vmatpush1.bf16.msra.mxu0 0
      %10262 = vmatprep.subr.bf16.mxu0 0
      %10263 = vmatpush1.bf16.msra.mxu0 0
      %10264 = vmatprep.mubr.bf16.mxu0 0
      %10265 = vmatmul.mubr.bf16.gmra.mrb[0].mxu0 %v10133
      %v10266 = vpop.f32.mrb[0].mxu0
      %v10267 = vadd.f32 0.0, %v10266
      %v10268 = vpop.f32.mrb[0].mxu0
      %v10269 = vpop.f32.mrb[0].mxu0
      %v10270 = vadd.f32 0.0, %v10269
      %v10271 = vpop.f32.mrb[0].mxu0
      %10272 = vmatprep.mubr.bf16.mxu0 0
      %10273 = vmatmul.mubr.bf16.gmra.mrb[0].mxu0 %v10136
      %v10274 = vpop.f32.mrb[0].mxu0
      %v10275 = vadd.f32 0.0, %v10274
      %v10276 = vpop.f32.mrb[0].mxu0
      %v10277 = vpop.f32.mrb[0].mxu0
      %v10278 = vadd.f32 0.0, %v10277
      %v10279 = vpop.f32.mrb[0].mxu0
      %10280 = vmatprep.mubr.bf16.mxu0 0
      %10281 = vmatmul.mubr.bf16.gmra.mrb[0].mxu0 %v10139
      %v10282 = vpop.f32.mrb[0].mxu0
      %v10283 = vadd.f32 0.0, %v10282
      %v10284 = vpop.f32.mrb[0].mxu0
      %v10285 = vpop.f32.mrb[0].mxu0
      %v10286 = vadd.f32 0.0, %v10285
      %v10287 = vpop.f32.mrb[0].mxu0
      %10288 = vmatprep.mubr.bf16.mxu0 0
      %10289 = vmatmul.mubr.bf16.gmra.mrb[0].mxu0 %v10142
      %v10290 = vpop.f32.mrb[0].mxu0
      %v10291 = vadd.f32 0.0, %v10290
      %v10292 = vpop.f32.mrb[0].mxu0
      %v10293 = vpop.f32.mrb[0].mxu0
      %v10294 = vadd.f32 0.0, %v10293
      %v10295 = vpop.f32.mrb[0].mxu0
      %10296 = vmatprep.mubr.bf16.mxu0 0
      %10297 = vmatmul.mubr.bf16.gmra.mrb[0].mxu0 %v10145
      %v10298 = vpop.f32.mrb[0].mxu0
      %v10299 = vadd.f32 0.0, %v10298
      %v10300 = vpop.f32.mrb[0].mxu0
      %v10301 = vpop.f32.mrb[0].mxu0
      %v10302 = vadd.f32 0.0, %v10301
      %v10303 = vpop.f32.mrb[0].mxu0
      %10304 = vmatprep.mubr.bf16.mxu0 0
      %10305 = vmatmul.mubr.bf16.gmra.mrb[0].mxu0 %v10148
      %v10306 = vpop.f32.mrb[0].mxu0
      %v10307 = vadd.f32 0.0, %v10306
      %v10308 = vpop.f32.mrb[0].mxu0
      %v10309 = vpop.f32.mrb[0].mxu0
      %v10310 = vadd.f32 0.0, %v10309
      %v10311 = vpop.f32.mrb[0].mxu0
      %10312 = vmatprep.mubr.bf16.mxu0 0
      %10313 = vmatmul.mubr.bf16.gmra.mrb[0].mxu0 %v10151
      %v10314 = vpop.f32.mrb[0].mxu0
      %v10315 = vadd.f32 0.0, %v10314
      %v10316 = vpop.f32.mrb[0].mxu0
      %v10317 = vpop.f32.mrb[0].mxu0
      %v10318 = vadd.f32 0.0, %v10317
      %v10319 = vpop.f32.mrb[0].mxu0
      %10320 = vmatprep.mubr.bf16.mxu0 0
      %10321 = vmatmul.mubr.bf16.gmra.mrb[0].mxu0 %v10154
      %v10322 = vpop.f32.mrb[0].mxu0
      %v10323 = vadd.f32 0.0, %v10322
      %v10324 = vpop.f32.mrb[0].mxu0
      %v10325 = vpop.f32.mrb[0].mxu0
      %v10326 = vadd.f32 0.0, %v10325
      %v10327 = vpop.f32.mrb[0].mxu0
      %10328 = vmatprep.mubr.bf16.mxu0 0
      %10329 = vmatmul.mubr.bf16.gmra.mrb[0].mxu0 %v10157
      %v10330 = vpop.f32.mrb[0].mxu0
      %v10331 = vadd.f32 0.0, %v10330
      %v10332 = vpop.f32.mrb[0].mxu0
      %v10333 = vpop.f32.mrb[0].mxu0
      %v10334 = vadd.f32 0.0, %v10333
      %v10335 = vpop.f32.mrb[0].mxu0
      %10336 = vmatprep.mubr.bf16.mxu0 0
      %10337 = vmatmul.mubr.bf16.gmra.mrb[0].mxu0 %v10160
      %v10338 = vpop.f32.mrb[0].mxu0
      %v10339 = vadd.f32 0.0, %v10338
      %v10340 = vpop.f32.mrb[0].mxu0
      %v10341 = vpop.f32.mrb[0].mxu0
      %v10342 = vadd.f32 0.0, %v10341
      %v10343 = vpop.f32.mrb[0].mxu0
      %10344 = vmatprep.mubr.bf16.mxu0 0
      %10345 = vmatmul.mubr.bf16.gmra.mrb[0].mxu0 %v10163
      %v10346 = vpop.f32.mrb[0].mxu0
      %v10347 = vadd.f32 0.0, %v10346
      %v10348 = vpop.f32.mrb[0].mxu0
      %v10349 = vpop.f32.mrb[0].mxu0
      %v10350 = vadd.f32 0.0, %v10349
      %v10351 = vpop.f32.mrb[0].mxu0
      %10352 = vmatprep.mubr.bf16.mxu0 0
      %10353 = vmatmul.mubr.bf16.gmra.mrb[0].mxu0 %v10166
      %v10354 = vpop.f32.mrb[0].mxu0
      %v10355 = vadd.f32 0.0, %v10354
      %v10356 = vpop.f32.mrb[0].mxu0
      %v10357 = vpop.f32.mrb[0].mxu0
      %v10358 = vadd.f32 0.0, %v10357
      %v10359 = vpop.f32.mrb[0].mxu0
      %10360 = vmatprep.mubr.bf16.mxu0 0
      %10361 = vmatmul.mubr.bf16.gmra.mrb[0].mxu0 %v10169
      %v10362 = vpop.f32.mrb[0].mxu0
      %v10363 = vadd.f32 0.0, %v10362
      %v10364 = vpop.f32.mrb[0].mxu0
      %v10365 = vpop.f32.mrb[0].mxu0
      %v10366 = vadd.f32 0.0, %v10365
      %v10367 = vpop.f32.mrb[0].mxu0
      %10368 = vmatprep.mubr.bf16.mxu0 0
      %10369 = vmatmul.mubr.bf16.gmra.mrb[0].mxu0 %v10172
      %v10370 = vpop.f32.mrb[0].mxu0
      %v10371 = vadd.f32 0.0, %v10370
      %v10372 = vpop.f32.mrb[0].mxu0
      %v10373 = vpop.f32.mrb[0].mxu0
      %v10374 = vadd.f32 0.0, %v10373
      %v10375 = vpop.f32.mrb[0].mxu0
      %10376 = vmatprep.mubr.bf16.mxu0 0
      %10377 = vmatmul.mubr.bf16.gmra.mrb[0].mxu0 %v10175
      %v10378 = vpop.f32.mrb[0].mxu0
      %v10379 = vadd.f32 0.0, %v10378
      %v10380 = vpop.f32.mrb[0].mxu0
      %v10381 = vpop.f32.mrb[0].mxu0
      %v10382 = vadd.f32 0.0, %v10381
      %v10383 = vpop.f32.mrb[0].mxu0
      %10384 = vmatprep.mubr.bf16.mxu0 0
      %10385 = vmatmul.mubr.bf16.gmra.mrb[0].mxu0 %v10178
      %v10386 = vpop.f32.mrb[0].mxu0
      %v10387 = vadd.f32 0.0, %v10386
      %v10388 = vpop.f32.mrb[0].mxu0
      %v10389 = vpop.f32.mrb[0].mxu0
      %v10390 = vadd.f32 0.0, %v10389
      %v10391 = vpop.f32.mrb[0].mxu0
      %10392 = vmatprep.mubr.bf16.mxu0 0
      %10393 = vmatmul.mubr.bf16.gmra.mrb[0].mxu0 %v10181
      %v10394 = vpop.f32.mrb[0].mxu0
      %v10395 = vadd.f32 0.0, %v10394
      %v10396 = vpop.f32.mrb[0].mxu0
      %v10397 = vpop.f32.mrb[0].mxu0
      %v10398 = vadd.f32 0.0, %v10397
      %v10399 = vpop.f32.mrb[0].mxu0
      %10400 = vmatprep.mubr.bf16.mxu0 0
      %10401 = vmatmul.mubr.bf16.gmra.mrb[0].mxu0 %v10184
      %v10402 = vpop.f32.mrb[0].mxu0
      %v10403 = vadd.f32 0.0, %v10402
      %v10404 = vpop.f32.mrb[0].mxu0
      %v10405 = vpop.f32.mrb[0].mxu0
      %v10406 = vadd.f32 0.0, %v10405
      %v10407 = vpop.f32.mrb[0].mxu0
      %10408 = vmatprep.mubr.bf16.mxu0 0
      %10409 = vmatmul.mubr.bf16.gmra.mrb[0].mxu0 %v10187
      %v10410 = vpop.f32.mrb[0].mxu0
      %v10411 = vadd.f32 0.0, %v10410
      %v10412 = vpop.f32.mrb[0].mxu0
      %v10413 = vpop.f32.mrb[0].mxu0
      %v10414 = vadd.f32 0.0, %v10413
      %v10415 = vpop.f32.mrb[0].mxu0
      %10416 = vmatprep.mubr.bf16.mxu0 0
      %10417 = vmatmul.mubr.bf16.gmra.mrb[0].mxu0 %v10190
      %v10418 = vpop.f32.mrb[0].mxu0
      %v10419 = vadd.f32 0.0, %v10418
      %v10420 = vpop.f32.mrb[0].mxu0
      %v10421 = vpop.f32.mrb[0].mxu0
      %v10422 = vadd.f32 0.0, %v10421
      %v10423 = vpop.f32.mrb[0].mxu0
      %10424 = vmatprep.mubr.bf16.mxu0 0
      %10425 = vmatmul.mubr.bf16.gmra.mrb[0].mxu0 %v10193
      %v10426 = vpop.f32.mrb[0].mxu0
      %v10427 = vadd.f32 0.0, %v10426
      %v10428 = vpop.f32.mrb[0].mxu0
      %v10429 = vpop.f32.mrb[0].mxu0
      %v10430 = vadd.f32 0.0, %v10429
      %v10431 = vpop.f32.mrb[0].mxu0
      %10432 = vmatprep.mubr.bf16.mxu0 0
      %10433 = vmatmul.mubr.bf16.gmra.mrb[0].mxu0 %v10196
      %v10434 = vpop.f32.mrb[0].mxu0
      %v10435 = vadd.f32 0.0, %v10434
      %v10436 = vpop.f32.mrb[0].mxu0
      %v10437 = vpop.f32.mrb[0].mxu0
      %v10438 = vadd.f32 0.0, %v10437
      %v10439 = vpop.f32.mrb[0].mxu0
      %10440 = vmatprep.mubr.bf16.mxu0 0
      %10441 = vmatmul.mubr.bf16.gmra.mrb[0].mxu0 %v10199
      %v10442 = vpop.f32.mrb[0].mxu0
      %v10443 = vadd.f32 0.0, %v10442
      %v10444 = vpop.f32.mrb[0].mxu0
      %v10445 = vpop.f32.mrb[0].mxu0
      %v10446 = vadd.f32 0.0, %v10445
      %v10447 = vpop.f32.mrb[0].mxu0
      %10448 = vmatprep.mubr.bf16.mxu0 0
      %10449 = vmatmul.mubr.bf16.gmra.mrb[0].mxu0 %v10202
      %v10450 = vpop.f32.mrb[0].mxu0
      %v10451 = vadd.f32 0.0, %v10450
      %v10452 = vpop.f32.mrb[0].mxu0
      %v10453 = vpop.f32.mrb[0].mxu0
      %v10454 = vadd.f32 0.0, %v10453
      %v10455 = vpop.f32.mrb[0].mxu0
      %10456 = vmatprep.mubr.bf16.mxu0 0
      %10457 = vmatmul.mubr.bf16.gmra.mrb[0].mxu0 %v10205
      %v10458 = vpop.f32.mrb[0].mxu0
      %v10459 = vadd.f32 0.0, %v10458
      %v10460 = vpop.f32.mrb[0].mxu0
      %v10461 = vpop.f32.mrb[0].mxu0
      %v10462 = vadd.f32 0.0, %v10461
      %v10463 = vpop.f32.mrb[0].mxu0
      %10464 = vmatprep.mubr.bf16.mxu0 0
      %10465 = vmatmul.mubr.bf16.gmra.mrb[0].mxu0 %v10208
      %v10466 = vpop.f32.mrb[0].mxu0
      %v10467 = vadd.f32 0.0, %v10466
      %v10468 = vpop.f32.mrb[0].mxu0
      %v10469 = vpop.f32.mrb[0].mxu0
      %v10470 = vadd.f32 0.0, %v10469
      %v10471 = vpop.f32.mrb[0].mxu0
      %10472 = vmatprep.mubr.bf16.mxu0 0
      %10473 = vmatmul.mubr.bf16.gmra.mrb[0].mxu0 %v10211
      %v10474 = vpop.f32.mrb[0].mxu0
      %v10475 = vadd.f32 0.0, %v10474
      %v10476 = vpop.f32.mrb[0].mxu0
      %v10477 = vpop.f32.mrb[0].mxu0
      %v10478 = vadd.f32 0.0, %v10477
      %v10479 = vpop.f32.mrb[0].mxu0
      %10480 = vmatprep.mubr.bf16.mxu0 0
      %10481 = vmatmul.mubr.bf16.gmra.mrb[0].mxu0 %v10214
      %v10482 = vpop.f32.mrb[0].mxu0
      %v10483 = vadd.f32 0.0, %v10482
      %v10484 = vpop.f32.mrb[0].mxu0
      %v10485 = vpop.f32.mrb[0].mxu0
      %v10486 = vadd.f32 0.0, %v10485
      %v10487 = vpop.f32.mrb[0].mxu0
      %10488 = vmatprep.mubr.bf16.mxu0 0
      %10489 = vmatmul.mubr.bf16.gmra.mrb[0].mxu0 %v10217
      %v10490 = vpop.f32.mrb[0].mxu0
      %v10491 = vadd.f32 0.0, %v10490
      %v10492 = vpop.f32.mrb[0].mxu0
      %v10493 = vpop.f32.mrb[0].mxu0
      %v10494 = vadd.f32 0.0, %v10493
      %v10495 = vpop.f32.mrb[0].mxu0
      %10496 = vmatprep.mubr.bf16.mxu0 0
      %10497 = vmatmul.mubr.bf16.gmra.mrb[0].mxu0 %v10220
      %v10498 = vpop.f32.mrb[0].mxu0
      %v10499 = vadd.f32 0.0, %v10498
      %v10500 = vpop.f32.mrb[0].mxu0
      %v10501 = vpop.f32.mrb[0].mxu0
      %v10502 = vadd.f32 0.0, %v10501
      %v10503 = vpop.f32.mrb[0].mxu0
      %10504 = vmatprep.mubr.bf16.mxu0 0
      %10505 = vmatmul.mubr.bf16.gmra.mrb[0].mxu0 %v10223
      %v10506 = vpop.f32.mrb[0].mxu0
      %v10507 = vadd.f32 0.0, %v10506
      %v10508 = vpop.f32.mrb[0].mxu0
      %v10509 = vpop.f32.mrb[0].mxu0
      %v10510 = vadd.f32 0.0, %v10509
      %v10511 = vpop.f32.mrb[0].mxu0
      %10512 = vmatprep.mubr.bf16.mxu0 0
      %10513 = vmatmul.mubr.bf16.gmra.mrb[0].mxu0 %v10226
      %v10514 = vpop.f32.mrb[0].mxu0
      %v10515 = vadd.f32 0.0, %v10514
      %v10516 = vpop.f32.mrb[0].mxu0
      %v10517 = vpop.f32.mrb[0].mxu0
      %v10518 = vadd.f32 0.0, %v10517
      %v10519 = vpop.f32.mrb[0].mxu0
      %10520 = vdwg.mxu0
      %vm10521 = vcmask 31744
      %10522 = vst.msk [vmem:[%s213] sm:$0xff] %vm10521, %v10267
      %10523 = vst.msk [vmem:[%s213 + $0x8] sm:$0xff] %vm10521, %v10270
      %10524 = vst.msk [vmem:[%s213 + $0x10] sm:$0xff] %vm10521, %v10275
      %10525 = vst.msk [vmem:[%s213 + $0x18] sm:$0xff] %vm10521, %v10278
      %10526 = vst.msk [vmem:[%s213 + $0x20] sm:$0xff] %vm10521, %v10283
      %10527 = vst.msk [vmem:[%s213 + $0x28] sm:$0xff] %vm10521, %v10286
      %10528 = vst.msk [vmem:[%s213 + $0x30] sm:$0xff] %vm10521, %v10291
      %10529 = vst.msk [vmem:[%s213 + $0x38] sm:$0xff] %vm10521, %v10294
      %10530 = vst.msk [vmem:[%s213 + $0x40] sm:$0xff] %vm10521, %v10299
      %10531 = vst.msk [vmem:[%s213 + $0x48] sm:$0xff] %vm10521, %v10302
      %10532 = vst.msk [vmem:[%s213 + $0x50] sm:$0xff] %vm10521, %v10307
      %10533 = vst.msk [vmem:[%s213 + $0x58] sm:$0xff] %vm10521, %v10310
      %10534 = vst.msk [vmem:[%s213 + $0x60] sm:$0xff] %vm10521, %v10315
      %10535 = vst.msk [vmem:[%s213 + $0x68] sm:$0xff] %vm10521, %v10318
      %10536 = vst.msk [vmem:[%s213 + $0x70] sm:$0xff] %vm10521, %v10323
      %10537 = vst.msk [vmem:[%s213 + $0x78] sm:$0xff] %vm10521, %v10326
      %10538 = vst.msk [vmem:[%s213 + $0x80] sm:$0xff] %vm10521, %v10331
      %10539 = vst.msk [vmem:[%s213 + $0x88] sm:$0xff] %vm10521, %v10334
      %10540 = vst.msk [vmem:[%s213 + $0x90] sm:$0xff] %vm10521, %v10339
      %10541 = vst.msk [vmem:[%s213 + $0x98] sm:$0xff] %vm10521, %v10342
      %10542 = vst.msk [vmem:[%s213 + $0xa0] sm:$0xff] %vm10521, %v10347
      %10543 = vst.msk [vmem:[%s213 + $0xa8] sm:$0xff] %vm10521, %v10350
      %10544 = vst.msk [vmem:[%s213 + $0xb0] sm:$0xff] %vm10521, %v10355
      %10545 = vst.msk [vmem:[%s213 + $0xb8] sm:$0xff] %vm10521, %v10358
      %10546 = vst.msk [vmem:[%s213 + $0xc0] sm:$0xff] %vm10521, %v10363
      %10547 = vst.msk [vmem:[%s213 + $0xc8] sm:$0xff] %vm10521, %v10366
      %10548 = vst.msk [vmem:[%s213 + $0xd0] sm:$0xff] %vm10521, %v10371
      %10549 = vst.msk [vmem:[%s213 + $0xd8] sm:$0xff] %vm10521, %v10374
      %10550 = vst.msk [vmem:[%s213 + $0xe0] sm:$0xff] %vm10521, %v10379
      %10551 = vst.msk [vmem:[%s213 + $0xe8] sm:$0xff] %vm10521, %v10382
      %10552 = vst.msk [vmem:[%s213 + $0xf0] sm:$0xff] %vm10521, %v10387
      %10553 = vst.msk [vmem:[%s213 + $0xf8] sm:$0xff] %vm10521, %v10390
      %10554 = vst.msk [vmem:[%s213 + $0x100] sm:$0xff] %vm10521, %v10395
      %10555 = vst.msk [vmem:[%s213 + $0x108] sm:$0xff] %vm10521, %v10398
      %10556 = vst.msk [vmem:[%s213 + $0x110] sm:$0xff] %vm10521, %v10403
      %10557 = vst.msk [vmem:[%s213 + $0x118] sm:$0xff] %vm10521, %v10406
      %10558 = vst.msk [vmem:[%s213 + $0x120] sm:$0xff] %vm10521, %v10411
      %10559 = vst.msk [vmem:[%s213 + $0x128] sm:$0xff] %vm10521, %v10414
      %10560 = vst.msk [vmem:[%s213 + $0x130] sm:$0xff] %vm10521, %v10419
      %10561 = vst.msk [vmem:[%s213 + $0x138] sm:$0xff] %vm10521, %v10422
      %10562 = vst.msk [vmem:[%s213 + $0x140] sm:$0xff] %vm10521, %v10427
      %10563 = vst.msk [vmem:[%s213 + $0x148] sm:$0xff] %vm10521, %v10430
      %10564 = vst.msk [vmem:[%s213 + $0x150] sm:$0xff] %vm10521, %v10435
      %10565 = vst.msk [vmem:[%s213 + $0x158] sm:$0xff] %vm10521, %v10438
      %10566 = vst.msk [vmem:[%s213 + $0x160] sm:$0xff] %vm10521, %v10443
      %10567 = vst.msk [vmem:[%s213 + $0x168] sm:$0xff] %vm10521, %v10446
      %10568 = vst.msk [vmem:[%s213 + $0x170] sm:$0xff] %vm10521, %v10451
      %10569 = vst.msk [vmem:[%s213 + $0x178] sm:$0xff] %vm10521, %v10454
      %10570 = vst.msk [vmem:[%s213 + $0x180] sm:$0xff] %vm10521, %v10459
      %10571 = vst.msk [vmem:[%s213 + $0x188] sm:$0xff] %vm10521, %v10462
      %10572 = vst.msk [vmem:[%s213 + $0x190] sm:$0xff] %vm10521, %v10467
      %10573 = vst.msk [vmem:[%s213 + $0x198] sm:$0xff] %vm10521, %v10470
      %10574 = vst.msk [vmem:[%s213 + $0x1a0] sm:$0xff] %vm10521, %v10475
      %10575 = vst.msk [vmem:[%s213 + $0x1a8] sm:$0xff] %vm10521, %v10478
      %10576 = vst.msk [vmem:[%s213 + $0x1b0] sm:$0xff] %vm10521, %v10483
      %10577 = vst.msk [vmem:[%s213 + $0x1b8] sm:$0xff] %vm10521, %v10486
      %10578 = vst.msk [vmem:[%s213 + $0x1c0] sm:$0xff] %vm10521, %v10491
      %10579 = vst.msk [vmem:[%s213 + $0x1c8] sm:$0xff] %vm10521, %v10494
      %10580 = vst.msk [vmem:[%s213 + $0x1d0] sm:$0xff] %vm10521, %v10499
      %10581 = vst.msk [vmem:[%s213 + $0x1d8] sm:$0xff] %vm10521, %v10502
      %10582 = vst.msk [vmem:[%s213 + $0x1e0] sm:$0xff] %vm10521, %v10507
      %10583 = vst.msk [vmem:[%s213 + $0x1e8] sm:$0xff] %vm10521, %v10510
      %10584 = vst.msk [vmem:[%s213 + $0x1f0] sm:$0xff] %vm10521, %v10515
      %10585 = vst.msk [vmem:[%s213 + $0x1f8] sm:$0xff] %vm10521, %v10518
      %s10586 = sadd.s32 %s19, %s20
      %s10587 = smul.u32 64, %s10586
      %p10588 = scmp.lt.s32.totalorder %s10587, 127
      %s10589 = scalar_select %p10588, %s10587, 127
      %s10590 = smul.addr %s10589, 8
      %s10591 = scalar_lea.vmem %s4, %s10590
      // Predicated region
      $region37: #{temporal_transition_layer.3} parent=35 // pred_check
        %p10592 = pneg %p136
      $region38: #{temporal_transition_layer.3} parent=35 // pred_check_branch
        %10594 = sbr.rel (%p10592) target = $region40
      $region39: #{temporal_transition_layer.3} parent=35 // pred_region
        %s10595 = sadd.s32 %s19, %s20
        %s10596 = smul.u32 64, %s10595
      $region40: #{temporal_transition_layer.3} parent=35 // pred_fallthru
        _
    $region36: #{temporal_transition_layer.3} parent=5 // pred_fallthru
      _
    %p10597 = scmp.le.s32.totalorder 2, %s10
    // Predicated region
    $region41: #{temporal_transition_layer.3} parent=5 // pred_check
      %p10598 = pneg %p10597
    $region42: #{temporal_transition_layer.3} parent=5 // pred_check_branch
      %10600 = sbr.rel (%p10598) target = $region44
    $region43: #{temporal_transition_layer.3} parent=5 // pred_region
      %s10601 = ssub.s32 %s10, 2
      // Predicated region
      $region45: #{temporal_transition_layer.3} parent=43 // pred_check
        %p10602 = pneg %p142
      $region46: #{temporal_transition_layer.3} parent=43 // pred_check_branch
        %10604 = sbr.rel (%p10602) target = $region48
      $region47: #{temporal_transition_layer.3} parent=43 // pred_region
        %s10605 = sadd.s32 %s21, %s22
        %s10606 = smul.u32 64, %s10605
        %p10607 = scmp.lt.s32.totalorder %s10606, 127
        %s10608 = scalar_select %p10607, %s10606, 127
        %s10609 = smul.addr %s10608, 8
        %s10610 = scalar_lea.vmem %s4, %s10609
      $region48: #{temporal_transition_layer.3} parent=43 // pred_fallthru
        _
    $region44: #{temporal_transition_layer.3} parent=5 // pred_fallthru
      _
  $region6: #{temporal_transition_layer.3} parent=0 // loop_footer
    %s14 = sadd.s32 1, %s10
  $region7: #{temporal_transition_layer.3} parent=0 // loop_footer_branch
    %9 = sbr.rel target = $region3
  $region8: #{temporal_transition_layer.3} parent=0 // loop_exit
    _

</llo_original>
